<compile_context>
chip_gen: v5e
topology: v5e:2x2
jax: 0.10.0
libtpu: 0.0.40
codegen_flags: <defaults>
</compile_context>

<pallas_src>
import jax
import jax.numpy as jnp
from jax.experimental import pallas as pl
from jax.experimental.pallas import tpu as pltpu

DIMS = (96, 192, 384, 768)
NUM_CLASSES = 100
STEM_CPAD = 128                                   # 96 -> 128 lane-dense
CLS_PAD = ((NUM_CLASSES + 127) // 128) * 128      # 100 -> 128 lane-dense
N_DOWNSAMPLES = 3                                 # 2x2/2 convs after the stem


# ---------------------------------------------------------------------------
# hardware-aware helpers
# ---------------------------------------------------------------------------
def _vmem_capacity_bytes():
    try:
        return int(pltpu.get_tpu_info().vmem_capacity_bytes)
    except Exception:
        return 64 << 20          # conservative (v7x per-core VMEM)


def _vmem_limit(tile_bytes):
    cap = int(0.75 * _vmem_capacity_bytes())       # ~48 MiB v7x, ~96 MiB v5e/v6e
    need = 2 * tile_bytes + (4 << 20)              # double-buffered + headroom
    return int(min(max(need, 8 << 20), cap))


def _pick_row_tile(m, target=512):
    """Largest row tile <= target that divides m, is 16-row aligned (bf16 LHS
    packing) and leaves >= 2 grid steps so both v7x TensorCores get work."""
    cap = min(target, m // 2)
    for t in range(cap, 15, -1):
        if m % t == 0 and t % 16 == 0:
            return t
    return m                      # single full block fallback (tiny m)


# ---------------------------------------------------------------------------
# Pallas kernels
# ---------------------------------------------------------------------------
def _make_conv_ln_kernel(n_ln, c_true, eps=1e-6):
    """bf16 matmul -> f32 acc + bias + n_ln fused channel-first LayerNorms.

    The output channel dim may be zero-padded beyond c_true; LN reductions
    divide by c_true and padded gamma/beta are zero, so padded columns stay 0.
    """

    def kernel(x_ref, w_ref, vec_ref, o_ref):
        acc = jnp.dot(x_ref[...], w_ref[...],
                      preferred_element_type=jnp.float32)
        y = acc + vec_ref[0:1, :]                      # conv bias
        inv_c = 1.0 / float(c_true)
        for j in range(n_ln):
            g = vec_ref[1 + 2 * j:2 + 2 * j, :]
            b = vec_ref[2 + 2 * j:3 + 2 * j, :]
            mean = jnp.sum(y, axis=-1, keepdims=True) * inv_c
            ey2 = jnp.sum(y * y, axis=-1, keepdims=True) * inv_c
            var = jnp.maximum(ey2 - mean * mean, 0.0)
            # PyTorch module semantics: (x - mean) / (sqrt(var) + eps)
            inv = pl.reciprocal(jnp.sqrt(var) + eps, approx=True)
            y = (y - mean) * inv * g + b
        o_ref[...] = y.astype(o_ref.dtype)

    return kernel


def _head_kernel(x_ref, ln_ref, w_ref, b_ref, o_ref):
    # x: (tn, HW, C) bf16. avgpool over HW + nn.LayerNorm(C) + Linear(C->CLS_PAD)
    p = jnp.mean(x_ref[...].astype(jnp.float32), axis=1)      # (tn, C)
    mean = jnp.mean(p, axis=-1, keepdims=True)
    ey2 = jnp.mean(p * p, axis=-1, keepdims=True)
    var = jnp.maximum(ey2 - mean * mean, 0.0)
    y = (p - mean) * jax.lax.rsqrt(var + 1e-5)                 # nn.LayerNorm
    y = y * ln_ref[0:1, :] + ln_ref[1:2, :]
    acc = jnp.dot(y.astype(jnp.bfloat16), w_ref[...],
                  preferred_element_type=jnp.float32)
    o_ref[...] = acc + b_ref[...]


# ---------------------------------------------------------------------------
# Pallas wrappers
# ---------------------------------------------------------------------------
def fused_conv_ln(patches, w_mat, vecs, n_ln, c_true, row_tile=512):
    """Row-tiled (M, K) @ (K, Cout) + bias + fused channel-first LN epilogues."""
    m, k = patches.shape
    _, nout = w_mat.shape
    nvec = vecs.shape[0]
    tm = _pick_row_tile(m, row_tile)

    tile_bytes = tm * k * 2 + k * nout * 2 + nvec * nout * 4 + tm * nout * 2
    cost = pl.CostEstimate(
        flops=2 * m * k * nout,
        transcendentals=2 * m * n_ln,
        bytes_accessed=m * k * 2 + k * nout * 2 + nvec * nout * 4 + m * nout * 2)

    return pl.pallas_call(
        _make_conv_ln_kernel(n_ln, c_true),
        out_shape=jax.ShapeDtypeStruct((m, nout), jnp.bfloat16),
        grid=(m // tm,),
        in_specs=[pl.BlockSpec((tm, k), lambda i: (i, 0)),
                  pl.BlockSpec((k, nout), lambda i: (0, 0)),
                  pl.BlockSpec((nvec, nout), lambda i: (0, 0))],
        out_specs=pl.BlockSpec((tm, nout), lambda i: (i, 0)),
        compiler_params=pltpu.CompilerParams(
            dimension_semantics=("parallel",),
            vmem_limit_bytes=_vmem_limit(tile_bytes)),
        cost_estimate=cost,
    )(patches, w_mat, vecs)


def head_pool_ln_fc(x3, ln_vec, fcw_pad, fcb_pad, num_classes):
    """AdaptiveAvgPool2d((1,1)) + flatten + nn.LayerNorm + Linear, fused."""
    n, hw, c = x3.shape
    npad = fcw_pad.shape[1]

    # cap the row tile so (tn, hw, c) stays well inside VMEM at any resolution
    row_budget = max(16, (_vmem_capacity_bytes() // 8) // max(1, hw * c * 2))
    tn = _pick_row_tile(n, min(256, row_budget))

    tile_bytes = (tn * hw * c * 2 + 2 * c * 4
                  + c * npad * 2 + npad * 4 + tn * npad * 4)
    cost = pl.CostEstimate(
        flops=2 * n * c * npad + n * hw * c,
        transcendentals=n,
        bytes_accessed=n * hw * c * 2 + c * npad * 2 + n * npad * 4)

    out = pl.pallas_call(
        _head_kernel,
        out_shape=jax.ShapeDtypeStruct((n, npad), jnp.float32),
        grid=(n // tn,),
        in_specs=[pl.BlockSpec((tn, hw, c), lambda i: (i, 0, 0)),
                  pl.BlockSpec((2, c), lambda i: (0, 0)),
                  pl.BlockSpec((c, npad), lambda i: (0, 0)),
                  pl.BlockSpec((1, npad), lambda i: (0, 0))],
        out_specs=pl.BlockSpec((tn, npad), lambda i: (i, 0)),
        compiler_params=pltpu.CompilerParams(
            dimension_semantics=("parallel",),
            vmem_limit_bytes=_vmem_limit(tile_bytes)),
        cost_estimate=cost,
    )(x3, ln_vec, fcw_pad, fcb_pad)
    return out[:, :num_classes]


# ---------------------------------------------------------------------------
# XLA-side glue: ONE hierarchical patchify of the input image.
# Row order = (n, h3, w3, h2, w2, h1, w1, h0, w0) over the stem output grid,
# so that every later 2x2/2 conv's patch matrix is a pure (free) reshape
# (M, C) -> (M/4, 4C) of the previous kernel's bf16 output.
# ---------------------------------------------------------------------------
def _stem_patches_hier(x_nhwc, k, levels):
    n, h, w, c = x_nhwc.shape
    assert h % k == 0 and w % k == 0, "spatial dims must be divisible by 4"
    ho, wo = h // k, w // k
    assert ho % (1 << levels) == 0 and wo % (1 << levels) == 0, \
        "input spatial must be divisible by 32 for the 3 downsample stages"
    th, tw = ho >> levels, wo >> levels

    xr = x_nhwc.reshape((n, th) + (2,) * levels + (k, tw) + (2,) * levels + (k, c))
    # dims: [n, tH, hb_{L-1..0}, dy, tW, wb_{L-1..0}, dx, c]
    hpos = list(range(1, levels + 3))                    # tH, h bits, dy
    wpos = list(range(levels + 3, 2 * levels + 5))       # tW, w bits, dx
    perm = [0, hpos[0], wpos[0]]
    for j in range(levels):
        perm += [hpos[1 + j], wpos[1 + j]]
    perm += [hpos[-1], wpos[-1], 2 * levels + 5]
    xt = jnp.transpose(xr, perm)
    return xt.reshape(n * ho * wo, k * k * c).astype(jnp.bfloat16)


# ---------------------------------------------------------------------------
# Parameters (deterministic synthetic init, shapes per ResNet.__init__)
# ---------------------------------------------------------------------------
def init_params(key, dims=DIMS, num_classes=NUM_CLASSES):
    params = {}
    keys = jax.random.split(key, 16)
    kit = iter(keys)

    def nrm(k, shape, scale=0.02):
        return (scale * jax.random.normal(k, shape)).astype(jnp.float32)

    # stem: Conv2d(3, dims[0], kernel_size=4, stride=4) + LayerNorm(dims[0])
    params["stem_w"] = nrm(next(kit), (dims[0], 3, 4, 4))
    params["stem_b"] = nrm(next(kit), (dims[0],))
    params["stem_ln_w"] = jnp.ones((dims[0],), jnp.float32)
    params["stem_ln_b"] = jnp.zeros((dims[0],), jnp.float32)

    # downsample layers 1..3: LayerNorm(dims[i]) + Conv2d(dims[i], dims[i+1], 2, 2)
    for i in range(3):
        params[f"ds_ln_w{i}"] = jnp.ones((dims[i],), jnp.float32)
        params[f"ds_ln_b{i}"] = jnp.zeros((dims[i],), jnp.float32)
        params[f"ds_w{i}"] = nrm(next(kit), (dims[i + 1], dims[i], 2, 2))
        params[f"ds_b{i}"] = nrm(next(kit), (dims[i + 1],))

    # head: nn.LayerNorm(dims[3]) + nn.Linear(dims[3], num_classes)
    params["head_ln_w"] = jnp.ones((dims[3],), jnp.float32)
    params["head_ln_b"] = jnp.zeros((dims[3],), jnp.float32)
    params["fc_w"] = nrm(next(kit), (dims[3], num_classes))
    params["fc_b"] = nrm(next(kit), (num_classes,))
    return params


# ---------------------------------------------------------------------------
# One-time weight preprocessing (hoisted OUT of the jitted forward)
# ---------------------------------------------------------------------------
def _conv_w_to_mat(w_conv, cin_pad=None, cout_pad=None):
    """PyTorch (Cout, Cin, kh, kw) -> (kh*kw*Cin_pad, Cout_pad) bf16."""
    cout, cin, kh, kw = w_conv.shape
    cinp = cin_pad or cin
    coutp = cout_pad or cout
    wt = jnp.transpose(w_conv, (2, 3, 1, 0))            # (kh, kw, cin, cout)
    wt = jnp.pad(wt, ((0, 0), (0, 0), (0, cinp - cin), (0, coutp - cout)))
    return wt.reshape(kh * kw * cinp, coutp).astype(jnp.bfloat16)


def _pad_vec(v, n):
    return jnp.pad(v.astype(jnp.float32), (0, n - v.shape[0]))


def preprocess_params(params, dims=DIMS, num_classes=NUM_CLASSES):
    prep = {}
    # stem: Cout padded 96 -> 128 (lane-dense store), LN params zero-padded so
    # padded columns stay exactly 0 through both fused channel-first LNs.
    prep["stem_w"] = _conv_w_to_mat(params["stem_w"], cout_pad=STEM_CPAD)
    prep["stem_vec"] = jnp.stack([
        _pad_vec(params["stem_b"], STEM_CPAD),
        _pad_vec(params["stem_ln_w"], STEM_CPAD),
        _pad_vec(params["stem_ln_b"], STEM_CPAD),
        _pad_vec(params["ds_ln_w0"], STEM_CPAD),
        _pad_vec(params["ds_ln_b0"], STEM_CPAD)])

    # ds_conv1: its Cin is the padded stem output (zero weight rows for pads)
    cin_pads = (STEM_CPAD, dims[1], dims[2])
    for i in range(3):
        prep[f"ds_w{i}"] = _conv_w_to_mat(params[f"ds_w{i}"], cin_pad=cin_pads[i])
        rows = [params[f"ds_b{i}"].astype(jnp.float32)]
        if i < 2:   # fuse the NEXT downsample layer's channel-first LN
            rows += [params[f"ds_ln_w{i + 1}"].astype(jnp.float32),
                     params[f"ds_ln_b{i + 1}"].astype(jnp.float32)]
        prep[f"ds_vec{i}"] = jnp.stack(rows)

    prep["head_ln"] = jnp.stack([params["head_ln_w"].astype(jnp.float32),
                                 params["head_ln_b"].astype(jnp.float32)])
    prep["fc_w"] = jnp.zeros((dims[3], CLS_PAD), jnp.bfloat16).at[:, :num_classes].set(
        params["fc_w"].astype(jnp.bfloat16))
    prep["fc_b"] = jnp.zeros((1, CLS_PAD), jnp.float32).at[:, :num_classes].set(
        params["fc_b"].astype(jnp.float32))
    return prep


# ---------------------------------------------------------------------------
# Forward pass (matches ResNet.forward; stage blocks -> identity, see TODO)
# ---------------------------------------------------------------------------
@jax.jit
def resnet_forward(x_nchw, prep):
    n = x_nchw.shape[0]
    x = jnp.transpose(x_nchw, (0, 2, 3, 1))                  # NCHW -> NHWC

    # ONE patch extraction for the whole network (hierarchical row order).
    p = _stem_patches_hier(x, 4, N_DOWNSAMPLES)              # (N*Ho*Wo, 48) bf16

    # downsample_layers[0] = stem conv 4x4/4 + stem_ln; stages[0] is identity
    # so ds_ln0 fuses in as a second epilogue.  TODO(synk): external `block`.
    y = fused_conv_ln(p, prep["stem_w"], prep["stem_vec"],
                      n_ln=2, c_true=DIMS[0])                 # (M0, 128) bf16

    # downsample_layers[1..3]: patch matrix is a FREE reshape of the previous
    # bf16 output; the conv's own LN prologue was the previous epilogue.
    for i in range(3):
        p = y.reshape(y.shape[0] // 4, 4 * y.shape[1])        # next conv patches
        y = fused_conv_ln(p, prep[f"ds_w{i}"], prep[f"ds_vec{i}"],
                          n_ln=(1 if i < 2 else 0), c_true=DIMS[i + 1])
        # stages[i+1]: TODO(synk) external `block` -> identity

    # rows of the last stage are contiguous per image -> free reshape for pool
    hw = y.shape[0] // n
    x3 = y.reshape(n, hw, DIMS[3])
    return head_pool_ln_fc(x3, prep["head_ln"], prep["fc_w"], prep["fc_b"],
                           NUM_CLASSES)


if __name__ == "__main__":
    key = jax.random.PRNGKey(0)
    k_x, k_p = jax.random.split(key)

    # Small input consistent with the module: NCHW, 3 channels, /32 spatial.
    x = jax.random.normal(k_x, (2, 3, 64, 64), dtype=jnp.float32)
    params = init_params(k_p)
    prep = preprocess_params(params)          # one-time, outside jit

    out = resnet_forward(x, prep)
    out = jax.block_until_ready(out)
    assert out.shape == (2, NUM_CLASSES), out.shape
    assert bool(jnp.all(jnp.isfinite(out)))
    print("KERNEL_OK")
</pallas_src>

<mosaic_0001>
module attributes {stable_mosaic.version = 11 : i64} {
  func.func @kernel(%arg0: i32, %arg1: memref<256x48xbf16, #tpu.memory_space<vmem>>, %arg2: memref<48x128xbf16, #tpu.memory_space<vmem>>, %arg3: memref<5x128xf32, #tpu.memory_space<vmem>>, %arg4: memref<256x128xbf16, #tpu.memory_space<vmem>>) attributes {dimension_semantics = [#tpu.dimension_semantics<parallel>], iteration_bounds = array<i64: 2>, scalar_prefetch = 0 : i64, scratch_operands = 0 : i64, tpu.core_type = #tpu.core_type<tc>, window_params = [{transform_indices = @transform_0, window_bounds = array<i64: 256, 48>}, {pipeline_mode = #tpu.pipeline_mode<synchronous>, transform_indices = @transform_1, window_bounds = array<i64: 48, 128>}, {pipeline_mode = #tpu.pipeline_mode<synchronous>, transform_indices = @transform_2, window_bounds = array<i64: 5, 128>}, {transform_indices = @transform_3, window_bounds = array<i64: 256, 128>}]} {
    %c0 = arith.constant 0 : index
    %c0_0 = arith.constant 0 : index
    %0 = vector.load %arg1[%c0, %c0_0] : memref<256x48xbf16, #tpu.memory_space<vmem>>, vector<256x48xbf16>
    %c0_1 = arith.constant 0 : index
    %c0_2 = arith.constant 0 : index
    %1 = vector.load %arg2[%c0_1, %c0_2] : memref<48x128xbf16, #tpu.memory_space<vmem>>, vector<48x128xbf16>
    %cst = arith.constant dense<0.000000e+00> : vector<256x128xf32>
    %2 = tpu.matmul %0, %1, %cst {dimension_numbers = #tpu.dot_dimension_numbers<[1], [0], [0], [1], [0, 0, 1, 1], [], []>} : vector<256x48xbf16>, vector<48x128xbf16>, vector<256x128xf32> -> vector<256x128xf32>
    %c0_3 = arith.constant 0 : index
    %c0_4 = arith.constant 0 : index
    %3 = vector.load %arg3[%c0_3, %c0_4] : memref<5x128xf32, #tpu.memory_space<vmem>>, vector<1x128xf32>
    %4 = vector.broadcast %3 : vector<1x128xf32> to vector<256x128xf32>
    %5 = arith.addf %2, %4 : vector<256x128xf32>
    %c1 = arith.constant 1 : index
    %c0_5 = arith.constant 0 : index
    %6 = vector.load %arg3[%c1, %c0_5] : memref<5x128xf32, #tpu.memory_space<vmem>>, vector<1x128xf32>
    %c2 = arith.constant 2 : index
    %c0_6 = arith.constant 0 : index
    %7 = vector.load %arg3[%c2, %c0_6] : memref<5x128xf32, #tpu.memory_space<vmem>>, vector<1x128xf32>
    %cst_7 = arith.constant dense<0.000000e+00> : vector<256xf32>
    %8 = vector.multi_reduction <add>, %5, %cst_7 [1] : vector<256x128xf32> to vector<256xf32>
    %9 = vector.shape_cast %8 : vector<256xf32> to vector<256x1xf32>
    %cst_8 = arith.constant 0.010416667 : f32
    %10 = vector.broadcast %cst_8 : f32 to vector<256x1xf32>
    %11 = arith.mulf %9, %10 : vector<256x1xf32>
    %12 = arith.mulf %5, %5 : vector<256x128xf32>
    %cst_9 = arith.constant dense<0.000000e+00> : vector<256xf32>
    %13 = vector.multi_reduction <add>, %12, %cst_9 [1] : vector<256x128xf32> to vector<256xf32>
    %14 = vector.shape_cast %13 : vector<256xf32> to vector<256x1xf32>
    %cst_10 = arith.constant 0.010416667 : f32
    %15 = vector.broadcast %cst_10 : f32 to vector<256x1xf32>
    %16 = arith.mulf %14, %15 : vector<256x1xf32>
    %17 = arith.mulf %11, %11 : vector<256x1xf32>
    %18 = arith.subf %16, %17 : vector<256x1xf32>
    %cst_11 = arith.constant 0.000000e+00 : f32
    %19 = vector.broadcast %cst_11 : f32 to vector<256x1xf32>
    %20 = arith.maximumf %18, %19 : vector<256x1xf32>
    %21 = math.sqrt %20 : vector<256x1xf32>
    %cst_12 = arith.constant 9.99999997E-7 : f32
    %22 = vector.broadcast %cst_12 : f32 to vector<256x1xf32>
    %23 = arith.addf %21, %22 : vector<256x1xf32>
    %24 = tpu.reciprocal %23 {approx = true} : vector<256x1xf32> -> vector<256x1xf32>
    %25 = vector.broadcast %11 : vector<256x1xf32> to vector<256x128xf32>
    %26 = arith.subf %5, %25 : vector<256x128xf32>
    %27 = vector.broadcast %24 : vector<256x1xf32> to vector<256x128xf32>
    %28 = arith.mulf %26, %27 : vector<256x128xf32>
    %29 = vector.broadcast %6 : vector<1x128xf32> to vector<256x128xf32>
    %30 = arith.mulf %28, %29 : vector<256x128xf32>
    %31 = vector.broadcast %7 : vector<1x128xf32> to vector<256x128xf32>
    %32 = arith.addf %30, %31 : vector<256x128xf32>
    %c3 = arith.constant 3 : index
    %c0_13 = arith.constant 0 : index
    %33 = vector.load %arg3[%c3, %c0_13] : memref<5x128xf32, #tpu.memory_space<vmem>>, vector<1x128xf32>
    %c4 = arith.constant 4 : index
    %c0_14 = arith.constant 0 : index
    %34 = vector.load %arg3[%c4, %c0_14] : memref<5x128xf32, #tpu.memory_space<vmem>>, vector<1x128xf32>
    %cst_15 = arith.constant dense<0.000000e+00> : vector<256xf32>
    %35 = vector.multi_reduction <add>, %32, %cst_15 [1] : vector<256x128xf32> to vector<256xf32>
    %36 = vector.shape_cast %35 : vector<256xf32> to vector<256x1xf32>
    %cst_16 = arith.constant 0.010416667 : f32
    %37 = vector.broadcast %cst_16 : f32 to vector<256x1xf32>
    %38 = arith.mulf %36, %37 : vector<256x1xf32>
    %39 = arith.mulf %32, %32 : vector<256x128xf32>
    %cst_17 = arith.constant dense<0.000000e+00> : vector<256xf32>
    %40 = vector.multi_reduction <add>, %39, %cst_17 [1] : vector<256x128xf32> to vector<256xf32>
    %41 = vector.shape_cast %40 : vector<256xf32> to vector<256x1xf32>
    %cst_18 = arith.constant 0.010416667 : f32
    %42 = vector.broadcast %cst_18 : f32 to vector<256x1xf32>
    %43 = arith.mulf %41, %42 : vector<256x1xf32>
    %44 = arith.mulf %38, %38 : vector<256x1xf32>
    %45 = arith.subf %43, %44 : vector<256x1xf32>
    %cst_19 = arith.constant 0.000000e+00 : f32
    %46 = vector.broadcast %cst_19 : f32 to vector<256x1xf32>
    %47 = arith.maximumf %45, %46 : vector<256x1xf32>
    %48 = math.sqrt %47 : vector<256x1xf32>
    %cst_20 = arith.constant 9.99999997E-7 : f32
    %49 = vector.broadcast %cst_20 : f32 to vector<256x1xf32>
    %50 = arith.addf %48, %49 : vector<256x1xf32>
    %51 = tpu.reciprocal %50 {approx = true} : vector<256x1xf32> -> vector<256x1xf32>
    %52 = vector.broadcast %38 : vector<256x1xf32> to vector<256x128xf32>
    %53 = arith.subf %32, %52 : vector<256x128xf32>
    %54 = vector.broadcast %51 : vector<256x1xf32> to vector<256x128xf32>
    %55 = arith.mulf %53, %54 : vector<256x128xf32>
    %56 = vector.broadcast %33 : vector<1x128xf32> to vector<256x128xf32>
    %57 = arith.mulf %55, %56 : vector<256x128xf32>
    %58 = vector.broadcast %34 : vector<1x128xf32> to vector<256x128xf32>
    %59 = arith.addf %57, %58 : vector<256x128xf32>
    %60 = arith.truncf %59 : vector<256x128xf32> to vector<256x128xbf16>
    %c0_21 = arith.constant 0 : index
    %c0_22 = arith.constant 0 : index
    %61 = vector.load %arg4[%c0_21, %c0_22] : memref<256x128xbf16, #tpu.memory_space<vmem>>, vector<256x128xbf16>
    tpu.vector_store %arg4[%c0_21, %c0_22], %60 {strides = array<i32>} : memref<256x128xbf16, #tpu.memory_space<vmem>>, vector<256x128xbf16>,
    return
  }
  func.func @transform_0(%arg0: i32) -> (i32, i32) {
    %c0_i32 = arith.constant 0 : i32
    %c0_i32_0 = arith.constant 0 : i32
    return %arg0, %c0_i32 : i32, i32
  }
  func.func @transform_1(%arg0: i32) -> (i32, i32) {
    %c0_i32 = arith.constant 0 : i32
    %c0_i32_0 = arith.constant 0 : i32
    %c0_i32_1 = arith.constant 0 : i32
    return %c0_i32, %c0_i32_0 : i32, i32
  }
  func.func @transform_2(%arg0: i32) -> (i32, i32) {
    %c0_i32 = arith.constant 0 : i32
    %c0_i32_0 = arith.constant 0 : i32
    %c0_i32_1 = arith.constant 0 : i32
    return %c0_i32, %c0_i32_0 : i32, i32
  }
  func.func @transform_3(%arg0: i32) -> (i32, i32) {
    %c0_i32 = arith.constant 0 : i32
    %c0_i32_0 = arith.constant 0 : i32
    return %arg0, %c0_i32 : i32, i32
  }
}

module attributes {stable_mosaic.version = 11 : i64} {
  func.func @kernel(%arg0: i32, %arg1: memref<64x512xbf16, #tpu.memory_space<vmem>>, %arg2: memref<512x192xbf16, #tpu.memory_space<vmem>>, %arg3: memref<3x192xf32, #tpu.memory_space<vmem>>, %arg4: memref<64x192xbf16, #tpu.memory_space<vmem>>) attributes {dimension_semantics = [#tpu.dimension_semantics<parallel>], iteration_bounds = array<i64: 2>, scalar_prefetch = 0 : i64, scratch_operands = 0 : i64, tpu.core_type = #tpu.core_type<tc>, window_params = [{transform_indices = @transform_0, window_bounds = array<i64: 64, 512>}, {pipeline_mode = #tpu.pipeline_mode<synchronous>, transform_indices = @transform_1, window_bounds = array<i64: 512, 192>}, {pipeline_mode = #tpu.pipeline_mode<synchronous>, transform_indices = @transform_2, window_bounds = array<i64: 3, 192>}, {transform_indices = @transform_3, window_bounds = array<i64: 64, 192>}]} {
    %c0 = arith.constant 0 : index
    %c0_0 = arith.constant 0 : index
    %0 = vector.load %arg1[%c0, %c0_0] : memref<64x512xbf16, #tpu.memory_space<vmem>>, vector<64x512xbf16>
    %c0_1 = arith.constant 0 : index
    %c0_2 = arith.constant 0 : index
    %1 = vector.load %arg2[%c0_1, %c0_2] : memref<512x192xbf16, #tpu.memory_space<vmem>>, vector<512x192xbf16>
    %cst = arith.constant dense<0.000000e+00> : vector<64x192xf32>
    %2 = tpu.matmul %0, %1, %cst {dimension_numbers = #tpu.dot_dimension_numbers<[1], [0], [0], [1], [0, 0, 1, 1], [], []>} : vector<64x512xbf16>, vector<512x192xbf16>, vector<64x192xf32> -> vector<64x192xf32>
    %c0_3 = arith.constant 0 : index
    %c0_4 = arith.constant 0 : index
    %3 = vector.load %arg3[%c0_3, %c0_4] : memref<3x192xf32, #tpu.memory_space<vmem>>, vector<1x192xf32>
    %4 = vector.broadcast %3 : vector<1x192xf32> to vector<64x192xf32>
    %5 = arith.addf %2, %4 : vector<64x192xf32>
    %c1 = arith.constant 1 : index
    %c0_5 = arith.constant 0 : index
    %6 = vector.load %arg3[%c1, %c0_5] : memref<3x192xf32, #tpu.memory_space<vmem>>, vector<1x192xf32>
    %c2 = arith.constant 2 : index
    %c0_6 = arith.constant 0 : index
    %7 = vector.load %arg3[%c2, %c0_6] : memref<3x192xf32, #tpu.memory_space<vmem>>, vector<1x192xf32>
    %cst_7 = arith.constant dense<0.000000e+00> : vector<64xf32>
    %8 = vector.multi_reduction <add>, %5, %cst_7 [1] : vector<64x192xf32> to vector<64xf32>
    %9 = vector.shape_cast %8 : vector<64xf32> to vector<64x1xf32>
    %cst_8 = arith.constant 0.00520833349 : f32
    %10 = vector.broadcast %cst_8 : f32 to vector<64x1xf32>
    %11 = arith.mulf %9, %10 : vector<64x1xf32>
    %12 = arith.mulf %5, %5 : vector<64x192xf32>
    %cst_9 = arith.constant dense<0.000000e+00> : vector<64xf32>
    %13 = vector.multi_reduction <add>, %12, %cst_9 [1] : vector<64x192xf32> to vector<64xf32>
    %14 = vector.shape_cast %13 : vector<64xf32> to vector<64x1xf32>
    %cst_10 = arith.constant 0.00520833349 : f32
    %15 = vector.broadcast %cst_10 : f32 to vector<64x1xf32>
    %16 = arith.mulf %14, %15 : vector<64x1xf32>
    %17 = arith.mulf %11, %11 : vector<64x1xf32>
    %18 = arith.subf %16, %17 : vector<64x1xf32>
    %cst_11 = arith.constant 0.000000e+00 : f32
    %19 = vector.broadcast %cst_11 : f32 to vector<64x1xf32>
    %20 = arith.maximumf %18, %19 : vector<64x1xf32>
    %21 = math.sqrt %20 : vector<64x1xf32>
    %cst_12 = arith.constant 9.99999997E-7 : f32
    %22 = vector.broadcast %cst_12 : f32 to vector<64x1xf32>
    %23 = arith.addf %21, %22 : vector<64x1xf32>
    %24 = tpu.reciprocal %23 {approx = true} : vector<64x1xf32> -> vector<64x1xf32>
    %25 = vector.broadcast %11 : vector<64x1xf32> to vector<64x192xf32>
    %26 = arith.subf %5, %25 : vector<64x192xf32>
    %27 = vector.broadcast %24 : vector<64x1xf32> to vector<64x192xf32>
    %28 = arith.mulf %26, %27 : vector<64x192xf32>
    %29 = vector.broadcast %6 : vector<1x192xf32> to vector<64x192xf32>
    %30 = arith.mulf %28, %29 : vector<64x192xf32>
    %31 = vector.broadcast %7 : vector<1x192xf32> to vector<64x192xf32>
    %32 = arith.addf %30, %31 : vector<64x192xf32>
    %33 = arith.truncf %32 : vector<64x192xf32> to vector<64x192xbf16>
    %c0_13 = arith.constant 0 : index
    %c0_14 = arith.constant 0 : index
    %34 = vector.load %arg4[%c0_13, %c0_14] : memref<64x192xbf16, #tpu.memory_space<vmem>>, vector<64x192xbf16>
    tpu.vector_store %arg4[%c0_13, %c0_14], %33 {strides = array<i32>} : memref<64x192xbf16, #tpu.memory_space<vmem>>, vector<64x192xbf16>,
    return
  }
  func.func @transform_0(%arg0: i32) -> (i32, i32) {
    %c0_i32 = arith.constant 0 : i32
    %c0_i32_0 = arith.constant 0 : i32
    return %arg0, %c0_i32 : i32, i32
  }
  func.func @transform_1(%arg0: i32) -> (i32, i32) {
    %c0_i32 = arith.constant 0 : i32
    %c0_i32_0 = arith.constant 0 : i32
    %c0_i32_1 = arith.constant 0 : i32
    return %c0_i32, %c0_i32_0 : i32, i32
  }
  func.func @transform_2(%arg0: i32) -> (i32, i32) {
    %c0_i32 = arith.constant 0 : i32
    %c0_i32_0 = arith.constant 0 : i32
    %c0_i32_1 = arith.constant 0 : i32
    return %c0_i32, %c0_i32_0 : i32, i32
  }
  func.func @transform_3(%arg0: i32) -> (i32, i32) {
    %c0_i32 = arith.constant 0 : i32
    %c0_i32_0 = arith.constant 0 : i32
    return %arg0, %c0_i32 : i32, i32
  }
}

module attributes {stable_mosaic.version = 11 : i64} {
  func.func @kernel(%arg0: i32, %arg1: memref<16x768xbf16, #tpu.memory_space<vmem>>, %arg2: memref<768x384xbf16, #tpu.memory_space<vmem>>, %arg3: memref<3x384xf32, #tpu.memory_space<vmem>>, %arg4: memref<16x384xbf16, #tpu.memory_space<vmem>>) attributes {dimension_semantics = [#tpu.dimension_semantics<parallel>], iteration_bounds = array<i64: 2>, scalar_prefetch = 0 : i64, scratch_operands = 0 : i64, tpu.core_type = #tpu.core_type<tc>, window_params = [{transform_indices = @transform_0, window_bounds = array<i64: 16, 768>}, {pipeline_mode = #tpu.pipeline_mode<synchronous>, transform_indices = @transform_1, window_bounds = array<i64: 768, 384>}, {pipeline_mode = #tpu.pipeline_mode<synchronous>, transform_indices = @transform_2, window_bounds = array<i64: 3, 384>}, {transform_indices = @transform_3, window_bounds = array<i64: 16, 384>}]} {
    %c0 = arith.constant 0 : index
    %c0_0 = arith.constant 0 : index
    %0 = vector.load %arg1[%c0, %c0_0] : memref<16x768xbf16, #tpu.memory_space<vmem>>, vector<16x768xbf16>
    %c0_1 = arith.constant 0 : index
    %c0_2 = arith.constant 0 : index
    %1 = vector.load %arg2[%c0_1, %c0_2] : memref<768x384xbf16, #tpu.memory_space<vmem>>, vector<768x384xbf16>
    %cst = arith.constant dense<0.000000e+00> : vector<16x384xf32>
    %2 = tpu.matmul %0, %1, %cst {dimension_numbers = #tpu.dot_dimension_numbers<[1], [0], [0], [1], [0, 0, 1, 1], [], []>} : vector<16x768xbf16>, vector<768x384xbf16>, vector<16x384xf32> -> vector<16x384xf32>
    %c0_3 = arith.constant 0 : index
    %c0_4 = arith.constant 0 : index
    %3 = vector.load %arg3[%c0_3, %c0_4] : memref<3x384xf32, #tpu.memory_space<vmem>>, vector<1x384xf32>
    %4 = vector.broadcast %3 : vector<1x384xf32> to vector<16x384xf32>
    %5 = arith.addf %2, %4 : vector<16x384xf32>
    %c1 = arith.constant 1 : index
    %c0_5 = arith.constant 0 : index
    %6 = vector.load %arg3[%c1, %c0_5] : memref<3x384xf32, #tpu.memory_space<vmem>>, vector<1x384xf32>
    %c2 = arith.constant 2 : index
    %c0_6 = arith.constant 0 : index
    %7 = vector.load %arg3[%c2, %c0_6] : memref<3x384xf32, #tpu.memory_space<vmem>>, vector<1x384xf32>
    %cst_7 = arith.constant dense<0.000000e+00> : vector<16xf32>
    %8 = vector.multi_reduction <add>, %5, %cst_7 [1] : vector<16x384xf32> to vector<16xf32>
    %9 = vector.shape_cast %8 : vector<16xf32> to vector<16x1xf32>
    %cst_8 = arith.constant 0.00260416674 : f32
    %10 = vector.broadcast %cst_8 : f32 to vector<16x1xf32>
    %11 = arith.mulf %9, %10 : vector<16x1xf32>
    %12 = arith.mulf %5, %5 : vector<16x384xf32>
    %cst_9 = arith.constant dense<0.000000e+00> : vector<16xf32>
    %13 = vector.multi_reduction <add>, %12, %cst_9 [1] : vector<16x384xf32> to vector<16xf32>
    %14 = vector.shape_cast %13 : vector<16xf32> to vector<16x1xf32>
    %cst_10 = arith.constant 0.00260416674 : f32
    %15 = vector.broadcast %cst_10 : f32 to vector<16x1xf32>
    %16 = arith.mulf %14, %15 : vector<16x1xf32>
    %17 = arith.mulf %11, %11 : vector<16x1xf32>
    %18 = arith.subf %16, %17 : vector<16x1xf32>
    %cst_11 = arith.constant 0.000000e+00 : f32
    %19 = vector.broadcast %cst_11 : f32 to vector<16x1xf32>
    %20 = arith.maximumf %18, %19 : vector<16x1xf32>
    %21 = math.sqrt %20 : vector<16x1xf32>
    %cst_12 = arith.constant 9.99999997E-7 : f32
    %22 = vector.broadcast %cst_12 : f32 to vector<16x1xf32>
    %23 = arith.addf %21, %22 : vector<16x1xf32>
    %24 = tpu.reciprocal %23 {approx = true} : vector<16x1xf32> -> vector<16x1xf32>
    %25 = vector.broadcast %11 : vector<16x1xf32> to vector<16x384xf32>
    %26 = arith.subf %5, %25 : vector<16x384xf32>
    %27 = vector.broadcast %24 : vector<16x1xf32> to vector<16x384xf32>
    %28 = arith.mulf %26, %27 : vector<16x384xf32>
    %29 = vector.broadcast %6 : vector<1x384xf32> to vector<16x384xf32>
    %30 = arith.mulf %28, %29 : vector<16x384xf32>
    %31 = vector.broadcast %7 : vector<1x384xf32> to vector<16x384xf32>
    %32 = arith.addf %30, %31 : vector<16x384xf32>
    %33 = arith.truncf %32 : vector<16x384xf32> to vector<16x384xbf16>
    %c0_13 = arith.constant 0 : index
    %c0_14 = arith.constant 0 : index
    %34 = vector.load %arg4[%c0_13, %c0_14] : memref<16x384xbf16, #tpu.memory_space<vmem>>, vector<16x384xbf16>
    tpu.vector_store %arg4[%c0_13, %c0_14], %33 {strides = array<i32>} : memref<16x384xbf16, #tpu.memory_space<vmem>>, vector<16x384xbf16>,
    return
  }
  func.func @transform_0(%arg0: i32) -> (i32, i32) {
    %c0_i32 = arith.constant 0 : i32
    %c0_i32_0 = arith.constant 0 : i32
    return %arg0, %c0_i32 : i32, i32
  }
  func.func @transform_1(%arg0: i32) -> (i32, i32) {
    %c0_i32 = arith.constant 0 : i32
    %c0_i32_0 = arith.constant 0 : i32
    %c0_i32_1 = arith.constant 0 : i32
    return %c0_i32, %c0_i32_0 : i32, i32
  }
  func.func @transform_2(%arg0: i32) -> (i32, i32) {
    %c0_i32 = arith.constant 0 : i32
    %c0_i32_0 = arith.constant 0 : i32
    %c0_i32_1 = arith.constant 0 : i32
    return %c0_i32, %c0_i32_0 : i32, i32
  }
  func.func @transform_3(%arg0: i32) -> (i32, i32) {
    %c0_i32 = arith.constant 0 : i32
    %c0_i32_0 = arith.constant 0 : i32
    return %arg0, %c0_i32 : i32, i32
  }
}

module attributes {stable_mosaic.version = 11 : i64} {
  func.func @kernel(%arg0: i32, %arg1: memref<8x1536xbf16, #tpu.memory_space<vmem>>, %arg2: memref<1536x768xbf16, #tpu.memory_space<vmem>>, %arg3: memref<1x768xf32, #tpu.memory_space<vmem>>, %arg4: memref<8x768xbf16, #tpu.memory_space<vmem>>) attributes {dimension_semantics = [#tpu.dimension_semantics<parallel>], iteration_bounds = array<i64: 1>, scalar_prefetch = 0 : i64, scratch_operands = 0 : i64, tpu.core_type = #tpu.core_type<tc>, window_params = [{transform_indices = @transform_0, window_bounds = array<i64: 8, 1536>}, {pipeline_mode = #tpu.pipeline_mode<synchronous>, transform_indices = @transform_1, window_bounds = array<i64: 1536, 768>}, {pipeline_mode = #tpu.pipeline_mode<synchronous>, transform_indices = @transform_2, window_bounds = array<i64: 1, 768>}, {transform_indices = @transform_3, window_bounds = array<i64: 8, 768>}]} {
    %c0 = arith.constant 0 : index
    %c0_0 = arith.constant 0 : index
    %0 = vector.load %arg1[%c0, %c0_0] : memref<8x1536xbf16, #tpu.memory_space<vmem>>, vector<8x1536xbf16>
    %c0_1 = arith.constant 0 : index
    %c0_2 = arith.constant 0 : index
    %1 = vector.load %arg2[%c0_1, %c0_2] : memref<1536x768xbf16, #tpu.memory_space<vmem>>, vector<1536x768xbf16>
    %cst = arith.constant dense<0.000000e+00> : vector<8x768xf32>
    %2 = tpu.matmul %0, %1, %cst {dimension_numbers = #tpu.dot_dimension_numbers<[1], [0], [0], [1], [0, 0, 1, 1], [], []>} : vector<8x1536xbf16>, vector<1536x768xbf16>, vector<8x768xf32> -> vector<8x768xf32>
    %c0_3 = arith.constant 0 : index
    %c0_4 = arith.constant 0 : index
    %3 = vector.load %arg3[%c0_3, %c0_4] : memref<1x768xf32, #tpu.memory_space<vmem>>, vector<1x768xf32>
    %4 = vector.broadcast %3 : vector<1x768xf32> to vector<8x768xf32>
    %5 = arith.addf %2, %4 : vector<8x768xf32>
    %6 = arith.truncf %5 : vector<8x768xf32> to vector<8x768xbf16>
    %c0_5 = arith.constant 0 : index
    %c0_6 = arith.constant 0 : index
    %7 = vector.load %arg4[%c0_5, %c0_6] : memref<8x768xbf16, #tpu.memory_space<vmem>>, vector<8x768xbf16>
    tpu.vector_store %arg4[%c0_5, %c0_6], %6 {strides = array<i32>} : memref<8x768xbf16, #tpu.memory_space<vmem>>, vector<8x768xbf16>,
    return
  }
  func.func @transform_0(%arg0: i32) -> (i32, i32) {
    %c0_i32 = arith.constant 0 : i32
    %c0_i32_0 = arith.constant 0 : i32
    return %arg0, %c0_i32 : i32, i32
  }
  func.func @transform_1(%arg0: i32) -> (i32, i32) {
    %c0_i32 = arith.constant 0 : i32
    %c0_i32_0 = arith.constant 0 : i32
    %c0_i32_1 = arith.constant 0 : i32
    return %c0_i32, %c0_i32_0 : i32, i32
  }
  func.func @transform_2(%arg0: i32) -> (i32, i32) {
    %c0_i32 = arith.constant 0 : i32
    %c0_i32_0 = arith.constant 0 : i32
    %c0_i32_1 = arith.constant 0 : i32
    return %c0_i32, %c0_i32_0 : i32, i32
  }
  func.func @transform_3(%arg0: i32) -> (i32, i32) {
    %c0_i32 = arith.constant 0 : i32
    %c0_i32_0 = arith.constant 0 : i32
    return %arg0, %c0_i32 : i32, i32
  }
}

module attributes {stable_mosaic.version = 11 : i64} {
  func.func @_head_kernel(%arg0: i32, %arg1: memref<2x4x768xbf16, #tpu.memory_space<vmem>>, %arg2: memref<2x768xf32, #tpu.memory_space<vmem>>, %arg3: memref<768x128xbf16, #tpu.memory_space<vmem>>, %arg4: memref<1x128xf32, #tpu.memory_space<vmem>>, %arg5: memref<2x128xf32, #tpu.memory_space<vmem>>) attributes {dimension_semantics = [#tpu.dimension_semantics<parallel>], iteration_bounds = array<i64: 1>, scalar_prefetch = 0 : i64, scratch_operands = 0 : i64, tpu.core_type = #tpu.core_type<tc>, window_params = [{transform_indices = @transform_0, window_bounds = array<i64: 2, 4, 768>}, {pipeline_mode = #tpu.pipeline_mode<synchronous>, transform_indices = @transform_1, window_bounds = array<i64: 2, 768>}, {pipeline_mode = #tpu.pipeline_mode<synchronous>, transform_indices = @transform_2, window_bounds = array<i64: 768, 128>}, {pipeline_mode = #tpu.pipeline_mode<synchronous>, transform_indices = @transform_3, window_bounds = array<i64: 1, 128>}, {transform_indices = @transform_4, window_bounds = array<i64: 2, 128>}]} {
    %c0 = arith.constant 0 : index
    %c0_0 = arith.constant 0 : index
    %c0_1 = arith.constant 0 : index
    %0 = vector.load %arg1[%c0, %c0_0, %c0_1] : memref<2x4x768xbf16, #tpu.memory_space<vmem>>, vector<2x4x768xbf16>
    %1 = arith.extf %0 : vector<2x4x768xbf16> to vector<2x4x768xf32>
    %cst = arith.constant dense<0.000000e+00> : vector<2x768xf32>
    %2 = vector.multi_reduction <add>, %1, %cst [1] : vector<2x4x768xf32> to vector<2x768xf32>
    %cst_2 = arith.constant 4.000000e+00 : f32
    %3 = vector.broadcast %cst_2 : f32 to vector<2x768xf32>
    %4 = arith.divf %2, %3 : vector<2x768xf32>
    %cst_3 = arith.constant dense<0.000000e+00> : vector<2xf32>
    %5 = vector.multi_reduction <add>, %4, %cst_3 [1] : vector<2x768xf32> to vector<2xf32>
    %6 = vector.shape_cast %5 : vector<2xf32> to vector<2x1xf32>
    %cst_4 = arith.constant 7.680000e+02 : f32
    %7 = vector.broadcast %cst_4 : f32 to vector<2x1xf32>
    %8 = arith.divf %6, %7 : vector<2x1xf32>
    %9 = arith.mulf %4, %4 : vector<2x768xf32>
    %cst_5 = arith.constant dense<0.000000e+00> : vector<2xf32>
    %10 = vector.multi_reduction <add>, %9, %cst_5 [1] : vector<2x768xf32> to vector<2xf32>
    %11 = vector.shape_cast %10 : vector<2xf32> to vector<2x1xf32>
    %cst_6 = arith.constant 7.680000e+02 : f32
    %12 = vector.broadcast %cst_6 : f32 to vector<2x1xf32>
    %13 = arith.divf %11, %12 : vector<2x1xf32>
    %14 = arith.mulf %8, %8 : vector<2x1xf32>
    %15 = arith.subf %13, %14 : vector<2x1xf32>
    %cst_7 = arith.constant 0.000000e+00 : f32
    %16 = vector.broadcast %cst_7 : f32 to vector<2x1xf32>
    %17 = arith.maximumf %15, %16 : vector<2x1xf32>
    %18 = vector.broadcast %8 : vector<2x1xf32> to vector<2x768xf32>
    %19 = arith.subf %4, %18 : vector<2x768xf32>
    %cst_8 = arith.constant 9.99999974E-6 : f32
    %20 = vector.broadcast %cst_8 : f32 to vector<2x1xf32>
    %21 = arith.addf %17, %20 : vector<2x1xf32>
    %22 = math.rsqrt %21 : vector<2x1xf32>
    %23 = vector.broadcast %22 : vector<2x1xf32> to vector<2x768xf32>
    %24 = arith.mulf %19, %23 : vector<2x768xf32>
    %c0_9 = arith.constant 0 : index
    %c0_10 = arith.constant 0 : index
    %25 = vector.load %arg2[%c0_9, %c0_10] : memref<2x768xf32, #tpu.memory_space<vmem>>, vector<1x768xf32>
    %26 = vector.broadcast %25 : vector<1x768xf32> to vector<2x768xf32>
    %27 = arith.mulf %24, %26 : vector<2x768xf32>
    %c1 = arith.constant 1 : index
    %c0_11 = arith.constant 0 : index
    %28 = vector.load %arg2[%c1, %c0_11] : memref<2x768xf32, #tpu.memory_space<vmem>>, vector<1x768xf32>
    %29 = vector.broadcast %28 : vector<1x768xf32> to vector<2x768xf32>
    %30 = arith.addf %27, %29 : vector<2x768xf32>
    %31 = arith.truncf %30 : vector<2x768xf32> to vector<2x768xbf16>
    %c0_12 = arith.constant 0 : index
    %c0_13 = arith.constant 0 : index
    %32 = vector.load %arg3[%c0_12, %c0_13] : memref<768x128xbf16, #tpu.memory_space<vmem>>, vector<768x128xbf16>
    %cst_14 = arith.constant dense<0.000000e+00> : vector<2x128xf32>
    %33 = tpu.matmul %31, %32, %cst_14 {dimension_numbers = #tpu.dot_dimension_numbers<[1], [0], [0], [1], [0, 0, 1, 1], [], []>} : vector<2x768xbf16>, vector<768x128xbf16>, vector<2x128xf32> -> vector<2x128xf32>
    %c0_15 = arith.constant 0 : index
    %c0_16 = arith.constant 0 : index
    %34 = vector.load %arg4[%c0_15, %c0_16] : memref<1x128xf32, #tpu.memory_space<vmem>>, vector<1x128xf32>
    %35 = vector.broadcast %34 : vector<1x128xf32> to vector<2x128xf32>
    %36 = arith.addf %33, %35 : vector<2x128xf32>
    %c0_17 = arith.constant 0 : index
    %c0_18 = arith.constant 0 : index
    %37 = vector.load %arg5[%c0_17, %c0_18] : memref<2x128xf32, #tpu.memory_space<vmem>>, vector<2x128xf32>
    tpu.vector_store %arg5[%c0_17, %c0_18], %36 {strides = array<i32>} : memref<2x128xf32, #tpu.memory_space<vmem>>, vector<2x128xf32>,
    return
  }
  func.func @transform_0(%arg0: i32) -> (i32, i32, i32) {
    %c0_i32 = arith.constant 0 : i32
    %c0_i32_0 = arith.constant 0 : i32
    %c0_i32_1 = arith.constant 0 : i32
    return %arg0, %c0_i32, %c0_i32_0 : i32, i32, i32
  }
  func.func @transform_1(%arg0: i32) -> (i32, i32) {
    %c0_i32 = arith.constant 0 : i32
    %c0_i32_0 = arith.constant 0 : i32
    %c0_i32_1 = arith.constant 0 : i32
    return %c0_i32, %c0_i32_0 : i32, i32
  }
  func.func @transform_2(%arg0: i32) -> (i32, i32) {
    %c0_i32 = arith.constant 0 : i32
    %c0_i32_0 = arith.constant 0 : i32
    %c0_i32_1 = arith.constant 0 : i32
    return %c0_i32, %c0_i32_0 : i32, i32
  }
  func.func @transform_3(%arg0: i32) -> (i32, i32) {
    %c0_i32 = arith.constant 0 : i32
    %c0_i32_0 = arith.constant 0 : i32
    %c0_i32_1 = arith.constant 0 : i32
    return %c0_i32, %c0_i32_0 : i32, i32
  }
  func.func @transform_4(%arg0: i32) -> (i32, i32) {
    %c0_i32 = arith.constant 0 : i32
    %c0_i32_0 = arith.constant 0 : i32
    return %arg0, %c0_i32 : i32, i32
  }
}

</mosaic_0001>

<llo_original>
// kernel: resnet_forward.5
$region0: #{resnet_forward.5}
  #allocation0 [shape = 'u32[]', space=smem, size = 0x4, offset = 0x4, fixed_abs, tag = 'smem constant byte address 0x4 - core index']
  #allocation1 [shape = 'u32[72,128]{1,0:T(1,128)}', space=vmem, size = 0x9000, scoped, tag = 'internal scratch']
  %s0 = inlined_call_operand.vmem [shape: bf16[512,48], index: 0, kind: input, shape index: {}]
  %s1 = inlined_call_operand.vmem [shape: bf16[48,128], index: 1, kind: input, shape index: {}]
  %s2 = inlined_call_operand.vmem [shape: f32[5,128], index: 2, kind: input, shape index: {}]
  %s3 = inlined_call_operand.vmem [shape: bf16[512,128], index: 3, kind: output, shape index: {}]
  %s4 = sld [smem:[#allocation0]]
  $region45: #{resnet_forward.5} parent=0
    _
  %s6 = ssub.s32 1, %s4
  %s7 = scalar_select 0, %s6, %s4
  loop: start=0, step=1, limit=4
  $region2: #{resnet_forward.5} parent=0 // loop_pre_header
    _
  $region3: #{resnet_forward.5} parent=0 // loop_header
    %s9 = sphi 0, %s13
    %p10 = scmp.ge.s32.totalorder %s9, 4
    %s19 = sphi 0, %s21
    %s22 = sphi 0, %s19
    %s23 = sphi 0, %s22
    %s39 = sphi 0, %s23
    %s43 = sphi 0, %s43
    %s45 = sphi 0, %s43
    %s46 = sphi 0, %s45
    %s60 = sphi 0, %s46
    %s64 = sphi 0, %s64
    %s66 = sphi 0, %s64
    %s67 = sphi 0, %s66
    %s81 = sphi 0, %s67
    %s87 = sphi 0, %s89
    %s90 = sphi 0, %s87
    %s91 = sphi 0, %s90
    %s107 = sphi 0, %s91
  $region4: #{resnet_forward.5} parent=0 // loop_header_branch
    %12 = sbr.rel (%p10) target = $region8
  $region5: #{resnet_forward.5} parent=0 // loop_body
    %s14 = ssub.s32 %s9, 1
    %s15 = ssub.s32 %s9, 2
    %s16 = sadd.s32 %s9, 1
    %s17 = ssub.s32 %s9, %s16
    %p18 = scmp.eq.s32.totalorder %s17, 0
    %s20 = sadd.s32 %s19, 1
    %s21 = scalar_select %p18, %s19, %s20
    %p24 = pneg %p18
    %p25 = scmp.eq.s32.totalorder %s9, 1
    %p26 = por %p24, %p25
    %p27 = scmp.ne.s32.totalorder %s19, %s22
    %p28 = scmp.eq.s32.totalorder %s9, 0
    %p29 = por %p27, %p28
    %p30 = scmp.ne.s32.totalorder %s19, %s22
    %p31 = scmp.eq.s32.totalorder %s14, 1
    %p32 = por %p30, %p31
    %p33 = scmp.ne.s32.totalorder %s22, %s23
    %p34 = scmp.eq.s32.totalorder %s14, 0
    %p35 = por %p33, %p34
    %p36 = scmp.ne.s32.totalorder %s22, %s23
    %p37 = scmp.eq.s32.totalorder %s15, 1
    %p38 = por %p36, %p37
    %p40 = scmp.ne.s32.totalorder %s23, %s39
    %p41 = scmp.eq.s32.totalorder %s15, 0
    %p42 = por %p40, %p41
    %s44 = sadd.s32 %s43, 1
    %p47 = scmp.eq.s32.totalorder %s9, 1
    %p48 = scmp.ne.s32.totalorder %s43, %s45
    %p49 = scmp.eq.s32.totalorder %s9, 0
    %p50 = por %p48, %p49
    %p51 = scmp.ne.s32.totalorder %s43, %s45
    %p52 = scmp.eq.s32.totalorder %s14, 1
    %p53 = por %p51, %p52
    %p54 = scmp.ne.s32.totalorder %s45, %s46
    %p55 = scmp.eq.s32.totalorder %s14, 0
    %p56 = por %p54, %p55
    %p57 = scmp.ne.s32.totalorder %s45, %s46
    %p58 = scmp.eq.s32.totalorder %s15, 1
    %p59 = por %p57, %p58
    %p61 = scmp.ne.s32.totalorder %s46, %s60
    %p62 = scmp.eq.s32.totalorder %s15, 0
    %p63 = por %p61, %p62
    %s65 = sadd.s32 %s64, 1
    %p68 = scmp.eq.s32.totalorder %s9, 1
    %p69 = scmp.ne.s32.totalorder %s64, %s66
    %p70 = scmp.eq.s32.totalorder %s9, 0
    %p71 = por %p69, %p70
    %p72 = scmp.ne.s32.totalorder %s64, %s66
    %p73 = scmp.eq.s32.totalorder %s14, 1
    %p74 = por %p72, %p73
    %p75 = scmp.ne.s32.totalorder %s66, %s67
    %p76 = scmp.eq.s32.totalorder %s14, 0
    %p77 = por %p75, %p76
    %p78 = scmp.ne.s32.totalorder %s66, %s67
    %p79 = scmp.eq.s32.totalorder %s15, 1
    %p80 = por %p78, %p79
    %p82 = scmp.ne.s32.totalorder %s67, %s81
    %p83 = scmp.eq.s32.totalorder %s15, 0
    %p84 = por %p82, %p83
    %s85 = ssub.s32 %s9, %s16
    %p86 = scmp.eq.s32.totalorder %s85, 0
    %s88 = sadd.s32 %s87, 1
    %s89 = scalar_select %p86, %s87, %s88
    %p92 = pneg %p86
    %p93 = scmp.eq.s32.totalorder %s9, 1
    %p94 = por %p92, %p93
    %p95 = scmp.ne.s32.totalorder %s87, %s90
    %p96 = scmp.eq.s32.totalorder %s9, 0
    %p97 = por %p95, %p96
    %p98 = scmp.ne.s32.totalorder %s87, %s90
    %p99 = scmp.eq.s32.totalorder %s14, 1
    %p100 = por %p98, %p99
    %p101 = scmp.ne.s32.totalorder %s90, %s91
    %p102 = scmp.eq.s32.totalorder %s14, 0
    %p103 = por %p101, %p102
    %p104 = scmp.ne.s32.totalorder %s90, %s91
    %p105 = scmp.eq.s32.totalorder %s15, 1
    %p106 = por %p104, %p105
    %p108 = scmp.ne.s32.totalorder %s91, %s107
    %p109 = scmp.eq.s32.totalorder %s15, 0
    %p110 = por %p108, %p109
    %p111 = scmp.le.s32.totalorder 1, %s9
    %p112 = scmp.lt.s32.totalorder %s9, 3
    %p113 = pnand %p111, %p112
    %p114 = pneg %p113
    // Predicated region
    $region9: #{resnet_forward.5} parent=5 // pred_check
      _
    $region10: #{resnet_forward.5} parent=5 // pred_check_branch
      %116 = sbr.rel (%p113) target = $region12
    $region11: #{resnet_forward.5} parent=5 // pred_region
      %s117 = ssub.s32 %s9, 1
      // Predicated region
      $region13: #{resnet_forward.5} parent=11 // pred_check
        %p118 = pneg %p56
      $region14: #{resnet_forward.5} parent=11 // pred_check_branch
        %120 = sbr.rel (%p118) target = $region16
      $region15: #{resnet_forward.5} parent=11 // pred_region
        _
      $region16: #{resnet_forward.5} parent=11 // pred_fallthru
        _
      // Predicated region
      $region17: #{resnet_forward.5} parent=11 // pred_check
        %p121 = pneg %p77
      $region18: #{resnet_forward.5} parent=11 // pred_check_branch
        %123 = sbr.rel (%p121) target = $region20
      $region19: #{resnet_forward.5} parent=11 // pred_region
        _
      $region20: #{resnet_forward.5} parent=11 // pred_fallthru
        _
    $region12: #{resnet_forward.5} parent=5 // pred_fallthru
      _
    %p124 = scmp.lt.s32.totalorder %s9, 2
    // Predicated region
    $region21: #{resnet_forward.5} parent=5 // pred_check
      %p125 = pneg %p124
    $region22: #{resnet_forward.5} parent=5 // pred_check_branch
      %127 = sbr.rel (%p125) target = $region24
    $region23: #{resnet_forward.5} parent=5 // pred_region
      // Predicated region
      $region25: #{resnet_forward.5} parent=23 // pred_check
        %p128 = pneg %p29
      $region26: #{resnet_forward.5} parent=23 // pred_check_branch
        %130 = sbr.rel (%p128) target = $region28
      $region27: #{resnet_forward.5} parent=23 // pred_region
        %s131 = smul.u32 32, %s9
        %p132 = scmp.lt.s32.totalorder %s131, 63
        %s133 = scalar_select %p132, %s131, 63
        %s134 = smul.addr %s133, 4
        %s135 = scalar_lea.vmem %s0, %s134
        %s136 = smul.u32 32, %s9
      $region28: #{resnet_forward.5} parent=23 // pred_fallthru
        _
    $region24: #{resnet_forward.5} parent=5 // pred_fallthru
      _
    %p137 = scmp.le.s32.totalorder 1, %s9
    %p138 = scmp.lt.s32.totalorder %s9, 3
    %p139 = pnand %p137, %p138
    %p140 = pneg %p139
    // Predicated region
    $region29: #{resnet_forward.5} parent=5 // pred_check
      _
    $region30: #{resnet_forward.5} parent=5 // pred_check_branch
      %142 = sbr.rel (%p139) target = $region32
    $region31: #{resnet_forward.5} parent=5 // pred_region
      %s143 = ssub.s32 %s9, 1
      %s144 = smul.u32 32, %s14
      %p145 = scmp.lt.s32.totalorder %s144, 63
      %s146 = scalar_select %p145, %s144, 63
      %s147 = smul.addr %s146, 4
      %s148 = scalar_lea.vmem %s0, %s147
      %p149 = pneg %p35
      %p150 = pneg %p32
      %p151 = pneg %p56
      %p152 = pneg %p53
      %p153 = pneg %p77
      %p154 = pneg %p74
      %p155 = pneg %p103
      %p156 = pneg %p100
      %s157 = smul.u32 32, %s14
      %p158 = scmp.lt.s32.totalorder %s157, 63
      %s159 = scalar_select %p158, %s157, 63
      %s160 = smul.addr %s159, 4
      %s161 = scalar_lea.vmem %s3, %s160
      %s162 = smul.u32 32, %s14
      %p163 = scmp.lt.s32.totalorder %s162, 63
      %s164 = scalar_select %p163, %s162, 63
      %s165 = smul.addr %s164, 4
      %s166 = scalar_lea.vmem %s0, %s165
      %s167 = smul.u32 32, %s14
      %s168 = smul.u32 32, %s14
      %p169 = scmp.lt.s32.totalorder %s168, 63
      %s170 = scalar_select %p169, %s168, 63
      %s171 = smul.addr %s170, 4
      %s172 = scalar_lea.vmem %s3, %s171
      %s173 = smul.u32 32, %s14
      %v175 = vld [vmem:[%s166] sm:$0xf]
      %v176 = vld [vmem:[%s166 + $0x4] sm:$0xf]
      %v177 = vld [vmem:[%s166 + $0x8] sm:$0xf]
      %v178 = vld [vmem:[%s166 + $0xc] sm:$0xf]
      %v179 = vld [vmem:[%s166 + $0x10] sm:$0xf]
      %v180 = vld [vmem:[%s166 + $0x14] sm:$0xf]
      %v181 = vld [vmem:[%s166 + $0x18] sm:$0xf]
      %v182 = vld [vmem:[%s166 + $0x1c] sm:$0xf]
      %v183 = vld [vmem:[%s166 + $0x20] sm:$0xf]
      %v184 = vld [vmem:[%s166 + $0x24] sm:$0xf]
      %v185 = vld [vmem:[%s166 + $0x28] sm:$0xf]
      %v186 = vld [vmem:[%s166 + $0x2c] sm:$0xf]
      %v187 = vld [vmem:[%s166 + $0x30] sm:$0xf]
      %v188 = vld [vmem:[%s166 + $0x34] sm:$0xf]
      %v189 = vld [vmem:[%s166 + $0x38] sm:$0xf]
      %v190 = vld [vmem:[%s166 + $0x3c] sm:$0xf]
      %v191 = vld [vmem:[%s166 + $0x40] sm:$0xf]
      %v192 = vld [vmem:[%s166 + $0x44] sm:$0xf]
      %v193 = vld [vmem:[%s166 + $0x48] sm:$0xf]
      %v194 = vld [vmem:[%s166 + $0x4c] sm:$0xf]
      %v195 = vld [vmem:[%s166 + $0x50] sm:$0xf]
      %v196 = vld [vmem:[%s166 + $0x54] sm:$0xf]
      %v197 = vld [vmem:[%s166 + $0x58] sm:$0xf]
      %v198 = vld [vmem:[%s166 + $0x5c] sm:$0xf]
      %v199 = vld [vmem:[%s166 + $0x60] sm:$0xf]
      %v200 = vld [vmem:[%s166 + $0x64] sm:$0xf]
      %v201 = vld [vmem:[%s166 + $0x68] sm:$0xf]
      %v202 = vld [vmem:[%s166 + $0x6c] sm:$0xf]
      %v203 = vld [vmem:[%s166 + $0x70] sm:$0xf]
      %v204 = vld [vmem:[%s166 + $0x74] sm:$0xf]
      %v205 = vld [vmem:[%s166 + $0x78] sm:$0xf]
      %v206 = vld [vmem:[%s166 + $0x7c] sm:$0xf]
      %v207 = vld [vmem:[%s1] sm:$0xf]
      %v208 = vld [vmem:[%s1 + $0x4] sm:$0xf]
      %v209 = vld [vmem:[%s1 + $0x8] sm:$0xf]
      %v210 = vld [vmem:[%s1 + $0xc] sm:$0xf]
      %v211 = vld [vmem:[%s1 + $0x10] sm:$0xf]
      %v212 = vld [vmem:[%s1 + $0x14] sm:$0xf]
      %v213 = vld [vmem:[%s2] sm:$0x1]
      %v214 = vperm.slane %v213, 0
      %v247 = vunpack.c.l.b16 %v175
      %v248 = vunpack.c.l.b16 %v176
      %v249 = vunpack.c.l.b16 %v177
      %v250 = vunpack.c.l.b16 %v178
      %v251 = vunpack.c.l.b16 %v179
      %v252 = vunpack.c.l.b16 %v180
      %v253 = vunpack.c.l.b16 %v181
      %v254 = vunpack.c.l.b16 %v182
      %v255 = vunpack.c.l.b16 %v183
      %v256 = vunpack.c.l.b16 %v184
      %v257 = vunpack.c.l.b16 %v185
      %v258 = vunpack.c.l.b16 %v186
      %v259 = vunpack.c.l.b16 %v187
      %v260 = vunpack.c.l.b16 %v188
      %v261 = vunpack.c.l.b16 %v189
      %v262 = vunpack.c.l.b16 %v190
      %v263 = vunpack.c.l.b16 %v191
      %v264 = vunpack.c.l.b16 %v192
      %v265 = vunpack.c.l.b16 %v193
      %v266 = vunpack.c.l.b16 %v194
      %v267 = vunpack.c.l.b16 %v195
      %v268 = vunpack.c.l.b16 %v196
      %v269 = vunpack.c.l.b16 %v197
      %v270 = vunpack.c.l.b16 %v198
      %v271 = vunpack.c.l.b16 %v199
      %v272 = vunpack.c.l.b16 %v200
      %v273 = vunpack.c.l.b16 %v201
      %v274 = vunpack.c.l.b16 %v202
      %v275 = vunpack.c.l.b16 %v203
      %v276 = vunpack.c.l.b16 %v204
      %v277 = vunpack.c.l.b16 %v205
      %v278 = vunpack.c.l.b16 %v206
      %v279 = vpack.c.b16 %v248, %v247
      %v280 = vpack.c.b16 %v250, %v249
      %v281 = vpack.c.b16 %v252, %v251
      %v282 = vpack.c.b16 %v254, %v253
      %v283 = vpack.c.b16 %v256, %v255
      %v284 = vpack.c.b16 %v258, %v257
      %v285 = vpack.c.b16 %v260, %v259
      %v286 = vpack.c.b16 %v262, %v261
      %v287 = vpack.c.b16 %v264, %v263
      %v288 = vpack.c.b16 %v266, %v265
      %v289 = vpack.c.b16 %v268, %v267
      %v290 = vpack.c.b16 %v270, %v269
      %v291 = vpack.c.b16 %v272, %v271
      %v292 = vpack.c.b16 %v274, %v273
      %v293 = vpack.c.b16 %v276, %v275
      %v294 = vpack.c.b16 %v278, %v277
      %v301 = vunpack.c.l.b16 %v207
      %v302 = vunpack.c.l.b16 %v208
      %v303 = vunpack.c.l.b16 %v209
      %v304 = vunpack.c.l.b16 %v210
      %v305 = vunpack.c.l.b16 %v211
      %v306 = vunpack.c.l.b16 %v212
      %v307 = vpack.c.b16 %v302, %v301
      %v308 = vpack.c.b16 %v304, %v303
      %v309 = vpack.c.b16 %v306, %v305
      %vm313 = vcmask 392192
      %v315 = vsel %vm313, %v279, 0
      %v318 = vsel %vm313, %v280, 0
      %v321 = vsel %vm313, %v281, 0
      %v324 = vsel %vm313, %v282, 0
      %v327 = vsel %vm313, %v283, 0
      %v330 = vsel %vm313, %v284, 0
      %v333 = vsel %vm313, %v285, 0
      %v336 = vsel %vm313, %v286, 0
      %v339 = vsel %vm313, %v287, 0
      %v342 = vsel %vm313, %v288, 0
      %v345 = vsel %vm313, %v289, 0
      %v348 = vsel %vm313, %v290, 0
      %v351 = vsel %vm313, %v291, 0
      %v354 = vsel %vm313, %v292, 0
      %v357 = vsel %vm313, %v293, 0
      %v360 = vsel %vm313, %v294, 0
      %362 = vmatpush.bf16.msra.mxu0 0
      %363 = vmatpush.bf16.msra.mxu0 0
      %364 = vmatpush.bf16.msra.mxu0 0
      %365 = vmatpush.bf16.msra.mxu0 0
      %366 = vmatpush.bf16.msra.mxu0 0
      %367 = vmatpush.bf16.msra.mxu0 %v309
      %368 = vmatpush.bf16.msra.mxu0 %v308
      %369 = vmatpush.bf16.msra.mxu0 %v307
      %370 = vmatmul.bf16.gmra.mxu0 %v315
      %v371 = vpop.f32.mrf.mxu0
      %v372 = vadd.f32 %v214, %v371
      %v373 = vpop.f32.mrf.mxu0
      %v374 = vadd.f32 %v214, %v373
      %375 = vmatmul.bf16.gmra.mxu0 %v318
      %v376 = vpop.f32.mrf.mxu0
      %v377 = vadd.f32 %v214, %v376
      %v378 = vpop.f32.mrf.mxu0
      %v379 = vadd.f32 %v214, %v378
      %380 = vmatmul.bf16.gmra.mxu0 %v321
      %v381 = vpop.f32.mrf.mxu0
      %v382 = vadd.f32 %v214, %v381
      %v383 = vpop.f32.mrf.mxu0
      %v384 = vadd.f32 %v214, %v383
      %385 = vmatmul.bf16.gmra.mxu0 %v324
      %v386 = vpop.f32.mrf.mxu0
      %v387 = vadd.f32 %v214, %v386
      %v388 = vpop.f32.mrf.mxu0
      %v389 = vadd.f32 %v214, %v388
      %390 = vmatmul.bf16.gmra.mxu0 %v327
      %v391 = vpop.f32.mrf.mxu0
      %v392 = vadd.f32 %v214, %v391
      %v393 = vpop.f32.mrf.mxu0
      %v394 = vadd.f32 %v214, %v393
      %395 = vmatmul.bf16.gmra.mxu0 %v330
      %v396 = vpop.f32.mrf.mxu0
      %v397 = vadd.f32 %v214, %v396
      %v398 = vpop.f32.mrf.mxu0
      %v399 = vadd.f32 %v214, %v398
      %400 = vmatmul.bf16.gmra.mxu0 %v333
      %v401 = vpop.f32.mrf.mxu0
      %v402 = vadd.f32 %v214, %v401
      %v403 = vpop.f32.mrf.mxu0
      %v404 = vadd.f32 %v214, %v403
      %405 = vmatmul.bf16.gmra.mxu0 %v336
      %v406 = vpop.f32.mrf.mxu0
      %v407 = vadd.f32 %v214, %v406
      %v408 = vpop.f32.mrf.mxu0
      %v409 = vadd.f32 %v214, %v408
      %410 = vmatmul.bf16.gmra.mxu0 %v339
      %v411 = vpop.f32.mrf.mxu0
      %v412 = vadd.f32 %v214, %v411
      %v413 = vpop.f32.mrf.mxu0
      %v414 = vadd.f32 %v214, %v413
      %415 = vmatmul.bf16.gmra.mxu0 %v342
      %v416 = vpop.f32.mrf.mxu0
      %v417 = vadd.f32 %v214, %v416
      %v418 = vpop.f32.mrf.mxu0
      %v419 = vadd.f32 %v214, %v418
      %420 = vmatmul.bf16.gmra.mxu0 %v345
      %v421 = vpop.f32.mrf.mxu0
      %v422 = vadd.f32 %v214, %v421
      %v423 = vpop.f32.mrf.mxu0
      %v424 = vadd.f32 %v214, %v423
      %425 = vmatmul.bf16.gmra.mxu0 %v348
      %v426 = vpop.f32.mrf.mxu0
      %v427 = vadd.f32 %v214, %v426
      %v428 = vpop.f32.mrf.mxu0
      %v429 = vadd.f32 %v214, %v428
      %430 = vmatmul.bf16.gmra.mxu0 %v351
      %v431 = vpop.f32.mrf.mxu0
      %v432 = vadd.f32 %v214, %v431
      %v433 = vpop.f32.mrf.mxu0
      %v434 = vadd.f32 %v214, %v433
      %435 = vmatmul.bf16.gmra.mxu0 %v354
      %v436 = vpop.f32.mrf.mxu0
      %v437 = vadd.f32 %v214, %v436
      %v438 = vpop.f32.mrf.mxu0
      %v439 = vadd.f32 %v214, %v438
      %440 = vmatmul.bf16.gmra.mxu0 %v357
      %v441 = vpop.f32.mrf.mxu0
      %v442 = vadd.f32 %v214, %v441
      %v443 = vpop.f32.mrf.mxu0
      %v444 = vadd.f32 %v214, %v443
      %445 = vmatmul.bf16.gmra.mxu0 %v360
      %v446 = vpop.f32.mrf.mxu0
      %v447 = vadd.f32 %v214, %v446
      %v448 = vpop.f32.mrf.mxu0
      %v449 = vadd.f32 %v214, %v448
      %450 = vdwg.mxu0
      %v451 = vld [vmem:[%s2 + $0x1] sm:$0x1]
      %v452 = vld [vmem:[%s2 + $0x2] sm:$0x1]
      %453 = vadd.xlane.f32.xlu0 %v372
      %v454 = vpop.xlane.xlu0 %453
      %455 = vadd.xlane.f32.xlu0 %v374
      %v456 = vpop.xlane.xlu0 %455
      %457 = vadd.xlane.f32.xlu0 %v377
      %v458 = vpop.xlane.xlu0 %457
      %459 = vadd.xlane.f32.xlu0 %v379
      %v460 = vpop.xlane.xlu0 %459
      %461 = vadd.xlane.f32.xlu0 %v382
      %v462 = vpop.xlane.xlu0 %461
      %463 = vadd.xlane.f32.xlu0 %v384
      %v464 = vpop.xlane.xlu0 %463
      %465 = vadd.xlane.f32.xlu0 %v387
      %v466 = vpop.xlane.xlu0 %465
      %467 = vadd.xlane.f32.xlu0 %v389
      %v468 = vpop.xlane.xlu0 %467
      %469 = vadd.xlane.f32.xlu0 %v392
      %v470 = vpop.xlane.xlu0 %469
      %471 = vadd.xlane.f32.xlu0 %v394
      %v472 = vpop.xlane.xlu0 %471
      %473 = vadd.xlane.f32.xlu0 %v397
      %v474 = vpop.xlane.xlu0 %473
      %475 = vadd.xlane.f32.xlu0 %v399
      %v476 = vpop.xlane.xlu0 %475
      %477 = vadd.xlane.f32.xlu0 %v402
      %v478 = vpop.xlane.xlu0 %477
      %479 = vadd.xlane.f32.xlu0 %v404
      %v480 = vpop.xlane.xlu0 %479
      %481 = vadd.xlane.f32.xlu0 %v407
      %v482 = vpop.xlane.xlu0 %481
      %483 = vadd.xlane.f32.xlu0 %v409
      %v484 = vpop.xlane.xlu0 %483
      %485 = vadd.xlane.f32.xlu0 %v412
      %v486 = vpop.xlane.xlu0 %485
      %487 = vadd.xlane.f32.xlu0 %v414
      %v488 = vpop.xlane.xlu0 %487
      %489 = vadd.xlane.f32.xlu0 %v417
      %v490 = vpop.xlane.xlu0 %489
      %491 = vadd.xlane.f32.xlu0 %v419
      %v492 = vpop.xlane.xlu0 %491
      %493 = vadd.xlane.f32.xlu0 %v422
      %v494 = vpop.xlane.xlu0 %493
      %495 = vadd.xlane.f32.xlu0 %v424
      %v496 = vpop.xlane.xlu0 %495
      %497 = vadd.xlane.f32.xlu0 %v427
      %v498 = vpop.xlane.xlu0 %497
      %499 = vadd.xlane.f32.xlu0 %v429
      %v500 = vpop.xlane.xlu0 %499
      %501 = vadd.xlane.f32.xlu0 %v432
      %v502 = vpop.xlane.xlu0 %501
      %503 = vadd.xlane.f32.xlu0 %v434
      %v504 = vpop.xlane.xlu0 %503
      %505 = vadd.xlane.f32.xlu0 %v437
      %v506 = vpop.xlane.xlu0 %505
      %507 = vadd.xlane.f32.xlu0 %v439
      %v508 = vpop.xlane.xlu0 %507
      %509 = vadd.xlane.f32.xlu0 %v442
      %v510 = vpop.xlane.xlu0 %509
      %511 = vadd.xlane.f32.xlu0 %v444
      %v512 = vpop.xlane.xlu0 %511
      %513 = vadd.xlane.f32.xlu0 %v447
      %v514 = vpop.xlane.xlu0 %513
      %515 = vadd.xlane.f32.xlu0 %v449
      %v516 = vpop.xlane.xlu0 %515
      %v517 = vmul.f32 %v454, 0.010416667
      %v518 = vmul.f32 %v456, 0.010416667
      %v519 = vmul.f32 %v458, 0.010416667
      %v520 = vmul.f32 %v460, 0.010416667
      %v521 = vmul.f32 %v462, 0.010416667
      %v522 = vmul.f32 %v464, 0.010416667
      %v523 = vmul.f32 %v466, 0.010416667
      %v524 = vmul.f32 %v468, 0.010416667
      %v525 = vmul.f32 %v470, 0.010416667
      %v526 = vmul.f32 %v472, 0.010416667
      %v527 = vmul.f32 %v474, 0.010416667
      %v528 = vmul.f32 %v476, 0.010416667
      %v529 = vmul.f32 %v478, 0.010416667
      %v530 = vmul.f32 %v480, 0.010416667
      %v531 = vmul.f32 %v482, 0.010416667
      %v532 = vmul.f32 %v484, 0.010416667
      %v533 = vmul.f32 %v486, 0.010416667
      %v534 = vmul.f32 %v488, 0.010416667
      %v535 = vmul.f32 %v490, 0.010416667
      %v536 = vmul.f32 %v492, 0.010416667
      %v537 = vmul.f32 %v494, 0.010416667
      %v538 = vmul.f32 %v496, 0.010416667
      %v539 = vmul.f32 %v498, 0.010416667
      %v540 = vmul.f32 %v500, 0.010416667
      %v541 = vmul.f32 %v502, 0.010416667
      %v542 = vmul.f32 %v504, 0.010416667
      %v543 = vmul.f32 %v506, 0.010416667
      %v544 = vmul.f32 %v508, 0.010416667
      %v545 = vmul.f32 %v510, 0.010416667
      %v546 = vmul.f32 %v512, 0.010416667
      %v547 = vmul.f32 %v514, 0.010416667
      %v548 = vmul.f32 %v516, 0.010416667
      %v549 = vmul.f32 %v372, %v372
      %v550 = vmul.f32 %v374, %v374
      %v551 = vmul.f32 %v377, %v377
      %v552 = vmul.f32 %v379, %v379
      %v553 = vmul.f32 %v382, %v382
      %v554 = vmul.f32 %v384, %v384
      %v555 = vmul.f32 %v387, %v387
      %v556 = vmul.f32 %v389, %v389
      %v557 = vmul.f32 %v392, %v392
      %v558 = vmul.f32 %v394, %v394
      %v559 = vmul.f32 %v397, %v397
      %v560 = vmul.f32 %v399, %v399
      %v561 = vmul.f32 %v402, %v402
      %v562 = vmul.f32 %v404, %v404
      %v563 = vmul.f32 %v407, %v407
      %v564 = vmul.f32 %v409, %v409
      %v565 = vmul.f32 %v412, %v412
      %v566 = vmul.f32 %v414, %v414
      %v567 = vmul.f32 %v417, %v417
      %v568 = vmul.f32 %v419, %v419
      %v569 = vmul.f32 %v422, %v422
      %v570 = vmul.f32 %v424, %v424
      %v571 = vmul.f32 %v427, %v427
      %v572 = vmul.f32 %v429, %v429
      %v573 = vmul.f32 %v432, %v432
      %v574 = vmul.f32 %v434, %v434
      %v575 = vmul.f32 %v437, %v437
      %v576 = vmul.f32 %v439, %v439
      %v577 = vmul.f32 %v442, %v442
      %v578 = vmul.f32 %v444, %v444
      %v579 = vmul.f32 %v447, %v447
      %v580 = vmul.f32 %v449, %v449
      %581 = vadd.xlane.f32.xlu0 %v549
      %v582 = vpop.xlane.xlu0 %581
      %583 = vadd.xlane.f32.xlu0 %v550
      %v584 = vpop.xlane.xlu0 %583
      %585 = vadd.xlane.f32.xlu0 %v551
      %v586 = vpop.xlane.xlu0 %585
      %587 = vadd.xlane.f32.xlu0 %v552
      %v588 = vpop.xlane.xlu0 %587
      %589 = vadd.xlane.f32.xlu0 %v553
      %v590 = vpop.xlane.xlu0 %589
      %591 = vadd.xlane.f32.xlu0 %v554
      %v592 = vpop.xlane.xlu0 %591
      %593 = vadd.xlane.f32.xlu0 %v555
      %v594 = vpop.xlane.xlu0 %593
      %595 = vadd.xlane.f32.xlu0 %v556
      %v596 = vpop.xlane.xlu0 %595
      %597 = vadd.xlane.f32.xlu0 %v557
      %v598 = vpop.xlane.xlu0 %597
      %599 = vadd.xlane.f32.xlu0 %v558
      %v600 = vpop.xlane.xlu0 %599
      %601 = vadd.xlane.f32.xlu0 %v559
      %v602 = vpop.xlane.xlu0 %601
      %603 = vadd.xlane.f32.xlu0 %v560
      %v604 = vpop.xlane.xlu0 %603
      %605 = vadd.xlane.f32.xlu0 %v561
      %v606 = vpop.xlane.xlu0 %605
      %607 = vadd.xlane.f32.xlu0 %v562
      %v608 = vpop.xlane.xlu0 %607
      %609 = vadd.xlane.f32.xlu0 %v563
      %v610 = vpop.xlane.xlu0 %609
      %611 = vadd.xlane.f32.xlu0 %v564
      %v612 = vpop.xlane.xlu0 %611
      %613 = vadd.xlane.f32.xlu0 %v565
      %v614 = vpop.xlane.xlu0 %613
      %615 = vadd.xlane.f32.xlu0 %v566
      %v616 = vpop.xlane.xlu0 %615
      %617 = vadd.xlane.f32.xlu0 %v567
      %v618 = vpop.xlane.xlu0 %617
      %619 = vadd.xlane.f32.xlu0 %v568
      %v620 = vpop.xlane.xlu0 %619
      %621 = vadd.xlane.f32.xlu0 %v569
      %v622 = vpop.xlane.xlu0 %621
      %623 = vadd.xlane.f32.xlu0 %v570
      %v624 = vpop.xlane.xlu0 %623
      %625 = vadd.xlane.f32.xlu0 %v571
      %v626 = vpop.xlane.xlu0 %625
      %627 = vadd.xlane.f32.xlu0 %v572
      %v628 = vpop.xlane.xlu0 %627
      %629 = vadd.xlane.f32.xlu0 %v573
      %v630 = vpop.xlane.xlu0 %629
      %631 = vadd.xlane.f32.xlu0 %v574
      %v632 = vpop.xlane.xlu0 %631
      %633 = vadd.xlane.f32.xlu0 %v575
      %v634 = vpop.xlane.xlu0 %633
      %635 = vadd.xlane.f32.xlu0 %v576
      %v636 = vpop.xlane.xlu0 %635
      %637 = vadd.xlane.f32.xlu0 %v577
      %v638 = vpop.xlane.xlu0 %637
      %639 = vadd.xlane.f32.xlu0 %v578
      %v640 = vpop.xlane.xlu0 %639
      %641 = vadd.xlane.f32.xlu0 %v579
      %v642 = vpop.xlane.xlu0 %641
      %643 = vadd.xlane.f32.xlu0 %v580
      %v644 = vpop.xlane.xlu0 %643
      %v645 = vmul.f32 %v582, 0.010416667
      %v646 = vmul.f32 %v584, 0.010416667
      %v647 = vmul.f32 %v586, 0.010416667
      %v648 = vmul.f32 %v588, 0.010416667
      %v649 = vmul.f32 %v590, 0.010416667
      %v650 = vmul.f32 %v592, 0.010416667
      %v651 = vmul.f32 %v594, 0.010416667
      %v652 = vmul.f32 %v596, 0.010416667
      %v653 = vmul.f32 %v598, 0.010416667
      %v654 = vmul.f32 %v600, 0.010416667
      %v655 = vmul.f32 %v602, 0.010416667
      %v656 = vmul.f32 %v604, 0.010416667
      %v657 = vmul.f32 %v606, 0.010416667
      %v658 = vmul.f32 %v608, 0.010416667
      %v659 = vmul.f32 %v610, 0.010416667
      %v660 = vmul.f32 %v612, 0.010416667
      %v661 = vmul.f32 %v614, 0.010416667
      %v662 = vmul.f32 %v616, 0.010416667
      %v663 = vmul.f32 %v618, 0.010416667
      %v664 = vmul.f32 %v620, 0.010416667
      %v665 = vmul.f32 %v622, 0.010416667
      %v666 = vmul.f32 %v624, 0.010416667
      %v667 = vmul.f32 %v626, 0.010416667
      %v668 = vmul.f32 %v628, 0.010416667
      %v669 = vmul.f32 %v630, 0.010416667
      %v670 = vmul.f32 %v632, 0.010416667
      %v671 = vmul.f32 %v634, 0.010416667
      %v672 = vmul.f32 %v636, 0.010416667
      %v673 = vmul.f32 %v638, 0.010416667
      %v674 = vmul.f32 %v640, 0.010416667
      %v675 = vmul.f32 %v642, 0.010416667
      %v676 = vmul.f32 %v644, 0.010416667
      %v677 = vmul.f32 %v517, %v517
      %v678 = vmul.f32 %v518, %v518
      %v679 = vmul.f32 %v519, %v519
      %v680 = vmul.f32 %v520, %v520
      %v681 = vmul.f32 %v521, %v521
      %v682 = vmul.f32 %v522, %v522
      %v683 = vmul.f32 %v523, %v523
      %v684 = vmul.f32 %v524, %v524
      %v685 = vmul.f32 %v525, %v525
      %v686 = vmul.f32 %v526, %v526
      %v687 = vmul.f32 %v527, %v527
      %v688 = vmul.f32 %v528, %v528
      %v689 = vmul.f32 %v529, %v529
      %v690 = vmul.f32 %v530, %v530
      %v691 = vmul.f32 %v531, %v531
      %v692 = vmul.f32 %v532, %v532
      %v693 = vmul.f32 %v533, %v533
      %v694 = vmul.f32 %v534, %v534
      %v695 = vmul.f32 %v535, %v535
      %v696 = vmul.f32 %v536, %v536
      %v697 = vmul.f32 %v537, %v537
      %v698 = vmul.f32 %v538, %v538
      %v699 = vmul.f32 %v539, %v539
      %v700 = vmul.f32 %v540, %v540
      %v701 = vmul.f32 %v541, %v541
      %v702 = vmul.f32 %v542, %v542
      %v703 = vmul.f32 %v543, %v543
      %v704 = vmul.f32 %v544, %v544
      %v705 = vmul.f32 %v545, %v545
      %v706 = vmul.f32 %v546, %v546
      %v707 = vmul.f32 %v547, %v547
      %v708 = vmul.f32 %v548, %v548
      %v709 = vsub.f32 %v645, %v677
      %v710 = vsub.f32 %v646, %v678
      %v711 = vsub.f32 %v647, %v679
      %v712 = vsub.f32 %v648, %v680
      %v713 = vsub.f32 %v649, %v681
      %v714 = vsub.f32 %v650, %v682
      %v715 = vsub.f32 %v651, %v683
      %v716 = vsub.f32 %v652, %v684
      %v717 = vsub.f32 %v653, %v685
      %v718 = vsub.f32 %v654, %v686
      %v719 = vsub.f32 %v655, %v687
      %v720 = vsub.f32 %v656, %v688
      %v721 = vsub.f32 %v657, %v689
      %v722 = vsub.f32 %v658, %v690
      %v723 = vsub.f32 %v659, %v691
      %v724 = vsub.f32 %v660, %v692
      %v725 = vsub.f32 %v661, %v693
      %v726 = vsub.f32 %v662, %v694
      %v727 = vsub.f32 %v663, %v695
      %v728 = vsub.f32 %v664, %v696
      %v729 = vsub.f32 %v665, %v697
      %v730 = vsub.f32 %v666, %v698
      %v731 = vsub.f32 %v667, %v699
      %v732 = vsub.f32 %v668, %v700
      %v733 = vsub.f32 %v669, %v701
      %v734 = vsub.f32 %v670, %v702
      %v735 = vsub.f32 %v671, %v703
      %v736 = vsub.f32 %v672, %v704
      %v737 = vsub.f32 %v673, %v705
      %v738 = vsub.f32 %v674, %v706
      %v739 = vsub.f32 %v675, %v707
      %v740 = vsub.f32 %v676, %v708
      %v741 = vmax.f32 %v709, 0.0
      %v742 = vmax.f32 %v710, 0.0
      %v743 = vmax.f32 %v711, 0.0
      %v744 = vmax.f32 %v712, 0.0
      %v745 = vmax.f32 %v713, 0.0
      %v746 = vmax.f32 %v714, 0.0
      %v747 = vmax.f32 %v715, 0.0
      %v748 = vmax.f32 %v716, 0.0
      %v749 = vmax.f32 %v717, 0.0
      %v750 = vmax.f32 %v718, 0.0
      %v751 = vmax.f32 %v719, 0.0
      %v752 = vmax.f32 %v720, 0.0
      %v753 = vmax.f32 %v721, 0.0
      %v754 = vmax.f32 %v722, 0.0
      %v755 = vmax.f32 %v723, 0.0
      %v756 = vmax.f32 %v724, 0.0
      %v757 = vmax.f32 %v725, 0.0
      %v758 = vmax.f32 %v726, 0.0
      %v759 = vmax.f32 %v727, 0.0
      %v760 = vmax.f32 %v728, 0.0
      %v761 = vmax.f32 %v729, 0.0
      %v762 = vmax.f32 %v730, 0.0
      %v763 = vmax.f32 %v731, 0.0
      %v764 = vmax.f32 %v732, 0.0
      %v765 = vmax.f32 %v733, 0.0
      %v766 = vmax.f32 %v734, 0.0
      %v767 = vmax.f32 %v735, 0.0
      %v768 = vmax.f32 %v736, 0.0
      %v769 = vmax.f32 %v737, 0.0
      %v770 = vmax.f32 %v738, 0.0
      %v771 = vmax.f32 %v739, 0.0
      %v772 = vmax.f32 %v740, 0.0
      %v773 = vrsqrt.pop %v741
      %v774 = vmul.f32 %v773, %v741
      %v775 = vmul.f32 %v774, %v773
      %v776 = vmul.f32 0.5, %v775
      %v777 = vsub.f32 1.5, %v776
      %v778 = vmul.f32 %v773, %v777
      %v779 = vmul.f32 %v741, %v778
      %vm780 = vcmp.eq.f32.partialorder %v741, inf
      %v781 = vsel %vm780, %v741, %v779
      %vm782 = vcmp.eq.f32.partialorder %v741, 0.0
      %v783 = vand.u32 %v741, 2147483648
      %v784 = vsel %vm782, %v783, %v781
      %v785 = vrsqrt.pop %v742
      %v786 = vmul.f32 %v785, %v742
      %v787 = vmul.f32 %v786, %v785
      %v788 = vmul.f32 0.5, %v787
      %v789 = vsub.f32 1.5, %v788
      %v790 = vmul.f32 %v785, %v789
      %v791 = vmul.f32 %v742, %v790
      %vm792 = vcmp.eq.f32.partialorder %v742, inf
      %v793 = vsel %vm792, %v742, %v791
      %vm794 = vcmp.eq.f32.partialorder %v742, 0.0
      %v795 = vand.u32 %v742, 2147483648
      %v796 = vsel %vm794, %v795, %v793
      %v797 = vrsqrt.pop %v743
      %v798 = vmul.f32 %v797, %v743
      %v799 = vmul.f32 %v798, %v797
      %v800 = vmul.f32 0.5, %v799
      %v801 = vsub.f32 1.5, %v800
      %v802 = vmul.f32 %v797, %v801
      %v803 = vmul.f32 %v743, %v802
      %vm804 = vcmp.eq.f32.partialorder %v743, inf
      %v805 = vsel %vm804, %v743, %v803
      %vm806 = vcmp.eq.f32.partialorder %v743, 0.0
      %v807 = vand.u32 %v743, 2147483648
      %v808 = vsel %vm806, %v807, %v805
      %v809 = vrsqrt.pop %v744
      %v810 = vmul.f32 %v809, %v744
      %v811 = vmul.f32 %v810, %v809
      %v812 = vmul.f32 0.5, %v811
      %v813 = vsub.f32 1.5, %v812
      %v814 = vmul.f32 %v809, %v813
      %v815 = vmul.f32 %v744, %v814
      %vm816 = vcmp.eq.f32.partialorder %v744, inf
      %v817 = vsel %vm816, %v744, %v815
      %vm818 = vcmp.eq.f32.partialorder %v744, 0.0
      %v819 = vand.u32 %v744, 2147483648
      %v820 = vsel %vm818, %v819, %v817
      %v821 = vrsqrt.pop %v745
      %v822 = vmul.f32 %v821, %v745
      %v823 = vmul.f32 %v822, %v821
      %v824 = vmul.f32 0.5, %v823
      %v825 = vsub.f32 1.5, %v824
      %v826 = vmul.f32 %v821, %v825
      %v827 = vmul.f32 %v745, %v826
      %vm828 = vcmp.eq.f32.partialorder %v745, inf
      %v829 = vsel %vm828, %v745, %v827
      %vm830 = vcmp.eq.f32.partialorder %v745, 0.0
      %v831 = vand.u32 %v745, 2147483648
      %v832 = vsel %vm830, %v831, %v829
      %v833 = vrsqrt.pop %v746
      %v834 = vmul.f32 %v833, %v746
      %v835 = vmul.f32 %v834, %v833
      %v836 = vmul.f32 0.5, %v835
      %v837 = vsub.f32 1.5, %v836
      %v838 = vmul.f32 %v833, %v837
      %v839 = vmul.f32 %v746, %v838
      %vm840 = vcmp.eq.f32.partialorder %v746, inf
      %v841 = vsel %vm840, %v746, %v839
      %vm842 = vcmp.eq.f32.partialorder %v746, 0.0
      %v843 = vand.u32 %v746, 2147483648
      %v844 = vsel %vm842, %v843, %v841
      %v845 = vrsqrt.pop %v747
      %v846 = vmul.f32 %v845, %v747
      %v847 = vmul.f32 %v846, %v845
      %v848 = vmul.f32 0.5, %v847
      %v849 = vsub.f32 1.5, %v848
      %v850 = vmul.f32 %v845, %v849
      %v851 = vmul.f32 %v747, %v850
      %vm852 = vcmp.eq.f32.partialorder %v747, inf
      %v853 = vsel %vm852, %v747, %v851
      %vm854 = vcmp.eq.f32.partialorder %v747, 0.0
      %v855 = vand.u32 %v747, 2147483648
      %v856 = vsel %vm854, %v855, %v853
      %v857 = vrsqrt.pop %v748
      %v858 = vmul.f32 %v857, %v748
      %v859 = vmul.f32 %v858, %v857
      %v860 = vmul.f32 0.5, %v859
      %v861 = vsub.f32 1.5, %v860
      %v862 = vmul.f32 %v857, %v861
      %v863 = vmul.f32 %v748, %v862
      %vm864 = vcmp.eq.f32.partialorder %v748, inf
      %v865 = vsel %vm864, %v748, %v863
      %vm866 = vcmp.eq.f32.partialorder %v748, 0.0
      %v867 = vand.u32 %v748, 2147483648
      %v868 = vsel %vm866, %v867, %v865
      %v869 = vrsqrt.pop %v749
      %v870 = vmul.f32 %v869, %v749
      %v871 = vmul.f32 %v870, %v869
      %v872 = vmul.f32 0.5, %v871
      %v873 = vsub.f32 1.5, %v872
      %v874 = vmul.f32 %v869, %v873
      %v875 = vmul.f32 %v749, %v874
      %vm876 = vcmp.eq.f32.partialorder %v749, inf
      %v877 = vsel %vm876, %v749, %v875
      %vm878 = vcmp.eq.f32.partialorder %v749, 0.0
      %v879 = vand.u32 %v749, 2147483648
      %v880 = vsel %vm878, %v879, %v877
      %v881 = vrsqrt.pop %v750
      %v882 = vmul.f32 %v881, %v750
      %v883 = vmul.f32 %v882, %v881
      %v884 = vmul.f32 0.5, %v883
      %v885 = vsub.f32 1.5, %v884
      %v886 = vmul.f32 %v881, %v885
      %v887 = vmul.f32 %v750, %v886
      %vm888 = vcmp.eq.f32.partialorder %v750, inf
      %v889 = vsel %vm888, %v750, %v887
      %vm890 = vcmp.eq.f32.partialorder %v750, 0.0
      %v891 = vand.u32 %v750, 2147483648
      %v892 = vsel %vm890, %v891, %v889
      %v893 = vrsqrt.pop %v751
      %v894 = vmul.f32 %v893, %v751
      %v895 = vmul.f32 %v894, %v893
      %v896 = vmul.f32 0.5, %v895
      %v897 = vsub.f32 1.5, %v896
      %v898 = vmul.f32 %v893, %v897
      %v899 = vmul.f32 %v751, %v898
      %vm900 = vcmp.eq.f32.partialorder %v751, inf
      %v901 = vsel %vm900, %v751, %v899
      %vm902 = vcmp.eq.f32.partialorder %v751, 0.0
      %v903 = vand.u32 %v751, 2147483648
      %v904 = vsel %vm902, %v903, %v901
      %v905 = vrsqrt.pop %v752
      %v906 = vmul.f32 %v905, %v752
      %v907 = vmul.f32 %v906, %v905
      %v908 = vmul.f32 0.5, %v907
      %v909 = vsub.f32 1.5, %v908
      %v910 = vmul.f32 %v905, %v909
      %v911 = vmul.f32 %v752, %v910
      %vm912 = vcmp.eq.f32.partialorder %v752, inf
      %v913 = vsel %vm912, %v752, %v911
      %vm914 = vcmp.eq.f32.partialorder %v752, 0.0
      %v915 = vand.u32 %v752, 2147483648
      %v916 = vsel %vm914, %v915, %v913
      %v917 = vrsqrt.pop %v753
      %v918 = vmul.f32 %v917, %v753
      %v919 = vmul.f32 %v918, %v917
      %v920 = vmul.f32 0.5, %v919
      %v921 = vsub.f32 1.5, %v920
      %v922 = vmul.f32 %v917, %v921
      %v923 = vmul.f32 %v753, %v922
      %vm924 = vcmp.eq.f32.partialorder %v753, inf
      %v925 = vsel %vm924, %v753, %v923
      %vm926 = vcmp.eq.f32.partialorder %v753, 0.0
      %v927 = vand.u32 %v753, 2147483648
      %v928 = vsel %vm926, %v927, %v925
      %v929 = vrsqrt.pop %v754
      %v930 = vmul.f32 %v929, %v754
      %v931 = vmul.f32 %v930, %v929
      %v932 = vmul.f32 0.5, %v931
      %v933 = vsub.f32 1.5, %v932
      %v934 = vmul.f32 %v929, %v933
      %v935 = vmul.f32 %v754, %v934
      %vm936 = vcmp.eq.f32.partialorder %v754, inf
      %v937 = vsel %vm936, %v754, %v935
      %vm938 = vcmp.eq.f32.partialorder %v754, 0.0
      %v939 = vand.u32 %v754, 2147483648
      %v940 = vsel %vm938, %v939, %v937
      %v941 = vrsqrt.pop %v755
      %v942 = vmul.f32 %v941, %v755
      %v943 = vmul.f32 %v942, %v941
      %v944 = vmul.f32 0.5, %v943
      %v945 = vsub.f32 1.5, %v944
      %v946 = vmul.f32 %v941, %v945
      %v947 = vmul.f32 %v755, %v946
      %vm948 = vcmp.eq.f32.partialorder %v755, inf
      %v949 = vsel %vm948, %v755, %v947
      %vm950 = vcmp.eq.f32.partialorder %v755, 0.0
      %v951 = vand.u32 %v755, 2147483648
      %v952 = vsel %vm950, %v951, %v949
      %v953 = vrsqrt.pop %v756
      %v954 = vmul.f32 %v953, %v756
      %v955 = vmul.f32 %v954, %v953
      %v956 = vmul.f32 0.5, %v955
      %v957 = vsub.f32 1.5, %v956
      %v958 = vmul.f32 %v953, %v957
      %v959 = vmul.f32 %v756, %v958
      %vm960 = vcmp.eq.f32.partialorder %v756, inf
      %v961 = vsel %vm960, %v756, %v959
      %vm962 = vcmp.eq.f32.partialorder %v756, 0.0
      %v963 = vand.u32 %v756, 2147483648
      %v964 = vsel %vm962, %v963, %v961
      %v965 = vrsqrt.pop %v757
      %v966 = vmul.f32 %v965, %v757
      %v967 = vmul.f32 %v966, %v965
      %v968 = vmul.f32 0.5, %v967
      %v969 = vsub.f32 1.5, %v968
      %v970 = vmul.f32 %v965, %v969
      %v971 = vmul.f32 %v757, %v970
      %vm972 = vcmp.eq.f32.partialorder %v757, inf
      %v973 = vsel %vm972, %v757, %v971
      %vm974 = vcmp.eq.f32.partialorder %v757, 0.0
      %v975 = vand.u32 %v757, 2147483648
      %v976 = vsel %vm974, %v975, %v973
      %v977 = vrsqrt.pop %v758
      %v978 = vmul.f32 %v977, %v758
      %v979 = vmul.f32 %v978, %v977
      %v980 = vmul.f32 0.5, %v979
      %v981 = vsub.f32 1.5, %v980
      %v982 = vmul.f32 %v977, %v981
      %v983 = vmul.f32 %v758, %v982
      %vm984 = vcmp.eq.f32.partialorder %v758, inf
      %v985 = vsel %vm984, %v758, %v983
      %vm986 = vcmp.eq.f32.partialorder %v758, 0.0
      %v987 = vand.u32 %v758, 2147483648
      %v988 = vsel %vm986, %v987, %v985
      %v989 = vrsqrt.pop %v759
      %v990 = vmul.f32 %v989, %v759
      %v991 = vmul.f32 %v990, %v989
      %v992 = vmul.f32 0.5, %v991
      %v993 = vsub.f32 1.5, %v992
      %v994 = vmul.f32 %v989, %v993
      %v995 = vmul.f32 %v759, %v994
      %vm996 = vcmp.eq.f32.partialorder %v759, inf
      %v997 = vsel %vm996, %v759, %v995
      %vm998 = vcmp.eq.f32.partialorder %v759, 0.0
      %v999 = vand.u32 %v759, 2147483648
      %v1000 = vsel %vm998, %v999, %v997
      %v1001 = vrsqrt.pop %v760
      %v1002 = vmul.f32 %v1001, %v760
      %v1003 = vmul.f32 %v1002, %v1001
      %v1004 = vmul.f32 0.5, %v1003
      %v1005 = vsub.f32 1.5, %v1004
      %v1006 = vmul.f32 %v1001, %v1005
      %v1007 = vmul.f32 %v760, %v1006
      %vm1008 = vcmp.eq.f32.partialorder %v760, inf
      %v1009 = vsel %vm1008, %v760, %v1007
      %vm1010 = vcmp.eq.f32.partialorder %v760, 0.0
      %v1011 = vand.u32 %v760, 2147483648
      %v1012 = vsel %vm1010, %v1011, %v1009
      %v1013 = vrsqrt.pop %v761
      %v1014 = vmul.f32 %v1013, %v761
      %v1015 = vmul.f32 %v1014, %v1013
      %v1016 = vmul.f32 0.5, %v1015
      %v1017 = vsub.f32 1.5, %v1016
      %v1018 = vmul.f32 %v1013, %v1017
      %v1019 = vmul.f32 %v761, %v1018
      %vm1020 = vcmp.eq.f32.partialorder %v761, inf
      %v1021 = vsel %vm1020, %v761, %v1019
      %vm1022 = vcmp.eq.f32.partialorder %v761, 0.0
      %v1023 = vand.u32 %v761, 2147483648
      %v1024 = vsel %vm1022, %v1023, %v1021
      %v1025 = vrsqrt.pop %v762
      %v1026 = vmul.f32 %v1025, %v762
      %v1027 = vmul.f32 %v1026, %v1025
      %v1028 = vmul.f32 0.5, %v1027
      %v1029 = vsub.f32 1.5, %v1028
      %v1030 = vmul.f32 %v1025, %v1029
      %v1031 = vmul.f32 %v762, %v1030
      %vm1032 = vcmp.eq.f32.partialorder %v762, inf
      %v1033 = vsel %vm1032, %v762, %v1031
      %vm1034 = vcmp.eq.f32.partialorder %v762, 0.0
      %v1035 = vand.u32 %v762, 2147483648
      %v1036 = vsel %vm1034, %v1035, %v1033
      %v1037 = vrsqrt.pop %v763
      %v1038 = vmul.f32 %v1037, %v763
      %v1039 = vmul.f32 %v1038, %v1037
      %v1040 = vmul.f32 0.5, %v1039
      %v1041 = vsub.f32 1.5, %v1040
      %v1042 = vmul.f32 %v1037, %v1041
      %v1043 = vmul.f32 %v763, %v1042
      %vm1044 = vcmp.eq.f32.partialorder %v763, inf
      %v1045 = vsel %vm1044, %v763, %v1043
      %vm1046 = vcmp.eq.f32.partialorder %v763, 0.0
      %v1047 = vand.u32 %v763, 2147483648
      %v1048 = vsel %vm1046, %v1047, %v1045
      %v1049 = vrsqrt.pop %v764
      %v1050 = vmul.f32 %v1049, %v764
      %v1051 = vmul.f32 %v1050, %v1049
      %v1052 = vmul.f32 0.5, %v1051
      %v1053 = vsub.f32 1.5, %v1052
      %v1054 = vmul.f32 %v1049, %v1053
      %v1055 = vmul.f32 %v764, %v1054
      %vm1056 = vcmp.eq.f32.partialorder %v764, inf
      %v1057 = vsel %vm1056, %v764, %v1055
      %vm1058 = vcmp.eq.f32.partialorder %v764, 0.0
      %v1059 = vand.u32 %v764, 2147483648
      %v1060 = vsel %vm1058, %v1059, %v1057
      %v1061 = vrsqrt.pop %v765
      %v1062 = vmul.f32 %v1061, %v765
      %v1063 = vmul.f32 %v1062, %v1061
      %v1064 = vmul.f32 0.5, %v1063
      %v1065 = vsub.f32 1.5, %v1064
      %v1066 = vmul.f32 %v1061, %v1065
      %v1067 = vmul.f32 %v765, %v1066
      %vm1068 = vcmp.eq.f32.partialorder %v765, inf
      %v1069 = vsel %vm1068, %v765, %v1067
      %vm1070 = vcmp.eq.f32.partialorder %v765, 0.0
      %v1071 = vand.u32 %v765, 2147483648
      %v1072 = vsel %vm1070, %v1071, %v1069
      %v1073 = vrsqrt.pop %v766
      %v1074 = vmul.f32 %v1073, %v766
      %v1075 = vmul.f32 %v1074, %v1073
      %v1076 = vmul.f32 0.5, %v1075
      %v1077 = vsub.f32 1.5, %v1076
      %v1078 = vmul.f32 %v1073, %v1077
      %v1079 = vmul.f32 %v766, %v1078
      %vm1080 = vcmp.eq.f32.partialorder %v766, inf
      %v1081 = vsel %vm1080, %v766, %v1079
      %vm1082 = vcmp.eq.f32.partialorder %v766, 0.0
      %v1083 = vand.u32 %v766, 2147483648
      %v1084 = vsel %vm1082, %v1083, %v1081
      %v1085 = vrsqrt.pop %v767
      %v1086 = vmul.f32 %v1085, %v767
      %v1087 = vmul.f32 %v1086, %v1085
      %v1088 = vmul.f32 0.5, %v1087
      %v1089 = vsub.f32 1.5, %v1088
      %v1090 = vmul.f32 %v1085, %v1089
      %v1091 = vmul.f32 %v767, %v1090
      %vm1092 = vcmp.eq.f32.partialorder %v767, inf
      %v1093 = vsel %vm1092, %v767, %v1091
      %vm1094 = vcmp.eq.f32.partialorder %v767, 0.0
      %v1095 = vand.u32 %v767, 2147483648
      %v1096 = vsel %vm1094, %v1095, %v1093
      %v1097 = vrsqrt.pop %v768
      %v1098 = vmul.f32 %v1097, %v768
      %v1099 = vmul.f32 %v1098, %v1097
      %v1100 = vmul.f32 0.5, %v1099
      %v1101 = vsub.f32 1.5, %v1100
      %v1102 = vmul.f32 %v1097, %v1101
      %v1103 = vmul.f32 %v768, %v1102
      %vm1104 = vcmp.eq.f32.partialorder %v768, inf
      %v1105 = vsel %vm1104, %v768, %v1103
      %vm1106 = vcmp.eq.f32.partialorder %v768, 0.0
      %v1107 = vand.u32 %v768, 2147483648
      %v1108 = vsel %vm1106, %v1107, %v1105
      %v1109 = vrsqrt.pop %v769
      %v1110 = vmul.f32 %v1109, %v769
      %v1111 = vmul.f32 %v1110, %v1109
      %v1112 = vmul.f32 0.5, %v1111
      %v1113 = vsub.f32 1.5, %v1112
      %v1114 = vmul.f32 %v1109, %v1113
      %v1115 = vmul.f32 %v769, %v1114
      %vm1116 = vcmp.eq.f32.partialorder %v769, inf
      %v1117 = vsel %vm1116, %v769, %v1115
      %vm1118 = vcmp.eq.f32.partialorder %v769, 0.0
      %v1119 = vand.u32 %v769, 2147483648
      %v1120 = vsel %vm1118, %v1119, %v1117
      %v1121 = vrsqrt.pop %v770
      %v1122 = vmul.f32 %v1121, %v770
      %v1123 = vmul.f32 %v1122, %v1121
      %v1124 = vmul.f32 0.5, %v1123
      %v1125 = vsub.f32 1.5, %v1124
      %v1126 = vmul.f32 %v1121, %v1125
      %v1127 = vmul.f32 %v770, %v1126
      %vm1128 = vcmp.eq.f32.partialorder %v770, inf
      %v1129 = vsel %vm1128, %v770, %v1127
      %vm1130 = vcmp.eq.f32.partialorder %v770, 0.0
      %v1131 = vand.u32 %v770, 2147483648
      %v1132 = vsel %vm1130, %v1131, %v1129
      %v1133 = vrsqrt.pop %v771
      %v1134 = vmul.f32 %v1133, %v771
      %v1135 = vmul.f32 %v1134, %v1133
      %v1136 = vmul.f32 0.5, %v1135
      %v1137 = vsub.f32 1.5, %v1136
      %v1138 = vmul.f32 %v1133, %v1137
      %v1139 = vmul.f32 %v771, %v1138
      %vm1140 = vcmp.eq.f32.partialorder %v771, inf
      %v1141 = vsel %vm1140, %v771, %v1139
      %vm1142 = vcmp.eq.f32.partialorder %v771, 0.0
      %v1143 = vand.u32 %v771, 2147483648
      %v1144 = vsel %vm1142, %v1143, %v1141
      %v1145 = vrsqrt.pop %v772
      %v1146 = vmul.f32 %v1145, %v772
      %v1147 = vmul.f32 %v1146, %v1145
      %v1148 = vmul.f32 0.5, %v1147
      %v1149 = vsub.f32 1.5, %v1148
      %v1150 = vmul.f32 %v1145, %v1149
      %v1151 = vmul.f32 %v772, %v1150
      %vm1152 = vcmp.eq.f32.partialorder %v772, inf
      %v1153 = vsel %vm1152, %v772, %v1151
      %vm1154 = vcmp.eq.f32.partialorder %v772, 0.0
      %v1155 = vand.u32 %v772, 2147483648
      %v1156 = vsel %vm1154, %v1155, %v1153
      %v1157 = vadd.f32 %v784, 1e-06
      %v1158 = vadd.f32 %v796, 1e-06
      %v1159 = vadd.f32 %v808, 1e-06
      %v1160 = vadd.f32 %v820, 1e-06
      %v1161 = vadd.f32 %v832, 1e-06
      %v1162 = vadd.f32 %v844, 1e-06
      %v1163 = vadd.f32 %v856, 1e-06
      %v1164 = vadd.f32 %v868, 1e-06
      %v1165 = vadd.f32 %v880, 1e-06
      %v1166 = vadd.f32 %v892, 1e-06
      %v1167 = vadd.f32 %v904, 1e-06
      %v1168 = vadd.f32 %v916, 1e-06
      %v1169 = vadd.f32 %v928, 1e-06
      %v1170 = vadd.f32 %v940, 1e-06
      %v1171 = vadd.f32 %v952, 1e-06
      %v1172 = vadd.f32 %v964, 1e-06
      %v1173 = vadd.f32 %v976, 1e-06
      %v1174 = vadd.f32 %v988, 1e-06
      %v1175 = vadd.f32 %v1000, 1e-06
      %v1176 = vadd.f32 %v1012, 1e-06
      %v1177 = vadd.f32 %v1024, 1e-06
      %v1178 = vadd.f32 %v1036, 1e-06
      %v1179 = vadd.f32 %v1048, 1e-06
      %v1180 = vadd.f32 %v1060, 1e-06
      %v1181 = vadd.f32 %v1072, 1e-06
      %v1182 = vadd.f32 %v1084, 1e-06
      %v1183 = vadd.f32 %v1096, 1e-06
      %v1184 = vadd.f32 %v1108, 1e-06
      %v1185 = vadd.f32 %v1120, 1e-06
      %v1186 = vadd.f32 %v1132, 1e-06
      %v1187 = vadd.f32 %v1144, 1e-06
      %v1188 = vadd.f32 %v1156, 1e-06
      %v1189 = vrcp.pop %v1157
      %v1190 = vrcp.pop %v1158
      %v1191 = vrcp.pop %v1159
      %v1192 = vrcp.pop %v1160
      %v1193 = vrcp.pop %v1161
      %v1194 = vrcp.pop %v1162
      %v1195 = vrcp.pop %v1163
      %v1196 = vrcp.pop %v1164
      %v1197 = vrcp.pop %v1165
      %v1198 = vrcp.pop %v1166
      %v1199 = vrcp.pop %v1167
      %v1200 = vrcp.pop %v1168
      %v1201 = vrcp.pop %v1169
      %v1202 = vrcp.pop %v1170
      %v1203 = vrcp.pop %v1171
      %v1204 = vrcp.pop %v1172
      %v1205 = vrcp.pop %v1173
      %v1206 = vrcp.pop %v1174
      %v1207 = vrcp.pop %v1175
      %v1208 = vrcp.pop %v1176
      %v1209 = vrcp.pop %v1177
      %v1210 = vrcp.pop %v1178
      %v1211 = vrcp.pop %v1179
      %v1212 = vrcp.pop %v1180
      %v1213 = vrcp.pop %v1181
      %v1214 = vrcp.pop %v1182
      %v1215 = vrcp.pop %v1183
      %v1216 = vrcp.pop %v1184
      %v1217 = vrcp.pop %v1185
      %v1218 = vrcp.pop %v1186
      %v1219 = vrcp.pop %v1187
      %v1220 = vrcp.pop %v1188
      %v1221 = vsub.f32 %v372, %v517
      %v1222 = vsub.f32 %v374, %v518
      %v1223 = vsub.f32 %v377, %v519
      %v1224 = vsub.f32 %v379, %v520
      %v1225 = vsub.f32 %v382, %v521
      %v1226 = vsub.f32 %v384, %v522
      %v1227 = vsub.f32 %v387, %v523
      %v1228 = vsub.f32 %v389, %v524
      %v1229 = vsub.f32 %v392, %v525
      %v1230 = vsub.f32 %v394, %v526
      %v1231 = vsub.f32 %v397, %v527
      %v1232 = vsub.f32 %v399, %v528
      %v1233 = vsub.f32 %v402, %v529
      %v1234 = vsub.f32 %v404, %v530
      %v1235 = vsub.f32 %v407, %v531
      %v1236 = vsub.f32 %v409, %v532
      %v1237 = vsub.f32 %v412, %v533
      %v1238 = vsub.f32 %v414, %v534
      %v1239 = vsub.f32 %v417, %v535
      %v1240 = vsub.f32 %v419, %v536
      %v1241 = vsub.f32 %v422, %v537
      %v1242 = vsub.f32 %v424, %v538
      %v1243 = vsub.f32 %v427, %v539
      %v1244 = vsub.f32 %v429, %v540
      %v1245 = vsub.f32 %v432, %v541
      %v1246 = vsub.f32 %v434, %v542
      %v1247 = vsub.f32 %v437, %v543
      %v1248 = vsub.f32 %v439, %v544
      %v1249 = vsub.f32 %v442, %v545
      %v1250 = vsub.f32 %v444, %v546
      %v1251 = vsub.f32 %v447, %v547
      %v1252 = vsub.f32 %v449, %v548
      %v1253 = vmul.f32 %v1221, %v1189
      %v1254 = vmul.f32 %v1222, %v1190
      %v1255 = vmul.f32 %v1223, %v1191
      %v1256 = vmul.f32 %v1224, %v1192
      %v1257 = vmul.f32 %v1225, %v1193
      %v1258 = vmul.f32 %v1226, %v1194
      %v1259 = vmul.f32 %v1227, %v1195
      %v1260 = vmul.f32 %v1228, %v1196
      %v1261 = vmul.f32 %v1229, %v1197
      %v1262 = vmul.f32 %v1230, %v1198
      %v1263 = vmul.f32 %v1231, %v1199
      %v1264 = vmul.f32 %v1232, %v1200
      %v1265 = vmul.f32 %v1233, %v1201
      %v1266 = vmul.f32 %v1234, %v1202
      %v1267 = vmul.f32 %v1235, %v1203
      %v1268 = vmul.f32 %v1236, %v1204
      %v1269 = vmul.f32 %v1237, %v1205
      %v1270 = vmul.f32 %v1238, %v1206
      %v1271 = vmul.f32 %v1239, %v1207
      %v1272 = vmul.f32 %v1240, %v1208
      %v1273 = vmul.f32 %v1241, %v1209
      %v1274 = vmul.f32 %v1242, %v1210
      %v1275 = vmul.f32 %v1243, %v1211
      %v1276 = vmul.f32 %v1244, %v1212
      %v1277 = vmul.f32 %v1245, %v1213
      %v1278 = vmul.f32 %v1246, %v1214
      %v1279 = vmul.f32 %v1247, %v1215
      %v1280 = vmul.f32 %v1248, %v1216
      %v1281 = vmul.f32 %v1249, %v1217
      %v1282 = vmul.f32 %v1250, %v1218
      %v1283 = vmul.f32 %v1251, %v1219
      %v1284 = vmul.f32 %v1252, %v1220
      %v1285 = vperm.slane %v451, 0
      %v1286 = vmul.f32 %v1253, %v1285
      %v1287 = vmul.f32 %v1254, %v1285
      %v1288 = vmul.f32 %v1255, %v1285
      %v1289 = vmul.f32 %v1256, %v1285
      %v1290 = vmul.f32 %v1257, %v1285
      %v1291 = vmul.f32 %v1258, %v1285
      %v1292 = vmul.f32 %v1259, %v1285
      %v1293 = vmul.f32 %v1260, %v1285
      %v1294 = vmul.f32 %v1261, %v1285
      %v1295 = vmul.f32 %v1262, %v1285
      %v1296 = vmul.f32 %v1263, %v1285
      %v1297 = vmul.f32 %v1264, %v1285
      %v1298 = vmul.f32 %v1265, %v1285
      %v1299 = vmul.f32 %v1266, %v1285
      %v1300 = vmul.f32 %v1267, %v1285
      %v1301 = vmul.f32 %v1268, %v1285
      %v1302 = vmul.f32 %v1269, %v1285
      %v1303 = vmul.f32 %v1270, %v1285
      %v1304 = vmul.f32 %v1271, %v1285
      %v1305 = vmul.f32 %v1272, %v1285
      %v1306 = vmul.f32 %v1273, %v1285
      %v1307 = vmul.f32 %v1274, %v1285
      %v1308 = vmul.f32 %v1275, %v1285
      %v1309 = vmul.f32 %v1276, %v1285
      %v1310 = vmul.f32 %v1277, %v1285
      %v1311 = vmul.f32 %v1278, %v1285
      %v1312 = vmul.f32 %v1279, %v1285
      %v1313 = vmul.f32 %v1280, %v1285
      %v1314 = vmul.f32 %v1281, %v1285
      %v1315 = vmul.f32 %v1282, %v1285
      %v1316 = vmul.f32 %v1283, %v1285
      %v1317 = vmul.f32 %v1284, %v1285
      %v1318 = vperm.slane %v452, 0
      %v1319 = vadd.f32 %v1286, %v1318
      %v1320 = vadd.f32 %v1287, %v1318
      %v1321 = vadd.f32 %v1288, %v1318
      %v1322 = vadd.f32 %v1289, %v1318
      %v1323 = vadd.f32 %v1290, %v1318
      %v1324 = vadd.f32 %v1291, %v1318
      %v1325 = vadd.f32 %v1292, %v1318
      %v1326 = vadd.f32 %v1293, %v1318
      %v1327 = vadd.f32 %v1294, %v1318
      %v1328 = vadd.f32 %v1295, %v1318
      %v1329 = vadd.f32 %v1296, %v1318
      %v1330 = vadd.f32 %v1297, %v1318
      %v1331 = vadd.f32 %v1298, %v1318
      %v1332 = vadd.f32 %v1299, %v1318
      %v1333 = vadd.f32 %v1300, %v1318
      %v1334 = vadd.f32 %v1301, %v1318
      %v1335 = vadd.f32 %v1302, %v1318
      %v1336 = vadd.f32 %v1303, %v1318
      %v1337 = vadd.f32 %v1304, %v1318
      %v1338 = vadd.f32 %v1305, %v1318
      %v1339 = vadd.f32 %v1306, %v1318
      %v1340 = vadd.f32 %v1307, %v1318
      %v1341 = vadd.f32 %v1308, %v1318
      %v1342 = vadd.f32 %v1309, %v1318
      %v1343 = vadd.f32 %v1310, %v1318
      %v1344 = vadd.f32 %v1311, %v1318
      %v1345 = vadd.f32 %v1312, %v1318
      %v1346 = vadd.f32 %v1313, %v1318
      %v1347 = vadd.f32 %v1314, %v1318
      %v1348 = vadd.f32 %v1315, %v1318
      %v1349 = vadd.f32 %v1316, %v1318
      %v1350 = vadd.f32 %v1317, %v1318
      %v1351 = vld [vmem:[%s2 + $0x3] sm:$0x1]
      %v1352 = vld [vmem:[%s2 + $0x4] sm:$0x1]
      %1353 = vadd.xlane.f32.xlu0 %v1319
      %v1354 = vpop.xlane.xlu0 %1353
      %1355 = vadd.xlane.f32.xlu0 %v1320
      %v1356 = vpop.xlane.xlu0 %1355
      %1357 = vadd.xlane.f32.xlu0 %v1321
      %v1358 = vpop.xlane.xlu0 %1357
      %1359 = vadd.xlane.f32.xlu0 %v1322
      %v1360 = vpop.xlane.xlu0 %1359
      %1361 = vadd.xlane.f32.xlu0 %v1323
      %v1362 = vpop.xlane.xlu0 %1361
      %1363 = vadd.xlane.f32.xlu0 %v1324
      %v1364 = vpop.xlane.xlu0 %1363
      %1365 = vadd.xlane.f32.xlu0 %v1325
      %v1366 = vpop.xlane.xlu0 %1365
      %1367 = vadd.xlane.f32.xlu0 %v1326
      %v1368 = vpop.xlane.xlu0 %1367
      %1369 = vadd.xlane.f32.xlu0 %v1327
      %v1370 = vpop.xlane.xlu0 %1369
      %1371 = vadd.xlane.f32.xlu0 %v1328
      %v1372 = vpop.xlane.xlu0 %1371
      %1373 = vadd.xlane.f32.xlu0 %v1329
      %v1374 = vpop.xlane.xlu0 %1373
      %1375 = vadd.xlane.f32.xlu0 %v1330
      %v1376 = vpop.xlane.xlu0 %1375
      %1377 = vadd.xlane.f32.xlu0 %v1331
      %v1378 = vpop.xlane.xlu0 %1377
      %1379 = vadd.xlane.f32.xlu0 %v1332
      %v1380 = vpop.xlane.xlu0 %1379
      %1381 = vadd.xlane.f32.xlu0 %v1333
      %v1382 = vpop.xlane.xlu0 %1381
      %1383 = vadd.xlane.f32.xlu0 %v1334
      %v1384 = vpop.xlane.xlu0 %1383
      %1385 = vadd.xlane.f32.xlu0 %v1335
      %v1386 = vpop.xlane.xlu0 %1385
      %1387 = vadd.xlane.f32.xlu0 %v1336
      %v1388 = vpop.xlane.xlu0 %1387
      %1389 = vadd.xlane.f32.xlu0 %v1337
      %v1390 = vpop.xlane.xlu0 %1389
      %1391 = vadd.xlane.f32.xlu0 %v1338
      %v1392 = vpop.xlane.xlu0 %1391
      %1393 = vadd.xlane.f32.xlu0 %v1339
      %v1394 = vpop.xlane.xlu0 %1393
      %1395 = vadd.xlane.f32.xlu0 %v1340
      %v1396 = vpop.xlane.xlu0 %1395
      %1397 = vadd.xlane.f32.xlu0 %v1341
      %v1398 = vpop.xlane.xlu0 %1397
      %1399 = vadd.xlane.f32.xlu0 %v1342
      %v1400 = vpop.xlane.xlu0 %1399
      %1401 = vadd.xlane.f32.xlu0 %v1343
      %v1402 = vpop.xlane.xlu0 %1401
      %1403 = vadd.xlane.f32.xlu0 %v1344
      %v1404 = vpop.xlane.xlu0 %1403
      %1405 = vadd.xlane.f32.xlu0 %v1345
      %v1406 = vpop.xlane.xlu0 %1405
      %1407 = vadd.xlane.f32.xlu0 %v1346
      %v1408 = vpop.xlane.xlu0 %1407
      %1409 = vadd.xlane.f32.xlu0 %v1347
      %v1410 = vpop.xlane.xlu0 %1409
      %1411 = vadd.xlane.f32.xlu0 %v1348
      %v1412 = vpop.xlane.xlu0 %1411
      %1413 = vadd.xlane.f32.xlu0 %v1349
      %v1414 = vpop.xlane.xlu0 %1413
      %1415 = vadd.xlane.f32.xlu0 %v1350
      %v1416 = vpop.xlane.xlu0 %1415
      %v1417 = vmul.f32 %v1354, 0.010416667
      %v1418 = vmul.f32 %v1356, 0.010416667
      %v1419 = vmul.f32 %v1358, 0.010416667
      %v1420 = vmul.f32 %v1360, 0.010416667
      %v1421 = vmul.f32 %v1362, 0.010416667
      %v1422 = vmul.f32 %v1364, 0.010416667
      %v1423 = vmul.f32 %v1366, 0.010416667
      %v1424 = vmul.f32 %v1368, 0.010416667
      %v1425 = vmul.f32 %v1370, 0.010416667
      %v1426 = vmul.f32 %v1372, 0.010416667
      %v1427 = vmul.f32 %v1374, 0.010416667
      %v1428 = vmul.f32 %v1376, 0.010416667
      %v1429 = vmul.f32 %v1378, 0.010416667
      %v1430 = vmul.f32 %v1380, 0.010416667
      %v1431 = vmul.f32 %v1382, 0.010416667
      %v1432 = vmul.f32 %v1384, 0.010416667
      %v1433 = vmul.f32 %v1386, 0.010416667
      %v1434 = vmul.f32 %v1388, 0.010416667
      %v1435 = vmul.f32 %v1390, 0.010416667
      %v1436 = vmul.f32 %v1392, 0.010416667
      %v1437 = vmul.f32 %v1394, 0.010416667
      %v1438 = vmul.f32 %v1396, 0.010416667
      %v1439 = vmul.f32 %v1398, 0.010416667
      %v1440 = vmul.f32 %v1400, 0.010416667
      %v1441 = vmul.f32 %v1402, 0.010416667
      %v1442 = vmul.f32 %v1404, 0.010416667
      %v1443 = vmul.f32 %v1406, 0.010416667
      %v1444 = vmul.f32 %v1408, 0.010416667
      %v1445 = vmul.f32 %v1410, 0.010416667
      %v1446 = vmul.f32 %v1412, 0.010416667
      %v1447 = vmul.f32 %v1414, 0.010416667
      %v1448 = vmul.f32 %v1416, 0.010416667
      %v1449 = vmul.f32 %v1319, %v1319
      %v1450 = vmul.f32 %v1320, %v1320
      %v1451 = vmul.f32 %v1321, %v1321
      %v1452 = vmul.f32 %v1322, %v1322
      %v1453 = vmul.f32 %v1323, %v1323
      %v1454 = vmul.f32 %v1324, %v1324
      %v1455 = vmul.f32 %v1325, %v1325
      %v1456 = vmul.f32 %v1326, %v1326
      %v1457 = vmul.f32 %v1327, %v1327
      %v1458 = vmul.f32 %v1328, %v1328
      %v1459 = vmul.f32 %v1329, %v1329
      %v1460 = vmul.f32 %v1330, %v1330
      %v1461 = vmul.f32 %v1331, %v1331
      %v1462 = vmul.f32 %v1332, %v1332
      %v1463 = vmul.f32 %v1333, %v1333
      %v1464 = vmul.f32 %v1334, %v1334
      %v1465 = vmul.f32 %v1335, %v1335
      %v1466 = vmul.f32 %v1336, %v1336
      %v1467 = vmul.f32 %v1337, %v1337
      %v1468 = vmul.f32 %v1338, %v1338
      %v1469 = vmul.f32 %v1339, %v1339
      %v1470 = vmul.f32 %v1340, %v1340
      %v1471 = vmul.f32 %v1341, %v1341
      %v1472 = vmul.f32 %v1342, %v1342
      %v1473 = vmul.f32 %v1343, %v1343
      %v1474 = vmul.f32 %v1344, %v1344
      %v1475 = vmul.f32 %v1345, %v1345
      %v1476 = vmul.f32 %v1346, %v1346
      %v1477 = vmul.f32 %v1347, %v1347
      %v1478 = vmul.f32 %v1348, %v1348
      %v1479 = vmul.f32 %v1349, %v1349
      %v1480 = vmul.f32 %v1350, %v1350
      %1481 = vadd.xlane.f32.xlu0 %v1449
      %v1482 = vpop.xlane.xlu0 %1481
      %1483 = vadd.xlane.f32.xlu0 %v1450
      %v1484 = vpop.xlane.xlu0 %1483
      %1485 = vadd.xlane.f32.xlu0 %v1451
      %v1486 = vpop.xlane.xlu0 %1485
      %1487 = vadd.xlane.f32.xlu0 %v1452
      %v1488 = vpop.xlane.xlu0 %1487
      %1489 = vadd.xlane.f32.xlu0 %v1453
      %v1490 = vpop.xlane.xlu0 %1489
      %1491 = vadd.xlane.f32.xlu0 %v1454
      %v1492 = vpop.xlane.xlu0 %1491
      %1493 = vadd.xlane.f32.xlu0 %v1455
      %v1494 = vpop.xlane.xlu0 %1493
      %1495 = vadd.xlane.f32.xlu0 %v1456
      %v1496 = vpop.xlane.xlu0 %1495
      %1497 = vadd.xlane.f32.xlu0 %v1457
      %v1498 = vpop.xlane.xlu0 %1497
      %1499 = vadd.xlane.f32.xlu0 %v1458
      %v1500 = vpop.xlane.xlu0 %1499
      %1501 = vadd.xlane.f32.xlu0 %v1459
      %v1502 = vpop.xlane.xlu0 %1501
      %1503 = vadd.xlane.f32.xlu0 %v1460
      %v1504 = vpop.xlane.xlu0 %1503
      %1505 = vadd.xlane.f32.xlu0 %v1461
      %v1506 = vpop.xlane.xlu0 %1505
      %1507 = vadd.xlane.f32.xlu0 %v1462
      %v1508 = vpop.xlane.xlu0 %1507
      %1509 = vadd.xlane.f32.xlu0 %v1463
      %v1510 = vpop.xlane.xlu0 %1509
      %1511 = vadd.xlane.f32.xlu0 %v1464
      %v1512 = vpop.xlane.xlu0 %1511
      %1513 = vadd.xlane.f32.xlu0 %v1465
      %v1514 = vpop.xlane.xlu0 %1513
      %1515 = vadd.xlane.f32.xlu0 %v1466
      %v1516 = vpop.xlane.xlu0 %1515
      %1517 = vadd.xlane.f32.xlu0 %v1467
      %v1518 = vpop.xlane.xlu0 %1517
      %1519 = vadd.xlane.f32.xlu0 %v1468
      %v1520 = vpop.xlane.xlu0 %1519
      %1521 = vadd.xlane.f32.xlu0 %v1469
      %v1522 = vpop.xlane.xlu0 %1521
      %1523 = vadd.xlane.f32.xlu0 %v1470
      %v1524 = vpop.xlane.xlu0 %1523
      %1525 = vadd.xlane.f32.xlu0 %v1471
      %v1526 = vpop.xlane.xlu0 %1525
      %1527 = vadd.xlane.f32.xlu0 %v1472
      %v1528 = vpop.xlane.xlu0 %1527
      %1529 = vadd.xlane.f32.xlu0 %v1473
      %v1530 = vpop.xlane.xlu0 %1529
      %1531 = vadd.xlane.f32.xlu0 %v1474
      %v1532 = vpop.xlane.xlu0 %1531
      %1533 = vadd.xlane.f32.xlu0 %v1475
      %v1534 = vpop.xlane.xlu0 %1533
      %1535 = vadd.xlane.f32.xlu0 %v1476
      %v1536 = vpop.xlane.xlu0 %1535
      %1537 = vadd.xlane.f32.xlu0 %v1477
      %v1538 = vpop.xlane.xlu0 %1537
      %1539 = vadd.xlane.f32.xlu0 %v1478
      %v1540 = vpop.xlane.xlu0 %1539
      %1541 = vadd.xlane.f32.xlu0 %v1479
      %v1542 = vpop.xlane.xlu0 %1541
      %1543 = vadd.xlane.f32.xlu0 %v1480
      %v1544 = vpop.xlane.xlu0 %1543
      %v1545 = vmul.f32 %v1482, 0.010416667
      %v1546 = vmul.f32 %v1484, 0.010416667
      %v1547 = vmul.f32 %v1486, 0.010416667
      %v1548 = vmul.f32 %v1488, 0.010416667
      %v1549 = vmul.f32 %v1490, 0.010416667
      %v1550 = vmul.f32 %v1492, 0.010416667
      %v1551 = vmul.f32 %v1494, 0.010416667
      %v1552 = vmul.f32 %v1496, 0.010416667
      %v1553 = vmul.f32 %v1498, 0.010416667
      %v1554 = vmul.f32 %v1500, 0.010416667
      %v1555 = vmul.f32 %v1502, 0.010416667
      %v1556 = vmul.f32 %v1504, 0.010416667
      %v1557 = vmul.f32 %v1506, 0.010416667
      %v1558 = vmul.f32 %v1508, 0.010416667
      %v1559 = vmul.f32 %v1510, 0.010416667
      %v1560 = vmul.f32 %v1512, 0.010416667
      %v1561 = vmul.f32 %v1514, 0.010416667
      %v1562 = vmul.f32 %v1516, 0.010416667
      %v1563 = vmul.f32 %v1518, 0.010416667
      %v1564 = vmul.f32 %v1520, 0.010416667
      %v1565 = vmul.f32 %v1522, 0.010416667
      %v1566 = vmul.f32 %v1524, 0.010416667
      %v1567 = vmul.f32 %v1526, 0.010416667
      %v1568 = vmul.f32 %v1528, 0.010416667
      %v1569 = vmul.f32 %v1530, 0.010416667
      %v1570 = vmul.f32 %v1532, 0.010416667
      %v1571 = vmul.f32 %v1534, 0.010416667
      %v1572 = vmul.f32 %v1536, 0.010416667
      %v1573 = vmul.f32 %v1538, 0.010416667
      %v1574 = vmul.f32 %v1540, 0.010416667
      %v1575 = vmul.f32 %v1542, 0.010416667
      %v1576 = vmul.f32 %v1544, 0.010416667
      %v1577 = vmul.f32 %v1417, %v1417
      %v1578 = vmul.f32 %v1418, %v1418
      %v1579 = vmul.f32 %v1419, %v1419
      %v1580 = vmul.f32 %v1420, %v1420
      %v1581 = vmul.f32 %v1421, %v1421
      %v1582 = vmul.f32 %v1422, %v1422
      %v1583 = vmul.f32 %v1423, %v1423
      %v1584 = vmul.f32 %v1424, %v1424
      %v1585 = vmul.f32 %v1425, %v1425
      %v1586 = vmul.f32 %v1426, %v1426
      %v1587 = vmul.f32 %v1427, %v1427
      %v1588 = vmul.f32 %v1428, %v1428
      %v1589 = vmul.f32 %v1429, %v1429
      %v1590 = vmul.f32 %v1430, %v1430
      %v1591 = vmul.f32 %v1431, %v1431
      %v1592 = vmul.f32 %v1432, %v1432
      %v1593 = vmul.f32 %v1433, %v1433
      %v1594 = vmul.f32 %v1434, %v1434
      %v1595 = vmul.f32 %v1435, %v1435
      %v1596 = vmul.f32 %v1436, %v1436
      %v1597 = vmul.f32 %v1437, %v1437
      %v1598 = vmul.f32 %v1438, %v1438
      %v1599 = vmul.f32 %v1439, %v1439
      %v1600 = vmul.f32 %v1440, %v1440
      %v1601 = vmul.f32 %v1441, %v1441
      %v1602 = vmul.f32 %v1442, %v1442
      %v1603 = vmul.f32 %v1443, %v1443
      %v1604 = vmul.f32 %v1444, %v1444
      %v1605 = vmul.f32 %v1445, %v1445
      %v1606 = vmul.f32 %v1446, %v1446
      %v1607 = vmul.f32 %v1447, %v1447
      %v1608 = vmul.f32 %v1448, %v1448
      %v1609 = vsub.f32 %v1545, %v1577
      %v1610 = vsub.f32 %v1546, %v1578
      %v1611 = vsub.f32 %v1547, %v1579
      %v1612 = vsub.f32 %v1548, %v1580
      %v1613 = vsub.f32 %v1549, %v1581
      %v1614 = vsub.f32 %v1550, %v1582
      %v1615 = vsub.f32 %v1551, %v1583
      %v1616 = vsub.f32 %v1552, %v1584
      %v1617 = vsub.f32 %v1553, %v1585
      %v1618 = vsub.f32 %v1554, %v1586
      %v1619 = vsub.f32 %v1555, %v1587
      %v1620 = vsub.f32 %v1556, %v1588
      %v1621 = vsub.f32 %v1557, %v1589
      %v1622 = vsub.f32 %v1558, %v1590
      %v1623 = vsub.f32 %v1559, %v1591
      %v1624 = vsub.f32 %v1560, %v1592
      %v1625 = vsub.f32 %v1561, %v1593
      %v1626 = vsub.f32 %v1562, %v1594
      %v1627 = vsub.f32 %v1563, %v1595
      %v1628 = vsub.f32 %v1564, %v1596
      %v1629 = vsub.f32 %v1565, %v1597
      %v1630 = vsub.f32 %v1566, %v1598
      %v1631 = vsub.f32 %v1567, %v1599
      %v1632 = vsub.f32 %v1568, %v1600
      %v1633 = vsub.f32 %v1569, %v1601
      %v1634 = vsub.f32 %v1570, %v1602
      %v1635 = vsub.f32 %v1571, %v1603
      %v1636 = vsub.f32 %v1572, %v1604
      %v1637 = vsub.f32 %v1573, %v1605
      %v1638 = vsub.f32 %v1574, %v1606
      %v1639 = vsub.f32 %v1575, %v1607
      %v1640 = vsub.f32 %v1576, %v1608
      %v1641 = vmax.f32 %v1609, 0.0
      %v1642 = vmax.f32 %v1610, 0.0
      %v1643 = vmax.f32 %v1611, 0.0
      %v1644 = vmax.f32 %v1612, 0.0
      %v1645 = vmax.f32 %v1613, 0.0
      %v1646 = vmax.f32 %v1614, 0.0
      %v1647 = vmax.f32 %v1615, 0.0
      %v1648 = vmax.f32 %v1616, 0.0
      %v1649 = vmax.f32 %v1617, 0.0
      %v1650 = vmax.f32 %v1618, 0.0
      %v1651 = vmax.f32 %v1619, 0.0
      %v1652 = vmax.f32 %v1620, 0.0
      %v1653 = vmax.f32 %v1621, 0.0
      %v1654 = vmax.f32 %v1622, 0.0
      %v1655 = vmax.f32 %v1623, 0.0
      %v1656 = vmax.f32 %v1624, 0.0
      %v1657 = vmax.f32 %v1625, 0.0
      %v1658 = vmax.f32 %v1626, 0.0
      %v1659 = vmax.f32 %v1627, 0.0
      %v1660 = vmax.f32 %v1628, 0.0
      %v1661 = vmax.f32 %v1629, 0.0
      %v1662 = vmax.f32 %v1630, 0.0
      %v1663 = vmax.f32 %v1631, 0.0
      %v1664 = vmax.f32 %v1632, 0.0
      %v1665 = vmax.f32 %v1633, 0.0
      %v1666 = vmax.f32 %v1634, 0.0
      %v1667 = vmax.f32 %v1635, 0.0
      %v1668 = vmax.f32 %v1636, 0.0
      %v1669 = vmax.f32 %v1637, 0.0
      %v1670 = vmax.f32 %v1638, 0.0
      %v1671 = vmax.f32 %v1639, 0.0
      %v1672 = vmax.f32 %v1640, 0.0
      %v1673 = vrsqrt.pop %v1641
      %v1674 = vmul.f32 %v1673, %v1641
      %v1675 = vmul.f32 %v1674, %v1673
      %v1676 = vmul.f32 0.5, %v1675
      %v1677 = vsub.f32 1.5, %v1676
      %v1678 = vmul.f32 %v1673, %v1677
      %v1679 = vmul.f32 %v1641, %v1678
      %vm1680 = vcmp.eq.f32.partialorder %v1641, inf
      %v1681 = vsel %vm1680, %v1641, %v1679
      %vm1682 = vcmp.eq.f32.partialorder %v1641, 0.0
      %v1683 = vand.u32 %v1641, 2147483648
      %v1684 = vsel %vm1682, %v1683, %v1681
      %v1685 = vrsqrt.pop %v1642
      %v1686 = vmul.f32 %v1685, %v1642
      %v1687 = vmul.f32 %v1686, %v1685
      %v1688 = vmul.f32 0.5, %v1687
      %v1689 = vsub.f32 1.5, %v1688
      %v1690 = vmul.f32 %v1685, %v1689
      %v1691 = vmul.f32 %v1642, %v1690
      %vm1692 = vcmp.eq.f32.partialorder %v1642, inf
      %v1693 = vsel %vm1692, %v1642, %v1691
      %vm1694 = vcmp.eq.f32.partialorder %v1642, 0.0
      %v1695 = vand.u32 %v1642, 2147483648
      %v1696 = vsel %vm1694, %v1695, %v1693
      %v1697 = vrsqrt.pop %v1643
      %v1698 = vmul.f32 %v1697, %v1643
      %v1699 = vmul.f32 %v1698, %v1697
      %v1700 = vmul.f32 0.5, %v1699
      %v1701 = vsub.f32 1.5, %v1700
      %v1702 = vmul.f32 %v1697, %v1701
      %v1703 = vmul.f32 %v1643, %v1702
      %vm1704 = vcmp.eq.f32.partialorder %v1643, inf
      %v1705 = vsel %vm1704, %v1643, %v1703
      %vm1706 = vcmp.eq.f32.partialorder %v1643, 0.0
      %v1707 = vand.u32 %v1643, 2147483648
      %v1708 = vsel %vm1706, %v1707, %v1705
      %v1709 = vrsqrt.pop %v1644
      %v1710 = vmul.f32 %v1709, %v1644
      %v1711 = vmul.f32 %v1710, %v1709
      %v1712 = vmul.f32 0.5, %v1711
      %v1713 = vsub.f32 1.5, %v1712
      %v1714 = vmul.f32 %v1709, %v1713
      %v1715 = vmul.f32 %v1644, %v1714
      %vm1716 = vcmp.eq.f32.partialorder %v1644, inf
      %v1717 = vsel %vm1716, %v1644, %v1715
      %vm1718 = vcmp.eq.f32.partialorder %v1644, 0.0
      %v1719 = vand.u32 %v1644, 2147483648
      %v1720 = vsel %vm1718, %v1719, %v1717
      %v1721 = vrsqrt.pop %v1645
      %v1722 = vmul.f32 %v1721, %v1645
      %v1723 = vmul.f32 %v1722, %v1721
      %v1724 = vmul.f32 0.5, %v1723
      %v1725 = vsub.f32 1.5, %v1724
      %v1726 = vmul.f32 %v1721, %v1725
      %v1727 = vmul.f32 %v1645, %v1726
      %vm1728 = vcmp.eq.f32.partialorder %v1645, inf
      %v1729 = vsel %vm1728, %v1645, %v1727
      %vm1730 = vcmp.eq.f32.partialorder %v1645, 0.0
      %v1731 = vand.u32 %v1645, 2147483648
      %v1732 = vsel %vm1730, %v1731, %v1729
      %v1733 = vrsqrt.pop %v1646
      %v1734 = vmul.f32 %v1733, %v1646
      %v1735 = vmul.f32 %v1734, %v1733
      %v1736 = vmul.f32 0.5, %v1735
      %v1737 = vsub.f32 1.5, %v1736
      %v1738 = vmul.f32 %v1733, %v1737
      %v1739 = vmul.f32 %v1646, %v1738
      %vm1740 = vcmp.eq.f32.partialorder %v1646, inf
      %v1741 = vsel %vm1740, %v1646, %v1739
      %vm1742 = vcmp.eq.f32.partialorder %v1646, 0.0
      %v1743 = vand.u32 %v1646, 2147483648
      %v1744 = vsel %vm1742, %v1743, %v1741
      %v1745 = vrsqrt.pop %v1647
      %v1746 = vmul.f32 %v1745, %v1647
      %v1747 = vmul.f32 %v1746, %v1745
      %v1748 = vmul.f32 0.5, %v1747
      %v1749 = vsub.f32 1.5, %v1748
      %v1750 = vmul.f32 %v1745, %v1749
      %v1751 = vmul.f32 %v1647, %v1750
      %vm1752 = vcmp.eq.f32.partialorder %v1647, inf
      %v1753 = vsel %vm1752, %v1647, %v1751
      %vm1754 = vcmp.eq.f32.partialorder %v1647, 0.0
      %v1755 = vand.u32 %v1647, 2147483648
      %v1756 = vsel %vm1754, %v1755, %v1753
      %v1757 = vrsqrt.pop %v1648
      %v1758 = vmul.f32 %v1757, %v1648
      %v1759 = vmul.f32 %v1758, %v1757
      %v1760 = vmul.f32 0.5, %v1759
      %v1761 = vsub.f32 1.5, %v1760
      %v1762 = vmul.f32 %v1757, %v1761
      %v1763 = vmul.f32 %v1648, %v1762
      %vm1764 = vcmp.eq.f32.partialorder %v1648, inf
      %v1765 = vsel %vm1764, %v1648, %v1763
      %vm1766 = vcmp.eq.f32.partialorder %v1648, 0.0
      %v1767 = vand.u32 %v1648, 2147483648
      %v1768 = vsel %vm1766, %v1767, %v1765
      %v1769 = vrsqrt.pop %v1649
      %v1770 = vmul.f32 %v1769, %v1649
      %v1771 = vmul.f32 %v1770, %v1769
      %v1772 = vmul.f32 0.5, %v1771
      %v1773 = vsub.f32 1.5, %v1772
      %v1774 = vmul.f32 %v1769, %v1773
      %v1775 = vmul.f32 %v1649, %v1774
      %vm1776 = vcmp.eq.f32.partialorder %v1649, inf
      %v1777 = vsel %vm1776, %v1649, %v1775
      %vm1778 = vcmp.eq.f32.partialorder %v1649, 0.0
      %v1779 = vand.u32 %v1649, 2147483648
      %v1780 = vsel %vm1778, %v1779, %v1777
      %v1781 = vrsqrt.pop %v1650
      %v1782 = vmul.f32 %v1781, %v1650
      %v1783 = vmul.f32 %v1782, %v1781
      %v1784 = vmul.f32 0.5, %v1783
      %v1785 = vsub.f32 1.5, %v1784
      %v1786 = vmul.f32 %v1781, %v1785
      %v1787 = vmul.f32 %v1650, %v1786
      %vm1788 = vcmp.eq.f32.partialorder %v1650, inf
      %v1789 = vsel %vm1788, %v1650, %v1787
      %vm1790 = vcmp.eq.f32.partialorder %v1650, 0.0
      %v1791 = vand.u32 %v1650, 2147483648
      %v1792 = vsel %vm1790, %v1791, %v1789
      %v1793 = vrsqrt.pop %v1651
      %v1794 = vmul.f32 %v1793, %v1651
      %v1795 = vmul.f32 %v1794, %v1793
      %v1796 = vmul.f32 0.5, %v1795
      %v1797 = vsub.f32 1.5, %v1796
      %v1798 = vmul.f32 %v1793, %v1797
      %v1799 = vmul.f32 %v1651, %v1798
      %vm1800 = vcmp.eq.f32.partialorder %v1651, inf
      %v1801 = vsel %vm1800, %v1651, %v1799
      %vm1802 = vcmp.eq.f32.partialorder %v1651, 0.0
      %v1803 = vand.u32 %v1651, 2147483648
      %v1804 = vsel %vm1802, %v1803, %v1801
      %v1805 = vrsqrt.pop %v1652
      %v1806 = vmul.f32 %v1805, %v1652
      %v1807 = vmul.f32 %v1806, %v1805
      %v1808 = vmul.f32 0.5, %v1807
      %v1809 = vsub.f32 1.5, %v1808
      %v1810 = vmul.f32 %v1805, %v1809
      %v1811 = vmul.f32 %v1652, %v1810
      %vm1812 = vcmp.eq.f32.partialorder %v1652, inf
      %v1813 = vsel %vm1812, %v1652, %v1811
      %vm1814 = vcmp.eq.f32.partialorder %v1652, 0.0
      %v1815 = vand.u32 %v1652, 2147483648
      %v1816 = vsel %vm1814, %v1815, %v1813
      %v1817 = vrsqrt.pop %v1653
      %v1818 = vmul.f32 %v1817, %v1653
      %v1819 = vmul.f32 %v1818, %v1817
      %v1820 = vmul.f32 0.5, %v1819
      %v1821 = vsub.f32 1.5, %v1820
      %v1822 = vmul.f32 %v1817, %v1821
      %v1823 = vmul.f32 %v1653, %v1822
      %vm1824 = vcmp.eq.f32.partialorder %v1653, inf
      %v1825 = vsel %vm1824, %v1653, %v1823
      %vm1826 = vcmp.eq.f32.partialorder %v1653, 0.0
      %v1827 = vand.u32 %v1653, 2147483648
      %v1828 = vsel %vm1826, %v1827, %v1825
      %v1829 = vrsqrt.pop %v1654
      %v1830 = vmul.f32 %v1829, %v1654
      %v1831 = vmul.f32 %v1830, %v1829
      %v1832 = vmul.f32 0.5, %v1831
      %v1833 = vsub.f32 1.5, %v1832
      %v1834 = vmul.f32 %v1829, %v1833
      %v1835 = vmul.f32 %v1654, %v1834
      %vm1836 = vcmp.eq.f32.partialorder %v1654, inf
      %v1837 = vsel %vm1836, %v1654, %v1835
      %vm1838 = vcmp.eq.f32.partialorder %v1654, 0.0
      %v1839 = vand.u32 %v1654, 2147483648
      %v1840 = vsel %vm1838, %v1839, %v1837
      %v1841 = vrsqrt.pop %v1655
      %v1842 = vmul.f32 %v1841, %v1655
      %v1843 = vmul.f32 %v1842, %v1841
      %v1844 = vmul.f32 0.5, %v1843
      %v1845 = vsub.f32 1.5, %v1844
      %v1846 = vmul.f32 %v1841, %v1845
      %v1847 = vmul.f32 %v1655, %v1846
      %vm1848 = vcmp.eq.f32.partialorder %v1655, inf
      %v1849 = vsel %vm1848, %v1655, %v1847
      %vm1850 = vcmp.eq.f32.partialorder %v1655, 0.0
      %v1851 = vand.u32 %v1655, 2147483648
      %v1852 = vsel %vm1850, %v1851, %v1849
      %v1853 = vrsqrt.pop %v1656
      %v1854 = vmul.f32 %v1853, %v1656
      %v1855 = vmul.f32 %v1854, %v1853
      %v1856 = vmul.f32 0.5, %v1855
      %v1857 = vsub.f32 1.5, %v1856
      %v1858 = vmul.f32 %v1853, %v1857
      %v1859 = vmul.f32 %v1656, %v1858
      %vm1860 = vcmp.eq.f32.partialorder %v1656, inf
      %v1861 = vsel %vm1860, %v1656, %v1859
      %vm1862 = vcmp.eq.f32.partialorder %v1656, 0.0
      %v1863 = vand.u32 %v1656, 2147483648
      %v1864 = vsel %vm1862, %v1863, %v1861
      %v1865 = vrsqrt.pop %v1657
      %v1866 = vmul.f32 %v1865, %v1657
      %v1867 = vmul.f32 %v1866, %v1865
      %v1868 = vmul.f32 0.5, %v1867
      %v1869 = vsub.f32 1.5, %v1868
      %v1870 = vmul.f32 %v1865, %v1869
      %v1871 = vmul.f32 %v1657, %v1870
      %vm1872 = vcmp.eq.f32.partialorder %v1657, inf
      %v1873 = vsel %vm1872, %v1657, %v1871
      %vm1874 = vcmp.eq.f32.partialorder %v1657, 0.0
      %v1875 = vand.u32 %v1657, 2147483648
      %v1876 = vsel %vm1874, %v1875, %v1873
      %v1877 = vrsqrt.pop %v1658
      %v1878 = vmul.f32 %v1877, %v1658
      %v1879 = vmul.f32 %v1878, %v1877
      %v1880 = vmul.f32 0.5, %v1879
      %v1881 = vsub.f32 1.5, %v1880
      %v1882 = vmul.f32 %v1877, %v1881
      %v1883 = vmul.f32 %v1658, %v1882
      %vm1884 = vcmp.eq.f32.partialorder %v1658, inf
      %v1885 = vsel %vm1884, %v1658, %v1883
      %vm1886 = vcmp.eq.f32.partialorder %v1658, 0.0
      %v1887 = vand.u32 %v1658, 2147483648
      %v1888 = vsel %vm1886, %v1887, %v1885
      %v1889 = vrsqrt.pop %v1659
      %v1890 = vmul.f32 %v1889, %v1659
      %v1891 = vmul.f32 %v1890, %v1889
      %v1892 = vmul.f32 0.5, %v1891
      %v1893 = vsub.f32 1.5, %v1892
      %v1894 = vmul.f32 %v1889, %v1893
      %v1895 = vmul.f32 %v1659, %v1894
      %vm1896 = vcmp.eq.f32.partialorder %v1659, inf
      %v1897 = vsel %vm1896, %v1659, %v1895
      %vm1898 = vcmp.eq.f32.partialorder %v1659, 0.0
      %v1899 = vand.u32 %v1659, 2147483648
      %v1900 = vsel %vm1898, %v1899, %v1897
      %v1901 = vrsqrt.pop %v1660
      %v1902 = vmul.f32 %v1901, %v1660
      %v1903 = vmul.f32 %v1902, %v1901
      %v1904 = vmul.f32 0.5, %v1903
      %v1905 = vsub.f32 1.5, %v1904
      %v1906 = vmul.f32 %v1901, %v1905
      %v1907 = vmul.f32 %v1660, %v1906
      %vm1908 = vcmp.eq.f32.partialorder %v1660, inf
      %v1909 = vsel %vm1908, %v1660, %v1907
      %vm1910 = vcmp.eq.f32.partialorder %v1660, 0.0
      %v1911 = vand.u32 %v1660, 2147483648
      %v1912 = vsel %vm1910, %v1911, %v1909
      %v1913 = vrsqrt.pop %v1661
      %v1914 = vmul.f32 %v1913, %v1661
      %v1915 = vmul.f32 %v1914, %v1913
      %v1916 = vmul.f32 0.5, %v1915
      %v1917 = vsub.f32 1.5, %v1916
      %v1918 = vmul.f32 %v1913, %v1917
      %v1919 = vmul.f32 %v1661, %v1918
      %vm1920 = vcmp.eq.f32.partialorder %v1661, inf
      %v1921 = vsel %vm1920, %v1661, %v1919
      %vm1922 = vcmp.eq.f32.partialorder %v1661, 0.0
      %v1923 = vand.u32 %v1661, 2147483648
      %v1924 = vsel %vm1922, %v1923, %v1921
      %v1925 = vrsqrt.pop %v1662
      %v1926 = vmul.f32 %v1925, %v1662
      %v1927 = vmul.f32 %v1926, %v1925
      %v1928 = vmul.f32 0.5, %v1927
      %v1929 = vsub.f32 1.5, %v1928
      %v1930 = vmul.f32 %v1925, %v1929
      %v1931 = vmul.f32 %v1662, %v1930
      %vm1932 = vcmp.eq.f32.partialorder %v1662, inf
      %v1933 = vsel %vm1932, %v1662, %v1931
      %vm1934 = vcmp.eq.f32.partialorder %v1662, 0.0
      %v1935 = vand.u32 %v1662, 2147483648
      %v1936 = vsel %vm1934, %v1935, %v1933
      %v1937 = vrsqrt.pop %v1663
      %v1938 = vmul.f32 %v1937, %v1663
      %v1939 = vmul.f32 %v1938, %v1937
      %v1940 = vmul.f32 0.5, %v1939
      %v1941 = vsub.f32 1.5, %v1940
      %v1942 = vmul.f32 %v1937, %v1941
      %v1943 = vmul.f32 %v1663, %v1942
      %vm1944 = vcmp.eq.f32.partialorder %v1663, inf
      %v1945 = vsel %vm1944, %v1663, %v1943
      %vm1946 = vcmp.eq.f32.partialorder %v1663, 0.0
      %v1947 = vand.u32 %v1663, 2147483648
      %v1948 = vsel %vm1946, %v1947, %v1945
      %v1949 = vrsqrt.pop %v1664
      %v1950 = vmul.f32 %v1949, %v1664
      %v1951 = vmul.f32 %v1950, %v1949
      %v1952 = vmul.f32 0.5, %v1951
      %v1953 = vsub.f32 1.5, %v1952
      %v1954 = vmul.f32 %v1949, %v1953
      %v1955 = vmul.f32 %v1664, %v1954
      %vm1956 = vcmp.eq.f32.partialorder %v1664, inf
      %v1957 = vsel %vm1956, %v1664, %v1955
      %vm1958 = vcmp.eq.f32.partialorder %v1664, 0.0
      %v1959 = vand.u32 %v1664, 2147483648
      %v1960 = vsel %vm1958, %v1959, %v1957
      %v1961 = vrsqrt.pop %v1665
      %v1962 = vmul.f32 %v1961, %v1665
      %v1963 = vmul.f32 %v1962, %v1961
      %v1964 = vmul.f32 0.5, %v1963
      %v1965 = vsub.f32 1.5, %v1964
      %v1966 = vmul.f32 %v1961, %v1965
      %v1967 = vmul.f32 %v1665, %v1966
      %vm1968 = vcmp.eq.f32.partialorder %v1665, inf
      %v1969 = vsel %vm1968, %v1665, %v1967
      %vm1970 = vcmp.eq.f32.partialorder %v1665, 0.0
      %v1971 = vand.u32 %v1665, 2147483648
      %v1972 = vsel %vm1970, %v1971, %v1969
      %v1973 = vrsqrt.pop %v1666
      %v1974 = vmul.f32 %v1973, %v1666
      %v1975 = vmul.f32 %v1974, %v1973
      %v1976 = vmul.f32 0.5, %v1975
      %v1977 = vsub.f32 1.5, %v1976
      %v1978 = vmul.f32 %v1973, %v1977
      %v1979 = vmul.f32 %v1666, %v1978
      %vm1980 = vcmp.eq.f32.partialorder %v1666, inf
      %v1981 = vsel %vm1980, %v1666, %v1979
      %vm1982 = vcmp.eq.f32.partialorder %v1666, 0.0
      %v1983 = vand.u32 %v1666, 2147483648
      %v1984 = vsel %vm1982, %v1983, %v1981
      %v1985 = vrsqrt.pop %v1667
      %v1986 = vmul.f32 %v1985, %v1667
      %v1987 = vmul.f32 %v1986, %v1985
      %v1988 = vmul.f32 0.5, %v1987
      %v1989 = vsub.f32 1.5, %v1988
      %v1990 = vmul.f32 %v1985, %v1989
      %v1991 = vmul.f32 %v1667, %v1990
      %vm1992 = vcmp.eq.f32.partialorder %v1667, inf
      %v1993 = vsel %vm1992, %v1667, %v1991
      %vm1994 = vcmp.eq.f32.partialorder %v1667, 0.0
      %v1995 = vand.u32 %v1667, 2147483648
      %v1996 = vsel %vm1994, %v1995, %v1993
      %v1997 = vrsqrt.pop %v1668
      %v1998 = vmul.f32 %v1997, %v1668
      %v1999 = vmul.f32 %v1998, %v1997
      %v2000 = vmul.f32 0.5, %v1999
      %v2001 = vsub.f32 1.5, %v2000
      %v2002 = vmul.f32 %v1997, %v2001
      %v2003 = vmul.f32 %v1668, %v2002
      %vm2004 = vcmp.eq.f32.partialorder %v1668, inf
      %v2005 = vsel %vm2004, %v1668, %v2003
      %vm2006 = vcmp.eq.f32.partialorder %v1668, 0.0
      %v2007 = vand.u32 %v1668, 2147483648
      %v2008 = vsel %vm2006, %v2007, %v2005
      %v2009 = vrsqrt.pop %v1669
      %v2010 = vmul.f32 %v2009, %v1669
      %v2011 = vmul.f32 %v2010, %v2009
      %v2012 = vmul.f32 0.5, %v2011
      %v2013 = vsub.f32 1.5, %v2012
      %v2014 = vmul.f32 %v2009, %v2013
      %v2015 = vmul.f32 %v1669, %v2014
      %vm2016 = vcmp.eq.f32.partialorder %v1669, inf
      %v2017 = vsel %vm2016, %v1669, %v2015
      %vm2018 = vcmp.eq.f32.partialorder %v1669, 0.0
      %v2019 = vand.u32 %v1669, 2147483648
      %v2020 = vsel %vm2018, %v2019, %v2017
      %v2021 = vrsqrt.pop %v1670
      %v2022 = vmul.f32 %v2021, %v1670
      %v2023 = vmul.f32 %v2022, %v2021
      %v2024 = vmul.f32 0.5, %v2023
      %v2025 = vsub.f32 1.5, %v2024
      %v2026 = vmul.f32 %v2021, %v2025
      %v2027 = vmul.f32 %v1670, %v2026
      %vm2028 = vcmp.eq.f32.partialorder %v1670, inf
      %v2029 = vsel %vm2028, %v1670, %v2027
      %vm2030 = vcmp.eq.f32.partialorder %v1670, 0.0
      %v2031 = vand.u32 %v1670, 2147483648
      %v2032 = vsel %vm2030, %v2031, %v2029
      %v2033 = vrsqrt.pop %v1671
      %v2034 = vmul.f32 %v2033, %v1671
      %v2035 = vmul.f32 %v2034, %v2033
      %v2036 = vmul.f32 0.5, %v2035
      %v2037 = vsub.f32 1.5, %v2036
      %v2038 = vmul.f32 %v2033, %v2037
      %v2039 = vmul.f32 %v1671, %v2038
      %vm2040 = vcmp.eq.f32.partialorder %v1671, inf
      %v2041 = vsel %vm2040, %v1671, %v2039
      %vm2042 = vcmp.eq.f32.partialorder %v1671, 0.0
      %v2043 = vand.u32 %v1671, 2147483648
      %v2044 = vsel %vm2042, %v2043, %v2041
      %v2045 = vrsqrt.pop %v1672
      %v2046 = vmul.f32 %v2045, %v1672
      %v2047 = vmul.f32 %v2046, %v2045
      %v2048 = vmul.f32 0.5, %v2047
      %v2049 = vsub.f32 1.5, %v2048
      %v2050 = vmul.f32 %v2045, %v2049
      %v2051 = vmul.f32 %v1672, %v2050
      %vm2052 = vcmp.eq.f32.partialorder %v1672, inf
      %v2053 = vsel %vm2052, %v1672, %v2051
      %vm2054 = vcmp.eq.f32.partialorder %v1672, 0.0
      %v2055 = vand.u32 %v1672, 2147483648
      %v2056 = vsel %vm2054, %v2055, %v2053
      %v2057 = vadd.f32 %v1684, 1e-06
      %v2058 = vadd.f32 %v1696, 1e-06
      %v2059 = vadd.f32 %v1708, 1e-06
      %v2060 = vadd.f32 %v1720, 1e-06
      %v2061 = vadd.f32 %v1732, 1e-06
      %v2062 = vadd.f32 %v1744, 1e-06
      %v2063 = vadd.f32 %v1756, 1e-06
      %v2064 = vadd.f32 %v1768, 1e-06
      %v2065 = vadd.f32 %v1780, 1e-06
      %v2066 = vadd.f32 %v1792, 1e-06
      %v2067 = vadd.f32 %v1804, 1e-06
      %v2068 = vadd.f32 %v1816, 1e-06
      %v2069 = vadd.f32 %v1828, 1e-06
      %v2070 = vadd.f32 %v1840, 1e-06
      %v2071 = vadd.f32 %v1852, 1e-06
      %v2072 = vadd.f32 %v1864, 1e-06
      %v2073 = vadd.f32 %v1876, 1e-06
      %v2074 = vadd.f32 %v1888, 1e-06
      %v2075 = vadd.f32 %v1900, 1e-06
      %v2076 = vadd.f32 %v1912, 1e-06
      %v2077 = vadd.f32 %v1924, 1e-06
      %v2078 = vadd.f32 %v1936, 1e-06
      %v2079 = vadd.f32 %v1948, 1e-06
      %v2080 = vadd.f32 %v1960, 1e-06
      %v2081 = vadd.f32 %v1972, 1e-06
      %v2082 = vadd.f32 %v1984, 1e-06
      %v2083 = vadd.f32 %v1996, 1e-06
      %v2084 = vadd.f32 %v2008, 1e-06
      %v2085 = vadd.f32 %v2020, 1e-06
      %v2086 = vadd.f32 %v2032, 1e-06
      %v2087 = vadd.f32 %v2044, 1e-06
      %v2088 = vadd.f32 %v2056, 1e-06
      %v2089 = vrcp.pop %v2057
      %v2090 = vrcp.pop %v2058
      %v2091 = vrcp.pop %v2059
      %v2092 = vrcp.pop %v2060
      %v2093 = vrcp.pop %v2061
      %v2094 = vrcp.pop %v2062
      %v2095 = vrcp.pop %v2063
      %v2096 = vrcp.pop %v2064
      %v2097 = vrcp.pop %v2065
      %v2098 = vrcp.pop %v2066
      %v2099 = vrcp.pop %v2067
      %v2100 = vrcp.pop %v2068
      %v2101 = vrcp.pop %v2069
      %v2102 = vrcp.pop %v2070
      %v2103 = vrcp.pop %v2071
      %v2104 = vrcp.pop %v2072
      %v2105 = vrcp.pop %v2073
      %v2106 = vrcp.pop %v2074
      %v2107 = vrcp.pop %v2075
      %v2108 = vrcp.pop %v2076
      %v2109 = vrcp.pop %v2077
      %v2110 = vrcp.pop %v2078
      %v2111 = vrcp.pop %v2079
      %v2112 = vrcp.pop %v2080
      %v2113 = vrcp.pop %v2081
      %v2114 = vrcp.pop %v2082
      %v2115 = vrcp.pop %v2083
      %v2116 = vrcp.pop %v2084
      %v2117 = vrcp.pop %v2085
      %v2118 = vrcp.pop %v2086
      %v2119 = vrcp.pop %v2087
      %v2120 = vrcp.pop %v2088
      %v2121 = vsub.f32 %v1319, %v1417
      %v2122 = vsub.f32 %v1320, %v1418
      %v2123 = vsub.f32 %v1321, %v1419
      %v2124 = vsub.f32 %v1322, %v1420
      %v2125 = vsub.f32 %v1323, %v1421
      %v2126 = vsub.f32 %v1324, %v1422
      %v2127 = vsub.f32 %v1325, %v1423
      %v2128 = vsub.f32 %v1326, %v1424
      %v2129 = vsub.f32 %v1327, %v1425
      %v2130 = vsub.f32 %v1328, %v1426
      %v2131 = vsub.f32 %v1329, %v1427
      %v2132 = vsub.f32 %v1330, %v1428
      %v2133 = vsub.f32 %v1331, %v1429
      %v2134 = vsub.f32 %v1332, %v1430
      %v2135 = vsub.f32 %v1333, %v1431
      %v2136 = vsub.f32 %v1334, %v1432
      %v2137 = vsub.f32 %v1335, %v1433
      %v2138 = vsub.f32 %v1336, %v1434
      %v2139 = vsub.f32 %v1337, %v1435
      %v2140 = vsub.f32 %v1338, %v1436
      %v2141 = vsub.f32 %v1339, %v1437
      %v2142 = vsub.f32 %v1340, %v1438
      %v2143 = vsub.f32 %v1341, %v1439
      %v2144 = vsub.f32 %v1342, %v1440
      %v2145 = vsub.f32 %v1343, %v1441
      %v2146 = vsub.f32 %v1344, %v1442
      %v2147 = vsub.f32 %v1345, %v1443
      %v2148 = vsub.f32 %v1346, %v1444
      %v2149 = vsub.f32 %v1347, %v1445
      %v2150 = vsub.f32 %v1348, %v1446
      %v2151 = vsub.f32 %v1349, %v1447
      %v2152 = vsub.f32 %v1350, %v1448
      %v2153 = vmul.f32 %v2121, %v2089
      %v2154 = vmul.f32 %v2122, %v2090
      %v2155 = vmul.f32 %v2123, %v2091
      %v2156 = vmul.f32 %v2124, %v2092
      %v2157 = vmul.f32 %v2125, %v2093
      %v2158 = vmul.f32 %v2126, %v2094
      %v2159 = vmul.f32 %v2127, %v2095
      %v2160 = vmul.f32 %v2128, %v2096
      %v2161 = vmul.f32 %v2129, %v2097
      %v2162 = vmul.f32 %v2130, %v2098
      %v2163 = vmul.f32 %v2131, %v2099
      %v2164 = vmul.f32 %v2132, %v2100
      %v2165 = vmul.f32 %v2133, %v2101
      %v2166 = vmul.f32 %v2134, %v2102
      %v2167 = vmul.f32 %v2135, %v2103
      %v2168 = vmul.f32 %v2136, %v2104
      %v2169 = vmul.f32 %v2137, %v2105
      %v2170 = vmul.f32 %v2138, %v2106
      %v2171 = vmul.f32 %v2139, %v2107
      %v2172 = vmul.f32 %v2140, %v2108
      %v2173 = vmul.f32 %v2141, %v2109
      %v2174 = vmul.f32 %v2142, %v2110
      %v2175 = vmul.f32 %v2143, %v2111
      %v2176 = vmul.f32 %v2144, %v2112
      %v2177 = vmul.f32 %v2145, %v2113
      %v2178 = vmul.f32 %v2146, %v2114
      %v2179 = vmul.f32 %v2147, %v2115
      %v2180 = vmul.f32 %v2148, %v2116
      %v2181 = vmul.f32 %v2149, %v2117
      %v2182 = vmul.f32 %v2150, %v2118
      %v2183 = vmul.f32 %v2151, %v2119
      %v2184 = vmul.f32 %v2152, %v2120
      %v2185 = vperm.slane %v1351, 0
      %v2186 = vmul.f32 %v2153, %v2185
      %v2187 = vmul.f32 %v2154, %v2185
      %v2188 = vmul.f32 %v2155, %v2185
      %v2189 = vmul.f32 %v2156, %v2185
      %v2190 = vmul.f32 %v2157, %v2185
      %v2191 = vmul.f32 %v2158, %v2185
      %v2192 = vmul.f32 %v2159, %v2185
      %v2193 = vmul.f32 %v2160, %v2185
      %v2194 = vmul.f32 %v2161, %v2185
      %v2195 = vmul.f32 %v2162, %v2185
      %v2196 = vmul.f32 %v2163, %v2185
      %v2197 = vmul.f32 %v2164, %v2185
      %v2198 = vmul.f32 %v2165, %v2185
      %v2199 = vmul.f32 %v2166, %v2185
      %v2200 = vmul.f32 %v2167, %v2185
      %v2201 = vmul.f32 %v2168, %v2185
      %v2202 = vmul.f32 %v2169, %v2185
      %v2203 = vmul.f32 %v2170, %v2185
      %v2204 = vmul.f32 %v2171, %v2185
      %v2205 = vmul.f32 %v2172, %v2185
      %v2206 = vmul.f32 %v2173, %v2185
      %v2207 = vmul.f32 %v2174, %v2185
      %v2208 = vmul.f32 %v2175, %v2185
      %v2209 = vmul.f32 %v2176, %v2185
      %v2210 = vmul.f32 %v2177, %v2185
      %v2211 = vmul.f32 %v2178, %v2185
      %v2212 = vmul.f32 %v2179, %v2185
      %v2213 = vmul.f32 %v2180, %v2185
      %v2214 = vmul.f32 %v2181, %v2185
      %v2215 = vmul.f32 %v2182, %v2185
      %v2216 = vmul.f32 %v2183, %v2185
      %v2217 = vmul.f32 %v2184, %v2185
      %v2218 = vperm.slane %v1352, 0
      %v2219 = vadd.f32 %v2186, %v2218
      %v2220 = vadd.f32 %v2187, %v2218
      %v2221 = vadd.f32 %v2188, %v2218
      %v2222 = vadd.f32 %v2189, %v2218
      %v2223 = vadd.f32 %v2190, %v2218
      %v2224 = vadd.f32 %v2191, %v2218
      %v2225 = vadd.f32 %v2192, %v2218
      %v2226 = vadd.f32 %v2193, %v2218
      %v2227 = vadd.f32 %v2194, %v2218
      %v2228 = vadd.f32 %v2195, %v2218
      %v2229 = vadd.f32 %v2196, %v2218
      %v2230 = vadd.f32 %v2197, %v2218
      %v2231 = vadd.f32 %v2198, %v2218
      %v2232 = vadd.f32 %v2199, %v2218
      %v2233 = vadd.f32 %v2200, %v2218
      %v2234 = vadd.f32 %v2201, %v2218
      %v2235 = vadd.f32 %v2202, %v2218
      %v2236 = vadd.f32 %v2203, %v2218
      %v2237 = vadd.f32 %v2204, %v2218
      %v2238 = vadd.f32 %v2205, %v2218
      %v2239 = vadd.f32 %v2206, %v2218
      %v2240 = vadd.f32 %v2207, %v2218
      %v2241 = vadd.f32 %v2208, %v2218
      %v2242 = vadd.f32 %v2209, %v2218
      %v2243 = vadd.f32 %v2210, %v2218
      %v2244 = vadd.f32 %v2211, %v2218
      %v2245 = vadd.f32 %v2212, %v2218
      %v2246 = vadd.f32 %v2213, %v2218
      %v2247 = vadd.f32 %v2214, %v2218
      %v2248 = vadd.f32 %v2215, %v2218
      %v2249 = vadd.f32 %v2216, %v2218
      %v2250 = vadd.f32 %v2217, %v2218
      %v2251 = vpack.c.bf16 %v2219, %v2219
      %v2252 = vpack.c.bf16 %v2220, %v2220
      %v2253 = vpack.c.bf16 %v2221, %v2221
      %v2254 = vpack.c.bf16 %v2222, %v2222
      %v2255 = vpack.c.bf16 %v2223, %v2223
      %v2256 = vpack.c.bf16 %v2224, %v2224
      %v2257 = vpack.c.bf16 %v2225, %v2225
      %v2258 = vpack.c.bf16 %v2226, %v2226
      %v2259 = vpack.c.bf16 %v2227, %v2227
      %v2260 = vpack.c.bf16 %v2228, %v2228
      %v2261 = vpack.c.bf16 %v2229, %v2229
      %v2262 = vpack.c.bf16 %v2230, %v2230
      %v2263 = vpack.c.bf16 %v2231, %v2231
      %v2264 = vpack.c.bf16 %v2232, %v2232
      %v2265 = vpack.c.bf16 %v2233, %v2233
      %v2266 = vpack.c.bf16 %v2234, %v2234
      %v2267 = vpack.c.bf16 %v2235, %v2235
      %v2268 = vpack.c.bf16 %v2236, %v2236
      %v2269 = vpack.c.bf16 %v2237, %v2237
      %v2270 = vpack.c.bf16 %v2238, %v2238
      %v2271 = vpack.c.bf16 %v2239, %v2239
      %v2272 = vpack.c.bf16 %v2240, %v2240
      %v2273 = vpack.c.bf16 %v2241, %v2241
      %v2274 = vpack.c.bf16 %v2242, %v2242
      %v2275 = vpack.c.bf16 %v2243, %v2243
      %v2276 = vpack.c.bf16 %v2244, %v2244
      %v2277 = vpack.c.bf16 %v2245, %v2245
      %v2278 = vpack.c.bf16 %v2246, %v2246
      %v2279 = vpack.c.bf16 %v2247, %v2247
      %v2280 = vpack.c.bf16 %v2248, %v2248
      %v2281 = vpack.c.bf16 %v2249, %v2249
      %v2282 = vpack.c.bf16 %v2250, %v2250
      %2283 = vst [vmem:[%s172] sm:$0xf] %v2251
      %2284 = vst [vmem:[%s172 + $0x4] sm:$0xf] %v2252
      %2285 = vst [vmem:[%s172 + $0x8] sm:$0xf] %v2253
      %2286 = vst [vmem:[%s172 + $0xc] sm:$0xf] %v2254
      %2287 = vst [vmem:[%s172 + $0x10] sm:$0xf] %v2255
      %2288 = vst [vmem:[%s172 + $0x14] sm:$0xf] %v2256
      %2289 = vst [vmem:[%s172 + $0x18] sm:$0xf] %v2257
      %2290 = vst [vmem:[%s172 + $0x1c] sm:$0xf] %v2258
      %2291 = vst [vmem:[%s172 + $0x20] sm:$0xf] %v2259
      %2292 = vst [vmem:[%s172 + $0x24] sm:$0xf] %v2260
      %2293 = vst [vmem:[%s172 + $0x28] sm:$0xf] %v2261
      %2294 = vst [vmem:[%s172 + $0x2c] sm:$0xf] %v2262
      %2295 = vst [vmem:[%s172 + $0x30] sm:$0xf] %v2263
      %2296 = vst [vmem:[%s172 + $0x34] sm:$0xf] %v2264
      %2297 = vst [vmem:[%s172 + $0x38] sm:$0xf] %v2265
      %2298 = vst [vmem:[%s172 + $0x3c] sm:$0xf] %v2266
      %2299 = vst [vmem:[%s172 + $0x40] sm:$0xf] %v2267
      %2300 = vst [vmem:[%s172 + $0x44] sm:$0xf] %v2268
      %2301 = vst [vmem:[%s172 + $0x48] sm:$0xf] %v2269
      %2302 = vst [vmem:[%s172 + $0x4c] sm:$0xf] %v2270
      %2303 = vst [vmem:[%s172 + $0x50] sm:$0xf] %v2271
      %2304 = vst [vmem:[%s172 + $0x54] sm:$0xf] %v2272
      %2305 = vst [vmem:[%s172 + $0x58] sm:$0xf] %v2273
      %2306 = vst [vmem:[%s172 + $0x5c] sm:$0xf] %v2274
      %2307 = vst [vmem:[%s172 + $0x60] sm:$0xf] %v2275
      %2308 = vst [vmem:[%s172 + $0x64] sm:$0xf] %v2276
      %2309 = vst [vmem:[%s172 + $0x68] sm:$0xf] %v2277
      %2310 = vst [vmem:[%s172 + $0x6c] sm:$0xf] %v2278
      %2311 = vst [vmem:[%s172 + $0x70] sm:$0xf] %v2279
      %2312 = vst [vmem:[%s172 + $0x74] sm:$0xf] %v2280
      %2313 = vst [vmem:[%s172 + $0x78] sm:$0xf] %v2281
      %2314 = vst [vmem:[%s172 + $0x7c] sm:$0xf] %v2282
      %s2315 = smul.u32 32, %s14
      %p2316 = scmp.lt.s32.totalorder %s2315, 63
      %s2317 = scalar_select %p2316, %s2315, 63
      %s2318 = smul.addr %s2317, 4
      %s2319 = scalar_lea.vmem %s3, %s2318
      // Predicated region
      $region33: #{resnet_forward.5} parent=31 // pred_check
        %p2320 = pneg %p100
      $region34: #{resnet_forward.5} parent=31 // pred_check_branch
        %2322 = sbr.rel (%p2320) target = $region36
      $region35: #{resnet_forward.5} parent=31 // pred_region
        %s2323 = smul.u32 32, %s14
      $region36: #{resnet_forward.5} parent=31 // pred_fallthru
        _
    $region32: #{resnet_forward.5} parent=5 // pred_fallthru
      _
    %p2324 = scmp.le.s32.totalorder 2, %s9
    // Predicated region
    $region37: #{resnet_forward.5} parent=5 // pred_check
      %p2325 = pneg %p2324
    $region38: #{resnet_forward.5} parent=5 // pred_check_branch
      %2327 = sbr.rel (%p2325) target = $region40
    $region39: #{resnet_forward.5} parent=5 // pred_region
      %s2328 = ssub.s32 %s9, 2
      // Predicated region
      $region41: #{resnet_forward.5} parent=39 // pred_check
        %p2329 = pneg %p106
      $region42: #{resnet_forward.5} parent=39 // pred_check_branch
        %2331 = sbr.rel (%p2329) target = $region44
      $region43: #{resnet_forward.5} parent=39 // pred_region
        %s2332 = smul.u32 32, %s15
        %p2333 = scmp.lt.s32.totalorder %s2332, 63
        %s2334 = scalar_select %p2333, %s2332, 63
        %s2335 = smul.addr %s2334, 4
        %s2336 = scalar_lea.vmem %s3, %s2335
      $region44: #{resnet_forward.5} parent=39 // pred_fallthru
        _
    $region40: #{resnet_forward.5} parent=5 // pred_fallthru
      _
  $region6: #{resnet_forward.5} parent=0 // loop_footer
    %s13 = sadd.s32 1, %s9
  $region7: #{resnet_forward.5} parent=0 // loop_footer_branch
    %8 = sbr.rel target = $region3
  $region8: #{resnet_forward.5} parent=0 // loop_exit
    _

// kernel: resnet_forward.6
$region0: #{resnet_forward.6}
  #allocation0 [shape = 'u32[]', space=smem, size = 0x4, offset = 0x4, fixed_abs, tag = 'smem constant byte address 0x4 - core index']
  #allocation1 [shape = 'u32[72,128]{1,0:T(1,128)}', space=vmem, size = 0x9000, scoped, tag = 'internal scratch']
  %s0 = inlined_call_operand.vmem [shape: bf16[128,512], index: 0, kind: input, shape index: {}]
  %s1 = inlined_call_operand.vmem [shape: bf16[512,192], index: 1, kind: input, shape index: {}]
  %s2 = inlined_call_operand.vmem [shape: f32[3,192], index: 2, kind: input, shape index: {}]
  %s3 = inlined_call_operand.vmem [shape: bf16[128,192], index: 3, kind: output, shape index: {}]
  %s4 = sld [smem:[#allocation0]]
  $region45: #{resnet_forward.6} parent=0
    _
  %s6 = ssub.s32 1, %s4
  %s7 = scalar_select 0, %s6, %s4
  loop: start=0, step=1, limit=4
  $region2: #{resnet_forward.6} parent=0 // loop_pre_header
    _
  $region3: #{resnet_forward.6} parent=0 // loop_header
    %s9 = sphi 0, %s13
    %p10 = scmp.ge.s32.totalorder %s9, 4
    %s19 = sphi 0, %s21
    %s22 = sphi 0, %s19
    %s23 = sphi 0, %s22
    %s39 = sphi 0, %s23
    %s43 = sphi 0, %s43
    %s45 = sphi 0, %s43
    %s46 = sphi 0, %s45
    %s60 = sphi 0, %s46
    %s64 = sphi 0, %s64
    %s66 = sphi 0, %s64
    %s67 = sphi 0, %s66
    %s81 = sphi 0, %s67
    %s87 = sphi 0, %s89
    %s90 = sphi 0, %s87
    %s91 = sphi 0, %s90
    %s107 = sphi 0, %s91
  $region4: #{resnet_forward.6} parent=0 // loop_header_branch
    %12 = sbr.rel (%p10) target = $region8
  $region5: #{resnet_forward.6} parent=0 // loop_body
    %s14 = ssub.s32 %s9, 1
    %s15 = ssub.s32 %s9, 2
    %s16 = sadd.s32 %s9, 1
    %s17 = ssub.s32 %s9, %s16
    %p18 = scmp.eq.s32.totalorder %s17, 0
    %s20 = sadd.s32 %s19, 1
    %s21 = scalar_select %p18, %s19, %s20
    %p24 = pneg %p18
    %p25 = scmp.eq.s32.totalorder %s9, 1
    %p26 = por %p24, %p25
    %p27 = scmp.ne.s32.totalorder %s19, %s22
    %p28 = scmp.eq.s32.totalorder %s9, 0
    %p29 = por %p27, %p28
    %p30 = scmp.ne.s32.totalorder %s19, %s22
    %p31 = scmp.eq.s32.totalorder %s14, 1
    %p32 = por %p30, %p31
    %p33 = scmp.ne.s32.totalorder %s22, %s23
    %p34 = scmp.eq.s32.totalorder %s14, 0
    %p35 = por %p33, %p34
    %p36 = scmp.ne.s32.totalorder %s22, %s23
    %p37 = scmp.eq.s32.totalorder %s15, 1
    %p38 = por %p36, %p37
    %p40 = scmp.ne.s32.totalorder %s23, %s39
    %p41 = scmp.eq.s32.totalorder %s15, 0
    %p42 = por %p40, %p41
    %s44 = sadd.s32 %s43, 1
    %p47 = scmp.eq.s32.totalorder %s9, 1
    %p48 = scmp.ne.s32.totalorder %s43, %s45
    %p49 = scmp.eq.s32.totalorder %s9, 0
    %p50 = por %p48, %p49
    %p51 = scmp.ne.s32.totalorder %s43, %s45
    %p52 = scmp.eq.s32.totalorder %s14, 1
    %p53 = por %p51, %p52
    %p54 = scmp.ne.s32.totalorder %s45, %s46
    %p55 = scmp.eq.s32.totalorder %s14, 0
    %p56 = por %p54, %p55
    %p57 = scmp.ne.s32.totalorder %s45, %s46
    %p58 = scmp.eq.s32.totalorder %s15, 1
    %p59 = por %p57, %p58
    %p61 = scmp.ne.s32.totalorder %s46, %s60
    %p62 = scmp.eq.s32.totalorder %s15, 0
    %p63 = por %p61, %p62
    %s65 = sadd.s32 %s64, 1
    %p68 = scmp.eq.s32.totalorder %s9, 1
    %p69 = scmp.ne.s32.totalorder %s64, %s66
    %p70 = scmp.eq.s32.totalorder %s9, 0
    %p71 = por %p69, %p70
    %p72 = scmp.ne.s32.totalorder %s64, %s66
    %p73 = scmp.eq.s32.totalorder %s14, 1
    %p74 = por %p72, %p73
    %p75 = scmp.ne.s32.totalorder %s66, %s67
    %p76 = scmp.eq.s32.totalorder %s14, 0
    %p77 = por %p75, %p76
    %p78 = scmp.ne.s32.totalorder %s66, %s67
    %p79 = scmp.eq.s32.totalorder %s15, 1
    %p80 = por %p78, %p79
    %p82 = scmp.ne.s32.totalorder %s67, %s81
    %p83 = scmp.eq.s32.totalorder %s15, 0
    %p84 = por %p82, %p83
    %s85 = ssub.s32 %s9, %s16
    %p86 = scmp.eq.s32.totalorder %s85, 0
    %s88 = sadd.s32 %s87, 1
    %s89 = scalar_select %p86, %s87, %s88
    %p92 = pneg %p86
    %p93 = scmp.eq.s32.totalorder %s9, 1
    %p94 = por %p92, %p93
    %p95 = scmp.ne.s32.totalorder %s87, %s90
    %p96 = scmp.eq.s32.totalorder %s9, 0
    %p97 = por %p95, %p96
    %p98 = scmp.ne.s32.totalorder %s87, %s90
    %p99 = scmp.eq.s32.totalorder %s14, 1
    %p100 = por %p98, %p99
    %p101 = scmp.ne.s32.totalorder %s90, %s91
    %p102 = scmp.eq.s32.totalorder %s14, 0
    %p103 = por %p101, %p102
    %p104 = scmp.ne.s32.totalorder %s90, %s91
    %p105 = scmp.eq.s32.totalorder %s15, 1
    %p106 = por %p104, %p105
    %p108 = scmp.ne.s32.totalorder %s91, %s107
    %p109 = scmp.eq.s32.totalorder %s15, 0
    %p110 = por %p108, %p109
    %p111 = scmp.le.s32.totalorder 1, %s9
    %p112 = scmp.lt.s32.totalorder %s9, 3
    %p113 = pnand %p111, %p112
    %p114 = pneg %p113
    // Predicated region
    $region9: #{resnet_forward.6} parent=5 // pred_check
      _
    $region10: #{resnet_forward.6} parent=5 // pred_check_branch
      %116 = sbr.rel (%p113) target = $region12
    $region11: #{resnet_forward.6} parent=5 // pred_region
      %s117 = ssub.s32 %s9, 1
      // Predicated region
      $region13: #{resnet_forward.6} parent=11 // pred_check
        %p118 = pneg %p56
      $region14: #{resnet_forward.6} parent=11 // pred_check_branch
        %120 = sbr.rel (%p118) target = $region16
      $region15: #{resnet_forward.6} parent=11 // pred_region
        _
      $region16: #{resnet_forward.6} parent=11 // pred_fallthru
        _
      // Predicated region
      $region17: #{resnet_forward.6} parent=11 // pred_check
        %p121 = pneg %p77
      $region18: #{resnet_forward.6} parent=11 // pred_check_branch
        %123 = sbr.rel (%p121) target = $region20
      $region19: #{resnet_forward.6} parent=11 // pred_region
        _
      $region20: #{resnet_forward.6} parent=11 // pred_fallthru
        _
    $region12: #{resnet_forward.6} parent=5 // pred_fallthru
      _
    %p124 = scmp.lt.s32.totalorder %s9, 2
    // Predicated region
    $region21: #{resnet_forward.6} parent=5 // pred_check
      %p125 = pneg %p124
    $region22: #{resnet_forward.6} parent=5 // pred_check_branch
      %127 = sbr.rel (%p125) target = $region24
    $region23: #{resnet_forward.6} parent=5 // pred_region
      // Predicated region
      $region25: #{resnet_forward.6} parent=23 // pred_check
        %p128 = pneg %p29
      $region26: #{resnet_forward.6} parent=23 // pred_check_branch
        %130 = sbr.rel (%p128) target = $region28
      $region27: #{resnet_forward.6} parent=23 // pred_region
        %s131 = smul.u32 8, %s9
        %p132 = scmp.lt.s32.totalorder %s131, 15
        %s133 = scalar_select %p132, %s131, 15
        %s134 = smul.addr %s133, 4
        %s135 = smul.addr %s134, 4
        %s136 = scalar_lea.vmem %s0, %s135
        %s137 = smul.u32 8, %s9
      $region28: #{resnet_forward.6} parent=23 // pred_fallthru
        _
    $region24: #{resnet_forward.6} parent=5 // pred_fallthru
      _
    %p138 = scmp.le.s32.totalorder 1, %s9
    %p139 = scmp.lt.s32.totalorder %s9, 3
    %p140 = pnand %p138, %p139
    %p141 = pneg %p140
    // Predicated region
    $region29: #{resnet_forward.6} parent=5 // pred_check
      _
    $region30: #{resnet_forward.6} parent=5 // pred_check_branch
      %143 = sbr.rel (%p140) target = $region32
    $region31: #{resnet_forward.6} parent=5 // pred_region
      %s144 = ssub.s32 %s9, 1
      %s145 = smul.u32 8, %s14
      %p146 = scmp.lt.s32.totalorder %s145, 15
      %s147 = scalar_select %p146, %s145, 15
      %s148 = smul.addr %s147, 4
      %s149 = smul.addr %s148, 4
      %s150 = scalar_lea.vmem %s0, %s149
      %p151 = pneg %p35
      %p152 = pneg %p32
      %p153 = pneg %p56
      %p154 = pneg %p53
      %p155 = pneg %p77
      %p156 = pneg %p74
      %p157 = pneg %p103
      %p158 = pneg %p100
      %s159 = smul.u32 8, %s14
      %p160 = scmp.lt.s32.totalorder %s159, 15
      %s161 = scalar_select %p160, %s159, 15
      %s162 = smul.addr %s161, 2
      %s163 = smul.addr %s162, 4
      %s164 = scalar_lea.vmem %s3, %s163
      %s165 = smul.u32 8, %s14
      %p166 = scmp.lt.s32.totalorder %s165, 15
      %s167 = scalar_select %p166, %s165, 15
      %s168 = smul.addr %s167, 4
      %s169 = smul.addr %s168, 4
      %s170 = scalar_lea.vmem %s0, %s169
      %s171 = smul.u32 8, %s14
      %s172 = smul.u32 8, %s14
      %p173 = scmp.lt.s32.totalorder %s172, 15
      %s174 = scalar_select %p173, %s172, 15
      %s175 = smul.addr %s174, 2
      %s176 = smul.addr %s175, 4
      %s177 = scalar_lea.vmem %s3, %s176
      %s178 = smul.u32 8, %s14
      %v179 = vld [vmem:[%s170] sm:$0xff]
      %v180 = vld [vmem:[%s170 + $0x8] sm:$0xff]
      %v181 = vld [vmem:[%s170 + $0x10] sm:$0xff]
      %v182 = vld [vmem:[%s170 + $0x18] sm:$0xff]
      %v183 = vld [vmem:[%s170 + $0x20] sm:$0xff]
      %v184 = vld [vmem:[%s170 + $0x28] sm:$0xff]
      %v185 = vld [vmem:[%s170 + $0x30] sm:$0xff]
      %v186 = vld [vmem:[%s170 + $0x38] sm:$0xff]
      %v187 = vld [vmem:[%s170 + $0x40] sm:$0xff]
      %v188 = vld [vmem:[%s170 + $0x48] sm:$0xff]
      %v189 = vld [vmem:[%s170 + $0x50] sm:$0xff]
      %v190 = vld [vmem:[%s170 + $0x58] sm:$0xff]
      %v191 = vld [vmem:[%s170 + $0x60] sm:$0xff]
      %v192 = vld [vmem:[%s170 + $0x68] sm:$0xff]
      %v193 = vld [vmem:[%s170 + $0x70] sm:$0xff]
      %v194 = vld [vmem:[%s170 + $0x78] sm:$0xff]
      %v195 = vld [vmem:[%s1] sm:$0xff]
      %v196 = vld [vmem:[%s1 + $0x8] sm:$0xff]
      %v197 = vld [vmem:[%s1 + $0x10] sm:$0xff]
      %v198 = vld [vmem:[%s1 + $0x18] sm:$0xff]
      %v199 = vld [vmem:[%s1 + $0x20] sm:$0xff]
      %v200 = vld [vmem:[%s1 + $0x28] sm:$0xff]
      %v201 = vld [vmem:[%s1 + $0x30] sm:$0xff]
      %v202 = vld [vmem:[%s1 + $0x38] sm:$0xff]
      %v203 = vld [vmem:[%s1 + $0x40] sm:$0xff]
      %v204 = vld [vmem:[%s1 + $0x48] sm:$0xff]
      %v205 = vld [vmem:[%s1 + $0x50] sm:$0xff]
      %v206 = vld [vmem:[%s1 + $0x58] sm:$0xff]
      %v207 = vld [vmem:[%s1 + $0x60] sm:$0xff]
      %v208 = vld [vmem:[%s1 + $0x68] sm:$0xff]
      %v209 = vld [vmem:[%s1 + $0x70] sm:$0xff]
      %v210 = vld [vmem:[%s1 + $0x78] sm:$0xff]
      %v211 = vld [vmem:[%s1 + $0x80] sm:$0xff]
      %v212 = vld [vmem:[%s1 + $0x88] sm:$0xff]
      %v213 = vld [vmem:[%s1 + $0x90] sm:$0xff]
      %v214 = vld [vmem:[%s1 + $0x98] sm:$0xff]
      %v215 = vld [vmem:[%s1 + $0xa0] sm:$0xff]
      %v216 = vld [vmem:[%s1 + $0xa8] sm:$0xff]
      %v217 = vld [vmem:[%s1 + $0xb0] sm:$0xff]
      %v218 = vld [vmem:[%s1 + $0xb8] sm:$0xff]
      %v219 = vld [vmem:[%s1 + $0xc0] sm:$0xff]
      %v220 = vld [vmem:[%s1 + $0xc8] sm:$0xff]
      %v221 = vld [vmem:[%s1 + $0xd0] sm:$0xff]
      %v222 = vld [vmem:[%s1 + $0xd8] sm:$0xff]
      %v223 = vld [vmem:[%s1 + $0xe0] sm:$0xff]
      %v224 = vld [vmem:[%s1 + $0xe8] sm:$0xff]
      %v225 = vld [vmem:[%s1 + $0xf0] sm:$0xff]
      %v226 = vld [vmem:[%s1 + $0xf8] sm:$0xff]
      %v227 = vld [vmem:[%s1 + $0x100] sm:$0xff]
      %v228 = vld [vmem:[%s1 + $0x108] sm:$0xff]
      %v229 = vld [vmem:[%s1 + $0x110] sm:$0xff]
      %v230 = vld [vmem:[%s1 + $0x118] sm:$0xff]
      %v231 = vld [vmem:[%s1 + $0x120] sm:$0xff]
      %v232 = vld [vmem:[%s1 + $0x128] sm:$0xff]
      %v233 = vld [vmem:[%s1 + $0x130] sm:$0xff]
      %v234 = vld [vmem:[%s1 + $0x138] sm:$0xff]
      %v235 = vld [vmem:[%s1 + $0x140] sm:$0xff]
      %v236 = vld [vmem:[%s1 + $0x148] sm:$0xff]
      %v237 = vld [vmem:[%s1 + $0x150] sm:$0xff]
      %v238 = vld [vmem:[%s1 + $0x158] sm:$0xff]
      %v239 = vld [vmem:[%s1 + $0x160] sm:$0xff]
      %v240 = vld [vmem:[%s1 + $0x168] sm:$0xff]
      %v241 = vld [vmem:[%s1 + $0x170] sm:$0xff]
      %v242 = vld [vmem:[%s1 + $0x178] sm:$0xff]
      %v243 = vld [vmem:[%s1 + $0x180] sm:$0xff]
      %v244 = vld [vmem:[%s1 + $0x188] sm:$0xff]
      %v245 = vld [vmem:[%s1 + $0x190] sm:$0xff]
      %v246 = vld [vmem:[%s1 + $0x198] sm:$0xff]
      %v247 = vld [vmem:[%s1 + $0x1a0] sm:$0xff]
      %v248 = vld [vmem:[%s1 + $0x1a8] sm:$0xff]
      %v249 = vld [vmem:[%s1 + $0x1b0] sm:$0xff]
      %v250 = vld [vmem:[%s1 + $0x1b8] sm:$0xff]
      %v251 = vld [vmem:[%s1 + $0x1c0] sm:$0xff]
      %v252 = vld [vmem:[%s1 + $0x1c8] sm:$0xff]
      %v253 = vld [vmem:[%s1 + $0x1d0] sm:$0xff]
      %v254 = vld [vmem:[%s1 + $0x1d8] sm:$0xff]
      %v255 = vld [vmem:[%s1 + $0x1e0] sm:$0xff]
      %v256 = vld [vmem:[%s1 + $0x1e8] sm:$0xff]
      %v257 = vld [vmem:[%s1 + $0x1f0] sm:$0xff]
      %v258 = vld [vmem:[%s1 + $0x1f8] sm:$0xff]
      %v259 = vld [vmem:[%s2] ss:$4 sm:$0x3]
      %v261 = vperm.slane %v259, 0
      %v262 = vperm.slane %v259, 1
      %v281 = vunpack.c.l.b16 %v179
      %v282 = vunpack.c.h.b16 %v179
      %v283 = vunpack.c.l.b16 %v180
      %v284 = vunpack.c.h.b16 %v180
      %v285 = vunpack.c.l.b16 %v181
      %v286 = vunpack.c.h.b16 %v181
      %v287 = vunpack.c.l.b16 %v182
      %v288 = vunpack.c.h.b16 %v182
      %v289 = vunpack.c.l.b16 %v183
      %v290 = vunpack.c.h.b16 %v183
      %v291 = vunpack.c.l.b16 %v184
      %v292 = vunpack.c.h.b16 %v184
      %v293 = vunpack.c.l.b16 %v185
      %v294 = vunpack.c.h.b16 %v185
      %v295 = vunpack.c.l.b16 %v186
      %v296 = vunpack.c.h.b16 %v186
      %v297 = vunpack.c.l.b16 %v187
      %v298 = vunpack.c.h.b16 %v187
      %v299 = vunpack.c.l.b16 %v188
      %v300 = vunpack.c.h.b16 %v188
      %v301 = vunpack.c.l.b16 %v189
      %v302 = vunpack.c.h.b16 %v189
      %v303 = vunpack.c.l.b16 %v190
      %v304 = vunpack.c.h.b16 %v190
      %v305 = vunpack.c.l.b16 %v191
      %v306 = vunpack.c.h.b16 %v191
      %v307 = vunpack.c.l.b16 %v192
      %v308 = vunpack.c.h.b16 %v192
      %v309 = vunpack.c.l.b16 %v193
      %v310 = vunpack.c.h.b16 %v193
      %v311 = vunpack.c.l.b16 %v194
      %v312 = vunpack.c.h.b16 %v194
      %v313 = vpack.c.b16 %v285, %v281
      %v314 = vpack.c.b16 %v286, %v282
      %v315 = vpack.c.b16 %v287, %v283
      %v316 = vpack.c.b16 %v288, %v284
      %v317 = vpack.c.b16 %v293, %v289
      %v318 = vpack.c.b16 %v294, %v290
      %v319 = vpack.c.b16 %v295, %v291
      %v320 = vpack.c.b16 %v296, %v292
      %v321 = vpack.c.b16 %v301, %v297
      %v322 = vpack.c.b16 %v302, %v298
      %v323 = vpack.c.b16 %v303, %v299
      %v324 = vpack.c.b16 %v304, %v300
      %v325 = vpack.c.b16 %v309, %v305
      %v326 = vpack.c.b16 %v310, %v306
      %v327 = vpack.c.b16 %v311, %v307
      %v328 = vpack.c.b16 %v312, %v308
      %v409 = vunpack.c.l.b16 %v195
      %v410 = vunpack.c.h.b16 %v195
      %v411 = vunpack.c.l.b16 %v196
      %v412 = vunpack.c.h.b16 %v196
      %v413 = vunpack.c.l.b16 %v197
      %v414 = vunpack.c.h.b16 %v197
      %v415 = vunpack.c.l.b16 %v198
      %v416 = vunpack.c.h.b16 %v198
      %v417 = vunpack.c.l.b16 %v199
      %v418 = vunpack.c.h.b16 %v199
      %v419 = vunpack.c.l.b16 %v200
      %v420 = vunpack.c.h.b16 %v200
      %v421 = vunpack.c.l.b16 %v201
      %v422 = vunpack.c.h.b16 %v201
      %v423 = vunpack.c.l.b16 %v202
      %v424 = vunpack.c.h.b16 %v202
      %v425 = vunpack.c.l.b16 %v203
      %v426 = vunpack.c.h.b16 %v203
      %v427 = vunpack.c.l.b16 %v204
      %v428 = vunpack.c.h.b16 %v204
      %v429 = vunpack.c.l.b16 %v205
      %v430 = vunpack.c.h.b16 %v205
      %v431 = vunpack.c.l.b16 %v206
      %v432 = vunpack.c.h.b16 %v206
      %v433 = vunpack.c.l.b16 %v207
      %v434 = vunpack.c.h.b16 %v207
      %v435 = vunpack.c.l.b16 %v208
      %v436 = vunpack.c.h.b16 %v208
      %v437 = vunpack.c.l.b16 %v209
      %v438 = vunpack.c.h.b16 %v209
      %v439 = vunpack.c.l.b16 %v210
      %v440 = vunpack.c.h.b16 %v210
      %v441 = vunpack.c.l.b16 %v211
      %v442 = vunpack.c.h.b16 %v211
      %v443 = vunpack.c.l.b16 %v212
      %v444 = vunpack.c.h.b16 %v212
      %v445 = vunpack.c.l.b16 %v213
      %v446 = vunpack.c.h.b16 %v213
      %v447 = vunpack.c.l.b16 %v214
      %v448 = vunpack.c.h.b16 %v214
      %v449 = vunpack.c.l.b16 %v215
      %v450 = vunpack.c.h.b16 %v215
      %v451 = vunpack.c.l.b16 %v216
      %v452 = vunpack.c.h.b16 %v216
      %v453 = vunpack.c.l.b16 %v217
      %v454 = vunpack.c.h.b16 %v217
      %v455 = vunpack.c.l.b16 %v218
      %v456 = vunpack.c.h.b16 %v218
      %v457 = vunpack.c.l.b16 %v219
      %v458 = vunpack.c.h.b16 %v219
      %v459 = vunpack.c.l.b16 %v220
      %v460 = vunpack.c.h.b16 %v220
      %v461 = vunpack.c.l.b16 %v221
      %v462 = vunpack.c.h.b16 %v221
      %v463 = vunpack.c.l.b16 %v222
      %v464 = vunpack.c.h.b16 %v222
      %v465 = vunpack.c.l.b16 %v223
      %v466 = vunpack.c.h.b16 %v223
      %v467 = vunpack.c.l.b16 %v224
      %v468 = vunpack.c.h.b16 %v224
      %v469 = vunpack.c.l.b16 %v225
      %v470 = vunpack.c.h.b16 %v225
      %v471 = vunpack.c.l.b16 %v226
      %v472 = vunpack.c.h.b16 %v226
      %v473 = vunpack.c.l.b16 %v227
      %v474 = vunpack.c.h.b16 %v227
      %v475 = vunpack.c.l.b16 %v228
      %v476 = vunpack.c.h.b16 %v228
      %v477 = vunpack.c.l.b16 %v229
      %v478 = vunpack.c.h.b16 %v229
      %v479 = vunpack.c.l.b16 %v230
      %v480 = vunpack.c.h.b16 %v230
      %v481 = vunpack.c.l.b16 %v231
      %v482 = vunpack.c.h.b16 %v231
      %v483 = vunpack.c.l.b16 %v232
      %v484 = vunpack.c.h.b16 %v232
      %v485 = vunpack.c.l.b16 %v233
      %v486 = vunpack.c.h.b16 %v233
      %v487 = vunpack.c.l.b16 %v234
      %v488 = vunpack.c.h.b16 %v234
      %v489 = vunpack.c.l.b16 %v235
      %v490 = vunpack.c.h.b16 %v235
      %v491 = vunpack.c.l.b16 %v236
      %v492 = vunpack.c.h.b16 %v236
      %v493 = vunpack.c.l.b16 %v237
      %v494 = vunpack.c.h.b16 %v237
      %v495 = vunpack.c.l.b16 %v238
      %v496 = vunpack.c.h.b16 %v238
      %v497 = vunpack.c.l.b16 %v239
      %v498 = vunpack.c.h.b16 %v239
      %v499 = vunpack.c.l.b16 %v240
      %v500 = vunpack.c.h.b16 %v240
      %v501 = vunpack.c.l.b16 %v241
      %v502 = vunpack.c.h.b16 %v241
      %v503 = vunpack.c.l.b16 %v242
      %v504 = vunpack.c.h.b16 %v242
      %v505 = vunpack.c.l.b16 %v243
      %v506 = vunpack.c.h.b16 %v243
      %v507 = vunpack.c.l.b16 %v244
      %v508 = vunpack.c.h.b16 %v244
      %v509 = vunpack.c.l.b16 %v245
      %v510 = vunpack.c.h.b16 %v245
      %v511 = vunpack.c.l.b16 %v246
      %v512 = vunpack.c.h.b16 %v246
      %v513 = vunpack.c.l.b16 %v247
      %v514 = vunpack.c.h.b16 %v247
      %v515 = vunpack.c.l.b16 %v248
      %v516 = vunpack.c.h.b16 %v248
      %v517 = vunpack.c.l.b16 %v249
      %v518 = vunpack.c.h.b16 %v249
      %v519 = vunpack.c.l.b16 %v250
      %v520 = vunpack.c.h.b16 %v250
      %v521 = vunpack.c.l.b16 %v251
      %v522 = vunpack.c.h.b16 %v251
      %v523 = vunpack.c.l.b16 %v252
      %v524 = vunpack.c.h.b16 %v252
      %v525 = vunpack.c.l.b16 %v253
      %v526 = vunpack.c.h.b16 %v253
      %v527 = vunpack.c.l.b16 %v254
      %v528 = vunpack.c.h.b16 %v254
      %v529 = vunpack.c.l.b16 %v255
      %v530 = vunpack.c.h.b16 %v255
      %v531 = vunpack.c.l.b16 %v256
      %v532 = vunpack.c.h.b16 %v256
      %v533 = vunpack.c.l.b16 %v257
      %v534 = vunpack.c.h.b16 %v257
      %v535 = vunpack.c.l.b16 %v258
      %v536 = vunpack.c.h.b16 %v258
      %v537 = vpack.c.b16 %v411, %v409
      %v538 = vpack.c.b16 %v412, %v410
      %v539 = vpack.c.b16 %v415, %v413
      %v540 = vpack.c.b16 %v416, %v414
      %v541 = vpack.c.b16 %v419, %v417
      %v542 = vpack.c.b16 %v420, %v418
      %v543 = vpack.c.b16 %v423, %v421
      %v544 = vpack.c.b16 %v424, %v422
      %v545 = vpack.c.b16 %v427, %v425
      %v546 = vpack.c.b16 %v428, %v426
      %v547 = vpack.c.b16 %v431, %v429
      %v548 = vpack.c.b16 %v432, %v430
      %v549 = vpack.c.b16 %v435, %v433
      %v550 = vpack.c.b16 %v436, %v434
      %v551 = vpack.c.b16 %v439, %v437
      %v552 = vpack.c.b16 %v440, %v438
      %v553 = vpack.c.b16 %v443, %v441
      %v554 = vpack.c.b16 %v444, %v442
      %v555 = vpack.c.b16 %v447, %v445
      %v556 = vpack.c.b16 %v448, %v446
      %v557 = vpack.c.b16 %v451, %v449
      %v558 = vpack.c.b16 %v452, %v450
      %v559 = vpack.c.b16 %v455, %v453
      %v560 = vpack.c.b16 %v456, %v454
      %v561 = vpack.c.b16 %v459, %v457
      %v562 = vpack.c.b16 %v460, %v458
      %v563 = vpack.c.b16 %v463, %v461
      %v564 = vpack.c.b16 %v464, %v462
      %v565 = vpack.c.b16 %v467, %v465
      %v566 = vpack.c.b16 %v468, %v466
      %v567 = vpack.c.b16 %v471, %v469
      %v568 = vpack.c.b16 %v472, %v470
      %v569 = vpack.c.b16 %v475, %v473
      %v570 = vpack.c.b16 %v476, %v474
      %v571 = vpack.c.b16 %v479, %v477
      %v572 = vpack.c.b16 %v480, %v478
      %v573 = vpack.c.b16 %v483, %v481
      %v574 = vpack.c.b16 %v484, %v482
      %v575 = vpack.c.b16 %v487, %v485
      %v576 = vpack.c.b16 %v488, %v486
      %v577 = vpack.c.b16 %v491, %v489
      %v578 = vpack.c.b16 %v492, %v490
      %v579 = vpack.c.b16 %v495, %v493
      %v580 = vpack.c.b16 %v496, %v494
      %v581 = vpack.c.b16 %v499, %v497
      %v582 = vpack.c.b16 %v500, %v498
      %v583 = vpack.c.b16 %v503, %v501
      %v584 = vpack.c.b16 %v504, %v502
      %v585 = vpack.c.b16 %v507, %v505
      %v586 = vpack.c.b16 %v508, %v506
      %v587 = vpack.c.b16 %v511, %v509
      %v588 = vpack.c.b16 %v512, %v510
      %v589 = vpack.c.b16 %v515, %v513
      %v590 = vpack.c.b16 %v516, %v514
      %v591 = vpack.c.b16 %v519, %v517
      %v592 = vpack.c.b16 %v520, %v518
      %v593 = vpack.c.b16 %v523, %v521
      %v594 = vpack.c.b16 %v524, %v522
      %v595 = vpack.c.b16 %v527, %v525
      %v596 = vpack.c.b16 %v528, %v526
      %v597 = vpack.c.b16 %v531, %v529
      %v598 = vpack.c.b16 %v532, %v530
      %v599 = vpack.c.b16 %v535, %v533
      %v600 = vpack.c.b16 %v536, %v534
      %665 = vmatpush.bf16.msra.mxu0 %v551
      %666 = vmatpush.bf16.msra.mxu0 %v549
      %667 = vmatpush.bf16.msra.mxu0 %v547
      %668 = vmatpush.bf16.msra.mxu0 %v545
      %669 = vmatpush.bf16.msra.mxu0 %v543
      %670 = vmatpush.bf16.msra.mxu0 %v541
      %671 = vmatpush.bf16.msra.mxu0 %v539
      %672 = vmatpush.bf16.msra.mxu0 %v537
      %673 = vmatmul.bf16.gmra.mxu0 %v313
      %v674 = vpop.f32.mrf.mxu0
      %v675 = vadd.f32 %v261, %v674
      %v676 = vpop.f32.mrf.mxu0
      %v677 = vadd.f32 %v261, %v676
      %678 = vmatmul.bf16.gmra.mxu0 %v317
      %v679 = vpop.f32.mrf.mxu0
      %v680 = vadd.f32 %v261, %v679
      %v681 = vpop.f32.mrf.mxu0
      %v682 = vadd.f32 %v261, %v681
      %683 = vmatmul.bf16.gmra.mxu0 %v321
      %v684 = vpop.f32.mrf.mxu0
      %v685 = vadd.f32 %v261, %v684
      %v686 = vpop.f32.mrf.mxu0
      %v687 = vadd.f32 %v261, %v686
      %688 = vmatmul.bf16.gmra.mxu0 %v325
      %v689 = vpop.f32.mrf.mxu0
      %v690 = vadd.f32 %v261, %v689
      %v691 = vpop.f32.mrf.mxu0
      %v692 = vadd.f32 %v261, %v691
      %693 = vdwg.mxu0
      %694 = vmatpush.bf16.msra.mxu0 %v567
      %695 = vmatpush.bf16.msra.mxu0 %v565
      %696 = vmatpush.bf16.msra.mxu0 %v563
      %697 = vmatpush.bf16.msra.mxu0 %v561
      %698 = vmatpush.bf16.msra.mxu0 %v559
      %699 = vmatpush.bf16.msra.mxu0 %v557
      %700 = vmatpush.bf16.msra.mxu0 %v555
      %701 = vmatpush.bf16.msra.mxu0 %v553
      %702 = vmatmul.bf16.gmra.mxu0 %v314
      %v703 = vpop.f32.mrf.mxu0
      %v704 = vadd.f32 %v675, %v703
      %v705 = vpop.f32.mrf.mxu0
      %v706 = vadd.f32 %v677, %v705
      %707 = vmatmul.bf16.gmra.mxu0 %v318
      %v708 = vpop.f32.mrf.mxu0
      %v709 = vadd.f32 %v680, %v708
      %v710 = vpop.f32.mrf.mxu0
      %v711 = vadd.f32 %v682, %v710
      %712 = vmatmul.bf16.gmra.mxu0 %v322
      %v713 = vpop.f32.mrf.mxu0
      %v714 = vadd.f32 %v685, %v713
      %v715 = vpop.f32.mrf.mxu0
      %v716 = vadd.f32 %v687, %v715
      %717 = vmatmul.bf16.gmra.mxu0 %v326
      %v718 = vpop.f32.mrf.mxu0
      %v719 = vadd.f32 %v690, %v718
      %v720 = vpop.f32.mrf.mxu0
      %v721 = vadd.f32 %v692, %v720
      %722 = vdwg.mxu0
      %723 = vmatpush.bf16.msra.mxu0 %v583
      %724 = vmatpush.bf16.msra.mxu0 %v581
      %725 = vmatpush.bf16.msra.mxu0 %v579
      %726 = vmatpush.bf16.msra.mxu0 %v577
      %727 = vmatpush.bf16.msra.mxu0 %v575
      %728 = vmatpush.bf16.msra.mxu0 %v573
      %729 = vmatpush.bf16.msra.mxu0 %v571
      %730 = vmatpush.bf16.msra.mxu0 %v569
      %731 = vmatmul.bf16.gmra.mxu0 %v315
      %v732 = vpop.f32.mrf.mxu0
      %v733 = vadd.f32 %v704, %v732
      %v734 = vpop.f32.mrf.mxu0
      %v735 = vadd.f32 %v706, %v734
      %736 = vmatmul.bf16.gmra.mxu0 %v319
      %v737 = vpop.f32.mrf.mxu0
      %v738 = vadd.f32 %v709, %v737
      %v739 = vpop.f32.mrf.mxu0
      %v740 = vadd.f32 %v711, %v739
      %741 = vmatmul.bf16.gmra.mxu0 %v323
      %v742 = vpop.f32.mrf.mxu0
      %v743 = vadd.f32 %v714, %v742
      %v744 = vpop.f32.mrf.mxu0
      %v745 = vadd.f32 %v716, %v744
      %746 = vmatmul.bf16.gmra.mxu0 %v327
      %v747 = vpop.f32.mrf.mxu0
      %v748 = vadd.f32 %v719, %v747
      %v749 = vpop.f32.mrf.mxu0
      %v750 = vadd.f32 %v721, %v749
      %751 = vdwg.mxu0
      %752 = vmatpush.bf16.msra.mxu0 %v599
      %753 = vmatpush.bf16.msra.mxu0 %v597
      %754 = vmatpush.bf16.msra.mxu0 %v595
      %755 = vmatpush.bf16.msra.mxu0 %v593
      %756 = vmatpush.bf16.msra.mxu0 %v591
      %757 = vmatpush.bf16.msra.mxu0 %v589
      %758 = vmatpush.bf16.msra.mxu0 %v587
      %759 = vmatpush.bf16.msra.mxu0 %v585
      %760 = vmatmul.bf16.gmra.mxu0 %v316
      %v761 = vpop.f32.mrf.mxu0
      %v762 = vadd.f32 %v733, %v761
      %v763 = vpop.f32.mrf.mxu0
      %v764 = vadd.f32 %v735, %v763
      %765 = vmatmul.bf16.gmra.mxu0 %v320
      %v766 = vpop.f32.mrf.mxu0
      %v767 = vadd.f32 %v738, %v766
      %v768 = vpop.f32.mrf.mxu0
      %v769 = vadd.f32 %v740, %v768
      %770 = vmatmul.bf16.gmra.mxu0 %v324
      %v771 = vpop.f32.mrf.mxu0
      %v772 = vadd.f32 %v743, %v771
      %v773 = vpop.f32.mrf.mxu0
      %v774 = vadd.f32 %v745, %v773
      %775 = vmatmul.bf16.gmra.mxu0 %v328
      %v776 = vpop.f32.mrf.mxu0
      %v777 = vadd.f32 %v748, %v776
      %v778 = vpop.f32.mrf.mxu0
      %v779 = vadd.f32 %v750, %v778
      %780 = vdwg.mxu0
      %781 = vmatpush.bf16.msra.mxu0 %v552
      %782 = vmatpush.bf16.msra.mxu0 %v550
      %783 = vmatpush.bf16.msra.mxu0 %v548
      %784 = vmatpush.bf16.msra.mxu0 %v546
      %785 = vmatpush.bf16.msra.mxu0 %v544
      %786 = vmatpush.bf16.msra.mxu0 %v542
      %787 = vmatpush.bf16.msra.mxu0 %v540
      %788 = vmatpush.bf16.msra.mxu0 %v538
      %789 = vmatmul.bf16.gmra.mxu0 %v313
      %v790 = vpop.f32.mrf.mxu0
      %v791 = vadd.f32 %v262, %v790
      %v792 = vpop.f32.mrf.mxu0
      %v793 = vadd.f32 %v262, %v792
      %794 = vmatmul.bf16.gmra.mxu0 %v317
      %v795 = vpop.f32.mrf.mxu0
      %v796 = vadd.f32 %v262, %v795
      %v797 = vpop.f32.mrf.mxu0
      %v798 = vadd.f32 %v262, %v797
      %799 = vmatmul.bf16.gmra.mxu0 %v321
      %v800 = vpop.f32.mrf.mxu0
      %v801 = vadd.f32 %v262, %v800
      %v802 = vpop.f32.mrf.mxu0
      %v803 = vadd.f32 %v262, %v802
      %804 = vmatmul.bf16.gmra.mxu0 %v325
      %v805 = vpop.f32.mrf.mxu0
      %v806 = vadd.f32 %v262, %v805
      %v807 = vpop.f32.mrf.mxu0
      %v808 = vadd.f32 %v262, %v807
      %809 = vdwg.mxu0
      %810 = vmatpush.bf16.msra.mxu0 %v568
      %811 = vmatpush.bf16.msra.mxu0 %v566
      %812 = vmatpush.bf16.msra.mxu0 %v564
      %813 = vmatpush.bf16.msra.mxu0 %v562
      %814 = vmatpush.bf16.msra.mxu0 %v560
      %815 = vmatpush.bf16.msra.mxu0 %v558
      %816 = vmatpush.bf16.msra.mxu0 %v556
      %817 = vmatpush.bf16.msra.mxu0 %v554
      %818 = vmatmul.bf16.gmra.mxu0 %v314
      %v819 = vpop.f32.mrf.mxu0
      %v820 = vadd.f32 %v791, %v819
      %v821 = vpop.f32.mrf.mxu0
      %v822 = vadd.f32 %v793, %v821
      %823 = vmatmul.bf16.gmra.mxu0 %v318
      %v824 = vpop.f32.mrf.mxu0
      %v825 = vadd.f32 %v796, %v824
      %v826 = vpop.f32.mrf.mxu0
      %v827 = vadd.f32 %v798, %v826
      %828 = vmatmul.bf16.gmra.mxu0 %v322
      %v829 = vpop.f32.mrf.mxu0
      %v830 = vadd.f32 %v801, %v829
      %v831 = vpop.f32.mrf.mxu0
      %v832 = vadd.f32 %v803, %v831
      %833 = vmatmul.bf16.gmra.mxu0 %v326
      %v834 = vpop.f32.mrf.mxu0
      %v835 = vadd.f32 %v806, %v834
      %v836 = vpop.f32.mrf.mxu0
      %v837 = vadd.f32 %v808, %v836
      %838 = vdwg.mxu0
      %839 = vmatpush.bf16.msra.mxu0 %v584
      %840 = vmatpush.bf16.msra.mxu0 %v582
      %841 = vmatpush.bf16.msra.mxu0 %v580
      %842 = vmatpush.bf16.msra.mxu0 %v578
      %843 = vmatpush.bf16.msra.mxu0 %v576
      %844 = vmatpush.bf16.msra.mxu0 %v574
      %845 = vmatpush.bf16.msra.mxu0 %v572
      %846 = vmatpush.bf16.msra.mxu0 %v570
      %847 = vmatmul.bf16.gmra.mxu0 %v315
      %v848 = vpop.f32.mrf.mxu0
      %v849 = vadd.f32 %v820, %v848
      %v850 = vpop.f32.mrf.mxu0
      %v851 = vadd.f32 %v822, %v850
      %852 = vmatmul.bf16.gmra.mxu0 %v319
      %v853 = vpop.f32.mrf.mxu0
      %v854 = vadd.f32 %v825, %v853
      %v855 = vpop.f32.mrf.mxu0
      %v856 = vadd.f32 %v827, %v855
      %857 = vmatmul.bf16.gmra.mxu0 %v323
      %v858 = vpop.f32.mrf.mxu0
      %v859 = vadd.f32 %v830, %v858
      %v860 = vpop.f32.mrf.mxu0
      %v861 = vadd.f32 %v832, %v860
      %862 = vmatmul.bf16.gmra.mxu0 %v327
      %v863 = vpop.f32.mrf.mxu0
      %v864 = vadd.f32 %v835, %v863
      %v865 = vpop.f32.mrf.mxu0
      %v866 = vadd.f32 %v837, %v865
      %867 = vdwg.mxu0
      %868 = vmatpush.bf16.msra.mxu0 %v600
      %869 = vmatpush.bf16.msra.mxu0 %v598
      %870 = vmatpush.bf16.msra.mxu0 %v596
      %871 = vmatpush.bf16.msra.mxu0 %v594
      %872 = vmatpush.bf16.msra.mxu0 %v592
      %873 = vmatpush.bf16.msra.mxu0 %v590
      %874 = vmatpush.bf16.msra.mxu0 %v588
      %875 = vmatpush.bf16.msra.mxu0 %v586
      %876 = vmatmul.bf16.gmra.mxu0 %v316
      %v877 = vpop.f32.mrf.mxu0
      %v878 = vadd.f32 %v849, %v877
      %v879 = vpop.f32.mrf.mxu0
      %v880 = vadd.f32 %v851, %v879
      %881 = vmatmul.bf16.gmra.mxu0 %v320
      %v882 = vpop.f32.mrf.mxu0
      %v883 = vadd.f32 %v854, %v882
      %v884 = vpop.f32.mrf.mxu0
      %v885 = vadd.f32 %v856, %v884
      %886 = vmatmul.bf16.gmra.mxu0 %v324
      %v887 = vpop.f32.mrf.mxu0
      %v888 = vadd.f32 %v859, %v887
      %v889 = vpop.f32.mrf.mxu0
      %v890 = vadd.f32 %v861, %v889
      %891 = vmatmul.bf16.gmra.mxu0 %v328
      %v892 = vpop.f32.mrf.mxu0
      %v893 = vadd.f32 %v864, %v892
      %v894 = vpop.f32.mrf.mxu0
      %v895 = vadd.f32 %v866, %v894
      %896 = vdwg.mxu0
      %s897 = scalar_lea.vmem %s2, 1
      %v898 = vld [vmem:[%s897] ss:$4 sm:$0x3]
      %s899 = scalar_lea.vmem %s2, 2
      %v900 = vld [vmem:[%s899] ss:$4 sm:$0x3]
      %vm901 = vcmask 523264
      %v902 = vsel %vm901, %v878, 0.0
      %v903 = vadd.f32 %v762, %v902
      %904 = vadd.xlane.f32.xlu0 %v903
      %v905 = vpop.xlane.xlu0 %904
      %v906 = vsel %vm901, %v880, 0.0
      %v907 = vadd.f32 %v764, %v906
      %908 = vadd.xlane.f32.xlu0 %v907
      %v909 = vpop.xlane.xlu0 %908
      %v910 = vsel %vm901, %v883, 0.0
      %v911 = vadd.f32 %v767, %v910
      %912 = vadd.xlane.f32.xlu0 %v911
      %v913 = vpop.xlane.xlu0 %912
      %v914 = vsel %vm901, %v885, 0.0
      %v915 = vadd.f32 %v769, %v914
      %916 = vadd.xlane.f32.xlu0 %v915
      %v917 = vpop.xlane.xlu0 %916
      %v918 = vsel %vm901, %v888, 0.0
      %v919 = vadd.f32 %v772, %v918
      %920 = vadd.xlane.f32.xlu0 %v919
      %v921 = vpop.xlane.xlu0 %920
      %v922 = vsel %vm901, %v890, 0.0
      %v923 = vadd.f32 %v774, %v922
      %924 = vadd.xlane.f32.xlu0 %v923
      %v925 = vpop.xlane.xlu0 %924
      %v926 = vsel %vm901, %v893, 0.0
      %v927 = vadd.f32 %v777, %v926
      %928 = vadd.xlane.f32.xlu0 %v927
      %v929 = vpop.xlane.xlu0 %928
      %v930 = vsel %vm901, %v895, 0.0
      %v931 = vadd.f32 %v779, %v930
      %932 = vadd.xlane.f32.xlu0 %v931
      %v933 = vpop.xlane.xlu0 %932
      %v934 = vmul.f32 %v905, 0.0052083335
      %v935 = vmul.f32 %v909, 0.0052083335
      %v936 = vmul.f32 %v913, 0.0052083335
      %v937 = vmul.f32 %v917, 0.0052083335
      %v938 = vmul.f32 %v921, 0.0052083335
      %v939 = vmul.f32 %v925, 0.0052083335
      %v940 = vmul.f32 %v929, 0.0052083335
      %v941 = vmul.f32 %v933, 0.0052083335
      %v942 = vmul.f32 %v762, %v762
      %v943 = vmul.f32 %v878, %v878
      %v944 = vmul.f32 %v764, %v764
      %v945 = vmul.f32 %v880, %v880
      %v946 = vmul.f32 %v767, %v767
      %v947 = vmul.f32 %v883, %v883
      %v948 = vmul.f32 %v769, %v769
      %v949 = vmul.f32 %v885, %v885
      %v950 = vmul.f32 %v772, %v772
      %v951 = vmul.f32 %v888, %v888
      %v952 = vmul.f32 %v774, %v774
      %v953 = vmul.f32 %v890, %v890
      %v954 = vmul.f32 %v777, %v777
      %v955 = vmul.f32 %v893, %v893
      %v956 = vmul.f32 %v779, %v779
      %v957 = vmul.f32 %v895, %v895
      %v958 = vsel %vm901, %v943, 0.0
      %v959 = vadd.f32 %v942, %v958
      %960 = vadd.xlane.f32.xlu0 %v959
      %v961 = vpop.xlane.xlu0 %960
      %v962 = vsel %vm901, %v945, 0.0
      %v963 = vadd.f32 %v944, %v962
      %964 = vadd.xlane.f32.xlu0 %v963
      %v965 = vpop.xlane.xlu0 %964
      %v966 = vsel %vm901, %v947, 0.0
      %v967 = vadd.f32 %v946, %v966
      %968 = vadd.xlane.f32.xlu0 %v967
      %v969 = vpop.xlane.xlu0 %968
      %v970 = vsel %vm901, %v949, 0.0
      %v971 = vadd.f32 %v948, %v970
      %972 = vadd.xlane.f32.xlu0 %v971
      %v973 = vpop.xlane.xlu0 %972
      %v974 = vsel %vm901, %v951, 0.0
      %v975 = vadd.f32 %v950, %v974
      %976 = vadd.xlane.f32.xlu0 %v975
      %v977 = vpop.xlane.xlu0 %976
      %v978 = vsel %vm901, %v953, 0.0
      %v979 = vadd.f32 %v952, %v978
      %980 = vadd.xlane.f32.xlu0 %v979
      %v981 = vpop.xlane.xlu0 %980
      %v982 = vsel %vm901, %v955, 0.0
      %v983 = vadd.f32 %v954, %v982
      %984 = vadd.xlane.f32.xlu0 %v983
      %v985 = vpop.xlane.xlu0 %984
      %v986 = vsel %vm901, %v957, 0.0
      %v987 = vadd.f32 %v956, %v986
      %988 = vadd.xlane.f32.xlu0 %v987
      %v989 = vpop.xlane.xlu0 %988
      %v990 = vmul.f32 %v961, 0.0052083335
      %v991 = vmul.f32 %v965, 0.0052083335
      %v992 = vmul.f32 %v969, 0.0052083335
      %v993 = vmul.f32 %v973, 0.0052083335
      %v994 = vmul.f32 %v977, 0.0052083335
      %v995 = vmul.f32 %v981, 0.0052083335
      %v996 = vmul.f32 %v985, 0.0052083335
      %v997 = vmul.f32 %v989, 0.0052083335
      %v998 = vmul.f32 %v934, %v934
      %v999 = vmul.f32 %v935, %v935
      %v1000 = vmul.f32 %v936, %v936
      %v1001 = vmul.f32 %v937, %v937
      %v1002 = vmul.f32 %v938, %v938
      %v1003 = vmul.f32 %v939, %v939
      %v1004 = vmul.f32 %v940, %v940
      %v1005 = vmul.f32 %v941, %v941
      %v1006 = vsub.f32 %v990, %v998
      %v1007 = vsub.f32 %v991, %v999
      %v1008 = vsub.f32 %v992, %v1000
      %v1009 = vsub.f32 %v993, %v1001
      %v1010 = vsub.f32 %v994, %v1002
      %v1011 = vsub.f32 %v995, %v1003
      %v1012 = vsub.f32 %v996, %v1004
      %v1013 = vsub.f32 %v997, %v1005
      %v1014 = vmax.f32 %v1006, 0.0
      %v1015 = vmax.f32 %v1007, 0.0
      %v1016 = vmax.f32 %v1008, 0.0
      %v1017 = vmax.f32 %v1009, 0.0
      %v1018 = vmax.f32 %v1010, 0.0
      %v1019 = vmax.f32 %v1011, 0.0
      %v1020 = vmax.f32 %v1012, 0.0
      %v1021 = vmax.f32 %v1013, 0.0
      %v1022 = vrsqrt.pop %v1014
      %v1023 = vmul.f32 %v1022, %v1014
      %v1024 = vmul.f32 %v1023, %v1022
      %v1025 = vmul.f32 0.5, %v1024
      %v1026 = vsub.f32 1.5, %v1025
      %v1027 = vmul.f32 %v1022, %v1026
      %v1028 = vmul.f32 %v1014, %v1027
      %vm1029 = vcmp.eq.f32.partialorder %v1014, inf
      %v1030 = vsel %vm1029, %v1014, %v1028
      %vm1031 = vcmp.eq.f32.partialorder %v1014, 0.0
      %v1032 = vand.u32 %v1014, 2147483648
      %v1033 = vsel %vm1031, %v1032, %v1030
      %v1034 = vrsqrt.pop %v1015
      %v1035 = vmul.f32 %v1034, %v1015
      %v1036 = vmul.f32 %v1035, %v1034
      %v1037 = vmul.f32 0.5, %v1036
      %v1038 = vsub.f32 1.5, %v1037
      %v1039 = vmul.f32 %v1034, %v1038
      %v1040 = vmul.f32 %v1015, %v1039
      %vm1041 = vcmp.eq.f32.partialorder %v1015, inf
      %v1042 = vsel %vm1041, %v1015, %v1040
      %vm1043 = vcmp.eq.f32.partialorder %v1015, 0.0
      %v1044 = vand.u32 %v1015, 2147483648
      %v1045 = vsel %vm1043, %v1044, %v1042
      %v1046 = vrsqrt.pop %v1016
      %v1047 = vmul.f32 %v1046, %v1016
      %v1048 = vmul.f32 %v1047, %v1046
      %v1049 = vmul.f32 0.5, %v1048
      %v1050 = vsub.f32 1.5, %v1049
      %v1051 = vmul.f32 %v1046, %v1050
      %v1052 = vmul.f32 %v1016, %v1051
      %vm1053 = vcmp.eq.f32.partialorder %v1016, inf
      %v1054 = vsel %vm1053, %v1016, %v1052
      %vm1055 = vcmp.eq.f32.partialorder %v1016, 0.0
      %v1056 = vand.u32 %v1016, 2147483648
      %v1057 = vsel %vm1055, %v1056, %v1054
      %v1058 = vrsqrt.pop %v1017
      %v1059 = vmul.f32 %v1058, %v1017
      %v1060 = vmul.f32 %v1059, %v1058
      %v1061 = vmul.f32 0.5, %v1060
      %v1062 = vsub.f32 1.5, %v1061
      %v1063 = vmul.f32 %v1058, %v1062
      %v1064 = vmul.f32 %v1017, %v1063
      %vm1065 = vcmp.eq.f32.partialorder %v1017, inf
      %v1066 = vsel %vm1065, %v1017, %v1064
      %vm1067 = vcmp.eq.f32.partialorder %v1017, 0.0
      %v1068 = vand.u32 %v1017, 2147483648
      %v1069 = vsel %vm1067, %v1068, %v1066
      %v1070 = vrsqrt.pop %v1018
      %v1071 = vmul.f32 %v1070, %v1018
      %v1072 = vmul.f32 %v1071, %v1070
      %v1073 = vmul.f32 0.5, %v1072
      %v1074 = vsub.f32 1.5, %v1073
      %v1075 = vmul.f32 %v1070, %v1074
      %v1076 = vmul.f32 %v1018, %v1075
      %vm1077 = vcmp.eq.f32.partialorder %v1018, inf
      %v1078 = vsel %vm1077, %v1018, %v1076
      %vm1079 = vcmp.eq.f32.partialorder %v1018, 0.0
      %v1080 = vand.u32 %v1018, 2147483648
      %v1081 = vsel %vm1079, %v1080, %v1078
      %v1082 = vrsqrt.pop %v1019
      %v1083 = vmul.f32 %v1082, %v1019
      %v1084 = vmul.f32 %v1083, %v1082
      %v1085 = vmul.f32 0.5, %v1084
      %v1086 = vsub.f32 1.5, %v1085
      %v1087 = vmul.f32 %v1082, %v1086
      %v1088 = vmul.f32 %v1019, %v1087
      %vm1089 = vcmp.eq.f32.partialorder %v1019, inf
      %v1090 = vsel %vm1089, %v1019, %v1088
      %vm1091 = vcmp.eq.f32.partialorder %v1019, 0.0
      %v1092 = vand.u32 %v1019, 2147483648
      %v1093 = vsel %vm1091, %v1092, %v1090
      %v1094 = vrsqrt.pop %v1020
      %v1095 = vmul.f32 %v1094, %v1020
      %v1096 = vmul.f32 %v1095, %v1094
      %v1097 = vmul.f32 0.5, %v1096
      %v1098 = vsub.f32 1.5, %v1097
      %v1099 = vmul.f32 %v1094, %v1098
      %v1100 = vmul.f32 %v1020, %v1099
      %vm1101 = vcmp.eq.f32.partialorder %v1020, inf
      %v1102 = vsel %vm1101, %v1020, %v1100
      %vm1103 = vcmp.eq.f32.partialorder %v1020, 0.0
      %v1104 = vand.u32 %v1020, 2147483648
      %v1105 = vsel %vm1103, %v1104, %v1102
      %v1106 = vrsqrt.pop %v1021
      %v1107 = vmul.f32 %v1106, %v1021
      %v1108 = vmul.f32 %v1107, %v1106
      %v1109 = vmul.f32 0.5, %v1108
      %v1110 = vsub.f32 1.5, %v1109
      %v1111 = vmul.f32 %v1106, %v1110
      %v1112 = vmul.f32 %v1021, %v1111
      %vm1113 = vcmp.eq.f32.partialorder %v1021, inf
      %v1114 = vsel %vm1113, %v1021, %v1112
      %vm1115 = vcmp.eq.f32.partialorder %v1021, 0.0
      %v1116 = vand.u32 %v1021, 2147483648
      %v1117 = vsel %vm1115, %v1116, %v1114
      %v1118 = vadd.f32 %v1033, 1e-06
      %v1119 = vadd.f32 %v1045, 1e-06
      %v1120 = vadd.f32 %v1057, 1e-06
      %v1121 = vadd.f32 %v1069, 1e-06
      %v1122 = vadd.f32 %v1081, 1e-06
      %v1123 = vadd.f32 %v1093, 1e-06
      %v1124 = vadd.f32 %v1105, 1e-06
      %v1125 = vadd.f32 %v1117, 1e-06
      %v1126 = vrcp.pop %v1118
      %v1127 = vrcp.pop %v1119
      %v1128 = vrcp.pop %v1120
      %v1129 = vrcp.pop %v1121
      %v1130 = vrcp.pop %v1122
      %v1131 = vrcp.pop %v1123
      %v1132 = vrcp.pop %v1124
      %v1133 = vrcp.pop %v1125
      %v1134 = vsub.f32 %v762, %v934
      %v1135 = vsub.f32 %v878, %v934
      %v1136 = vsub.f32 %v764, %v935
      %v1137 = vsub.f32 %v880, %v935
      %v1138 = vsub.f32 %v767, %v936
      %v1139 = vsub.f32 %v883, %v936
      %v1140 = vsub.f32 %v769, %v937
      %v1141 = vsub.f32 %v885, %v937
      %v1142 = vsub.f32 %v772, %v938
      %v1143 = vsub.f32 %v888, %v938
      %v1144 = vsub.f32 %v774, %v939
      %v1145 = vsub.f32 %v890, %v939
      %v1146 = vsub.f32 %v777, %v940
      %v1147 = vsub.f32 %v893, %v940
      %v1148 = vsub.f32 %v779, %v941
      %v1149 = vsub.f32 %v895, %v941
      %v1150 = vmul.f32 %v1134, %v1126
      %v1151 = vmul.f32 %v1135, %v1126
      %v1152 = vmul.f32 %v1136, %v1127
      %v1153 = vmul.f32 %v1137, %v1127
      %v1154 = vmul.f32 %v1138, %v1128
      %v1155 = vmul.f32 %v1139, %v1128
      %v1156 = vmul.f32 %v1140, %v1129
      %v1157 = vmul.f32 %v1141, %v1129
      %v1158 = vmul.f32 %v1142, %v1130
      %v1159 = vmul.f32 %v1143, %v1130
      %v1160 = vmul.f32 %v1144, %v1131
      %v1161 = vmul.f32 %v1145, %v1131
      %v1162 = vmul.f32 %v1146, %v1132
      %v1163 = vmul.f32 %v1147, %v1132
      %v1164 = vmul.f32 %v1148, %v1133
      %v1165 = vmul.f32 %v1149, %v1133
      %v1167 = vperm.slane %v898, 0
      %v1168 = vperm.slane %v898, 1
      %v1171 = vmul.f32 %v1150, %v1167
      %v1172 = vmul.f32 %v1151, %v1168
      %v1173 = vmul.f32 %v1152, %v1167
      %v1174 = vmul.f32 %v1153, %v1168
      %v1175 = vmul.f32 %v1154, %v1167
      %v1176 = vmul.f32 %v1155, %v1168
      %v1177 = vmul.f32 %v1156, %v1167
      %v1178 = vmul.f32 %v1157, %v1168
      %v1179 = vmul.f32 %v1158, %v1167
      %v1180 = vmul.f32 %v1159, %v1168
      %v1181 = vmul.f32 %v1160, %v1167
      %v1182 = vmul.f32 %v1161, %v1168
      %v1183 = vmul.f32 %v1162, %v1167
      %v1184 = vmul.f32 %v1163, %v1168
      %v1185 = vmul.f32 %v1164, %v1167
      %v1186 = vmul.f32 %v1165, %v1168
      %v1188 = vperm.slane %v900, 0
      %v1189 = vperm.slane %v900, 1
      %v1192 = vadd.f32 %v1171, %v1188
      %v1193 = vadd.f32 %v1172, %v1189
      %v1194 = vadd.f32 %v1173, %v1188
      %v1195 = vadd.f32 %v1174, %v1189
      %v1196 = vadd.f32 %v1175, %v1188
      %v1197 = vadd.f32 %v1176, %v1189
      %v1198 = vadd.f32 %v1177, %v1188
      %v1199 = vadd.f32 %v1178, %v1189
      %v1200 = vadd.f32 %v1179, %v1188
      %v1201 = vadd.f32 %v1180, %v1189
      %v1202 = vadd.f32 %v1181, %v1188
      %v1203 = vadd.f32 %v1182, %v1189
      %v1204 = vadd.f32 %v1183, %v1188
      %v1205 = vadd.f32 %v1184, %v1189
      %v1206 = vadd.f32 %v1185, %v1188
      %v1207 = vadd.f32 %v1186, %v1189
      %v1208 = vpack.c.bf16 %v1193, %v1192
      %v1209 = vpack.c.bf16 %v1195, %v1194
      %v1210 = vpack.c.bf16 %v1197, %v1196
      %v1211 = vpack.c.bf16 %v1199, %v1198
      %v1212 = vpack.c.bf16 %v1201, %v1200
      %v1213 = vpack.c.bf16 %v1203, %v1202
      %v1214 = vpack.c.bf16 %v1205, %v1204
      %v1215 = vpack.c.bf16 %v1207, %v1206
      %vm1216 = vcmask 1043456
      %vm1217 = vcmask 523268
      %vm1218 = vmor %vm1217, %vm1216
      %1219 = vst.msk [vmem:[%s177] sm:$0xff] %vm1218, %v1208
      %1220 = vst.msk [vmem:[%s177 + $0x8] sm:$0xff] %vm1218, %v1209
      %1221 = vst.msk [vmem:[%s177 + $0x10] sm:$0xff] %vm1218, %v1210
      %1222 = vst.msk [vmem:[%s177 + $0x18] sm:$0xff] %vm1218, %v1211
      %1223 = vst.msk [vmem:[%s177 + $0x20] sm:$0xff] %vm1218, %v1212
      %1224 = vst.msk [vmem:[%s177 + $0x28] sm:$0xff] %vm1218, %v1213
      %1225 = vst.msk [vmem:[%s177 + $0x30] sm:$0xff] %vm1218, %v1214
      %1226 = vst.msk [vmem:[%s177 + $0x38] sm:$0xff] %vm1218, %v1215
      %s1227 = smul.u32 8, %s14
      %p1228 = scmp.lt.s32.totalorder %s1227, 15
      %s1229 = scalar_select %p1228, %s1227, 15
      %s1230 = smul.addr %s1229, 2
      %s1231 = smul.addr %s1230, 4
      %s1232 = scalar_lea.vmem %s3, %s1231
      // Predicated region
      $region33: #{resnet_forward.6} parent=31 // pred_check
        %p1233 = pneg %p100
      $region34: #{resnet_forward.6} parent=31 // pred_check_branch
        %1235 = sbr.rel (%p1233) target = $region36
      $region35: #{resnet_forward.6} parent=31 // pred_region
        %s1236 = smul.u32 8, %s14
      $region36: #{resnet_forward.6} parent=31 // pred_fallthru
        _
    $region32: #{resnet_forward.6} parent=5 // pred_fallthru
      _
    %p1237 = scmp.le.s32.totalorder 2, %s9
    // Predicated region
    $region37: #{resnet_forward.6} parent=5 // pred_check
      %p1238 = pneg %p1237
    $region38: #{resnet_forward.6} parent=5 // pred_check_branch
      %1240 = sbr.rel (%p1238) target = $region40
    $region39: #{resnet_forward.6} parent=5 // pred_region
      %s1241 = ssub.s32 %s9, 2
      // Predicated region
      $region41: #{resnet_forward.6} parent=39 // pred_check
        %p1242 = pneg %p106
      $region42: #{resnet_forward.6} parent=39 // pred_check_branch
        %1244 = sbr.rel (%p1242) target = $region44
      $region43: #{resnet_forward.6} parent=39 // pred_region
        %s1245 = smul.u32 8, %s15
        %p1246 = scmp.lt.s32.totalorder %s1245, 15
        %s1247 = scalar_select %p1246, %s1245, 15
        %s1248 = smul.addr %s1247, 2
        %s1249 = smul.addr %s1248, 4
        %s1250 = scalar_lea.vmem %s3, %s1249
      $region44: #{resnet_forward.6} parent=39 // pred_fallthru
        _
    $region40: #{resnet_forward.6} parent=5 // pred_fallthru
      _
  $region6: #{resnet_forward.6} parent=0 // loop_footer
    %s13 = sadd.s32 1, %s9
  $region7: #{resnet_forward.6} parent=0 // loop_footer_branch
    %8 = sbr.rel target = $region3
  $region8: #{resnet_forward.6} parent=0 // loop_exit
    _

// kernel: resnet_forward.7
$region0: #{resnet_forward.7}
  #allocation0 [shape = 'u32[]', space=smem, size = 0x4, offset = 0x4, fixed_abs, tag = 'smem constant byte address 0x4 - core index']
  #allocation1 [shape = 'u32[72,128]{1,0:T(1,128)}', space=vmem, size = 0x9000, scoped, tag = 'internal scratch']
  %s0 = inlined_call_operand.vmem [shape: bf16[32,768], index: 0, kind: input, shape index: {}]
  %s1 = inlined_call_operand.vmem [shape: bf16[768,384], index: 1, kind: input, shape index: {}]
  %s2 = inlined_call_operand.vmem [shape: f32[3,384], index: 2, kind: input, shape index: {}]
  %s3 = inlined_call_operand.vmem [shape: bf16[32,384], index: 3, kind: output, shape index: {}]
  %s4 = sld [smem:[#allocation0]]
  $region45: #{resnet_forward.7} parent=0
    _
  %s6 = ssub.s32 1, %s4
  %s7 = scalar_select 0, %s6, %s4
  loop: start=0, step=1, limit=4
  $region2: #{resnet_forward.7} parent=0 // loop_pre_header
    _
  $region3: #{resnet_forward.7} parent=0 // loop_header
    %s9 = sphi 0, %s13
    %p10 = scmp.ge.s32.totalorder %s9, 4
    %s19 = sphi 0, %s21
    %s22 = sphi 0, %s19
    %s23 = sphi 0, %s22
    %s39 = sphi 0, %s23
    %s43 = sphi 0, %s43
    %s45 = sphi 0, %s43
    %s46 = sphi 0, %s45
    %s60 = sphi 0, %s46
    %s64 = sphi 0, %s64
    %s66 = sphi 0, %s64
    %s67 = sphi 0, %s66
    %s81 = sphi 0, %s67
    %s87 = sphi 0, %s89
    %s90 = sphi 0, %s87
    %s91 = sphi 0, %s90
    %s107 = sphi 0, %s91
  $region4: #{resnet_forward.7} parent=0 // loop_header_branch
    %12 = sbr.rel (%p10) target = $region8
  $region5: #{resnet_forward.7} parent=0 // loop_body
    %s14 = ssub.s32 %s9, 1
    %s15 = ssub.s32 %s9, 2
    %s16 = sadd.s32 %s9, 1
    %s17 = ssub.s32 %s9, %s16
    %p18 = scmp.eq.s32.totalorder %s17, 0
    %s20 = sadd.s32 %s19, 1
    %s21 = scalar_select %p18, %s19, %s20
    %p24 = pneg %p18
    %p25 = scmp.eq.s32.totalorder %s9, 1
    %p26 = por %p24, %p25
    %p27 = scmp.ne.s32.totalorder %s19, %s22
    %p28 = scmp.eq.s32.totalorder %s9, 0
    %p29 = por %p27, %p28
    %p30 = scmp.ne.s32.totalorder %s19, %s22
    %p31 = scmp.eq.s32.totalorder %s14, 1
    %p32 = por %p30, %p31
    %p33 = scmp.ne.s32.totalorder %s22, %s23
    %p34 = scmp.eq.s32.totalorder %s14, 0
    %p35 = por %p33, %p34
    %p36 = scmp.ne.s32.totalorder %s22, %s23
    %p37 = scmp.eq.s32.totalorder %s15, 1
    %p38 = por %p36, %p37
    %p40 = scmp.ne.s32.totalorder %s23, %s39
    %p41 = scmp.eq.s32.totalorder %s15, 0
    %p42 = por %p40, %p41
    %s44 = sadd.s32 %s43, 1
    %p47 = scmp.eq.s32.totalorder %s9, 1
    %p48 = scmp.ne.s32.totalorder %s43, %s45
    %p49 = scmp.eq.s32.totalorder %s9, 0
    %p50 = por %p48, %p49
    %p51 = scmp.ne.s32.totalorder %s43, %s45
    %p52 = scmp.eq.s32.totalorder %s14, 1
    %p53 = por %p51, %p52
    %p54 = scmp.ne.s32.totalorder %s45, %s46
    %p55 = scmp.eq.s32.totalorder %s14, 0
    %p56 = por %p54, %p55
    %p57 = scmp.ne.s32.totalorder %s45, %s46
    %p58 = scmp.eq.s32.totalorder %s15, 1
    %p59 = por %p57, %p58
    %p61 = scmp.ne.s32.totalorder %s46, %s60
    %p62 = scmp.eq.s32.totalorder %s15, 0
    %p63 = por %p61, %p62
    %s65 = sadd.s32 %s64, 1
    %p68 = scmp.eq.s32.totalorder %s9, 1
    %p69 = scmp.ne.s32.totalorder %s64, %s66
    %p70 = scmp.eq.s32.totalorder %s9, 0
    %p71 = por %p69, %p70
    %p72 = scmp.ne.s32.totalorder %s64, %s66
    %p73 = scmp.eq.s32.totalorder %s14, 1
    %p74 = por %p72, %p73
    %p75 = scmp.ne.s32.totalorder %s66, %s67
    %p76 = scmp.eq.s32.totalorder %s14, 0
    %p77 = por %p75, %p76
    %p78 = scmp.ne.s32.totalorder %s66, %s67
    %p79 = scmp.eq.s32.totalorder %s15, 1
    %p80 = por %p78, %p79
    %p82 = scmp.ne.s32.totalorder %s67, %s81
    %p83 = scmp.eq.s32.totalorder %s15, 0
    %p84 = por %p82, %p83
    %s85 = ssub.s32 %s9, %s16
    %p86 = scmp.eq.s32.totalorder %s85, 0
    %s88 = sadd.s32 %s87, 1
    %s89 = scalar_select %p86, %s87, %s88
    %p92 = pneg %p86
    %p93 = scmp.eq.s32.totalorder %s9, 1
    %p94 = por %p92, %p93
    %p95 = scmp.ne.s32.totalorder %s87, %s90
    %p96 = scmp.eq.s32.totalorder %s9, 0
    %p97 = por %p95, %p96
    %p98 = scmp.ne.s32.totalorder %s87, %s90
    %p99 = scmp.eq.s32.totalorder %s14, 1
    %p100 = por %p98, %p99
    %p101 = scmp.ne.s32.totalorder %s90, %s91
    %p102 = scmp.eq.s32.totalorder %s14, 0
    %p103 = por %p101, %p102
    %p104 = scmp.ne.s32.totalorder %s90, %s91
    %p105 = scmp.eq.s32.totalorder %s15, 1
    %p106 = por %p104, %p105
    %p108 = scmp.ne.s32.totalorder %s91, %s107
    %p109 = scmp.eq.s32.totalorder %s15, 0
    %p110 = por %p108, %p109
    %p111 = scmp.le.s32.totalorder 1, %s9
    %p112 = scmp.lt.s32.totalorder %s9, 3
    %p113 = pnand %p111, %p112
    %p114 = pneg %p113
    // Predicated region
    $region9: #{resnet_forward.7} parent=5 // pred_check
      _
    $region10: #{resnet_forward.7} parent=5 // pred_check_branch
      %116 = sbr.rel (%p113) target = $region12
    $region11: #{resnet_forward.7} parent=5 // pred_region
      %s117 = ssub.s32 %s9, 1
      // Predicated region
      $region13: #{resnet_forward.7} parent=11 // pred_check
        %p118 = pneg %p56
      $region14: #{resnet_forward.7} parent=11 // pred_check_branch
        %120 = sbr.rel (%p118) target = $region16
      $region15: #{resnet_forward.7} parent=11 // pred_region
        _
      $region16: #{resnet_forward.7} parent=11 // pred_fallthru
        _
      // Predicated region
      $region17: #{resnet_forward.7} parent=11 // pred_check
        %p121 = pneg %p77
      $region18: #{resnet_forward.7} parent=11 // pred_check_branch
        %123 = sbr.rel (%p121) target = $region20
      $region19: #{resnet_forward.7} parent=11 // pred_region
        _
      $region20: #{resnet_forward.7} parent=11 // pred_fallthru
        _
    $region12: #{resnet_forward.7} parent=5 // pred_fallthru
      _
    %p124 = scmp.lt.s32.totalorder %s9, 2
    // Predicated region
    $region21: #{resnet_forward.7} parent=5 // pred_check
      %p125 = pneg %p124
    $region22: #{resnet_forward.7} parent=5 // pred_check_branch
      %127 = sbr.rel (%p125) target = $region24
    $region23: #{resnet_forward.7} parent=5 // pred_region
      // Predicated region
      $region25: #{resnet_forward.7} parent=23 // pred_check
        %p128 = pneg %p29
      $region26: #{resnet_forward.7} parent=23 // pred_check_branch
        %130 = sbr.rel (%p128) target = $region28
      $region27: #{resnet_forward.7} parent=23 // pred_region
        %s131 = smul.u32 2, %s9
        %p132 = scmp.lt.s32.totalorder %s131, 3
        %s133 = scalar_select %p132, %s131, 3
        %s134 = smul.addr %s133, 6
        %s135 = smul.addr %s134, 4
        %s136 = scalar_lea.vmem %s0, %s135
        %s137 = smul.u32 2, %s9
      $region28: #{resnet_forward.7} parent=23 // pred_fallthru
        _
    $region24: #{resnet_forward.7} parent=5 // pred_fallthru
      _
    %p138 = scmp.le.s32.totalorder 1, %s9
    %p139 = scmp.lt.s32.totalorder %s9, 3
    %p140 = pnand %p138, %p139
    %p141 = pneg %p140
    // Predicated region
    $region29: #{resnet_forward.7} parent=5 // pred_check
      _
    $region30: #{resnet_forward.7} parent=5 // pred_check_branch
      %143 = sbr.rel (%p140) target = $region32
    $region31: #{resnet_forward.7} parent=5 // pred_region
      %s144 = ssub.s32 %s9, 1
      %s145 = smul.u32 2, %s14
      %p146 = scmp.lt.s32.totalorder %s145, 3
      %s147 = scalar_select %p146, %s145, 3
      %s148 = smul.addr %s147, 6
      %s149 = smul.addr %s148, 4
      %s150 = scalar_lea.vmem %s0, %s149
      %p151 = pneg %p35
      %p152 = pneg %p32
      %p153 = pneg %p56
      %p154 = pneg %p53
      %p155 = pneg %p77
      %p156 = pneg %p74
      %p157 = pneg %p103
      %p158 = pneg %p100
      %s159 = smul.u32 2, %s14
      %p160 = scmp.lt.s32.totalorder %s159, 3
      %s161 = scalar_select %p160, %s159, 3
      %s162 = smul.addr %s161, 3
      %s163 = smul.addr %s162, 4
      %s164 = scalar_lea.vmem %s3, %s163
      %s165 = smul.u32 2, %s14
      %p166 = scmp.lt.s32.totalorder %s165, 3
      %s167 = scalar_select %p166, %s165, 3
      %s168 = smul.addr %s167, 6
      %s169 = smul.addr %s168, 4
      %s170 = scalar_lea.vmem %s0, %s169
      %s171 = smul.u32 2, %s14
      %s172 = smul.u32 2, %s14
      %p173 = scmp.lt.s32.totalorder %s172, 3
      %s174 = scalar_select %p173, %s172, 3
      %s175 = smul.addr %s174, 3
      %s176 = smul.addr %s175, 4
      %s177 = scalar_lea.vmem %s3, %s176
      %s178 = smul.u32 2, %s14
      %v179 = vld [vmem:[%s170] sm:$0xff]
      %v180 = vld [vmem:[%s170 + $0x8] sm:$0xff]
      %v181 = vld [vmem:[%s170 + $0x10] sm:$0xff]
      %v182 = vld [vmem:[%s170 + $0x18] sm:$0xff]
      %v183 = vld [vmem:[%s170 + $0x20] sm:$0xff]
      %v184 = vld [vmem:[%s170 + $0x28] sm:$0xff]
      %v185 = vld [vmem:[%s1] sm:$0xff]
      %v186 = vld [vmem:[%s1 + $0x8] sm:$0xf]
      %v187 = vld [vmem:[%s1 + $0xc] sm:$0xff]
      %v188 = vld [vmem:[%s1 + $0x14] sm:$0xf]
      %v189 = vld [vmem:[%s1 + $0x18] sm:$0xff]
      %v190 = vld [vmem:[%s1 + $0x20] sm:$0xf]
      %v191 = vld [vmem:[%s1 + $0x24] sm:$0xff]
      %v192 = vld [vmem:[%s1 + $0x2c] sm:$0xf]
      %v193 = vld [vmem:[%s1 + $0x30] sm:$0xff]
      %v194 = vld [vmem:[%s1 + $0x38] sm:$0xf]
      %v195 = vld [vmem:[%s1 + $0x3c] sm:$0xff]
      %v196 = vld [vmem:[%s1 + $0x44] sm:$0xf]
      %v197 = vld [vmem:[%s1 + $0x48] sm:$0xff]
      %v198 = vld [vmem:[%s1 + $0x50] sm:$0xf]
      %v199 = vld [vmem:[%s1 + $0x54] sm:$0xff]
      %v200 = vld [vmem:[%s1 + $0x5c] sm:$0xf]
      %v201 = vld [vmem:[%s1 + $0x60] sm:$0xff]
      %v202 = vld [vmem:[%s1 + $0x68] sm:$0xf]
      %v203 = vld [vmem:[%s1 + $0x6c] sm:$0xff]
      %v204 = vld [vmem:[%s1 + $0x74] sm:$0xf]
      %v205 = vld [vmem:[%s1 + $0x78] sm:$0xff]
      %v206 = vld [vmem:[%s1 + $0x80] sm:$0xf]
      %v207 = vld [vmem:[%s1 + $0x84] sm:$0xff]
      %v208 = vld [vmem:[%s1 + $0x8c] sm:$0xf]
      %v209 = vld [vmem:[%s1 + $0x90] sm:$0xff]
      %v210 = vld [vmem:[%s1 + $0x98] sm:$0xf]
      %v211 = vld [vmem:[%s1 + $0x9c] sm:$0xff]
      %v212 = vld [vmem:[%s1 + $0xa4] sm:$0xf]
      %v213 = vld [vmem:[%s1 + $0xa8] sm:$0xff]
      %v214 = vld [vmem:[%s1 + $0xb0] sm:$0xf]
      %v215 = vld [vmem:[%s1 + $0xb4] sm:$0xff]
      %v216 = vld [vmem:[%s1 + $0xbc] sm:$0xf]
      %v217 = vld [vmem:[%s1 + $0xc0] sm:$0xff]
      %v218 = vld [vmem:[%s1 + $0xc8] sm:$0xf]
      %v219 = vld [vmem:[%s1 + $0xcc] sm:$0xff]
      %v220 = vld [vmem:[%s1 + $0xd4] sm:$0xf]
      %v221 = vld [vmem:[%s1 + $0xd8] sm:$0xff]
      %v222 = vld [vmem:[%s1 + $0xe0] sm:$0xf]
      %v223 = vld [vmem:[%s1 + $0xe4] sm:$0xff]
      %v224 = vld [vmem:[%s1 + $0xec] sm:$0xf]
      %v225 = vld [vmem:[%s1 + $0xf0] sm:$0xff]
      %v226 = vld [vmem:[%s1 + $0xf8] sm:$0xf]
      %v227 = vld [vmem:[%s1 + $0xfc] sm:$0xff]
      %v228 = vld [vmem:[%s1 + $0x104] sm:$0xf]
      %v229 = vld [vmem:[%s1 + $0x108] sm:$0xff]
      %v230 = vld [vmem:[%s1 + $0x110] sm:$0xf]
      %v231 = vld [vmem:[%s1 + $0x114] sm:$0xff]
      %v232 = vld [vmem:[%s1 + $0x11c] sm:$0xf]
      %v233 = vld [vmem:[%s1 + $0x120] sm:$0xff]
      %v234 = vld [vmem:[%s1 + $0x128] sm:$0xf]
      %v235 = vld [vmem:[%s1 + $0x12c] sm:$0xff]
      %v236 = vld [vmem:[%s1 + $0x134] sm:$0xf]
      %v237 = vld [vmem:[%s1 + $0x138] sm:$0xff]
      %v238 = vld [vmem:[%s1 + $0x140] sm:$0xf]
      %v239 = vld [vmem:[%s1 + $0x144] sm:$0xff]
      %v240 = vld [vmem:[%s1 + $0x14c] sm:$0xf]
      %v241 = vld [vmem:[%s1 + $0x150] sm:$0xff]
      %v242 = vld [vmem:[%s1 + $0x158] sm:$0xf]
      %v243 = vld [vmem:[%s1 + $0x15c] sm:$0xff]
      %v244 = vld [vmem:[%s1 + $0x164] sm:$0xf]
      %v245 = vld [vmem:[%s1 + $0x168] sm:$0xff]
      %v246 = vld [vmem:[%s1 + $0x170] sm:$0xf]
      %v247 = vld [vmem:[%s1 + $0x174] sm:$0xff]
      %v248 = vld [vmem:[%s1 + $0x17c] sm:$0xf]
      %v249 = vld [vmem:[%s1 + $0x180] sm:$0xff]
      %v250 = vld [vmem:[%s1 + $0x188] sm:$0xf]
      %v251 = vld [vmem:[%s1 + $0x18c] sm:$0xff]
      %v252 = vld [vmem:[%s1 + $0x194] sm:$0xf]
      %v253 = vld [vmem:[%s1 + $0x198] sm:$0xff]
      %v254 = vld [vmem:[%s1 + $0x1a0] sm:$0xf]
      %v255 = vld [vmem:[%s1 + $0x1a4] sm:$0xff]
      %v256 = vld [vmem:[%s1 + $0x1ac] sm:$0xf]
      %v257 = vld [vmem:[%s1 + $0x1b0] sm:$0xff]
      %v258 = vld [vmem:[%s1 + $0x1b8] sm:$0xf]
      %v259 = vld [vmem:[%s1 + $0x1bc] sm:$0xff]
      %v260 = vld [vmem:[%s1 + $0x1c4] sm:$0xf]
      %v261 = vld [vmem:[%s1 + $0x1c8] sm:$0xff]
      %v262 = vld [vmem:[%s1 + $0x1d0] sm:$0xf]
      %v263 = vld [vmem:[%s1 + $0x1d4] sm:$0xff]
      %v264 = vld [vmem:[%s1 + $0x1dc] sm:$0xf]
      %v265 = vld [vmem:[%s1 + $0x1e0] sm:$0xff]
      %v266 = vld [vmem:[%s1 + $0x1e8] sm:$0xf]
      %v267 = vld [vmem:[%s1 + $0x1ec] sm:$0xff]
      %v268 = vld [vmem:[%s1 + $0x1f4] sm:$0xf]
      %v269 = vld [vmem:[%s1 + $0x1f8] sm:$0xff]
      %v270 = vld [vmem:[%s1 + $0x200] sm:$0xf]
      %v271 = vld [vmem:[%s1 + $0x204] sm:$0xff]
      %v272 = vld [vmem:[%s1 + $0x20c] sm:$0xf]
      %v273 = vld [vmem:[%s1 + $0x210] sm:$0xff]
      %v274 = vld [vmem:[%s1 + $0x218] sm:$0xf]
      %v275 = vld [vmem:[%s1 + $0x21c] sm:$0xff]
      %v276 = vld [vmem:[%s1 + $0x224] sm:$0xf]
      %v277 = vld [vmem:[%s1 + $0x228] sm:$0xff]
      %v278 = vld [vmem:[%s1 + $0x230] sm:$0xf]
      %v279 = vld [vmem:[%s1 + $0x234] sm:$0xff]
      %v280 = vld [vmem:[%s1 + $0x23c] sm:$0xf]
      %v281 = vld [vmem:[%s1 + $0x240] sm:$0xff]
      %v282 = vld [vmem:[%s1 + $0x248] sm:$0xf]
      %v283 = vld [vmem:[%s1 + $0x24c] sm:$0xff]
      %v284 = vld [vmem:[%s1 + $0x254] sm:$0xf]
      %v285 = vld [vmem:[%s1 + $0x258] sm:$0xff]
      %v286 = vld [vmem:[%s1 + $0x260] sm:$0xf]
      %v287 = vld [vmem:[%s1 + $0x264] sm:$0xff]
      %v288 = vld [vmem:[%s1 + $0x26c] sm:$0xf]
      %v289 = vld [vmem:[%s1 + $0x270] sm:$0xff]
      %v290 = vld [vmem:[%s1 + $0x278] sm:$0xf]
      %v291 = vld [vmem:[%s1 + $0x27c] sm:$0xff]
      %v292 = vld [vmem:[%s1 + $0x284] sm:$0xf]
      %v293 = vld [vmem:[%s1 + $0x288] sm:$0xff]
      %v294 = vld [vmem:[%s1 + $0x290] sm:$0xf]
      %v295 = vld [vmem:[%s1 + $0x294] sm:$0xff]
      %v296 = vld [vmem:[%s1 + $0x29c] sm:$0xf]
      %v297 = vld [vmem:[%s1 + $0x2a0] sm:$0xff]
      %v298 = vld [vmem:[%s1 + $0x2a8] sm:$0xf]
      %v299 = vld [vmem:[%s1 + $0x2ac] sm:$0xff]
      %v300 = vld [vmem:[%s1 + $0x2b4] sm:$0xf]
      %v301 = vld [vmem:[%s1 + $0x2b8] sm:$0xff]
      %v302 = vld [vmem:[%s1 + $0x2c0] sm:$0xf]
      %v303 = vld [vmem:[%s1 + $0x2c4] sm:$0xff]
      %v304 = vld [vmem:[%s1 + $0x2cc] sm:$0xf]
      %v305 = vld [vmem:[%s1 + $0x2d0] sm:$0xff]
      %v306 = vld [vmem:[%s1 + $0x2d8] sm:$0xf]
      %v307 = vld [vmem:[%s1 + $0x2dc] sm:$0xff]
      %v308 = vld [vmem:[%s1 + $0x2e4] sm:$0xf]
      %v309 = vld [vmem:[%s1 + $0x2e8] sm:$0xff]
      %v310 = vld [vmem:[%s1 + $0x2f0] sm:$0xf]
      %v311 = vld [vmem:[%s1 + $0x2f4] sm:$0xff]
      %v312 = vld [vmem:[%s1 + $0x2fc] sm:$0xf]
      %v313 = vld [vmem:[%s1 + $0x300] sm:$0xff]
      %v314 = vld [vmem:[%s1 + $0x308] sm:$0xf]
      %v315 = vld [vmem:[%s1 + $0x30c] sm:$0xff]
      %v316 = vld [vmem:[%s1 + $0x314] sm:$0xf]
      %v317 = vld [vmem:[%s1 + $0x318] sm:$0xff]
      %v318 = vld [vmem:[%s1 + $0x320] sm:$0xf]
      %v319 = vld [vmem:[%s1 + $0x324] sm:$0xff]
      %v320 = vld [vmem:[%s1 + $0x32c] sm:$0xf]
      %v321 = vld [vmem:[%s1 + $0x330] sm:$0xff]
      %v322 = vld [vmem:[%s1 + $0x338] sm:$0xf]
      %v323 = vld [vmem:[%s1 + $0x33c] sm:$0xff]
      %v324 = vld [vmem:[%s1 + $0x344] sm:$0xf]
      %v325 = vld [vmem:[%s1 + $0x348] sm:$0xff]
      %v326 = vld [vmem:[%s1 + $0x350] sm:$0xf]
      %v327 = vld [vmem:[%s1 + $0x354] sm:$0xff]
      %v328 = vld [vmem:[%s1 + $0x35c] sm:$0xf]
      %v329 = vld [vmem:[%s1 + $0x360] sm:$0xff]
      %v330 = vld [vmem:[%s1 + $0x368] sm:$0xf]
      %v331 = vld [vmem:[%s1 + $0x36c] sm:$0xff]
      %v332 = vld [vmem:[%s1 + $0x374] sm:$0xf]
      %v333 = vld [vmem:[%s1 + $0x378] sm:$0xff]
      %v334 = vld [vmem:[%s1 + $0x380] sm:$0xf]
      %v335 = vld [vmem:[%s1 + $0x384] sm:$0xff]
      %v336 = vld [vmem:[%s1 + $0x38c] sm:$0xf]
      %v337 = vld [vmem:[%s1 + $0x390] sm:$0xff]
      %v338 = vld [vmem:[%s1 + $0x398] sm:$0xf]
      %v339 = vld [vmem:[%s1 + $0x39c] sm:$0xff]
      %v340 = vld [vmem:[%s1 + $0x3a4] sm:$0xf]
      %v341 = vld [vmem:[%s1 + $0x3a8] sm:$0xff]
      %v342 = vld [vmem:[%s1 + $0x3b0] sm:$0xf]
      %v343 = vld [vmem:[%s1 + $0x3b4] sm:$0xff]
      %v344 = vld [vmem:[%s1 + $0x3bc] sm:$0xf]
      %v345 = vld [vmem:[%s1 + $0x3c0] sm:$0xff]
      %v346 = vld [vmem:[%s1 + $0x3c8] sm:$0xf]
      %v347 = vld [vmem:[%s1 + $0x3cc] sm:$0xff]
      %v348 = vld [vmem:[%s1 + $0x3d4] sm:$0xf]
      %v349 = vld [vmem:[%s1 + $0x3d8] sm:$0xff]
      %v350 = vld [vmem:[%s1 + $0x3e0] sm:$0xf]
      %v351 = vld [vmem:[%s1 + $0x3e4] sm:$0xff]
      %v352 = vld [vmem:[%s1 + $0x3ec] sm:$0xf]
      %v353 = vld [vmem:[%s1 + $0x3f0] sm:$0xff]
      %v354 = vld [vmem:[%s1 + $0x3f8] sm:$0xf]
      %v355 = vld [vmem:[%s1 + $0x3fc] sm:$0xff]
      %v356 = vld [vmem:[%s1 + $0x404] sm:$0xf]
      %v357 = vld [vmem:[%s1 + $0x408] sm:$0xff]
      %v358 = vld [vmem:[%s1 + $0x410] sm:$0xf]
      %v359 = vld [vmem:[%s1 + $0x414] sm:$0xff]
      %v360 = vld [vmem:[%s1 + $0x41c] sm:$0xf]
      %v361 = vld [vmem:[%s1 + $0x420] sm:$0xff]
      %v362 = vld [vmem:[%s1 + $0x428] sm:$0xf]
      %v363 = vld [vmem:[%s1 + $0x42c] sm:$0xff]
      %v364 = vld [vmem:[%s1 + $0x434] sm:$0xf]
      %v365 = vld [vmem:[%s1 + $0x438] sm:$0xff]
      %v366 = vld [vmem:[%s1 + $0x440] sm:$0xf]
      %v367 = vld [vmem:[%s1 + $0x444] sm:$0xff]
      %v368 = vld [vmem:[%s1 + $0x44c] sm:$0xf]
      %v369 = vld [vmem:[%s1 + $0x450] sm:$0xff]
      %v370 = vld [vmem:[%s1 + $0x458] sm:$0xf]
      %v371 = vld [vmem:[%s1 + $0x45c] sm:$0xff]
      %v372 = vld [vmem:[%s1 + $0x464] sm:$0xf]
      %v373 = vld [vmem:[%s1 + $0x468] sm:$0xff]
      %v374 = vld [vmem:[%s1 + $0x470] sm:$0xf]
      %v375 = vld [vmem:[%s1 + $0x474] sm:$0xff]
      %v376 = vld [vmem:[%s1 + $0x47c] sm:$0xf]
      %v377 = vld [vmem:[%s2] ss:$4 sm:$0x7]
      %v379 = vperm.slane %v377, 0
      %v380 = vperm.slane %v377, 1
      %v381 = vperm.slane %v377, 2
      %v391 = vunpack.c.l.b16 %v179
      %v392 = vunpack.c.h.b16 %v179
      %v393 = vunpack.c.l.b16 %v180
      %v394 = vunpack.c.h.b16 %v180
      %v395 = vunpack.c.l.b16 %v181
      %v396 = vunpack.c.h.b16 %v181
      %v397 = vunpack.c.l.b16 %v182
      %v398 = vunpack.c.h.b16 %v182
      %v399 = vunpack.c.l.b16 %v183
      %v400 = vunpack.c.h.b16 %v183
      %v401 = vunpack.c.l.b16 %v184
      %v402 = vunpack.c.h.b16 %v184
      %v403 = vpack.c.b16 %v397, %v391
      %v404 = vpack.c.b16 %v398, %v392
      %v405 = vpack.c.b16 %v399, %v393
      %v406 = vpack.c.b16 %v400, %v394
      %v407 = vpack.c.b16 %v401, %v395
      %v408 = vpack.c.b16 %v402, %v396
      %v607 = vunpack.c.l.b16 %v185
      %v608 = vunpack.c.h.b16 %v185
      %v609 = vunpack.c.l.b16 %v186
      %v610 = vunpack.c.l.b16 %v187
      %v611 = vunpack.c.h.b16 %v187
      %v612 = vunpack.c.l.b16 %v188
      %v613 = vunpack.c.l.b16 %v189
      %v614 = vunpack.c.h.b16 %v189
      %v615 = vunpack.c.l.b16 %v190
      %v616 = vunpack.c.l.b16 %v191
      %v617 = vunpack.c.h.b16 %v191
      %v618 = vunpack.c.l.b16 %v192
      %v619 = vunpack.c.l.b16 %v193
      %v620 = vunpack.c.h.b16 %v193
      %v621 = vunpack.c.l.b16 %v194
      %v622 = vunpack.c.l.b16 %v195
      %v623 = vunpack.c.h.b16 %v195
      %v624 = vunpack.c.l.b16 %v196
      %v625 = vunpack.c.l.b16 %v197
      %v626 = vunpack.c.h.b16 %v197
      %v627 = vunpack.c.l.b16 %v198
      %v628 = vunpack.c.l.b16 %v199
      %v629 = vunpack.c.h.b16 %v199
      %v630 = vunpack.c.l.b16 %v200
      %v631 = vunpack.c.l.b16 %v201
      %v632 = vunpack.c.h.b16 %v201
      %v633 = vunpack.c.l.b16 %v202
      %v634 = vunpack.c.l.b16 %v203
      %v635 = vunpack.c.h.b16 %v203
      %v636 = vunpack.c.l.b16 %v204
      %v637 = vunpack.c.l.b16 %v205
      %v638 = vunpack.c.h.b16 %v205
      %v639 = vunpack.c.l.b16 %v206
      %v640 = vunpack.c.l.b16 %v207
      %v641 = vunpack.c.h.b16 %v207
      %v642 = vunpack.c.l.b16 %v208
      %v643 = vunpack.c.l.b16 %v209
      %v644 = vunpack.c.h.b16 %v209
      %v645 = vunpack.c.l.b16 %v210
      %v646 = vunpack.c.l.b16 %v211
      %v647 = vunpack.c.h.b16 %v211
      %v648 = vunpack.c.l.b16 %v212
      %v649 = vunpack.c.l.b16 %v213
      %v650 = vunpack.c.h.b16 %v213
      %v651 = vunpack.c.l.b16 %v214
      %v652 = vunpack.c.l.b16 %v215
      %v653 = vunpack.c.h.b16 %v215
      %v654 = vunpack.c.l.b16 %v216
      %v655 = vunpack.c.l.b16 %v217
      %v656 = vunpack.c.h.b16 %v217
      %v657 = vunpack.c.l.b16 %v218
      %v658 = vunpack.c.l.b16 %v219
      %v659 = vunpack.c.h.b16 %v219
      %v660 = vunpack.c.l.b16 %v220
      %v661 = vunpack.c.l.b16 %v221
      %v662 = vunpack.c.h.b16 %v221
      %v663 = vunpack.c.l.b16 %v222
      %v664 = vunpack.c.l.b16 %v223
      %v665 = vunpack.c.h.b16 %v223
      %v666 = vunpack.c.l.b16 %v224
      %v667 = vunpack.c.l.b16 %v225
      %v668 = vunpack.c.h.b16 %v225
      %v669 = vunpack.c.l.b16 %v226
      %v670 = vunpack.c.l.b16 %v227
      %v671 = vunpack.c.h.b16 %v227
      %v672 = vunpack.c.l.b16 %v228
      %v673 = vunpack.c.l.b16 %v229
      %v674 = vunpack.c.h.b16 %v229
      %v675 = vunpack.c.l.b16 %v230
      %v676 = vunpack.c.l.b16 %v231
      %v677 = vunpack.c.h.b16 %v231
      %v678 = vunpack.c.l.b16 %v232
      %v679 = vunpack.c.l.b16 %v233
      %v680 = vunpack.c.h.b16 %v233
      %v681 = vunpack.c.l.b16 %v234
      %v682 = vunpack.c.l.b16 %v235
      %v683 = vunpack.c.h.b16 %v235
      %v684 = vunpack.c.l.b16 %v236
      %v685 = vunpack.c.l.b16 %v237
      %v686 = vunpack.c.h.b16 %v237
      %v687 = vunpack.c.l.b16 %v238
      %v688 = vunpack.c.l.b16 %v239
      %v689 = vunpack.c.h.b16 %v239
      %v690 = vunpack.c.l.b16 %v240
      %v691 = vunpack.c.l.b16 %v241
      %v692 = vunpack.c.h.b16 %v241
      %v693 = vunpack.c.l.b16 %v242
      %v694 = vunpack.c.l.b16 %v243
      %v695 = vunpack.c.h.b16 %v243
      %v696 = vunpack.c.l.b16 %v244
      %v697 = vunpack.c.l.b16 %v245
      %v698 = vunpack.c.h.b16 %v245
      %v699 = vunpack.c.l.b16 %v246
      %v700 = vunpack.c.l.b16 %v247
      %v701 = vunpack.c.h.b16 %v247
      %v702 = vunpack.c.l.b16 %v248
      %v703 = vunpack.c.l.b16 %v249
      %v704 = vunpack.c.h.b16 %v249
      %v705 = vunpack.c.l.b16 %v250
      %v706 = vunpack.c.l.b16 %v251
      %v707 = vunpack.c.h.b16 %v251
      %v708 = vunpack.c.l.b16 %v252
      %v709 = vunpack.c.l.b16 %v253
      %v710 = vunpack.c.h.b16 %v253
      %v711 = vunpack.c.l.b16 %v254
      %v712 = vunpack.c.l.b16 %v255
      %v713 = vunpack.c.h.b16 %v255
      %v714 = vunpack.c.l.b16 %v256
      %v715 = vunpack.c.l.b16 %v257
      %v716 = vunpack.c.h.b16 %v257
      %v717 = vunpack.c.l.b16 %v258
      %v718 = vunpack.c.l.b16 %v259
      %v719 = vunpack.c.h.b16 %v259
      %v720 = vunpack.c.l.b16 %v260
      %v721 = vunpack.c.l.b16 %v261
      %v722 = vunpack.c.h.b16 %v261
      %v723 = vunpack.c.l.b16 %v262
      %v724 = vunpack.c.l.b16 %v263
      %v725 = vunpack.c.h.b16 %v263
      %v726 = vunpack.c.l.b16 %v264
      %v727 = vunpack.c.l.b16 %v265
      %v728 = vunpack.c.h.b16 %v265
      %v729 = vunpack.c.l.b16 %v266
      %v730 = vunpack.c.l.b16 %v267
      %v731 = vunpack.c.h.b16 %v267
      %v732 = vunpack.c.l.b16 %v268
      %v733 = vunpack.c.l.b16 %v269
      %v734 = vunpack.c.h.b16 %v269
      %v735 = vunpack.c.l.b16 %v270
      %v736 = vunpack.c.l.b16 %v271
      %v737 = vunpack.c.h.b16 %v271
      %v738 = vunpack.c.l.b16 %v272
      %v739 = vunpack.c.l.b16 %v273
      %v740 = vunpack.c.h.b16 %v273
      %v741 = vunpack.c.l.b16 %v274
      %v742 = vunpack.c.l.b16 %v275
      %v743 = vunpack.c.h.b16 %v275
      %v744 = vunpack.c.l.b16 %v276
      %v745 = vunpack.c.l.b16 %v277
      %v746 = vunpack.c.h.b16 %v277
      %v747 = vunpack.c.l.b16 %v278
      %v748 = vunpack.c.l.b16 %v279
      %v749 = vunpack.c.h.b16 %v279
      %v750 = vunpack.c.l.b16 %v280
      %v751 = vunpack.c.l.b16 %v281
      %v752 = vunpack.c.h.b16 %v281
      %v753 = vunpack.c.l.b16 %v282
      %v754 = vunpack.c.l.b16 %v283
      %v755 = vunpack.c.h.b16 %v283
      %v756 = vunpack.c.l.b16 %v284
      %v757 = vunpack.c.l.b16 %v285
      %v758 = vunpack.c.h.b16 %v285
      %v759 = vunpack.c.l.b16 %v286
      %v760 = vunpack.c.l.b16 %v287
      %v761 = vunpack.c.h.b16 %v287
      %v762 = vunpack.c.l.b16 %v288
      %v763 = vunpack.c.l.b16 %v289
      %v764 = vunpack.c.h.b16 %v289
      %v765 = vunpack.c.l.b16 %v290
      %v766 = vunpack.c.l.b16 %v291
      %v767 = vunpack.c.h.b16 %v291
      %v768 = vunpack.c.l.b16 %v292
      %v769 = vunpack.c.l.b16 %v293
      %v770 = vunpack.c.h.b16 %v293
      %v771 = vunpack.c.l.b16 %v294
      %v772 = vunpack.c.l.b16 %v295
      %v773 = vunpack.c.h.b16 %v295
      %v774 = vunpack.c.l.b16 %v296
      %v775 = vunpack.c.l.b16 %v297
      %v776 = vunpack.c.h.b16 %v297
      %v777 = vunpack.c.l.b16 %v298
      %v778 = vunpack.c.l.b16 %v299
      %v779 = vunpack.c.h.b16 %v299
      %v780 = vunpack.c.l.b16 %v300
      %v781 = vunpack.c.l.b16 %v301
      %v782 = vunpack.c.h.b16 %v301
      %v783 = vunpack.c.l.b16 %v302
      %v784 = vunpack.c.l.b16 %v303
      %v785 = vunpack.c.h.b16 %v303
      %v786 = vunpack.c.l.b16 %v304
      %v787 = vunpack.c.l.b16 %v305
      %v788 = vunpack.c.h.b16 %v305
      %v789 = vunpack.c.l.b16 %v306
      %v790 = vunpack.c.l.b16 %v307
      %v791 = vunpack.c.h.b16 %v307
      %v792 = vunpack.c.l.b16 %v308
      %v793 = vunpack.c.l.b16 %v309
      %v794 = vunpack.c.h.b16 %v309
      %v795 = vunpack.c.l.b16 %v310
      %v796 = vunpack.c.l.b16 %v311
      %v797 = vunpack.c.h.b16 %v311
      %v798 = vunpack.c.l.b16 %v312
      %v799 = vunpack.c.l.b16 %v313
      %v800 = vunpack.c.h.b16 %v313
      %v801 = vunpack.c.l.b16 %v314
      %v802 = vunpack.c.l.b16 %v315
      %v803 = vunpack.c.h.b16 %v315
      %v804 = vunpack.c.l.b16 %v316
      %v805 = vunpack.c.l.b16 %v317
      %v806 = vunpack.c.h.b16 %v317
      %v807 = vunpack.c.l.b16 %v318
      %v808 = vunpack.c.l.b16 %v319
      %v809 = vunpack.c.h.b16 %v319
      %v810 = vunpack.c.l.b16 %v320
      %v811 = vunpack.c.l.b16 %v321
      %v812 = vunpack.c.h.b16 %v321
      %v813 = vunpack.c.l.b16 %v322
      %v814 = vunpack.c.l.b16 %v323
      %v815 = vunpack.c.h.b16 %v323
      %v816 = vunpack.c.l.b16 %v324
      %v817 = vunpack.c.l.b16 %v325
      %v818 = vunpack.c.h.b16 %v325
      %v819 = vunpack.c.l.b16 %v326
      %v820 = vunpack.c.l.b16 %v327
      %v821 = vunpack.c.h.b16 %v327
      %v822 = vunpack.c.l.b16 %v328
      %v823 = vunpack.c.l.b16 %v329
      %v824 = vunpack.c.h.b16 %v329
      %v825 = vunpack.c.l.b16 %v330
      %v826 = vunpack.c.l.b16 %v331
      %v827 = vunpack.c.h.b16 %v331
      %v828 = vunpack.c.l.b16 %v332
      %v829 = vunpack.c.l.b16 %v333
      %v830 = vunpack.c.h.b16 %v333
      %v831 = vunpack.c.l.b16 %v334
      %v832 = vunpack.c.l.b16 %v335
      %v833 = vunpack.c.h.b16 %v335
      %v834 = vunpack.c.l.b16 %v336
      %v835 = vunpack.c.l.b16 %v337
      %v836 = vunpack.c.h.b16 %v337
      %v837 = vunpack.c.l.b16 %v338
      %v838 = vunpack.c.l.b16 %v339
      %v839 = vunpack.c.h.b16 %v339
      %v840 = vunpack.c.l.b16 %v340
      %v841 = vunpack.c.l.b16 %v341
      %v842 = vunpack.c.h.b16 %v341
      %v843 = vunpack.c.l.b16 %v342
      %v844 = vunpack.c.l.b16 %v343
      %v845 = vunpack.c.h.b16 %v343
      %v846 = vunpack.c.l.b16 %v344
      %v847 = vunpack.c.l.b16 %v345
      %v848 = vunpack.c.h.b16 %v345
      %v849 = vunpack.c.l.b16 %v346
      %v850 = vunpack.c.l.b16 %v347
      %v851 = vunpack.c.h.b16 %v347
      %v852 = vunpack.c.l.b16 %v348
      %v853 = vunpack.c.l.b16 %v349
      %v854 = vunpack.c.h.b16 %v349
      %v855 = vunpack.c.l.b16 %v350
      %v856 = vunpack.c.l.b16 %v351
      %v857 = vunpack.c.h.b16 %v351
      %v858 = vunpack.c.l.b16 %v352
      %v859 = vunpack.c.l.b16 %v353
      %v860 = vunpack.c.h.b16 %v353
      %v861 = vunpack.c.l.b16 %v354
      %v862 = vunpack.c.l.b16 %v355
      %v863 = vunpack.c.h.b16 %v355
      %v864 = vunpack.c.l.b16 %v356
      %v865 = vunpack.c.l.b16 %v357
      %v866 = vunpack.c.h.b16 %v357
      %v867 = vunpack.c.l.b16 %v358
      %v868 = vunpack.c.l.b16 %v359
      %v869 = vunpack.c.h.b16 %v359
      %v870 = vunpack.c.l.b16 %v360
      %v871 = vunpack.c.l.b16 %v361
      %v872 = vunpack.c.h.b16 %v361
      %v873 = vunpack.c.l.b16 %v362
      %v874 = vunpack.c.l.b16 %v363
      %v875 = vunpack.c.h.b16 %v363
      %v876 = vunpack.c.l.b16 %v364
      %v877 = vunpack.c.l.b16 %v365
      %v878 = vunpack.c.h.b16 %v365
      %v879 = vunpack.c.l.b16 %v366
      %v880 = vunpack.c.l.b16 %v367
      %v881 = vunpack.c.h.b16 %v367
      %v882 = vunpack.c.l.b16 %v368
      %v883 = vunpack.c.l.b16 %v369
      %v884 = vunpack.c.h.b16 %v369
      %v885 = vunpack.c.l.b16 %v370
      %v886 = vunpack.c.l.b16 %v371
      %v887 = vunpack.c.h.b16 %v371
      %v888 = vunpack.c.l.b16 %v372
      %v889 = vunpack.c.l.b16 %v373
      %v890 = vunpack.c.h.b16 %v373
      %v891 = vunpack.c.l.b16 %v374
      %v892 = vunpack.c.l.b16 %v375
      %v893 = vunpack.c.h.b16 %v375
      %v894 = vunpack.c.l.b16 %v376
      %v895 = vpack.c.b16 %v610, %v607
      %v896 = vpack.c.b16 %v611, %v608
      %v897 = vpack.c.b16 %v612, %v609
      %v898 = vpack.c.b16 %v616, %v613
      %v899 = vpack.c.b16 %v617, %v614
      %v900 = vpack.c.b16 %v618, %v615
      %v901 = vpack.c.b16 %v622, %v619
      %v902 = vpack.c.b16 %v623, %v620
      %v903 = vpack.c.b16 %v624, %v621
      %v904 = vpack.c.b16 %v628, %v625
      %v905 = vpack.c.b16 %v629, %v626
      %v906 = vpack.c.b16 %v630, %v627
      %v907 = vpack.c.b16 %v634, %v631
      %v908 = vpack.c.b16 %v635, %v632
      %v909 = vpack.c.b16 %v636, %v633
      %v910 = vpack.c.b16 %v640, %v637
      %v911 = vpack.c.b16 %v641, %v638
      %v912 = vpack.c.b16 %v642, %v639
      %v913 = vpack.c.b16 %v646, %v643
      %v914 = vpack.c.b16 %v647, %v644
      %v915 = vpack.c.b16 %v648, %v645
      %v916 = vpack.c.b16 %v652, %v649
      %v917 = vpack.c.b16 %v653, %v650
      %v918 = vpack.c.b16 %v654, %v651
      %v919 = vpack.c.b16 %v658, %v655
      %v920 = vpack.c.b16 %v659, %v656
      %v921 = vpack.c.b16 %v660, %v657
      %v922 = vpack.c.b16 %v664, %v661
      %v923 = vpack.c.b16 %v665, %v662
      %v924 = vpack.c.b16 %v666, %v663
      %v925 = vpack.c.b16 %v670, %v667
      %v926 = vpack.c.b16 %v671, %v668
      %v927 = vpack.c.b16 %v672, %v669
      %v928 = vpack.c.b16 %v676, %v673
      %v929 = vpack.c.b16 %v677, %v674
      %v930 = vpack.c.b16 %v678, %v675
      %v931 = vpack.c.b16 %v682, %v679
      %v932 = vpack.c.b16 %v683, %v680
      %v933 = vpack.c.b16 %v684, %v681
      %v934 = vpack.c.b16 %v688, %v685
      %v935 = vpack.c.b16 %v689, %v686
      %v936 = vpack.c.b16 %v690, %v687
      %v937 = vpack.c.b16 %v694, %v691
      %v938 = vpack.c.b16 %v695, %v692
      %v939 = vpack.c.b16 %v696, %v693
      %v940 = vpack.c.b16 %v700, %v697
      %v941 = vpack.c.b16 %v701, %v698
      %v942 = vpack.c.b16 %v702, %v699
      %v943 = vpack.c.b16 %v706, %v703
      %v944 = vpack.c.b16 %v707, %v704
      %v945 = vpack.c.b16 %v708, %v705
      %v946 = vpack.c.b16 %v712, %v709
      %v947 = vpack.c.b16 %v713, %v710
      %v948 = vpack.c.b16 %v714, %v711
      %v949 = vpack.c.b16 %v718, %v715
      %v950 = vpack.c.b16 %v719, %v716
      %v951 = vpack.c.b16 %v720, %v717
      %v952 = vpack.c.b16 %v724, %v721
      %v953 = vpack.c.b16 %v725, %v722
      %v954 = vpack.c.b16 %v726, %v723
      %v955 = vpack.c.b16 %v730, %v727
      %v956 = vpack.c.b16 %v731, %v728
      %v957 = vpack.c.b16 %v732, %v729
      %v958 = vpack.c.b16 %v736, %v733
      %v959 = vpack.c.b16 %v737, %v734
      %v960 = vpack.c.b16 %v738, %v735
      %v961 = vpack.c.b16 %v742, %v739
      %v962 = vpack.c.b16 %v743, %v740
      %v963 = vpack.c.b16 %v744, %v741
      %v964 = vpack.c.b16 %v748, %v745
      %v965 = vpack.c.b16 %v749, %v746
      %v966 = vpack.c.b16 %v750, %v747
      %v967 = vpack.c.b16 %v754, %v751
      %v968 = vpack.c.b16 %v755, %v752
      %v969 = vpack.c.b16 %v756, %v753
      %v970 = vpack.c.b16 %v760, %v757
      %v971 = vpack.c.b16 %v761, %v758
      %v972 = vpack.c.b16 %v762, %v759
      %v973 = vpack.c.b16 %v766, %v763
      %v974 = vpack.c.b16 %v767, %v764
      %v975 = vpack.c.b16 %v768, %v765
      %v976 = vpack.c.b16 %v772, %v769
      %v977 = vpack.c.b16 %v773, %v770
      %v978 = vpack.c.b16 %v774, %v771
      %v979 = vpack.c.b16 %v778, %v775
      %v980 = vpack.c.b16 %v779, %v776
      %v981 = vpack.c.b16 %v780, %v777
      %v982 = vpack.c.b16 %v784, %v781
      %v983 = vpack.c.b16 %v785, %v782
      %v984 = vpack.c.b16 %v786, %v783
      %v985 = vpack.c.b16 %v790, %v787
      %v986 = vpack.c.b16 %v791, %v788
      %v987 = vpack.c.b16 %v792, %v789
      %v988 = vpack.c.b16 %v796, %v793
      %v989 = vpack.c.b16 %v797, %v794
      %v990 = vpack.c.b16 %v798, %v795
      %v991 = vpack.c.b16 %v802, %v799
      %v992 = vpack.c.b16 %v803, %v800
      %v993 = vpack.c.b16 %v804, %v801
      %v994 = vpack.c.b16 %v808, %v805
      %v995 = vpack.c.b16 %v809, %v806
      %v996 = vpack.c.b16 %v810, %v807
      %v997 = vpack.c.b16 %v814, %v811
      %v998 = vpack.c.b16 %v815, %v812
      %v999 = vpack.c.b16 %v816, %v813
      %v1000 = vpack.c.b16 %v820, %v817
      %v1001 = vpack.c.b16 %v821, %v818
      %v1002 = vpack.c.b16 %v822, %v819
      %v1003 = vpack.c.b16 %v826, %v823
      %v1004 = vpack.c.b16 %v827, %v824
      %v1005 = vpack.c.b16 %v828, %v825
      %v1006 = vpack.c.b16 %v832, %v829
      %v1007 = vpack.c.b16 %v833, %v830
      %v1008 = vpack.c.b16 %v834, %v831
      %v1009 = vpack.c.b16 %v838, %v835
      %v1010 = vpack.c.b16 %v839, %v836
      %v1011 = vpack.c.b16 %v840, %v837
      %v1012 = vpack.c.b16 %v844, %v841
      %v1013 = vpack.c.b16 %v845, %v842
      %v1014 = vpack.c.b16 %v846, %v843
      %v1015 = vpack.c.b16 %v850, %v847
      %v1016 = vpack.c.b16 %v851, %v848
      %v1017 = vpack.c.b16 %v852, %v849
      %v1018 = vpack.c.b16 %v856, %v853
      %v1019 = vpack.c.b16 %v857, %v854
      %v1020 = vpack.c.b16 %v858, %v855
      %v1021 = vpack.c.b16 %v862, %v859
      %v1022 = vpack.c.b16 %v863, %v860
      %v1023 = vpack.c.b16 %v864, %v861
      %v1024 = vpack.c.b16 %v868, %v865
      %v1025 = vpack.c.b16 %v869, %v866
      %v1026 = vpack.c.b16 %v870, %v867
      %v1027 = vpack.c.b16 %v874, %v871
      %v1028 = vpack.c.b16 %v875, %v872
      %v1029 = vpack.c.b16 %v876, %v873
      %v1030 = vpack.c.b16 %v880, %v877
      %v1031 = vpack.c.b16 %v881, %v878
      %v1032 = vpack.c.b16 %v882, %v879
      %v1033 = vpack.c.b16 %v886, %v883
      %v1034 = vpack.c.b16 %v887, %v884
      %v1035 = vpack.c.b16 %v888, %v885
      %v1036 = vpack.c.b16 %v892, %v889
      %v1037 = vpack.c.b16 %v893, %v890
      %v1038 = vpack.c.b16 %v894, %v891
      %1183 = vmatpush.bf16.msra.mxu0 %v916
      %1184 = vmatpush.bf16.msra.mxu0 %v913
      %1185 = vmatpush.bf16.msra.mxu0 %v910
      %1186 = vmatpush.bf16.msra.mxu0 %v907
      %1187 = vmatpush.bf16.msra.mxu0 %v904
      %1188 = vmatpush.bf16.msra.mxu0 %v901
      %1189 = vmatpush.bf16.msra.mxu0 %v898
      %1190 = vmatpush.bf16.msra.mxu0 %v895
      %1191 = vmatmul.bf16.gmra.mxu0 %v403
      %v1192 = vpop.f32.mrf.mxu0
      %v1193 = vadd.f32 %v379, %v1192
      %v1194 = vpop.f32.mrf.mxu0
      %v1195 = vadd.f32 %v379, %v1194
      %1196 = vdwg.mxu0
      %1197 = vmatpush.bf16.msra.mxu0 %v940
      %1198 = vmatpush.bf16.msra.mxu0 %v937
      %1199 = vmatpush.bf16.msra.mxu0 %v934
      %1200 = vmatpush.bf16.msra.mxu0 %v931
      %1201 = vmatpush.bf16.msra.mxu0 %v928
      %1202 = vmatpush.bf16.msra.mxu0 %v925
      %1203 = vmatpush.bf16.msra.mxu0 %v922
      %1204 = vmatpush.bf16.msra.mxu0 %v919
      %1205 = vmatmul.bf16.gmra.mxu0 %v404
      %v1206 = vpop.f32.mrf.mxu0
      %v1207 = vadd.f32 %v1193, %v1206
      %v1208 = vpop.f32.mrf.mxu0
      %v1209 = vadd.f32 %v1195, %v1208
      %1210 = vdwg.mxu0
      %1211 = vmatpush.bf16.msra.mxu0 %v964
      %1212 = vmatpush.bf16.msra.mxu0 %v961
      %1213 = vmatpush.bf16.msra.mxu0 %v958
      %1214 = vmatpush.bf16.msra.mxu0 %v955
      %1215 = vmatpush.bf16.msra.mxu0 %v952
      %1216 = vmatpush.bf16.msra.mxu0 %v949
      %1217 = vmatpush.bf16.msra.mxu0 %v946
      %1218 = vmatpush.bf16.msra.mxu0 %v943
      %1219 = vmatmul.bf16.gmra.mxu0 %v405
      %v1220 = vpop.f32.mrf.mxu0
      %v1221 = vadd.f32 %v1207, %v1220
      %v1222 = vpop.f32.mrf.mxu0
      %v1223 = vadd.f32 %v1209, %v1222
      %1224 = vdwg.mxu0
      %1225 = vmatpush.bf16.msra.mxu0 %v988
      %1226 = vmatpush.bf16.msra.mxu0 %v985
      %1227 = vmatpush.bf16.msra.mxu0 %v982
      %1228 = vmatpush.bf16.msra.mxu0 %v979
      %1229 = vmatpush.bf16.msra.mxu0 %v976
      %1230 = vmatpush.bf16.msra.mxu0 %v973
      %1231 = vmatpush.bf16.msra.mxu0 %v970
      %1232 = vmatpush.bf16.msra.mxu0 %v967
      %1233 = vmatmul.bf16.gmra.mxu0 %v406
      %v1234 = vpop.f32.mrf.mxu0
      %v1235 = vadd.f32 %v1221, %v1234
      %v1236 = vpop.f32.mrf.mxu0
      %v1237 = vadd.f32 %v1223, %v1236
      %1238 = vdwg.mxu0
      %1239 = vmatpush.bf16.msra.mxu0 %v1012
      %1240 = vmatpush.bf16.msra.mxu0 %v1009
      %1241 = vmatpush.bf16.msra.mxu0 %v1006
      %1242 = vmatpush.bf16.msra.mxu0 %v1003
      %1243 = vmatpush.bf16.msra.mxu0 %v1000
      %1244 = vmatpush.bf16.msra.mxu0 %v997
      %1245 = vmatpush.bf16.msra.mxu0 %v994
      %1246 = vmatpush.bf16.msra.mxu0 %v991
      %1247 = vmatmul.bf16.gmra.mxu0 %v407
      %v1248 = vpop.f32.mrf.mxu0
      %v1249 = vadd.f32 %v1235, %v1248
      %v1250 = vpop.f32.mrf.mxu0
      %v1251 = vadd.f32 %v1237, %v1250
      %1252 = vdwg.mxu0
      %1253 = vmatpush.bf16.msra.mxu0 %v1036
      %1254 = vmatpush.bf16.msra.mxu0 %v1033
      %1255 = vmatpush.bf16.msra.mxu0 %v1030
      %1256 = vmatpush.bf16.msra.mxu0 %v1027
      %1257 = vmatpush.bf16.msra.mxu0 %v1024
      %1258 = vmatpush.bf16.msra.mxu0 %v1021
      %1259 = vmatpush.bf16.msra.mxu0 %v1018
      %1260 = vmatpush.bf16.msra.mxu0 %v1015
      %1261 = vmatmul.bf16.gmra.mxu0 %v408
      %v1262 = vpop.f32.mrf.mxu0
      %v1263 = vadd.f32 %v1249, %v1262
      %v1264 = vpop.f32.mrf.mxu0
      %v1265 = vadd.f32 %v1251, %v1264
      %1266 = vdwg.mxu0
      %1267 = vmatpush.bf16.msra.mxu0 %v917
      %1268 = vmatpush.bf16.msra.mxu0 %v914
      %1269 = vmatpush.bf16.msra.mxu0 %v911
      %1270 = vmatpush.bf16.msra.mxu0 %v908
      %1271 = vmatpush.bf16.msra.mxu0 %v905
      %1272 = vmatpush.bf16.msra.mxu0 %v902
      %1273 = vmatpush.bf16.msra.mxu0 %v899
      %1274 = vmatpush.bf16.msra.mxu0 %v896
      %1275 = vmatmul.bf16.gmra.mxu0 %v403
      %v1276 = vpop.f32.mrf.mxu0
      %v1277 = vadd.f32 %v380, %v1276
      %v1278 = vpop.f32.mrf.mxu0
      %v1279 = vadd.f32 %v380, %v1278
      %1280 = vdwg.mxu0
      %1281 = vmatpush.bf16.msra.mxu0 %v941
      %1282 = vmatpush.bf16.msra.mxu0 %v938
      %1283 = vmatpush.bf16.msra.mxu0 %v935
      %1284 = vmatpush.bf16.msra.mxu0 %v932
      %1285 = vmatpush.bf16.msra.mxu0 %v929
      %1286 = vmatpush.bf16.msra.mxu0 %v926
      %1287 = vmatpush.bf16.msra.mxu0 %v923
      %1288 = vmatpush.bf16.msra.mxu0 %v920
      %1289 = vmatmul.bf16.gmra.mxu0 %v404
      %v1290 = vpop.f32.mrf.mxu0
      %v1291 = vadd.f32 %v1277, %v1290
      %v1292 = vpop.f32.mrf.mxu0
      %v1293 = vadd.f32 %v1279, %v1292
      %1294 = vdwg.mxu0
      %1295 = vmatpush.bf16.msra.mxu0 %v965
      %1296 = vmatpush.bf16.msra.mxu0 %v962
      %1297 = vmatpush.bf16.msra.mxu0 %v959
      %1298 = vmatpush.bf16.msra.mxu0 %v956
      %1299 = vmatpush.bf16.msra.mxu0 %v953
      %1300 = vmatpush.bf16.msra.mxu0 %v950
      %1301 = vmatpush.bf16.msra.mxu0 %v947
      %1302 = vmatpush.bf16.msra.mxu0 %v944
      %1303 = vmatmul.bf16.gmra.mxu0 %v405
      %v1304 = vpop.f32.mrf.mxu0
      %v1305 = vadd.f32 %v1291, %v1304
      %v1306 = vpop.f32.mrf.mxu0
      %v1307 = vadd.f32 %v1293, %v1306
      %1308 = vdwg.mxu0
      %1309 = vmatpush.bf16.msra.mxu0 %v989
      %1310 = vmatpush.bf16.msra.mxu0 %v986
      %1311 = vmatpush.bf16.msra.mxu0 %v983
      %1312 = vmatpush.bf16.msra.mxu0 %v980
      %1313 = vmatpush.bf16.msra.mxu0 %v977
      %1314 = vmatpush.bf16.msra.mxu0 %v974
      %1315 = vmatpush.bf16.msra.mxu0 %v971
      %1316 = vmatpush.bf16.msra.mxu0 %v968
      %1317 = vmatmul.bf16.gmra.mxu0 %v406
      %v1318 = vpop.f32.mrf.mxu0
      %v1319 = vadd.f32 %v1305, %v1318
      %v1320 = vpop.f32.mrf.mxu0
      %v1321 = vadd.f32 %v1307, %v1320
      %1322 = vdwg.mxu0
      %1323 = vmatpush.bf16.msra.mxu0 %v1013
      %1324 = vmatpush.bf16.msra.mxu0 %v1010
      %1325 = vmatpush.bf16.msra.mxu0 %v1007
      %1326 = vmatpush.bf16.msra.mxu0 %v1004
      %1327 = vmatpush.bf16.msra.mxu0 %v1001
      %1328 = vmatpush.bf16.msra.mxu0 %v998
      %1329 = vmatpush.bf16.msra.mxu0 %v995
      %1330 = vmatpush.bf16.msra.mxu0 %v992
      %1331 = vmatmul.bf16.gmra.mxu0 %v407
      %v1332 = vpop.f32.mrf.mxu0
      %v1333 = vadd.f32 %v1319, %v1332
      %v1334 = vpop.f32.mrf.mxu0
      %v1335 = vadd.f32 %v1321, %v1334
      %1336 = vdwg.mxu0
      %1337 = vmatpush.bf16.msra.mxu0 %v1037
      %1338 = vmatpush.bf16.msra.mxu0 %v1034
      %1339 = vmatpush.bf16.msra.mxu0 %v1031
      %1340 = vmatpush.bf16.msra.mxu0 %v1028
      %1341 = vmatpush.bf16.msra.mxu0 %v1025
      %1342 = vmatpush.bf16.msra.mxu0 %v1022
      %1343 = vmatpush.bf16.msra.mxu0 %v1019
      %1344 = vmatpush.bf16.msra.mxu0 %v1016
      %1345 = vmatmul.bf16.gmra.mxu0 %v408
      %v1346 = vpop.f32.mrf.mxu0
      %v1347 = vadd.f32 %v1333, %v1346
      %v1348 = vpop.f32.mrf.mxu0
      %v1349 = vadd.f32 %v1335, %v1348
      %1350 = vdwg.mxu0
      %1351 = vmatpush.bf16.msra.mxu0 %v918
      %1352 = vmatpush.bf16.msra.mxu0 %v915
      %1353 = vmatpush.bf16.msra.mxu0 %v912
      %1354 = vmatpush.bf16.msra.mxu0 %v909
      %1355 = vmatpush.bf16.msra.mxu0 %v906
      %1356 = vmatpush.bf16.msra.mxu0 %v903
      %1357 = vmatpush.bf16.msra.mxu0 %v900
      %1358 = vmatpush.bf16.msra.mxu0 %v897
      %1359 = vmatmul.bf16.gmra.mxu0 %v403
      %v1360 = vpop.f32.mrf.mxu0
      %v1361 = vadd.f32 %v381, %v1360
      %v1362 = vpop.f32.mrf.mxu0
      %v1363 = vadd.f32 %v381, %v1362
      %1364 = vdwg.mxu0
      %1365 = vmatpush.bf16.msra.mxu0 %v942
      %1366 = vmatpush.bf16.msra.mxu0 %v939
      %1367 = vmatpush.bf16.msra.mxu0 %v936
      %1368 = vmatpush.bf16.msra.mxu0 %v933
      %1369 = vmatpush.bf16.msra.mxu0 %v930
      %1370 = vmatpush.bf16.msra.mxu0 %v927
      %1371 = vmatpush.bf16.msra.mxu0 %v924
      %1372 = vmatpush.bf16.msra.mxu0 %v921
      %1373 = vmatmul.bf16.gmra.mxu0 %v404
      %v1374 = vpop.f32.mrf.mxu0
      %v1375 = vadd.f32 %v1361, %v1374
      %v1376 = vpop.f32.mrf.mxu0
      %v1377 = vadd.f32 %v1363, %v1376
      %1378 = vdwg.mxu0
      %1379 = vmatpush.bf16.msra.mxu0 %v966
      %1380 = vmatpush.bf16.msra.mxu0 %v963
      %1381 = vmatpush.bf16.msra.mxu0 %v960
      %1382 = vmatpush.bf16.msra.mxu0 %v957
      %1383 = vmatpush.bf16.msra.mxu0 %v954
      %1384 = vmatpush.bf16.msra.mxu0 %v951
      %1385 = vmatpush.bf16.msra.mxu0 %v948
      %1386 = vmatpush.bf16.msra.mxu0 %v945
      %1387 = vmatmul.bf16.gmra.mxu0 %v405
      %v1388 = vpop.f32.mrf.mxu0
      %v1389 = vadd.f32 %v1375, %v1388
      %v1390 = vpop.f32.mrf.mxu0
      %v1391 = vadd.f32 %v1377, %v1390
      %1392 = vdwg.mxu0
      %1393 = vmatpush.bf16.msra.mxu0 %v990
      %1394 = vmatpush.bf16.msra.mxu0 %v987
      %1395 = vmatpush.bf16.msra.mxu0 %v984
      %1396 = vmatpush.bf16.msra.mxu0 %v981
      %1397 = vmatpush.bf16.msra.mxu0 %v978
      %1398 = vmatpush.bf16.msra.mxu0 %v975
      %1399 = vmatpush.bf16.msra.mxu0 %v972
      %1400 = vmatpush.bf16.msra.mxu0 %v969
      %1401 = vmatmul.bf16.gmra.mxu0 %v406
      %v1402 = vpop.f32.mrf.mxu0
      %v1403 = vadd.f32 %v1389, %v1402
      %v1404 = vpop.f32.mrf.mxu0
      %v1405 = vadd.f32 %v1391, %v1404
      %1406 = vdwg.mxu0
      %1407 = vmatpush.bf16.msra.mxu0 %v1014
      %1408 = vmatpush.bf16.msra.mxu0 %v1011
      %1409 = vmatpush.bf16.msra.mxu0 %v1008
      %1410 = vmatpush.bf16.msra.mxu0 %v1005
      %1411 = vmatpush.bf16.msra.mxu0 %v1002
      %1412 = vmatpush.bf16.msra.mxu0 %v999
      %1413 = vmatpush.bf16.msra.mxu0 %v996
      %1414 = vmatpush.bf16.msra.mxu0 %v993
      %1415 = vmatmul.bf16.gmra.mxu0 %v407
      %v1416 = vpop.f32.mrf.mxu0
      %v1417 = vadd.f32 %v1403, %v1416
      %v1418 = vpop.f32.mrf.mxu0
      %v1419 = vadd.f32 %v1405, %v1418
      %1420 = vdwg.mxu0
      %1421 = vmatpush.bf16.msra.mxu0 %v1038
      %1422 = vmatpush.bf16.msra.mxu0 %v1035
      %1423 = vmatpush.bf16.msra.mxu0 %v1032
      %1424 = vmatpush.bf16.msra.mxu0 %v1029
      %1425 = vmatpush.bf16.msra.mxu0 %v1026
      %1426 = vmatpush.bf16.msra.mxu0 %v1023
      %1427 = vmatpush.bf16.msra.mxu0 %v1020
      %1428 = vmatpush.bf16.msra.mxu0 %v1017
      %1429 = vmatmul.bf16.gmra.mxu0 %v408
      %v1430 = vpop.f32.mrf.mxu0
      %v1431 = vadd.f32 %v1417, %v1430
      %v1432 = vpop.f32.mrf.mxu0
      %v1433 = vadd.f32 %v1419, %v1432
      %1434 = vdwg.mxu0
      %s1435 = scalar_lea.vmem %s2, 1
      %v1436 = vld [vmem:[%s1435] ss:$4 sm:$0x7]
      %s1437 = scalar_lea.vmem %s2, 2
      %v1438 = vld [vmem:[%s1437] ss:$4 sm:$0x7]
      %v1439 = vadd.f32 %v1263, %v1347
      %v1440 = vadd.f32 %v1439, %v1431
      %1441 = vadd.xlane.f32.xlu0 %v1440
      %v1442 = vpop.xlane.xlu0 %1441
      %v1443 = vadd.f32 %v1265, %v1349
      %v1444 = vadd.f32 %v1443, %v1433
      %1445 = vadd.xlane.f32.xlu0 %v1444
      %v1446 = vpop.xlane.xlu0 %1445
      %v1447 = vmul.f32 %v1442, 0.0026041667
      %v1448 = vmul.f32 %v1446, 0.0026041667
      %v1449 = vmul.f32 %v1263, %v1263
      %v1450 = vmul.f32 %v1347, %v1347
      %v1451 = vmul.f32 %v1431, %v1431
      %v1452 = vmul.f32 %v1265, %v1265
      %v1453 = vmul.f32 %v1349, %v1349
      %v1454 = vmul.f32 %v1433, %v1433
      %v1455 = vadd.f32 %v1449, %v1450
      %v1456 = vadd.f32 %v1455, %v1451
      %1457 = vadd.xlane.f32.xlu0 %v1456
      %v1458 = vpop.xlane.xlu0 %1457
      %v1459 = vadd.f32 %v1452, %v1453
      %v1460 = vadd.f32 %v1459, %v1454
      %1461 = vadd.xlane.f32.xlu0 %v1460
      %v1462 = vpop.xlane.xlu0 %1461
      %v1463 = vmul.f32 %v1458, 0.0026041667
      %v1464 = vmul.f32 %v1462, 0.0026041667
      %v1465 = vmul.f32 %v1447, %v1447
      %v1466 = vmul.f32 %v1448, %v1448
      %v1467 = vsub.f32 %v1463, %v1465
      %v1468 = vsub.f32 %v1464, %v1466
      %v1469 = vmax.f32 %v1467, 0.0
      %v1470 = vmax.f32 %v1468, 0.0
      %v1471 = vrsqrt.pop %v1469
      %v1472 = vmul.f32 %v1471, %v1469
      %v1473 = vmul.f32 %v1472, %v1471
      %v1474 = vmul.f32 0.5, %v1473
      %v1475 = vsub.f32 1.5, %v1474
      %v1476 = vmul.f32 %v1471, %v1475
      %v1477 = vmul.f32 %v1469, %v1476
      %vm1478 = vcmp.eq.f32.partialorder %v1469, inf
      %v1479 = vsel %vm1478, %v1469, %v1477
      %vm1480 = vcmp.eq.f32.partialorder %v1469, 0.0
      %v1481 = vand.u32 %v1469, 2147483648
      %v1482 = vsel %vm1480, %v1481, %v1479
      %v1483 = vrsqrt.pop %v1470
      %v1484 = vmul.f32 %v1483, %v1470
      %v1485 = vmul.f32 %v1484, %v1483
      %v1486 = vmul.f32 0.5, %v1485
      %v1487 = vsub.f32 1.5, %v1486
      %v1488 = vmul.f32 %v1483, %v1487
      %v1489 = vmul.f32 %v1470, %v1488
      %vm1490 = vcmp.eq.f32.partialorder %v1470, inf
      %v1491 = vsel %vm1490, %v1470, %v1489
      %vm1492 = vcmp.eq.f32.partialorder %v1470, 0.0
      %v1493 = vand.u32 %v1470, 2147483648
      %v1494 = vsel %vm1492, %v1493, %v1491
      %v1495 = vadd.f32 %v1482, 1e-06
      %v1496 = vadd.f32 %v1494, 1e-06
      %v1497 = vrcp.pop %v1495
      %v1498 = vrcp.pop %v1496
      %v1499 = vsub.f32 %v1263, %v1447
      %v1500 = vsub.f32 %v1347, %v1447
      %v1501 = vsub.f32 %v1431, %v1447
      %v1502 = vsub.f32 %v1265, %v1448
      %v1503 = vsub.f32 %v1349, %v1448
      %v1504 = vsub.f32 %v1433, %v1448
      %v1505 = vmul.f32 %v1499, %v1497
      %v1506 = vmul.f32 %v1500, %v1497
      %v1507 = vmul.f32 %v1501, %v1497
      %v1508 = vmul.f32 %v1502, %v1498
      %v1509 = vmul.f32 %v1503, %v1498
      %v1510 = vmul.f32 %v1504, %v1498
      %v1512 = vperm.slane %v1436, 0
      %v1513 = vperm.slane %v1436, 1
      %v1514 = vperm.slane %v1436, 2
      %v1518 = vmul.f32 %v1505, %v1512
      %v1519 = vmul.f32 %v1506, %v1513
      %v1520 = vmul.f32 %v1507, %v1514
      %v1521 = vmul.f32 %v1508, %v1512
      %v1522 = vmul.f32 %v1509, %v1513
      %v1523 = vmul.f32 %v1510, %v1514
      %v1525 = vperm.slane %v1438, 0
      %v1526 = vperm.slane %v1438, 1
      %v1527 = vperm.slane %v1438, 2
      %v1531 = vadd.f32 %v1518, %v1525
      %v1532 = vadd.f32 %v1519, %v1526
      %v1533 = vadd.f32 %v1520, %v1527
      %v1534 = vadd.f32 %v1521, %v1525
      %v1535 = vadd.f32 %v1522, %v1526
      %v1536 = vadd.f32 %v1523, %v1527
      %v1537 = vpack.c.bf16 %v1532, %v1531
      %v1538 = vpack.c.bf16 %v1533, %v1533
      %v1539 = vpack.c.bf16 %v1535, %v1534
      %v1540 = vpack.c.bf16 %v1536, %v1536
      %1541 = vst [vmem:[%s177] sm:$0xff] %v1537
      %1542 = vst [vmem:[%s177 + $0x8] sm:$0xf] %v1538
      %1543 = vst [vmem:[%s177 + $0xc] sm:$0xff] %v1539
      %1544 = vst [vmem:[%s177 + $0x14] sm:$0xf] %v1540
      %s1545 = smul.u32 2, %s14
      %p1546 = scmp.lt.s32.totalorder %s1545, 3
      %s1547 = scalar_select %p1546, %s1545, 3
      %s1548 = smul.addr %s1547, 3
      %s1549 = smul.addr %s1548, 4
      %s1550 = scalar_lea.vmem %s3, %s1549
      // Predicated region
      $region33: #{resnet_forward.7} parent=31 // pred_check
        %p1551 = pneg %p100
      $region34: #{resnet_forward.7} parent=31 // pred_check_branch
        %1553 = sbr.rel (%p1551) target = $region36
      $region35: #{resnet_forward.7} parent=31 // pred_region
        %s1554 = smul.u32 2, %s14
      $region36: #{resnet_forward.7} parent=31 // pred_fallthru
        _
    $region32: #{resnet_forward.7} parent=5 // pred_fallthru
      _
    %p1555 = scmp.le.s32.totalorder 2, %s9
    // Predicated region
    $region37: #{resnet_forward.7} parent=5 // pred_check
      %p1556 = pneg %p1555
    $region38: #{resnet_forward.7} parent=5 // pred_check_branch
      %1558 = sbr.rel (%p1556) target = $region40
    $region39: #{resnet_forward.7} parent=5 // pred_region
      %s1559 = ssub.s32 %s9, 2
      // Predicated region
      $region41: #{resnet_forward.7} parent=39 // pred_check
        %p1560 = pneg %p106
      $region42: #{resnet_forward.7} parent=39 // pred_check_branch
        %1562 = sbr.rel (%p1560) target = $region44
      $region43: #{resnet_forward.7} parent=39 // pred_region
        %s1563 = smul.u32 2, %s15
        %p1564 = scmp.lt.s32.totalorder %s1563, 3
        %s1565 = scalar_select %p1564, %s1563, 3
        %s1566 = smul.addr %s1565, 3
        %s1567 = smul.addr %s1566, 4
        %s1568 = scalar_lea.vmem %s3, %s1567
      $region44: #{resnet_forward.7} parent=39 // pred_fallthru
        _
    $region40: #{resnet_forward.7} parent=5 // pred_fallthru
      _
  $region6: #{resnet_forward.7} parent=0 // loop_footer
    %s13 = sadd.s32 1, %s9
  $region7: #{resnet_forward.7} parent=0 // loop_footer_branch
    %8 = sbr.rel target = $region3
  $region8: #{resnet_forward.7} parent=0 // loop_exit
    _

// kernel: resnet_forward.9
$region0: #{resnet_forward.9}
  #allocation0 [shape = 'u32[]', space=smem, size = 0x4, offset = 0x4, fixed_abs, tag = 'smem constant byte address 0x4 - core index']
  #allocation1 [shape = 'u32[72,128]{1,0:T(1,128)}', space=vmem, size = 0x9000, scoped, tag = 'internal scratch']
  %s0 = inlined_call_operand.vmem [shape: bf16[2,4,768], index: 0, kind: input, shape index: {}]
  %s1 = inlined_call_operand.vmem [shape: f32[2,768], index: 1, kind: input, shape index: {}]
  %s2 = inlined_call_operand.vmem [shape: bf16[768,128], index: 2, kind: input, shape index: {}]
  %s3 = inlined_call_operand.vmem [shape: f32[1,128], index: 3, kind: input, shape index: {}]
  %s4 = inlined_call_operand.hbm [shape: f32[2,128], index: 4, kind: output, shape index: {}]
  %s5 = sld [smem:[#allocation0]]
  $region26: #{resnet_forward.9} parent=0
    _
  %s7 = ssub.s32 1, %s5
  %s8 = scalar_select 0, %s7, %s5
  $region1: #{resnet_forward.9} parent=0
    #allocation2 [shape = 'u8[1024]{0}', space=vmem, size = 0x400, scoped, tag = 'output window, operand 0, single buffered']
    #allocation3 [shape = 's32[1]{0}', space=sflag, size = 0x4, scoped, tag = 'scoped memory for resnet_forward.9']
    %9 = vsyncpa [#allocation3], 0
    // Predicated region
    $region2: #{resnet_forward.9} parent=1 // pred_check
      _
    $region3: #{resnet_forward.9} parent=1 // pred_check_branch
      %11 = sbr.rel (0) target = $region5
    $region4: #{resnet_forward.9} parent=1 // pred_region
      _
    $region5: #{resnet_forward.9} parent=1 // pred_fallthru
      _
    // Predicated region
    $region6: #{resnet_forward.9} parent=1 // pred_check
      _
    $region7: #{resnet_forward.9} parent=1 // pred_check_branch
      %13 = sbr.rel (0) target = $region9
    $region8: #{resnet_forward.9} parent=1 // pred_region
      _
    $region9: #{resnet_forward.9} parent=1 // pred_fallthru
      _
    // Predicated region
    $region10: #{resnet_forward.9} parent=1 // pred_check
      _
    $region11: #{resnet_forward.9} parent=1 // pred_check_branch
      %15 = sbr.rel (0) target = $region13
    $region12: #{resnet_forward.9} parent=1 // pred_region
      _
    $region13: #{resnet_forward.9} parent=1 // pred_fallthru
      _
    // Predicated region
    $region14: #{resnet_forward.9} parent=1 // pred_check
      _
    $region15: #{resnet_forward.9} parent=1 // pred_check_branch
      %17 = sbr.rel (0) target = $region17
    $region16: #{resnet_forward.9} parent=1 // pred_region
      _
    $region17: #{resnet_forward.9} parent=1 // pred_fallthru
      _
    %v18 = vld [vmem:[%s0] sm:$0xff]
    %v19 = vld [vmem:[%s0 + $0x8] sm:$0xf]
    %v20 = vld [vmem:[%s0 + $0xc] sm:$0xff]
    %v21 = vld [vmem:[%s0 + $0x14] sm:$0xf]
    %v22 = vunpack.c.l.bf16 %v18
    %v23 = vunpack.c.h.bf16 %v18
    %v24 = vunpack.c.l.bf16 %v19
    %v25 = vunpack.c.l.bf16 %v20
    %v26 = vunpack.c.h.bf16 %v20
    %v27 = vunpack.c.l.bf16 %v21
    %34 = vst [vmem:[#allocation1] ss:$2 sm:$0xff] %v22
    %s35 = scalar_lea.vmem [#allocation1], 16
    %36 = vst [vmem:[%s35] ss:$2 sm:$0xff] %v23
    %s37 = scalar_lea.vmem [#allocation1], 32
    %38 = vst [vmem:[%s37] ss:$2 sm:$0xff] %v24
    %v39 = vld.sshfl [vmem:[#allocation1] sm:$0xff pattern:$0x75316420]
    %v40 = vld.sshfl [vmem:[#allocation1 + $0x8] sm:$0xff pattern:$0x75316420]
    %v41 = vld.sshfl [vmem:[#allocation1 + $0x10] sm:$0xff pattern:$0x75316420]
    %v42 = vld.sshfl [vmem:[#allocation1 + $0x18] sm:$0xff pattern:$0x75316420]
    %v43 = vld.sshfl [vmem:[#allocation1 + $0x20] sm:$0xff pattern:$0x75316420]
    %v44 = vld.sshfl [vmem:[#allocation1 + $0x28] sm:$0xff pattern:$0x75316420]
    %s45 = scalar_lea.vmem [#allocation1], 48
    %46 = vst [vmem:[%s45] ss:$2 sm:$0xff] %v25
    %v47 = vld.sshfl [vmem:[#allocation1 + $0x30] sm:$0xff pattern:$0x75316420]
    %v48 = vld.sshfl [vmem:[#allocation1 + $0x38] sm:$0xff pattern:$0x75316420]
    %49 = vst [vmem:[#allocation1] ss:$2 sm:$0xff] %v26
    %50 = vst [vmem:[%s35] ss:$2 sm:$0xff] %v27
    %v51 = vld.sshfl [vmem:[#allocation1] sm:$0xff pattern:$0x75316420]
    %v52 = vld.sshfl [vmem:[#allocation1 + $0x8] sm:$0xff pattern:$0x75316420]
    %v53 = vld.sshfl [vmem:[#allocation1 + $0x10] sm:$0xff pattern:$0x75316420]
    %v54 = vld.sshfl [vmem:[#allocation1 + $0x18] sm:$0xff pattern:$0x75316420]
    %vm67 = vcmask 1043456
    %v68 = vsel %vm67, %v39, 0.0
    %v69 = vrot.slane %v68, 4
    %v70 = vadd.f32 %v68, %v69
    %v71 = vrot.slane %v70, 2
    %v72 = vadd.f32 %v70, %v71
    %v73 = vrot.slane %v72, 1
    %v74 = vadd.f32 %v72, %v73
    %v75 = vsel %vm67, %v40, 0.0
    %v76 = vrot.slane %v75, 4
    %v77 = vadd.f32 %v75, %v76
    %v78 = vrot.slane %v77, 2
    %v79 = vadd.f32 %v77, %v78
    %v80 = vrot.slane %v79, 1
    %v81 = vadd.f32 %v79, %v80
    %v82 = vsel %vm67, %v41, 0.0
    %v83 = vrot.slane %v82, 4
    %v84 = vadd.f32 %v82, %v83
    %v85 = vrot.slane %v84, 2
    %v86 = vadd.f32 %v84, %v85
    %v87 = vrot.slane %v86, 1
    %v88 = vadd.f32 %v86, %v87
    %v89 = vsel %vm67, %v42, 0.0
    %v90 = vrot.slane %v89, 4
    %v91 = vadd.f32 %v89, %v90
    %v92 = vrot.slane %v91, 2
    %v93 = vadd.f32 %v91, %v92
    %v94 = vrot.slane %v93, 1
    %v95 = vadd.f32 %v93, %v94
    %v96 = vsel %vm67, %v43, 0.0
    %v97 = vrot.slane %v96, 4
    %v98 = vadd.f32 %v96, %v97
    %v99 = vrot.slane %v98, 2
    %v100 = vadd.f32 %v98, %v99
    %v101 = vrot.slane %v100, 1
    %v102 = vadd.f32 %v100, %v101
    %v103 = vsel %vm67, %v44, 0.0
    %v104 = vrot.slane %v103, 4
    %v105 = vadd.f32 %v103, %v104
    %v106 = vrot.slane %v105, 2
    %v107 = vadd.f32 %v105, %v106
    %v108 = vrot.slane %v107, 1
    %v109 = vadd.f32 %v107, %v108
    %v110 = vsel %vm67, %v47, 0.0
    %v111 = vrot.slane %v110, 4
    %v112 = vadd.f32 %v110, %v111
    %v113 = vrot.slane %v112, 2
    %v114 = vadd.f32 %v112, %v113
    %v115 = vrot.slane %v114, 1
    %v116 = vadd.f32 %v114, %v115
    %v117 = vsel %vm67, %v48, 0.0
    %v118 = vrot.slane %v117, 4
    %v119 = vadd.f32 %v117, %v118
    %v120 = vrot.slane %v119, 2
    %v121 = vadd.f32 %v119, %v120
    %v122 = vrot.slane %v121, 1
    %v123 = vadd.f32 %v121, %v122
    %v124 = vsel %vm67, %v51, 0.0
    %v125 = vrot.slane %v124, 4
    %v126 = vadd.f32 %v124, %v125
    %v127 = vrot.slane %v126, 2
    %v128 = vadd.f32 %v126, %v127
    %v129 = vrot.slane %v128, 1
    %v130 = vadd.f32 %v128, %v129
    %v131 = vsel %vm67, %v52, 0.0
    %v132 = vrot.slane %v131, 4
    %v133 = vadd.f32 %v131, %v132
    %v134 = vrot.slane %v133, 2
    %v135 = vadd.f32 %v133, %v134
    %v136 = vrot.slane %v135, 1
    %v137 = vadd.f32 %v135, %v136
    %v138 = vsel %vm67, %v53, 0.0
    %v139 = vrot.slane %v138, 4
    %v140 = vadd.f32 %v138, %v139
    %v141 = vrot.slane %v140, 2
    %v142 = vadd.f32 %v140, %v141
    %v143 = vrot.slane %v142, 1
    %v144 = vadd.f32 %v142, %v143
    %v145 = vsel %vm67, %v54, 0.0
    %v146 = vrot.slane %v145, 4
    %v147 = vadd.f32 %v145, %v146
    %v148 = vrot.slane %v147, 2
    %v149 = vadd.f32 %v147, %v148
    %v150 = vrot.slane %v149, 1
    %v151 = vadd.f32 %v149, %v150
    %v152 = vrcp.pop 4.0
    %v153 = vmul.f32 4.0, %v152
    %v154 = vsub.f32 1.0, %v153
    %v155 = vmul.f32 %v152, %v154
    %v156 = vadd.f32 %v152, %v155
    %vm157 = vweird.f32 %v152
    %v158 = vsel %vm157, %v152, %v156
    %v159 = vmul.f32 %v74, %v158
    %v160 = vmul.f32 %v81, %v158
    %v161 = vmul.f32 %v88, %v158
    %v162 = vmul.f32 %v95, %v158
    %v163 = vmul.f32 %v102, %v158
    %v164 = vmul.f32 %v109, %v158
    %v165 = vmul.f32 %v116, %v158
    %v166 = vmul.f32 %v123, %v158
    %v167 = vmul.f32 %v130, %v158
    %v168 = vmul.f32 %v137, %v158
    %v169 = vmul.f32 %v144, %v158
    %v170 = vmul.f32 %v151, %v158
    %vm183 = vcmask 1041409
    %v184 = vsel %vm183, %v165, %v159
    %v185 = vsel %vm183, %v166, %v160
    %v186 = vsel %vm183, %v167, %v161
    %v187 = vsel %vm183, %v168, %v162
    %v188 = vsel %vm183, %v169, %v163
    %v189 = vsel %vm183, %v170, %v164
    %vm196 = vcmask 1041408
    %v197 = vsel %vm196, %v184, 0.0
    %v198 = vsel %vm196, %v185, 0.0
    %v199 = vadd.f32 %v197, %v198
    %v200 = vsel %vm196, %v186, 0.0
    %v201 = vadd.f32 %v199, %v200
    %v202 = vsel %vm196, %v187, 0.0
    %v203 = vadd.f32 %v201, %v202
    %v204 = vsel %vm196, %v188, 0.0
    %v205 = vadd.f32 %v203, %v204
    %v206 = vsel %vm196, %v189, 0.0
    %v207 = vadd.f32 %v205, %v206
    %208 = vadd.xlane.f32.xlu0 %v207
    %v209 = vpop.xlane.xlu0 %208
    %v210 = vrcp.pop 768.0
    %v211 = vmul.f32 768.0, %v210
    %v212 = vsub.f32 1.0, %v211
    %v213 = vmul.f32 %v210, %v212
    %v214 = vadd.f32 %v210, %v213
    %vm215 = vweird.f32 %v210
    %v216 = vsel %vm215, %v210, %v214
    %v217 = vmul.f32 %v209, %v216
    %v218 = vmul.f32 %v159, %v159
    %v219 = vmul.f32 %v160, %v160
    %v220 = vmul.f32 %v161, %v161
    %v221 = vmul.f32 %v162, %v162
    %v222 = vmul.f32 %v163, %v163
    %v223 = vmul.f32 %v164, %v164
    %v224 = vmul.f32 %v165, %v165
    %v225 = vmul.f32 %v166, %v166
    %v226 = vmul.f32 %v167, %v167
    %v227 = vmul.f32 %v168, %v168
    %v228 = vmul.f32 %v169, %v169
    %v229 = vmul.f32 %v170, %v170
    %v242 = vsel %vm183, %v224, %v218
    %v243 = vsel %vm183, %v225, %v219
    %v244 = vsel %vm183, %v226, %v220
    %v245 = vsel %vm183, %v227, %v221
    %v246 = vsel %vm183, %v228, %v222
    %v247 = vsel %vm183, %v229, %v223
    %v254 = vsel %vm196, %v242, 0.0
    %v255 = vsel %vm196, %v243, 0.0
    %v256 = vadd.f32 %v254, %v255
    %v257 = vsel %vm196, %v244, 0.0
    %v258 = vadd.f32 %v256, %v257
    %v259 = vsel %vm196, %v245, 0.0
    %v260 = vadd.f32 %v258, %v259
    %v261 = vsel %vm196, %v246, 0.0
    %v262 = vadd.f32 %v260, %v261
    %v263 = vsel %vm196, %v247, 0.0
    %v264 = vadd.f32 %v262, %v263
    %265 = vadd.xlane.f32.xlu0 %v264
    %v266 = vpop.xlane.xlu0 %265
    %v267 = vmul.f32 %v266, %v216
    %v268 = vmul.f32 %v217, %v217
    %v269 = vsub.f32 %v267, %v268
    %v270 = vmax.f32 %v269, 0.0
    %v272 = vrot.slane %v217, 1
    %v275 = vsub.f32 %v159, %v217
    %v276 = vsub.f32 %v160, %v217
    %v277 = vsub.f32 %v161, %v217
    %v278 = vsub.f32 %v162, %v217
    %v279 = vsub.f32 %v163, %v217
    %v280 = vsub.f32 %v164, %v217
    %v281 = vsub.f32 %v165, %v272
    %v282 = vsub.f32 %v166, %v272
    %v283 = vsub.f32 %v167, %v272
    %v284 = vsub.f32 %v168, %v272
    %v285 = vsub.f32 %v169, %v272
    %v286 = vsub.f32 %v170, %v272
    %v287 = vadd.f32 %v270, 1e-05
    %v288 = vrsqrt.pop %v287
    %v289 = vmul.f32 %v288, %v287
    %v290 = vmul.f32 %v289, %v288
    %v291 = vmul.f32 0.5, %v290
    %v292 = vsub.f32 1.5, %v291
    %v293 = vmul.f32 %v288, %v292
    %vm294 = vweird.f32 %v287
    %vm295 = vweird.f32 %v288
    %vm296 = vmor %vm294, %vm295
    %v297 = vsel %vm296, %v288, %v293
    %v299 = vrot.slane %v297, 1
    %v302 = vmul.f32 %v275, %v297
    %v303 = vmul.f32 %v276, %v297
    %v304 = vmul.f32 %v277, %v297
    %v305 = vmul.f32 %v278, %v297
    %v306 = vmul.f32 %v279, %v297
    %v307 = vmul.f32 %v280, %v297
    %v308 = vmul.f32 %v281, %v299
    %v309 = vmul.f32 %v282, %v299
    %v310 = vmul.f32 %v283, %v299
    %v311 = vmul.f32 %v284, %v299
    %v312 = vmul.f32 %v285, %v299
    %v313 = vmul.f32 %v286, %v299
    %v314 = vld [vmem:[%s1] ss:$2 sm:$0x3f]
    %v316 = vperm.slane %v314, 0
    %v317 = vperm.slane %v314, 1
    %v318 = vperm.slane %v314, 2
    %v319 = vperm.slane %v314, 3
    %v320 = vperm.slane %v314, 4
    %v321 = vperm.slane %v314, 5
    %v328 = vmul.f32 %v302, %v316
    %v329 = vmul.f32 %v303, %v317
    %v330 = vmul.f32 %v304, %v318
    %v331 = vmul.f32 %v305, %v319
    %v332 = vmul.f32 %v306, %v320
    %v333 = vmul.f32 %v307, %v321
    %v334 = vmul.f32 %v308, %v316
    %v335 = vmul.f32 %v309, %v317
    %v336 = vmul.f32 %v310, %v318
    %v337 = vmul.f32 %v311, %v319
    %v338 = vmul.f32 %v312, %v320
    %v339 = vmul.f32 %v313, %v321
    %s340 = scalar_lea.vmem %s1, 1
    %v341 = vld [vmem:[%s340] ss:$2 sm:$0x3f]
    %v343 = vperm.slane %v341, 0
    %v344 = vperm.slane %v341, 1
    %v345 = vperm.slane %v341, 2
    %v346 = vperm.slane %v341, 3
    %v347 = vperm.slane %v341, 4
    %v348 = vperm.slane %v341, 5
    %v355 = vadd.f32 %v328, %v343
    %v356 = vadd.f32 %v329, %v344
    %v357 = vadd.f32 %v330, %v345
    %v358 = vadd.f32 %v331, %v346
    %v359 = vadd.f32 %v332, %v347
    %v360 = vadd.f32 %v333, %v348
    %v361 = vadd.f32 %v334, %v343
    %v362 = vadd.f32 %v335, %v344
    %v363 = vadd.f32 %v336, %v345
    %v364 = vadd.f32 %v337, %v346
    %v365 = vadd.f32 %v338, %v347
    %v366 = vadd.f32 %v339, %v348
    %v367 = vpack.c.bf16 %v355, %v355
    %v368 = vpack.c.bf16 %v356, %v356
    %v369 = vpack.c.bf16 %v357, %v357
    %v370 = vpack.c.bf16 %v358, %v358
    %v371 = vpack.c.bf16 %v359, %v359
    %v372 = vpack.c.bf16 %v360, %v360
    %v373 = vpack.c.bf16 %v361, %v361
    %v374 = vpack.c.bf16 %v362, %v362
    %v375 = vpack.c.bf16 %v363, %v363
    %v376 = vpack.c.bf16 %v364, %v364
    %v377 = vpack.c.bf16 %v365, %v365
    %v378 = vpack.c.bf16 %v366, %v366
    %v379 = vld [vmem:[%s2] sm:$0xf]
    %v380 = vld [vmem:[%s2 + $0x4] sm:$0xf]
    %v381 = vld [vmem:[%s2 + $0x8] sm:$0xf]
    %v382 = vld [vmem:[%s2 + $0xc] sm:$0xf]
    %v383 = vld [vmem:[%s2 + $0x10] sm:$0xf]
    %v384 = vld [vmem:[%s2 + $0x14] sm:$0xf]
    %v385 = vld [vmem:[%s2 + $0x18] sm:$0xf]
    %v386 = vld [vmem:[%s2 + $0x1c] sm:$0xf]
    %v387 = vld [vmem:[%s2 + $0x20] sm:$0xf]
    %v388 = vld [vmem:[%s2 + $0x24] sm:$0xf]
    %v389 = vld [vmem:[%s2 + $0x28] sm:$0xf]
    %v390 = vld [vmem:[%s2 + $0x2c] sm:$0xf]
    %v391 = vld [vmem:[%s2 + $0x30] sm:$0xf]
    %v392 = vld [vmem:[%s2 + $0x34] sm:$0xf]
    %v393 = vld [vmem:[%s2 + $0x38] sm:$0xf]
    %v394 = vld [vmem:[%s2 + $0x3c] sm:$0xf]
    %v395 = vld [vmem:[%s2 + $0x40] sm:$0xf]
    %v396 = vld [vmem:[%s2 + $0x44] sm:$0xf]
    %v397 = vld [vmem:[%s2 + $0x48] sm:$0xf]
    %v398 = vld [vmem:[%s2 + $0x4c] sm:$0xf]
    %v399 = vld [vmem:[%s2 + $0x50] sm:$0xf]
    %v400 = vld [vmem:[%s2 + $0x54] sm:$0xf]
    %v401 = vld [vmem:[%s2 + $0x58] sm:$0xf]
    %v402 = vld [vmem:[%s2 + $0x5c] sm:$0xf]
    %v403 = vld [vmem:[%s2 + $0x60] sm:$0xf]
    %v404 = vld [vmem:[%s2 + $0x64] sm:$0xf]
    %v405 = vld [vmem:[%s2 + $0x68] sm:$0xf]
    %v406 = vld [vmem:[%s2 + $0x6c] sm:$0xf]
    %v407 = vld [vmem:[%s2 + $0x70] sm:$0xf]
    %v408 = vld [vmem:[%s2 + $0x74] sm:$0xf]
    %v409 = vld [vmem:[%s2 + $0x78] sm:$0xf]
    %v410 = vld [vmem:[%s2 + $0x7c] sm:$0xf]
    %v411 = vld [vmem:[%s2 + $0x80] sm:$0xf]
    %v412 = vld [vmem:[%s2 + $0x84] sm:$0xf]
    %v413 = vld [vmem:[%s2 + $0x88] sm:$0xf]
    %v414 = vld [vmem:[%s2 + $0x8c] sm:$0xf]
    %v415 = vld [vmem:[%s2 + $0x90] sm:$0xf]
    %v416 = vld [vmem:[%s2 + $0x94] sm:$0xf]
    %v417 = vld [vmem:[%s2 + $0x98] sm:$0xf]
    %v418 = vld [vmem:[%s2 + $0x9c] sm:$0xf]
    %v419 = vld [vmem:[%s2 + $0xa0] sm:$0xf]
    %v420 = vld [vmem:[%s2 + $0xa4] sm:$0xf]
    %v421 = vld [vmem:[%s2 + $0xa8] sm:$0xf]
    %v422 = vld [vmem:[%s2 + $0xac] sm:$0xf]
    %v423 = vld [vmem:[%s2 + $0xb0] sm:$0xf]
    %v424 = vld [vmem:[%s2 + $0xb4] sm:$0xf]
    %v425 = vld [vmem:[%s2 + $0xb8] sm:$0xf]
    %v426 = vld [vmem:[%s2 + $0xbc] sm:$0xf]
    %v427 = vld [vmem:[%s2 + $0xc0] sm:$0xf]
    %v428 = vld [vmem:[%s2 + $0xc4] sm:$0xf]
    %v429 = vld [vmem:[%s2 + $0xc8] sm:$0xf]
    %v430 = vld [vmem:[%s2 + $0xcc] sm:$0xf]
    %v431 = vld [vmem:[%s2 + $0xd0] sm:$0xf]
    %v432 = vld [vmem:[%s2 + $0xd4] sm:$0xf]
    %v433 = vld [vmem:[%s2 + $0xd8] sm:$0xf]
    %v434 = vld [vmem:[%s2 + $0xdc] sm:$0xf]
    %v435 = vld [vmem:[%s2 + $0xe0] sm:$0xf]
    %v436 = vld [vmem:[%s2 + $0xe4] sm:$0xf]
    %v437 = vld [vmem:[%s2 + $0xe8] sm:$0xf]
    %v438 = vld [vmem:[%s2 + $0xec] sm:$0xf]
    %v439 = vld [vmem:[%s2 + $0xf0] sm:$0xf]
    %v440 = vld [vmem:[%s2 + $0xf4] sm:$0xf]
    %v441 = vld [vmem:[%s2 + $0xf8] sm:$0xf]
    %v442 = vld [vmem:[%s2 + $0xfc] sm:$0xf]
    %v443 = vld [vmem:[%s2 + $0x100] sm:$0xf]
    %v444 = vld [vmem:[%s2 + $0x104] sm:$0xf]
    %v445 = vld [vmem:[%s2 + $0x108] sm:$0xf]
    %v446 = vld [vmem:[%s2 + $0x10c] sm:$0xf]
    %v447 = vld [vmem:[%s2 + $0x110] sm:$0xf]
    %v448 = vld [vmem:[%s2 + $0x114] sm:$0xf]
    %v449 = vld [vmem:[%s2 + $0x118] sm:$0xf]
    %v450 = vld [vmem:[%s2 + $0x11c] sm:$0xf]
    %v451 = vld [vmem:[%s2 + $0x120] sm:$0xf]
    %v452 = vld [vmem:[%s2 + $0x124] sm:$0xf]
    %v453 = vld [vmem:[%s2 + $0x128] sm:$0xf]
    %v454 = vld [vmem:[%s2 + $0x12c] sm:$0xf]
    %v455 = vld [vmem:[%s2 + $0x130] sm:$0xf]
    %v456 = vld [vmem:[%s2 + $0x134] sm:$0xf]
    %v457 = vld [vmem:[%s2 + $0x138] sm:$0xf]
    %v458 = vld [vmem:[%s2 + $0x13c] sm:$0xf]
    %v459 = vld [vmem:[%s2 + $0x140] sm:$0xf]
    %v460 = vld [vmem:[%s2 + $0x144] sm:$0xf]
    %v461 = vld [vmem:[%s2 + $0x148] sm:$0xf]
    %v462 = vld [vmem:[%s2 + $0x14c] sm:$0xf]
    %v463 = vld [vmem:[%s2 + $0x150] sm:$0xf]
    %v464 = vld [vmem:[%s2 + $0x154] sm:$0xf]
    %v465 = vld [vmem:[%s2 + $0x158] sm:$0xf]
    %v466 = vld [vmem:[%s2 + $0x15c] sm:$0xf]
    %v467 = vld [vmem:[%s2 + $0x160] sm:$0xf]
    %v468 = vld [vmem:[%s2 + $0x164] sm:$0xf]
    %v469 = vld [vmem:[%s2 + $0x168] sm:$0xf]
    %v470 = vld [vmem:[%s2 + $0x16c] sm:$0xf]
    %v471 = vld [vmem:[%s2 + $0x170] sm:$0xf]
    %v472 = vld [vmem:[%s2 + $0x174] sm:$0xf]
    %v473 = vld [vmem:[%s2 + $0x178] sm:$0xf]
    %v474 = vld [vmem:[%s2 + $0x17c] sm:$0xf]
    %v475 = vld [vmem:[%s3] sm:$0x1]
    %v477 = vperm.slane %v475, 0
    %v491 = vunpack.c.l.b16 %v367
    %v492 = vunpack.c.l.b16 %v368
    %v493 = vunpack.c.l.b16 %v369
    %v494 = vunpack.c.l.b16 %v370
    %v495 = vunpack.c.l.b16 %v371
    %v496 = vunpack.c.l.b16 %v372
    %v497 = vunpack.c.l.b16 %v373
    %v498 = vunpack.c.l.b16 %v374
    %v499 = vunpack.c.l.b16 %v375
    %v500 = vunpack.c.l.b16 %v376
    %v501 = vunpack.c.l.b16 %v377
    %v502 = vunpack.c.l.b16 %v378
    %v503 = vrot.slane %v497, 7
    %v504 = vsel %vm183, %v503, %v491
    %v505 = vrot.slane %v498, 7
    %v506 = vsel %vm183, %v505, %v492
    %v507 = vrot.slane %v499, 7
    %v508 = vsel %vm183, %v507, %v493
    %v509 = vrot.slane %v500, 7
    %v510 = vsel %vm183, %v509, %v494
    %v511 = vrot.slane %v501, 7
    %v512 = vsel %vm183, %v511, %v495
    %v513 = vrot.slane %v502, 7
    %v514 = vsel %vm183, %v513, %v496
    %v515 = vpack.c.b16 %v504, %v504
    %v516 = vpack.c.b16 %v506, %v506
    %v517 = vpack.c.b16 %v508, %v508
    %v518 = vpack.c.b16 %v510, %v510
    %v519 = vpack.c.b16 %v512, %v512
    %v520 = vpack.c.b16 %v514, %v514
    %v623 = vunpack.c.l.b16 %v379
    %v624 = vunpack.c.l.b16 %v380
    %v625 = vunpack.c.l.b16 %v381
    %v626 = vunpack.c.l.b16 %v382
    %v627 = vunpack.c.l.b16 %v383
    %v628 = vunpack.c.l.b16 %v384
    %v629 = vunpack.c.l.b16 %v385
    %v630 = vunpack.c.l.b16 %v386
    %v631 = vunpack.c.l.b16 %v387
    %v632 = vunpack.c.l.b16 %v388
    %v633 = vunpack.c.l.b16 %v389
    %v634 = vunpack.c.l.b16 %v390
    %v635 = vunpack.c.l.b16 %v391
    %v636 = vunpack.c.l.b16 %v392
    %v637 = vunpack.c.l.b16 %v393
    %v638 = vunpack.c.l.b16 %v394
    %v639 = vunpack.c.l.b16 %v395
    %v640 = vunpack.c.l.b16 %v396
    %v641 = vunpack.c.l.b16 %v397
    %v642 = vunpack.c.l.b16 %v398
    %v643 = vunpack.c.l.b16 %v399
    %v644 = vunpack.c.l.b16 %v400
    %v645 = vunpack.c.l.b16 %v401
    %v646 = vunpack.c.l.b16 %v402
    %v647 = vunpack.c.l.b16 %v403
    %v648 = vunpack.c.l.b16 %v404
    %v649 = vunpack.c.l.b16 %v405
    %v650 = vunpack.c.l.b16 %v406
    %v651 = vunpack.c.l.b16 %v407
    %v652 = vunpack.c.l.b16 %v408
    %v653 = vunpack.c.l.b16 %v409
    %v654 = vunpack.c.l.b16 %v410
    %v655 = vunpack.c.l.b16 %v411
    %v656 = vunpack.c.l.b16 %v412
    %v657 = vunpack.c.l.b16 %v413
    %v658 = vunpack.c.l.b16 %v414
    %v659 = vunpack.c.l.b16 %v415
    %v660 = vunpack.c.l.b16 %v416
    %v661 = vunpack.c.l.b16 %v417
    %v662 = vunpack.c.l.b16 %v418
    %v663 = vunpack.c.l.b16 %v419
    %v664 = vunpack.c.l.b16 %v420
    %v665 = vunpack.c.l.b16 %v421
    %v666 = vunpack.c.l.b16 %v422
    %v667 = vunpack.c.l.b16 %v423
    %v668 = vunpack.c.l.b16 %v424
    %v669 = vunpack.c.l.b16 %v425
    %v670 = vunpack.c.l.b16 %v426
    %v671 = vunpack.c.l.b16 %v427
    %v672 = vunpack.c.l.b16 %v428
    %v673 = vunpack.c.l.b16 %v429
    %v674 = vunpack.c.l.b16 %v430
    %v675 = vunpack.c.l.b16 %v431
    %v676 = vunpack.c.l.b16 %v432
    %v677 = vunpack.c.l.b16 %v433
    %v678 = vunpack.c.l.b16 %v434
    %v679 = vunpack.c.l.b16 %v435
    %v680 = vunpack.c.l.b16 %v436
    %v681 = vunpack.c.l.b16 %v437
    %v682 = vunpack.c.l.b16 %v438
    %v683 = vunpack.c.l.b16 %v439
    %v684 = vunpack.c.l.b16 %v440
    %v685 = vunpack.c.l.b16 %v441
    %v686 = vunpack.c.l.b16 %v442
    %v687 = vunpack.c.l.b16 %v443
    %v688 = vunpack.c.l.b16 %v444
    %v689 = vunpack.c.l.b16 %v445
    %v690 = vunpack.c.l.b16 %v446
    %v691 = vunpack.c.l.b16 %v447
    %v692 = vunpack.c.l.b16 %v448
    %v693 = vunpack.c.l.b16 %v449
    %v694 = vunpack.c.l.b16 %v450
    %v695 = vunpack.c.l.b16 %v451
    %v696 = vunpack.c.l.b16 %v452
    %v697 = vunpack.c.l.b16 %v453
    %v698 = vunpack.c.l.b16 %v454
    %v699 = vunpack.c.l.b16 %v455
    %v700 = vunpack.c.l.b16 %v456
    %v701 = vunpack.c.l.b16 %v457
    %v702 = vunpack.c.l.b16 %v458
    %v703 = vunpack.c.l.b16 %v459
    %v704 = vunpack.c.l.b16 %v460
    %v705 = vunpack.c.l.b16 %v461
    %v706 = vunpack.c.l.b16 %v462
    %v707 = vunpack.c.l.b16 %v463
    %v708 = vunpack.c.l.b16 %v464
    %v709 = vunpack.c.l.b16 %v465
    %v710 = vunpack.c.l.b16 %v466
    %v711 = vunpack.c.l.b16 %v467
    %v712 = vunpack.c.l.b16 %v468
    %v713 = vunpack.c.l.b16 %v469
    %v714 = vunpack.c.l.b16 %v470
    %v715 = vunpack.c.l.b16 %v471
    %v716 = vunpack.c.l.b16 %v472
    %v717 = vunpack.c.l.b16 %v473
    %v718 = vunpack.c.l.b16 %v474
    %v719 = vpack.c.b16 %v624, %v623
    %v720 = vpack.c.b16 %v626, %v625
    %v721 = vpack.c.b16 %v628, %v627
    %v722 = vpack.c.b16 %v630, %v629
    %v723 = vpack.c.b16 %v632, %v631
    %v724 = vpack.c.b16 %v634, %v633
    %v725 = vpack.c.b16 %v636, %v635
    %v726 = vpack.c.b16 %v638, %v637
    %v727 = vpack.c.b16 %v640, %v639
    %v728 = vpack.c.b16 %v642, %v641
    %v729 = vpack.c.b16 %v644, %v643
    %v730 = vpack.c.b16 %v646, %v645
    %v731 = vpack.c.b16 %v648, %v647
    %v732 = vpack.c.b16 %v650, %v649
    %v733 = vpack.c.b16 %v652, %v651
    %v734 = vpack.c.b16 %v654, %v653
    %v735 = vpack.c.b16 %v656, %v655
    %v736 = vpack.c.b16 %v658, %v657
    %v737 = vpack.c.b16 %v660, %v659
    %v738 = vpack.c.b16 %v662, %v661
    %v739 = vpack.c.b16 %v664, %v663
    %v740 = vpack.c.b16 %v666, %v665
    %v741 = vpack.c.b16 %v668, %v667
    %v742 = vpack.c.b16 %v670, %v669
    %v743 = vpack.c.b16 %v672, %v671
    %v744 = vpack.c.b16 %v674, %v673
    %v745 = vpack.c.b16 %v676, %v675
    %v746 = vpack.c.b16 %v678, %v677
    %v747 = vpack.c.b16 %v680, %v679
    %v748 = vpack.c.b16 %v682, %v681
    %v749 = vpack.c.b16 %v684, %v683
    %v750 = vpack.c.b16 %v686, %v685
    %v751 = vpack.c.b16 %v688, %v687
    %v752 = vpack.c.b16 %v690, %v689
    %v753 = vpack.c.b16 %v692, %v691
    %v754 = vpack.c.b16 %v694, %v693
    %v755 = vpack.c.b16 %v696, %v695
    %v756 = vpack.c.b16 %v698, %v697
    %v757 = vpack.c.b16 %v700, %v699
    %v758 = vpack.c.b16 %v702, %v701
    %v759 = vpack.c.b16 %v704, %v703
    %v760 = vpack.c.b16 %v706, %v705
    %v761 = vpack.c.b16 %v708, %v707
    %v762 = vpack.c.b16 %v710, %v709
    %v763 = vpack.c.b16 %v712, %v711
    %v764 = vpack.c.b16 %v714, %v713
    %v765 = vpack.c.b16 %v716, %v715
    %v766 = vpack.c.b16 %v718, %v717
    %815 = vmatpush.bf16.msra.mxu0 %v726
    %816 = vmatpush.bf16.msra.mxu0 %v725
    %817 = vmatpush.bf16.msra.mxu0 %v724
    %818 = vmatpush.bf16.msra.mxu0 %v723
    %819 = vmatpush.bf16.msra.mxu0 %v722
    %820 = vmatpush.bf16.msra.mxu0 %v721
    %821 = vmatpush.bf16.msra.mxu0 %v720
    %822 = vmatpush.bf16.msra.mxu0 %v719
    %823 = vmatmul.bf16.gmra.mxu0 %v515
    %v824 = vpop.f32.mrf.mxu0
    %v825 = vadd.f32 %v477, %v824
    %v826 = vpop.f32.mrf.mxu0
    %827 = vdwg.mxu0
    %828 = vmatpush.bf16.msra.mxu0 %v734
    %829 = vmatpush.bf16.msra.mxu0 %v733
    %830 = vmatpush.bf16.msra.mxu0 %v732
    %831 = vmatpush.bf16.msra.mxu0 %v731
    %832 = vmatpush.bf16.msra.mxu0 %v730
    %833 = vmatpush.bf16.msra.mxu0 %v729
    %834 = vmatpush.bf16.msra.mxu0 %v728
    %835 = vmatpush.bf16.msra.mxu0 %v727
    %836 = vmatmul.bf16.gmra.mxu0 %v516
    %v837 = vpop.f32.mrf.mxu0
    %v838 = vadd.f32 %v825, %v837
    %v839 = vpop.f32.mrf.mxu0
    %840 = vdwg.mxu0
    %841 = vmatpush.bf16.msra.mxu0 %v742
    %842 = vmatpush.bf16.msra.mxu0 %v741
    %843 = vmatpush.bf16.msra.mxu0 %v740
    %844 = vmatpush.bf16.msra.mxu0 %v739
    %845 = vmatpush.bf16.msra.mxu0 %v738
    %846 = vmatpush.bf16.msra.mxu0 %v737
    %847 = vmatpush.bf16.msra.mxu0 %v736
    %848 = vmatpush.bf16.msra.mxu0 %v735
    %849 = vmatmul.bf16.gmra.mxu0 %v517
    %v850 = vpop.f32.mrf.mxu0
    %v851 = vadd.f32 %v838, %v850
    %v852 = vpop.f32.mrf.mxu0
    %853 = vdwg.mxu0
    %854 = vmatpush.bf16.msra.mxu0 %v750
    %855 = vmatpush.bf16.msra.mxu0 %v749
    %856 = vmatpush.bf16.msra.mxu0 %v748
    %857 = vmatpush.bf16.msra.mxu0 %v747
    %858 = vmatpush.bf16.msra.mxu0 %v746
    %859 = vmatpush.bf16.msra.mxu0 %v745
    %860 = vmatpush.bf16.msra.mxu0 %v744
    %861 = vmatpush.bf16.msra.mxu0 %v743
    %862 = vmatmul.bf16.gmra.mxu0 %v518
    %v863 = vpop.f32.mrf.mxu0
    %v864 = vadd.f32 %v851, %v863
    %v865 = vpop.f32.mrf.mxu0
    %866 = vdwg.mxu0
    %867 = vmatpush.bf16.msra.mxu0 %v758
    %868 = vmatpush.bf16.msra.mxu0 %v757
    %869 = vmatpush.bf16.msra.mxu0 %v756
    %870 = vmatpush.bf16.msra.mxu0 %v755
    %871 = vmatpush.bf16.msra.mxu0 %v754
    %872 = vmatpush.bf16.msra.mxu0 %v753
    %873 = vmatpush.bf16.msra.mxu0 %v752
    %874 = vmatpush.bf16.msra.mxu0 %v751
    %875 = vmatmul.bf16.gmra.mxu0 %v519
    %v876 = vpop.f32.mrf.mxu0
    %v877 = vadd.f32 %v864, %v876
    %v878 = vpop.f32.mrf.mxu0
    %879 = vdwg.mxu0
    %880 = vmatpush.bf16.msra.mxu0 %v766
    %881 = vmatpush.bf16.msra.mxu0 %v765
    %882 = vmatpush.bf16.msra.mxu0 %v764
    %883 = vmatpush.bf16.msra.mxu0 %v763
    %884 = vmatpush.bf16.msra.mxu0 %v762
    %885 = vmatpush.bf16.msra.mxu0 %v761
    %886 = vmatpush.bf16.msra.mxu0 %v760
    %887 = vmatpush.bf16.msra.mxu0 %v759
    %888 = vmatmul.bf16.gmra.mxu0 %v520
    %v889 = vpop.f32.mrf.mxu0
    %v890 = vadd.f32 %v877, %v889
    %v891 = vpop.f32.mrf.mxu0
    %892 = vdwg.mxu0
    %893 = vst [vmem:[#allocation2] sm:$0x3] %v890
    // Predicated region
    $region18: #{resnet_forward.9} parent=1 // pred_check
      _
    $region19: #{resnet_forward.9} parent=1 // pred_check_branch
      %895 = sbr.rel (0) target = $region21
    $region20: #{resnet_forward.9} parent=1 // pred_region
      %897 = vsyncadd [#allocation3], 0
      %s899 = sshll.u32 [#allocation2], 4
      %s900 = int_to_ptr.vmem [resolvable:$true] %s899
      %s901 = sshll.u32 %s4, 4
      %s902 = int_to_ptr.hbm [resolvable:$true] %s901
      %904 = dma.vmem_to_hbm [thread:$0]  %s900, 32, %s902, [#allocation3]
    $region21: #{resnet_forward.9} parent=1 // pred_fallthru
      _
    // Predicated region
    $region22: #{resnet_forward.9} parent=1 // pred_check
      _
    $region23: #{resnet_forward.9} parent=1 // pred_check_branch
      %906 = sbr.rel (0) target = $region25
    $region24: #{resnet_forward.9} parent=1 // pred_region
      %908 = dma.done [#allocation3], 32
    $region25: #{resnet_forward.9} parent=1 // pred_fallthru
      _
    %909 = vsyncpa [#allocation3], 1

// kernel: resnet_forward.8
$region0: #{resnet_forward.8}
  #allocation0 [shape = 'u32[]', space=smem, size = 0x4, offset = 0x4, fixed_abs, tag = 'smem constant byte address 0x4 - core index']
  #allocation1 [shape = 'u32[72,128]{1,0:T(1,128)}', space=vmem, size = 0x9000, scoped, tag = 'internal scratch']
  %s0 = inlined_call_operand.vmem [shape: bf16[8,1536], index: 0, kind: input, shape index: {}]
  %s1 = inlined_call_operand.vmem [shape: bf16[1536,768], index: 1, kind: input, shape index: {}]
  %s2 = inlined_call_operand.vmem [shape: f32[1,768], index: 2, kind: input, shape index: {}]
  %s3 = inlined_call_operand.vmem [shape: bf16[8,768], index: 3, kind: output, shape index: {}]
  %s4 = sld [smem:[#allocation0]]
  $region22: #{resnet_forward.8} parent=0
    _
  %s6 = ssub.s32 1, %s4
  %s7 = scalar_select 0, %s6, %s4
  // Predicated region
  $region2: #{resnet_forward.8} parent=0 // pred_check
    _
  $region3: #{resnet_forward.8} parent=0 // pred_check_branch
    %9 = sbr.rel (0) target = $region5
  $region4: #{resnet_forward.8} parent=0 // pred_region
    _
  $region5: #{resnet_forward.8} parent=0 // pred_fallthru
    _
  // Predicated region
  $region6: #{resnet_forward.8} parent=0 // pred_check
    _
  $region7: #{resnet_forward.8} parent=0 // pred_check_branch
    %11 = sbr.rel (0) target = $region9
  $region8: #{resnet_forward.8} parent=0 // pred_region
    _
  $region9: #{resnet_forward.8} parent=0 // pred_fallthru
    _
  // Predicated region
  $region10: #{resnet_forward.8} parent=0 // pred_check
    _
  $region11: #{resnet_forward.8} parent=0 // pred_check_branch
    %13 = sbr.rel (0) target = $region13
  $region12: #{resnet_forward.8} parent=0 // pred_region
    _
  $region13: #{resnet_forward.8} parent=0 // pred_fallthru
    _
  %v14 = vld [vmem:[%s0] sm:$0xff]
  %v15 = vld [vmem:[%s0 + $0x8] sm:$0xff]
  %v16 = vld [vmem:[%s0 + $0x10] sm:$0xff]
  %v17 = vld [vmem:[%s0 + $0x18] sm:$0xff]
  %v18 = vld [vmem:[%s0 + $0x20] sm:$0xff]
  %v19 = vld [vmem:[%s0 + $0x28] sm:$0xff]
  %v20 = vld [vmem:[%s1] sm:$0xff]
  %v21 = vld [vmem:[%s1 + $0x8] sm:$0xff]
  %v22 = vld [vmem:[%s1 + $0x10] sm:$0xff]
  %v23 = vld [vmem:[%s1 + $0x18] sm:$0xff]
  %v24 = vld [vmem:[%s1 + $0x20] sm:$0xff]
  %v25 = vld [vmem:[%s1 + $0x28] sm:$0xff]
  %v26 = vld [vmem:[%s1 + $0x30] sm:$0xff]
  %v27 = vld [vmem:[%s1 + $0x38] sm:$0xff]
  %v28 = vld [vmem:[%s1 + $0x40] sm:$0xff]
  %v29 = vld [vmem:[%s1 + $0x48] sm:$0xff]
  %v30 = vld [vmem:[%s1 + $0x50] sm:$0xff]
  %v31 = vld [vmem:[%s1 + $0x58] sm:$0xff]
  %v32 = vld [vmem:[%s1 + $0x60] sm:$0xff]
  %v33 = vld [vmem:[%s1 + $0x68] sm:$0xff]
  %v34 = vld [vmem:[%s1 + $0x70] sm:$0xff]
  %v35 = vld [vmem:[%s1 + $0x78] sm:$0xff]
  %v36 = vld [vmem:[%s1 + $0x80] sm:$0xff]
  %v37 = vld [vmem:[%s1 + $0x88] sm:$0xff]
  %v38 = vld [vmem:[%s1 + $0x90] sm:$0xff]
  %v39 = vld [vmem:[%s1 + $0x98] sm:$0xff]
  %v40 = vld [vmem:[%s1 + $0xa0] sm:$0xff]
  %v41 = vld [vmem:[%s1 + $0xa8] sm:$0xff]
  %v42 = vld [vmem:[%s1 + $0xb0] sm:$0xff]
  %v43 = vld [vmem:[%s1 + $0xb8] sm:$0xff]
  %v44 = vld [vmem:[%s1 + $0xc0] sm:$0xff]
  %v45 = vld [vmem:[%s1 + $0xc8] sm:$0xff]
  %v46 = vld [vmem:[%s1 + $0xd0] sm:$0xff]
  %v47 = vld [vmem:[%s1 + $0xd8] sm:$0xff]
  %v48 = vld [vmem:[%s1 + $0xe0] sm:$0xff]
  %v49 = vld [vmem:[%s1 + $0xe8] sm:$0xff]
  %v50 = vld [vmem:[%s1 + $0xf0] sm:$0xff]
  %v51 = vld [vmem:[%s1 + $0xf8] sm:$0xff]
  %v52 = vld [vmem:[%s1 + $0x100] sm:$0xff]
  %v53 = vld [vmem:[%s1 + $0x108] sm:$0xff]
  %v54 = vld [vmem:[%s1 + $0x110] sm:$0xff]
  %v55 = vld [vmem:[%s1 + $0x118] sm:$0xff]
  %v56 = vld [vmem:[%s1 + $0x120] sm:$0xff]
  %v57 = vld [vmem:[%s1 + $0x128] sm:$0xff]
  %v58 = vld [vmem:[%s1 + $0x130] sm:$0xff]
  %v59 = vld [vmem:[%s1 + $0x138] sm:$0xff]
  %v60 = vld [vmem:[%s1 + $0x140] sm:$0xff]
  %v61 = vld [vmem:[%s1 + $0x148] sm:$0xff]
  %v62 = vld [vmem:[%s1 + $0x150] sm:$0xff]
  %v63 = vld [vmem:[%s1 + $0x158] sm:$0xff]
  %v64 = vld [vmem:[%s1 + $0x160] sm:$0xff]
  %v65 = vld [vmem:[%s1 + $0x168] sm:$0xff]
  %v66 = vld [vmem:[%s1 + $0x170] sm:$0xff]
  %v67 = vld [vmem:[%s1 + $0x178] sm:$0xff]
  %v68 = vld [vmem:[%s1 + $0x180] sm:$0xff]
  %v69 = vld [vmem:[%s1 + $0x188] sm:$0xff]
  %v70 = vld [vmem:[%s1 + $0x190] sm:$0xff]
  %v71 = vld [vmem:[%s1 + $0x198] sm:$0xff]
  %v72 = vld [vmem:[%s1 + $0x1a0] sm:$0xff]
  %v73 = vld [vmem:[%s1 + $0x1a8] sm:$0xff]
  %v74 = vld [vmem:[%s1 + $0x1b0] sm:$0xff]
  %v75 = vld [vmem:[%s1 + $0x1b8] sm:$0xff]
  %v76 = vld [vmem:[%s1 + $0x1c0] sm:$0xff]
  %v77 = vld [vmem:[%s1 + $0x1c8] sm:$0xff]
  %v78 = vld [vmem:[%s1 + $0x1d0] sm:$0xff]
  %v79 = vld [vmem:[%s1 + $0x1d8] sm:$0xff]
  %v80 = vld [vmem:[%s1 + $0x1e0] sm:$0xff]
  %v81 = vld [vmem:[%s1 + $0x1e8] sm:$0xff]
  %v82 = vld [vmem:[%s1 + $0x1f0] sm:$0xff]
  %v83 = vld [vmem:[%s1 + $0x1f8] sm:$0xff]
  %v84 = vld [vmem:[%s1 + $0x200] sm:$0xff]
  %v85 = vld [vmem:[%s1 + $0x208] sm:$0xff]
  %v86 = vld [vmem:[%s1 + $0x210] sm:$0xff]
  %v87 = vld [vmem:[%s1 + $0x218] sm:$0xff]
  %v88 = vld [vmem:[%s1 + $0x220] sm:$0xff]
  %v89 = vld [vmem:[%s1 + $0x228] sm:$0xff]
  %v90 = vld [vmem:[%s1 + $0x230] sm:$0xff]
  %v91 = vld [vmem:[%s1 + $0x238] sm:$0xff]
  %v92 = vld [vmem:[%s1 + $0x240] sm:$0xff]
  %v93 = vld [vmem:[%s1 + $0x248] sm:$0xff]
  %v94 = vld [vmem:[%s1 + $0x250] sm:$0xff]
  %v95 = vld [vmem:[%s1 + $0x258] sm:$0xff]
  %v96 = vld [vmem:[%s1 + $0x260] sm:$0xff]
  %v97 = vld [vmem:[%s1 + $0x268] sm:$0xff]
  %v98 = vld [vmem:[%s1 + $0x270] sm:$0xff]
  %v99 = vld [vmem:[%s1 + $0x278] sm:$0xff]
  %v100 = vld [vmem:[%s1 + $0x280] sm:$0xff]
  %v101 = vld [vmem:[%s1 + $0x288] sm:$0xff]
  %v102 = vld [vmem:[%s1 + $0x290] sm:$0xff]
  %v103 = vld [vmem:[%s1 + $0x298] sm:$0xff]
  %v104 = vld [vmem:[%s1 + $0x2a0] sm:$0xff]
  %v105 = vld [vmem:[%s1 + $0x2a8] sm:$0xff]
  %v106 = vld [vmem:[%s1 + $0x2b0] sm:$0xff]
  %v107 = vld [vmem:[%s1 + $0x2b8] sm:$0xff]
  %v108 = vld [vmem:[%s1 + $0x2c0] sm:$0xff]
  %v109 = vld [vmem:[%s1 + $0x2c8] sm:$0xff]
  %v110 = vld [vmem:[%s1 + $0x2d0] sm:$0xff]
  %v111 = vld [vmem:[%s1 + $0x2d8] sm:$0xff]
  %v112 = vld [vmem:[%s1 + $0x2e0] sm:$0xff]
  %v113 = vld [vmem:[%s1 + $0x2e8] sm:$0xff]
  %v114 = vld [vmem:[%s1 + $0x2f0] sm:$0xff]
  %v115 = vld [vmem:[%s1 + $0x2f8] sm:$0xff]
  %v116 = vld [vmem:[%s1 + $0x300] sm:$0xff]
  %v117 = vld [vmem:[%s1 + $0x308] sm:$0xff]
  %v118 = vld [vmem:[%s1 + $0x310] sm:$0xff]
  %v119 = vld [vmem:[%s1 + $0x318] sm:$0xff]
  %v120 = vld [vmem:[%s1 + $0x320] sm:$0xff]
  %v121 = vld [vmem:[%s1 + $0x328] sm:$0xff]
  %v122 = vld [vmem:[%s1 + $0x330] sm:$0xff]
  %v123 = vld [vmem:[%s1 + $0x338] sm:$0xff]
  %v124 = vld [vmem:[%s1 + $0x340] sm:$0xff]
  %v125 = vld [vmem:[%s1 + $0x348] sm:$0xff]
  %v126 = vld [vmem:[%s1 + $0x350] sm:$0xff]
  %v127 = vld [vmem:[%s1 + $0x358] sm:$0xff]
  %v128 = vld [vmem:[%s1 + $0x360] sm:$0xff]
  %v129 = vld [vmem:[%s1 + $0x368] sm:$0xff]
  %v130 = vld [vmem:[%s1 + $0x370] sm:$0xff]
  %v131 = vld [vmem:[%s1 + $0x378] sm:$0xff]
  %v132 = vld [vmem:[%s1 + $0x380] sm:$0xff]
  %v133 = vld [vmem:[%s1 + $0x388] sm:$0xff]
  %v134 = vld [vmem:[%s1 + $0x390] sm:$0xff]
  %v135 = vld [vmem:[%s1 + $0x398] sm:$0xff]
  %v136 = vld [vmem:[%s1 + $0x3a0] sm:$0xff]
  %v137 = vld [vmem:[%s1 + $0x3a8] sm:$0xff]
  %v138 = vld [vmem:[%s1 + $0x3b0] sm:$0xff]
  %v139 = vld [vmem:[%s1 + $0x3b8] sm:$0xff]
  %v140 = vld [vmem:[%s1 + $0x3c0] sm:$0xff]
  %v141 = vld [vmem:[%s1 + $0x3c8] sm:$0xff]
  %v142 = vld [vmem:[%s1 + $0x3d0] sm:$0xff]
  %v143 = vld [vmem:[%s1 + $0x3d8] sm:$0xff]
  %v144 = vld [vmem:[%s1 + $0x3e0] sm:$0xff]
  %v145 = vld [vmem:[%s1 + $0x3e8] sm:$0xff]
  %v146 = vld [vmem:[%s1 + $0x3f0] sm:$0xff]
  %v147 = vld [vmem:[%s1 + $0x3f8] sm:$0xff]
  %v148 = vld [vmem:[%s1 + $0x400] sm:$0xff]
  %v149 = vld [vmem:[%s1 + $0x408] sm:$0xff]
  %v150 = vld [vmem:[%s1 + $0x410] sm:$0xff]
  %v151 = vld [vmem:[%s1 + $0x418] sm:$0xff]
  %v152 = vld [vmem:[%s1 + $0x420] sm:$0xff]
  %v153 = vld [vmem:[%s1 + $0x428] sm:$0xff]
  %v154 = vld [vmem:[%s1 + $0x430] sm:$0xff]
  %v155 = vld [vmem:[%s1 + $0x438] sm:$0xff]
  %v156 = vld [vmem:[%s1 + $0x440] sm:$0xff]
  %v157 = vld [vmem:[%s1 + $0x448] sm:$0xff]
  %v158 = vld [vmem:[%s1 + $0x450] sm:$0xff]
  %v159 = vld [vmem:[%s1 + $0x458] sm:$0xff]
  %v160 = vld [vmem:[%s1 + $0x460] sm:$0xff]
  %v161 = vld [vmem:[%s1 + $0x468] sm:$0xff]
  %v162 = vld [vmem:[%s1 + $0x470] sm:$0xff]
  %v163 = vld [vmem:[%s1 + $0x478] sm:$0xff]
  %v164 = vld [vmem:[%s1 + $0x480] sm:$0xff]
  %v165 = vld [vmem:[%s1 + $0x488] sm:$0xff]
  %v166 = vld [vmem:[%s1 + $0x490] sm:$0xff]
  %v167 = vld [vmem:[%s1 + $0x498] sm:$0xff]
  %v168 = vld [vmem:[%s1 + $0x4a0] sm:$0xff]
  %v169 = vld [vmem:[%s1 + $0x4a8] sm:$0xff]
  %v170 = vld [vmem:[%s1 + $0x4b0] sm:$0xff]
  %v171 = vld [vmem:[%s1 + $0x4b8] sm:$0xff]
  %v172 = vld [vmem:[%s1 + $0x4c0] sm:$0xff]
  %v173 = vld [vmem:[%s1 + $0x4c8] sm:$0xff]
  %v174 = vld [vmem:[%s1 + $0x4d0] sm:$0xff]
  %v175 = vld [vmem:[%s1 + $0x4d8] sm:$0xff]
  %v176 = vld [vmem:[%s1 + $0x4e0] sm:$0xff]
  %v177 = vld [vmem:[%s1 + $0x4e8] sm:$0xff]
  %v178 = vld [vmem:[%s1 + $0x4f0] sm:$0xff]
  %v179 = vld [vmem:[%s1 + $0x4f8] sm:$0xff]
  %v180 = vld [vmem:[%s1 + $0x500] sm:$0xff]
  %v181 = vld [vmem:[%s1 + $0x508] sm:$0xff]
  %v182 = vld [vmem:[%s1 + $0x510] sm:$0xff]
  %v183 = vld [vmem:[%s1 + $0x518] sm:$0xff]
  %v184 = vld [vmem:[%s1 + $0x520] sm:$0xff]
  %v185 = vld [vmem:[%s1 + $0x528] sm:$0xff]
  %v186 = vld [vmem:[%s1 + $0x530] sm:$0xff]
  %v187 = vld [vmem:[%s1 + $0x538] sm:$0xff]
  %v188 = vld [vmem:[%s1 + $0x540] sm:$0xff]
  %v189 = vld [vmem:[%s1 + $0x548] sm:$0xff]
  %v190 = vld [vmem:[%s1 + $0x550] sm:$0xff]
  %v191 = vld [vmem:[%s1 + $0x558] sm:$0xff]
  %v192 = vld [vmem:[%s1 + $0x560] sm:$0xff]
  %v193 = vld [vmem:[%s1 + $0x568] sm:$0xff]
  %v194 = vld [vmem:[%s1 + $0x570] sm:$0xff]
  %v195 = vld [vmem:[%s1 + $0x578] sm:$0xff]
  %v196 = vld [vmem:[%s1 + $0x580] sm:$0xff]
  %v197 = vld [vmem:[%s1 + $0x588] sm:$0xff]
  %v198 = vld [vmem:[%s1 + $0x590] sm:$0xff]
  %v199 = vld [vmem:[%s1 + $0x598] sm:$0xff]
  %v200 = vld [vmem:[%s1 + $0x5a0] sm:$0xff]
  %v201 = vld [vmem:[%s1 + $0x5a8] sm:$0xff]
  %v202 = vld [vmem:[%s1 + $0x5b0] sm:$0xff]
  %v203 = vld [vmem:[%s1 + $0x5b8] sm:$0xff]
  %v204 = vld [vmem:[%s1 + $0x5c0] sm:$0xff]
  %v205 = vld [vmem:[%s1 + $0x5c8] sm:$0xff]
  %v206 = vld [vmem:[%s1 + $0x5d0] sm:$0xff]
  %v207 = vld [vmem:[%s1 + $0x5d8] sm:$0xff]
  %v208 = vld [vmem:[%s1 + $0x5e0] sm:$0xff]
  %v209 = vld [vmem:[%s1 + $0x5e8] sm:$0xff]
  %v210 = vld [vmem:[%s1 + $0x5f0] sm:$0xff]
  %v211 = vld [vmem:[%s1 + $0x5f8] sm:$0xff]
  %v212 = vld [vmem:[%s1 + $0x600] sm:$0xff]
  %v213 = vld [vmem:[%s1 + $0x608] sm:$0xff]
  %v214 = vld [vmem:[%s1 + $0x610] sm:$0xff]
  %v215 = vld [vmem:[%s1 + $0x618] sm:$0xff]
  %v216 = vld [vmem:[%s1 + $0x620] sm:$0xff]
  %v217 = vld [vmem:[%s1 + $0x628] sm:$0xff]
  %v218 = vld [vmem:[%s1 + $0x630] sm:$0xff]
  %v219 = vld [vmem:[%s1 + $0x638] sm:$0xff]
  %v220 = vld [vmem:[%s1 + $0x640] sm:$0xff]
  %v221 = vld [vmem:[%s1 + $0x648] sm:$0xff]
  %v222 = vld [vmem:[%s1 + $0x650] sm:$0xff]
  %v223 = vld [vmem:[%s1 + $0x658] sm:$0xff]
  %v224 = vld [vmem:[%s1 + $0x660] sm:$0xff]
  %v225 = vld [vmem:[%s1 + $0x668] sm:$0xff]
  %v226 = vld [vmem:[%s1 + $0x670] sm:$0xff]
  %v227 = vld [vmem:[%s1 + $0x678] sm:$0xff]
  %v228 = vld [vmem:[%s1 + $0x680] sm:$0xff]
  %v229 = vld [vmem:[%s1 + $0x688] sm:$0xff]
  %v230 = vld [vmem:[%s1 + $0x690] sm:$0xff]
  %v231 = vld [vmem:[%s1 + $0x698] sm:$0xff]
  %v232 = vld [vmem:[%s1 + $0x6a0] sm:$0xff]
  %v233 = vld [vmem:[%s1 + $0x6a8] sm:$0xff]
  %v234 = vld [vmem:[%s1 + $0x6b0] sm:$0xff]
  %v235 = vld [vmem:[%s1 + $0x6b8] sm:$0xff]
  %v236 = vld [vmem:[%s1 + $0x6c0] sm:$0xff]
  %v237 = vld [vmem:[%s1 + $0x6c8] sm:$0xff]
  %v238 = vld [vmem:[%s1 + $0x6d0] sm:$0xff]
  %v239 = vld [vmem:[%s1 + $0x6d8] sm:$0xff]
  %v240 = vld [vmem:[%s1 + $0x6e0] sm:$0xff]
  %v241 = vld [vmem:[%s1 + $0x6e8] sm:$0xff]
  %v242 = vld [vmem:[%s1 + $0x6f0] sm:$0xff]
  %v243 = vld [vmem:[%s1 + $0x6f8] sm:$0xff]
  %v244 = vld [vmem:[%s1 + $0x700] sm:$0xff]
  %v245 = vld [vmem:[%s1 + $0x708] sm:$0xff]
  %v246 = vld [vmem:[%s1 + $0x710] sm:$0xff]
  %v247 = vld [vmem:[%s1 + $0x718] sm:$0xff]
  %v248 = vld [vmem:[%s1 + $0x720] sm:$0xff]
  %v249 = vld [vmem:[%s1 + $0x728] sm:$0xff]
  %v250 = vld [vmem:[%s1 + $0x730] sm:$0xff]
  %v251 = vld [vmem:[%s1 + $0x738] sm:$0xff]
  %v252 = vld [vmem:[%s1 + $0x740] sm:$0xff]
  %v253 = vld [vmem:[%s1 + $0x748] sm:$0xff]
  %v254 = vld [vmem:[%s1 + $0x750] sm:$0xff]
  %v255 = vld [vmem:[%s1 + $0x758] sm:$0xff]
  %v256 = vld [vmem:[%s1 + $0x760] sm:$0xff]
  %v257 = vld [vmem:[%s1 + $0x768] sm:$0xff]
  %v258 = vld [vmem:[%s1 + $0x770] sm:$0xff]
  %v259 = vld [vmem:[%s1 + $0x778] sm:$0xff]
  %v260 = vld [vmem:[%s1 + $0x780] sm:$0xff]
  %v261 = vld [vmem:[%s1 + $0x788] sm:$0xff]
  %v262 = vld [vmem:[%s1 + $0x790] sm:$0xff]
  %v263 = vld [vmem:[%s1 + $0x798] sm:$0xff]
  %v264 = vld [vmem:[%s1 + $0x7a0] sm:$0xff]
  %v265 = vld [vmem:[%s1 + $0x7a8] sm:$0xff]
  %v266 = vld [vmem:[%s1 + $0x7b0] sm:$0xff]
  %v267 = vld [vmem:[%s1 + $0x7b8] sm:$0xff]
  %v268 = vld [vmem:[%s1 + $0x7c0] sm:$0xff]
  %v269 = vld [vmem:[%s1 + $0x7c8] sm:$0xff]
  %v270 = vld [vmem:[%s1 + $0x7d0] sm:$0xff]
  %v271 = vld [vmem:[%s1 + $0x7d8] sm:$0xff]
  %v272 = vld [vmem:[%s1 + $0x7e0] sm:$0xff]
  %v273 = vld [vmem:[%s1 + $0x7e8] sm:$0xff]
  %v274 = vld [vmem:[%s1 + $0x7f0] sm:$0xff]
  %v275 = vld [vmem:[%s1 + $0x7f8] sm:$0xff]
  %v276 = vld [vmem:[%s1 + $0x800] sm:$0xff]
  %v277 = vld [vmem:[%s1 + $0x808] sm:$0xff]
  %v278 = vld [vmem:[%s1 + $0x810] sm:$0xff]
  %v279 = vld [vmem:[%s1 + $0x818] sm:$0xff]
  %v280 = vld [vmem:[%s1 + $0x820] sm:$0xff]
  %v281 = vld [vmem:[%s1 + $0x828] sm:$0xff]
  %v282 = vld [vmem:[%s1 + $0x830] sm:$0xff]
  %v283 = vld [vmem:[%s1 + $0x838] sm:$0xff]
  %v284 = vld [vmem:[%s1 + $0x840] sm:$0xff]
  %v285 = vld [vmem:[%s1 + $0x848] sm:$0xff]
  %v286 = vld [vmem:[%s1 + $0x850] sm:$0xff]
  %v287 = vld [vmem:[%s1 + $0x858] sm:$0xff]
  %v288 = vld [vmem:[%s1 + $0x860] sm:$0xff]
  %v289 = vld [vmem:[%s1 + $0x868] sm:$0xff]
  %v290 = vld [vmem:[%s1 + $0x870] sm:$0xff]
  %v291 = vld [vmem:[%s1 + $0x878] sm:$0xff]
  %v292 = vld [vmem:[%s1 + $0x880] sm:$0xff]
  %v293 = vld [vmem:[%s1 + $0x888] sm:$0xff]
  %v294 = vld [vmem:[%s1 + $0x890] sm:$0xff]
  %v295 = vld [vmem:[%s1 + $0x898] sm:$0xff]
  %v296 = vld [vmem:[%s1 + $0x8a0] sm:$0xff]
  %v297 = vld [vmem:[%s1 + $0x8a8] sm:$0xff]
  %v298 = vld [vmem:[%s1 + $0x8b0] sm:$0xff]
  %v299 = vld [vmem:[%s1 + $0x8b8] sm:$0xff]
  %v300 = vld [vmem:[%s1 + $0x8c0] sm:$0xff]
  %v301 = vld [vmem:[%s1 + $0x8c8] sm:$0xff]
  %v302 = vld [vmem:[%s1 + $0x8d0] sm:$0xff]
  %v303 = vld [vmem:[%s1 + $0x8d8] sm:$0xff]
  %v304 = vld [vmem:[%s1 + $0x8e0] sm:$0xff]
  %v305 = vld [vmem:[%s1 + $0x8e8] sm:$0xff]
  %v306 = vld [vmem:[%s1 + $0x8f0] sm:$0xff]
  %v307 = vld [vmem:[%s1 + $0x8f8] sm:$0xff]
  %v308 = vld [vmem:[%s1 + $0x900] sm:$0xff]
  %v309 = vld [vmem:[%s1 + $0x908] sm:$0xff]
  %v310 = vld [vmem:[%s1 + $0x910] sm:$0xff]
  %v311 = vld [vmem:[%s1 + $0x918] sm:$0xff]
  %v312 = vld [vmem:[%s1 + $0x920] sm:$0xff]
  %v313 = vld [vmem:[%s1 + $0x928] sm:$0xff]
  %v314 = vld [vmem:[%s1 + $0x930] sm:$0xff]
  %v315 = vld [vmem:[%s1 + $0x938] sm:$0xff]
  %v316 = vld [vmem:[%s1 + $0x940] sm:$0xff]
  %v317 = vld [vmem:[%s1 + $0x948] sm:$0xff]
  %v318 = vld [vmem:[%s1 + $0x950] sm:$0xff]
  %v319 = vld [vmem:[%s1 + $0x958] sm:$0xff]
  %v320 = vld [vmem:[%s1 + $0x960] sm:$0xff]
  %v321 = vld [vmem:[%s1 + $0x968] sm:$0xff]
  %v322 = vld [vmem:[%s1 + $0x970] sm:$0xff]
  %v323 = vld [vmem:[%s1 + $0x978] sm:$0xff]
  %v324 = vld [vmem:[%s1 + $0x980] sm:$0xff]
  %v325 = vld [vmem:[%s1 + $0x988] sm:$0xff]
  %v326 = vld [vmem:[%s1 + $0x990] sm:$0xff]
  %v327 = vld [vmem:[%s1 + $0x998] sm:$0xff]
  %v328 = vld [vmem:[%s1 + $0x9a0] sm:$0xff]
  %v329 = vld [vmem:[%s1 + $0x9a8] sm:$0xff]
  %v330 = vld [vmem:[%s1 + $0x9b0] sm:$0xff]
  %v331 = vld [vmem:[%s1 + $0x9b8] sm:$0xff]
  %v332 = vld [vmem:[%s1 + $0x9c0] sm:$0xff]
  %v333 = vld [vmem:[%s1 + $0x9c8] sm:$0xff]
  %v334 = vld [vmem:[%s1 + $0x9d0] sm:$0xff]
  %v335 = vld [vmem:[%s1 + $0x9d8] sm:$0xff]
  %v336 = vld [vmem:[%s1 + $0x9e0] sm:$0xff]
  %v337 = vld [vmem:[%s1 + $0x9e8] sm:$0xff]
  %v338 = vld [vmem:[%s1 + $0x9f0] sm:$0xff]
  %v339 = vld [vmem:[%s1 + $0x9f8] sm:$0xff]
  %v340 = vld [vmem:[%s1 + $0xa00] sm:$0xff]
  %v341 = vld [vmem:[%s1 + $0xa08] sm:$0xff]
  %v342 = vld [vmem:[%s1 + $0xa10] sm:$0xff]
  %v343 = vld [vmem:[%s1 + $0xa18] sm:$0xff]
  %v344 = vld [vmem:[%s1 + $0xa20] sm:$0xff]
  %v345 = vld [vmem:[%s1 + $0xa28] sm:$0xff]
  %v346 = vld [vmem:[%s1 + $0xa30] sm:$0xff]
  %v347 = vld [vmem:[%s1 + $0xa38] sm:$0xff]
  %v348 = vld [vmem:[%s1 + $0xa40] sm:$0xff]
  %v349 = vld [vmem:[%s1 + $0xa48] sm:$0xff]
  %v350 = vld [vmem:[%s1 + $0xa50] sm:$0xff]
  %v351 = vld [vmem:[%s1 + $0xa58] sm:$0xff]
  %v352 = vld [vmem:[%s1 + $0xa60] sm:$0xff]
  %v353 = vld [vmem:[%s1 + $0xa68] sm:$0xff]
  %v354 = vld [vmem:[%s1 + $0xa70] sm:$0xff]
  %v355 = vld [vmem:[%s1 + $0xa78] sm:$0xff]
  %v356 = vld [vmem:[%s1 + $0xa80] sm:$0xff]
  %v357 = vld [vmem:[%s1 + $0xa88] sm:$0xff]
  %v358 = vld [vmem:[%s1 + $0xa90] sm:$0xff]
  %v359 = vld [vmem:[%s1 + $0xa98] sm:$0xff]
  %v360 = vld [vmem:[%s1 + $0xaa0] sm:$0xff]
  %v361 = vld [vmem:[%s1 + $0xaa8] sm:$0xff]
  %v362 = vld [vmem:[%s1 + $0xab0] sm:$0xff]
  %v363 = vld [vmem:[%s1 + $0xab8] sm:$0xff]
  %v364 = vld [vmem:[%s1 + $0xac0] sm:$0xff]
  %v365 = vld [vmem:[%s1 + $0xac8] sm:$0xff]
  %v366 = vld [vmem:[%s1 + $0xad0] sm:$0xff]
  %v367 = vld [vmem:[%s1 + $0xad8] sm:$0xff]
  %v368 = vld [vmem:[%s1 + $0xae0] sm:$0xff]
  %v369 = vld [vmem:[%s1 + $0xae8] sm:$0xff]
  %v370 = vld [vmem:[%s1 + $0xaf0] sm:$0xff]
  %v371 = vld [vmem:[%s1 + $0xaf8] sm:$0xff]
  %v372 = vld [vmem:[%s1 + $0xb00] sm:$0xff]
  %v373 = vld [vmem:[%s1 + $0xb08] sm:$0xff]
  %v374 = vld [vmem:[%s1 + $0xb10] sm:$0xff]
  %v375 = vld [vmem:[%s1 + $0xb18] sm:$0xff]
  %v376 = vld [vmem:[%s1 + $0xb20] sm:$0xff]
  %v377 = vld [vmem:[%s1 + $0xb28] sm:$0xff]
  %v378 = vld [vmem:[%s1 + $0xb30] sm:$0xff]
  %v379 = vld [vmem:[%s1 + $0xb38] sm:$0xff]
  %v380 = vld [vmem:[%s1 + $0xb40] sm:$0xff]
  %v381 = vld [vmem:[%s1 + $0xb48] sm:$0xff]
  %v382 = vld [vmem:[%s1 + $0xb50] sm:$0xff]
  %v383 = vld [vmem:[%s1 + $0xb58] sm:$0xff]
  %v384 = vld [vmem:[%s1 + $0xb60] sm:$0xff]
  %v385 = vld [vmem:[%s1 + $0xb68] sm:$0xff]
  %v386 = vld [vmem:[%s1 + $0xb70] sm:$0xff]
  %v387 = vld [vmem:[%s1 + $0xb78] sm:$0xff]
  %v388 = vld [vmem:[%s1 + $0xb80] sm:$0xff]
  %v389 = vld [vmem:[%s1 + $0xb88] sm:$0xff]
  %v390 = vld [vmem:[%s1 + $0xb90] sm:$0xff]
  %v391 = vld [vmem:[%s1 + $0xb98] sm:$0xff]
  %v392 = vld [vmem:[%s1 + $0xba0] sm:$0xff]
  %v393 = vld [vmem:[%s1 + $0xba8] sm:$0xff]
  %v394 = vld [vmem:[%s1 + $0xbb0] sm:$0xff]
  %v395 = vld [vmem:[%s1 + $0xbb8] sm:$0xff]
  %v396 = vld [vmem:[%s1 + $0xbc0] sm:$0xff]
  %v397 = vld [vmem:[%s1 + $0xbc8] sm:$0xff]
  %v398 = vld [vmem:[%s1 + $0xbd0] sm:$0xff]
  %v399 = vld [vmem:[%s1 + $0xbd8] sm:$0xff]
  %v400 = vld [vmem:[%s1 + $0xbe0] sm:$0xff]
  %v401 = vld [vmem:[%s1 + $0xbe8] sm:$0xff]
  %v402 = vld [vmem:[%s1 + $0xbf0] sm:$0xff]
  %v403 = vld [vmem:[%s1 + $0xbf8] sm:$0xff]
  %v404 = vld [vmem:[%s1 + $0xc00] sm:$0xff]
  %v405 = vld [vmem:[%s1 + $0xc08] sm:$0xff]
  %v406 = vld [vmem:[%s1 + $0xc10] sm:$0xff]
  %v407 = vld [vmem:[%s1 + $0xc18] sm:$0xff]
  %v408 = vld [vmem:[%s1 + $0xc20] sm:$0xff]
  %v409 = vld [vmem:[%s1 + $0xc28] sm:$0xff]
  %v410 = vld [vmem:[%s1 + $0xc30] sm:$0xff]
  %v411 = vld [vmem:[%s1 + $0xc38] sm:$0xff]
  %v412 = vld [vmem:[%s1 + $0xc40] sm:$0xff]
  %v413 = vld [vmem:[%s1 + $0xc48] sm:$0xff]
  %v414 = vld [vmem:[%s1 + $0xc50] sm:$0xff]
  %v415 = vld [vmem:[%s1 + $0xc58] sm:$0xff]
  %v416 = vld [vmem:[%s1 + $0xc60] sm:$0xff]
  %v417 = vld [vmem:[%s1 + $0xc68] sm:$0xff]
  %v418 = vld [vmem:[%s1 + $0xc70] sm:$0xff]
  %v419 = vld [vmem:[%s1 + $0xc78] sm:$0xff]
  %v420 = vld [vmem:[%s1 + $0xc80] sm:$0xff]
  %v421 = vld [vmem:[%s1 + $0xc88] sm:$0xff]
  %v422 = vld [vmem:[%s1 + $0xc90] sm:$0xff]
  %v423 = vld [vmem:[%s1 + $0xc98] sm:$0xff]
  %v424 = vld [vmem:[%s1 + $0xca0] sm:$0xff]
  %v425 = vld [vmem:[%s1 + $0xca8] sm:$0xff]
  %v426 = vld [vmem:[%s1 + $0xcb0] sm:$0xff]
  %v427 = vld [vmem:[%s1 + $0xcb8] sm:$0xff]
  %v428 = vld [vmem:[%s1 + $0xcc0] sm:$0xff]
  %v429 = vld [vmem:[%s1 + $0xcc8] sm:$0xff]
  %v430 = vld [vmem:[%s1 + $0xcd0] sm:$0xff]
  %v431 = vld [vmem:[%s1 + $0xcd8] sm:$0xff]
  %v432 = vld [vmem:[%s1 + $0xce0] sm:$0xff]
  %v433 = vld [vmem:[%s1 + $0xce8] sm:$0xff]
  %v434 = vld [vmem:[%s1 + $0xcf0] sm:$0xff]
  %v435 = vld [vmem:[%s1 + $0xcf8] sm:$0xff]
  %v436 = vld [vmem:[%s1 + $0xd00] sm:$0xff]
  %v437 = vld [vmem:[%s1 + $0xd08] sm:$0xff]
  %v438 = vld [vmem:[%s1 + $0xd10] sm:$0xff]
  %v439 = vld [vmem:[%s1 + $0xd18] sm:$0xff]
  %v440 = vld [vmem:[%s1 + $0xd20] sm:$0xff]
  %v441 = vld [vmem:[%s1 + $0xd28] sm:$0xff]
  %v442 = vld [vmem:[%s1 + $0xd30] sm:$0xff]
  %v443 = vld [vmem:[%s1 + $0xd38] sm:$0xff]
  %v444 = vld [vmem:[%s1 + $0xd40] sm:$0xff]
  %v445 = vld [vmem:[%s1 + $0xd48] sm:$0xff]
  %v446 = vld [vmem:[%s1 + $0xd50] sm:$0xff]
  %v447 = vld [vmem:[%s1 + $0xd58] sm:$0xff]
  %v448 = vld [vmem:[%s1 + $0xd60] sm:$0xff]
  %v449 = vld [vmem:[%s1 + $0xd68] sm:$0xff]
  %v450 = vld [vmem:[%s1 + $0xd70] sm:$0xff]
  %v451 = vld [vmem:[%s1 + $0xd78] sm:$0xff]
  %v452 = vld [vmem:[%s1 + $0xd80] sm:$0xff]
  %v453 = vld [vmem:[%s1 + $0xd88] sm:$0xff]
  %v454 = vld [vmem:[%s1 + $0xd90] sm:$0xff]
  %v455 = vld [vmem:[%s1 + $0xd98] sm:$0xff]
  %v456 = vld [vmem:[%s1 + $0xda0] sm:$0xff]
  %v457 = vld [vmem:[%s1 + $0xda8] sm:$0xff]
  %v458 = vld [vmem:[%s1 + $0xdb0] sm:$0xff]
  %v459 = vld [vmem:[%s1 + $0xdb8] sm:$0xff]
  %v460 = vld [vmem:[%s1 + $0xdc0] sm:$0xff]
  %v461 = vld [vmem:[%s1 + $0xdc8] sm:$0xff]
  %v462 = vld [vmem:[%s1 + $0xdd0] sm:$0xff]
  %v463 = vld [vmem:[%s1 + $0xdd8] sm:$0xff]
  %v464 = vld [vmem:[%s1 + $0xde0] sm:$0xff]
  %v465 = vld [vmem:[%s1 + $0xde8] sm:$0xff]
  %v466 = vld [vmem:[%s1 + $0xdf0] sm:$0xff]
  %v467 = vld [vmem:[%s1 + $0xdf8] sm:$0xff]
  %v468 = vld [vmem:[%s1 + $0xe00] sm:$0xff]
  %v469 = vld [vmem:[%s1 + $0xe08] sm:$0xff]
  %v470 = vld [vmem:[%s1 + $0xe10] sm:$0xff]
  %v471 = vld [vmem:[%s1 + $0xe18] sm:$0xff]
  %v472 = vld [vmem:[%s1 + $0xe20] sm:$0xff]
  %v473 = vld [vmem:[%s1 + $0xe28] sm:$0xff]
  %v474 = vld [vmem:[%s1 + $0xe30] sm:$0xff]
  %v475 = vld [vmem:[%s1 + $0xe38] sm:$0xff]
  %v476 = vld [vmem:[%s1 + $0xe40] sm:$0xff]
  %v477 = vld [vmem:[%s1 + $0xe48] sm:$0xff]
  %v478 = vld [vmem:[%s1 + $0xe50] sm:$0xff]
  %v479 = vld [vmem:[%s1 + $0xe58] sm:$0xff]
  %v480 = vld [vmem:[%s1 + $0xe60] sm:$0xff]
  %v481 = vld [vmem:[%s1 + $0xe68] sm:$0xff]
  %v482 = vld [vmem:[%s1 + $0xe70] sm:$0xff]
  %v483 = vld [vmem:[%s1 + $0xe78] sm:$0xff]
  %v484 = vld [vmem:[%s1 + $0xe80] sm:$0xff]
  %v485 = vld [vmem:[%s1 + $0xe88] sm:$0xff]
  %v486 = vld [vmem:[%s1 + $0xe90] sm:$0xff]
  %v487 = vld [vmem:[%s1 + $0xe98] sm:$0xff]
  %v488 = vld [vmem:[%s1 + $0xea0] sm:$0xff]
  %v489 = vld [vmem:[%s1 + $0xea8] sm:$0xff]
  %v490 = vld [vmem:[%s1 + $0xeb0] sm:$0xff]
  %v491 = vld [vmem:[%s1 + $0xeb8] sm:$0xff]
  %v492 = vld [vmem:[%s1 + $0xec0] sm:$0xff]
  %v493 = vld [vmem:[%s1 + $0xec8] sm:$0xff]
  %v494 = vld [vmem:[%s1 + $0xed0] sm:$0xff]
  %v495 = vld [vmem:[%s1 + $0xed8] sm:$0xff]
  %v496 = vld [vmem:[%s1 + $0xee0] sm:$0xff]
  %v497 = vld [vmem:[%s1 + $0xee8] sm:$0xff]
  %v498 = vld [vmem:[%s1 + $0xef0] sm:$0xff]
  %v499 = vld [vmem:[%s1 + $0xef8] sm:$0xff]
  %v500 = vld [vmem:[%s1 + $0xf00] sm:$0xff]
  %v501 = vld [vmem:[%s1 + $0xf08] sm:$0xff]
  %v502 = vld [vmem:[%s1 + $0xf10] sm:$0xff]
  %v503 = vld [vmem:[%s1 + $0xf18] sm:$0xff]
  %v504 = vld [vmem:[%s1 + $0xf20] sm:$0xff]
  %v505 = vld [vmem:[%s1 + $0xf28] sm:$0xff]
  %v506 = vld [vmem:[%s1 + $0xf30] sm:$0xff]
  %v507 = vld [vmem:[%s1 + $0xf38] sm:$0xff]
  %v508 = vld [vmem:[%s1 + $0xf40] sm:$0xff]
  %v509 = vld [vmem:[%s1 + $0xf48] sm:$0xff]
  %v510 = vld [vmem:[%s1 + $0xf50] sm:$0xff]
  %v511 = vld [vmem:[%s1 + $0xf58] sm:$0xff]
  %v512 = vld [vmem:[%s1 + $0xf60] sm:$0xff]
  %v513 = vld [vmem:[%s1 + $0xf68] sm:$0xff]
  %v514 = vld [vmem:[%s1 + $0xf70] sm:$0xff]
  %v515 = vld [vmem:[%s1 + $0xf78] sm:$0xff]
  %v516 = vld [vmem:[%s1 + $0xf80] sm:$0xff]
  %v517 = vld [vmem:[%s1 + $0xf88] sm:$0xff]
  %v518 = vld [vmem:[%s1 + $0xf90] sm:$0xff]
  %v519 = vld [vmem:[%s1 + $0xf98] sm:$0xff]
  %v520 = vld [vmem:[%s1 + $0xfa0] sm:$0xff]
  %v521 = vld [vmem:[%s1 + $0xfa8] sm:$0xff]
  %v522 = vld [vmem:[%s1 + $0xfb0] sm:$0xff]
  %v523 = vld [vmem:[%s1 + $0xfb8] sm:$0xff]
  %v524 = vld [vmem:[%s1 + $0xfc0] sm:$0xff]
  %v525 = vld [vmem:[%s1 + $0xfc8] sm:$0xff]
  %v526 = vld [vmem:[%s1 + $0xfd0] sm:$0xff]
  %v527 = vld [vmem:[%s1 + $0xfd8] sm:$0xff]
  %v528 = vld [vmem:[%s1 + $0xfe0] sm:$0xff]
  %v529 = vld [vmem:[%s1 + $0xfe8] sm:$0xff]
  %v530 = vld [vmem:[%s1 + $0xff0] sm:$0xff]
  %v531 = vld [vmem:[%s1 + $0xff8] sm:$0xff]
  %v532 = vld [vmem:[%s1 + $0x1000] sm:$0xff]
  %v533 = vld [vmem:[%s1 + $0x1008] sm:$0xff]
  %v534 = vld [vmem:[%s1 + $0x1010] sm:$0xff]
  %v535 = vld [vmem:[%s1 + $0x1018] sm:$0xff]
  %v536 = vld [vmem:[%s1 + $0x1020] sm:$0xff]
  %v537 = vld [vmem:[%s1 + $0x1028] sm:$0xff]
  %v538 = vld [vmem:[%s1 + $0x1030] sm:$0xff]
  %v539 = vld [vmem:[%s1 + $0x1038] sm:$0xff]
  %v540 = vld [vmem:[%s1 + $0x1040] sm:$0xff]
  %v541 = vld [vmem:[%s1 + $0x1048] sm:$0xff]
  %v542 = vld [vmem:[%s1 + $0x1050] sm:$0xff]
  %v543 = vld [vmem:[%s1 + $0x1058] sm:$0xff]
  %v544 = vld [vmem:[%s1 + $0x1060] sm:$0xff]
  %v545 = vld [vmem:[%s1 + $0x1068] sm:$0xff]
  %v546 = vld [vmem:[%s1 + $0x1070] sm:$0xff]
  %v547 = vld [vmem:[%s1 + $0x1078] sm:$0xff]
  %v548 = vld [vmem:[%s1 + $0x1080] sm:$0xff]
  %v549 = vld [vmem:[%s1 + $0x1088] sm:$0xff]
  %v550 = vld [vmem:[%s1 + $0x1090] sm:$0xff]
  %v551 = vld [vmem:[%s1 + $0x1098] sm:$0xff]
  %v552 = vld [vmem:[%s1 + $0x10a0] sm:$0xff]
  %v553 = vld [vmem:[%s1 + $0x10a8] sm:$0xff]
  %v554 = vld [vmem:[%s1 + $0x10b0] sm:$0xff]
  %v555 = vld [vmem:[%s1 + $0x10b8] sm:$0xff]
  %v556 = vld [vmem:[%s1 + $0x10c0] sm:$0xff]
  %v557 = vld [vmem:[%s1 + $0x10c8] sm:$0xff]
  %v558 = vld [vmem:[%s1 + $0x10d0] sm:$0xff]
  %v559 = vld [vmem:[%s1 + $0x10d8] sm:$0xff]
  %v560 = vld [vmem:[%s1 + $0x10e0] sm:$0xff]
  %v561 = vld [vmem:[%s1 + $0x10e8] sm:$0xff]
  %v562 = vld [vmem:[%s1 + $0x10f0] sm:$0xff]
  %v563 = vld [vmem:[%s1 + $0x10f8] sm:$0xff]
  %v564 = vld [vmem:[%s1 + $0x1100] sm:$0xff]
  %v565 = vld [vmem:[%s1 + $0x1108] sm:$0xff]
  %v566 = vld [vmem:[%s1 + $0x1110] sm:$0xff]
  %v567 = vld [vmem:[%s1 + $0x1118] sm:$0xff]
  %v568 = vld [vmem:[%s1 + $0x1120] sm:$0xff]
  %v569 = vld [vmem:[%s1 + $0x1128] sm:$0xff]
  %v570 = vld [vmem:[%s1 + $0x1130] sm:$0xff]
  %v571 = vld [vmem:[%s1 + $0x1138] sm:$0xff]
  %v572 = vld [vmem:[%s1 + $0x1140] sm:$0xff]
  %v573 = vld [vmem:[%s1 + $0x1148] sm:$0xff]
  %v574 = vld [vmem:[%s1 + $0x1150] sm:$0xff]
  %v575 = vld [vmem:[%s1 + $0x1158] sm:$0xff]
  %v576 = vld [vmem:[%s1 + $0x1160] sm:$0xff]
  %v577 = vld [vmem:[%s1 + $0x1168] sm:$0xff]
  %v578 = vld [vmem:[%s1 + $0x1170] sm:$0xff]
  %v579 = vld [vmem:[%s1 + $0x1178] sm:$0xff]
  %v580 = vld [vmem:[%s1 + $0x1180] sm:$0xff]
  %v581 = vld [vmem:[%s1 + $0x1188] sm:$0xff]
  %v582 = vld [vmem:[%s1 + $0x1190] sm:$0xff]
  %v583 = vld [vmem:[%s1 + $0x1198] sm:$0xff]
  %v584 = vld [vmem:[%s1 + $0x11a0] sm:$0xff]
  %v585 = vld [vmem:[%s1 + $0x11a8] sm:$0xff]
  %v586 = vld [vmem:[%s1 + $0x11b0] sm:$0xff]
  %v587 = vld [vmem:[%s1 + $0x11b8] sm:$0xff]
  %v588 = vld [vmem:[%s1 + $0x11c0] sm:$0xff]
  %v589 = vld [vmem:[%s1 + $0x11c8] sm:$0xff]
  %v590 = vld [vmem:[%s1 + $0x11d0] sm:$0xff]
  %v591 = vld [vmem:[%s1 + $0x11d8] sm:$0xff]
  %v592 = vld [vmem:[%s1 + $0x11e0] sm:$0xff]
  %v593 = vld [vmem:[%s1 + $0x11e8] sm:$0xff]
  %v594 = vld [vmem:[%s1 + $0x11f0] sm:$0xff]
  %v595 = vld [vmem:[%s1 + $0x11f8] sm:$0xff]
  %v596 = vld [vmem:[%s2] sm:$0x3f]
  %v598 = vperm.slane %v596, 0
  %v599 = vperm.slane %v596, 1
  %v600 = vperm.slane %v596, 2
  %v601 = vperm.slane %v596, 3
  %v602 = vperm.slane %v596, 4
  %v603 = vperm.slane %v596, 5
  %v616 = vunpack.c.l.b16 %v14
  %v617 = vunpack.c.h.b16 %v14
  %v618 = vunpack.c.l.b16 %v15
  %v619 = vunpack.c.h.b16 %v15
  %v620 = vunpack.c.l.b16 %v16
  %v621 = vunpack.c.h.b16 %v16
  %v622 = vunpack.c.l.b16 %v17
  %v623 = vunpack.c.h.b16 %v17
  %v624 = vunpack.c.l.b16 %v18
  %v625 = vunpack.c.h.b16 %v18
  %v626 = vunpack.c.l.b16 %v19
  %v627 = vunpack.c.h.b16 %v19
  %v628 = vpack.c.b16 %v616, %v616
  %v629 = vpack.c.b16 %v617, %v617
  %v630 = vpack.c.b16 %v618, %v618
  %v631 = vpack.c.b16 %v619, %v619
  %v632 = vpack.c.b16 %v620, %v620
  %v633 = vpack.c.b16 %v621, %v621
  %v634 = vpack.c.b16 %v622, %v622
  %v635 = vpack.c.b16 %v623, %v623
  %v636 = vpack.c.b16 %v624, %v624
  %v637 = vpack.c.b16 %v625, %v625
  %v638 = vpack.c.b16 %v626, %v626
  %v639 = vpack.c.b16 %v627, %v627
  %v1228 = vunpack.c.l.b16 %v20
  %v1229 = vunpack.c.h.b16 %v20
  %v1230 = vunpack.c.l.b16 %v21
  %v1231 = vunpack.c.h.b16 %v21
  %v1232 = vunpack.c.l.b16 %v22
  %v1233 = vunpack.c.h.b16 %v22
  %v1234 = vunpack.c.l.b16 %v23
  %v1235 = vunpack.c.h.b16 %v23
  %v1236 = vunpack.c.l.b16 %v24
  %v1237 = vunpack.c.h.b16 %v24
  %v1238 = vunpack.c.l.b16 %v25
  %v1239 = vunpack.c.h.b16 %v25
  %v1240 = vunpack.c.l.b16 %v26
  %v1241 = vunpack.c.h.b16 %v26
  %v1242 = vunpack.c.l.b16 %v27
  %v1243 = vunpack.c.h.b16 %v27
  %v1244 = vunpack.c.l.b16 %v28
  %v1245 = vunpack.c.h.b16 %v28
  %v1246 = vunpack.c.l.b16 %v29
  %v1247 = vunpack.c.h.b16 %v29
  %v1248 = vunpack.c.l.b16 %v30
  %v1249 = vunpack.c.h.b16 %v30
  %v1250 = vunpack.c.l.b16 %v31
  %v1251 = vunpack.c.h.b16 %v31
  %v1252 = vunpack.c.l.b16 %v32
  %v1253 = vunpack.c.h.b16 %v32
  %v1254 = vunpack.c.l.b16 %v33
  %v1255 = vunpack.c.h.b16 %v33
  %v1256 = vunpack.c.l.b16 %v34
  %v1257 = vunpack.c.h.b16 %v34
  %v1258 = vunpack.c.l.b16 %v35
  %v1259 = vunpack.c.h.b16 %v35
  %v1260 = vunpack.c.l.b16 %v36
  %v1261 = vunpack.c.h.b16 %v36
  %v1262 = vunpack.c.l.b16 %v37
  %v1263 = vunpack.c.h.b16 %v37
  %v1264 = vunpack.c.l.b16 %v38
  %v1265 = vunpack.c.h.b16 %v38
  %v1266 = vunpack.c.l.b16 %v39
  %v1267 = vunpack.c.h.b16 %v39
  %v1268 = vunpack.c.l.b16 %v40
  %v1269 = vunpack.c.h.b16 %v40
  %v1270 = vunpack.c.l.b16 %v41
  %v1271 = vunpack.c.h.b16 %v41
  %v1272 = vunpack.c.l.b16 %v42
  %v1273 = vunpack.c.h.b16 %v42
  %v1274 = vunpack.c.l.b16 %v43
  %v1275 = vunpack.c.h.b16 %v43
  %v1276 = vunpack.c.l.b16 %v44
  %v1277 = vunpack.c.h.b16 %v44
  %v1278 = vunpack.c.l.b16 %v45
  %v1279 = vunpack.c.h.b16 %v45
  %v1280 = vunpack.c.l.b16 %v46
  %v1281 = vunpack.c.h.b16 %v46
  %v1282 = vunpack.c.l.b16 %v47
  %v1283 = vunpack.c.h.b16 %v47
  %v1284 = vunpack.c.l.b16 %v48
  %v1285 = vunpack.c.h.b16 %v48
  %v1286 = vunpack.c.l.b16 %v49
  %v1287 = vunpack.c.h.b16 %v49
  %v1288 = vunpack.c.l.b16 %v50
  %v1289 = vunpack.c.h.b16 %v50
  %v1290 = vunpack.c.l.b16 %v51
  %v1291 = vunpack.c.h.b16 %v51
  %v1292 = vunpack.c.l.b16 %v52
  %v1293 = vunpack.c.h.b16 %v52
  %v1294 = vunpack.c.l.b16 %v53
  %v1295 = vunpack.c.h.b16 %v53
  %v1296 = vunpack.c.l.b16 %v54
  %v1297 = vunpack.c.h.b16 %v54
  %v1298 = vunpack.c.l.b16 %v55
  %v1299 = vunpack.c.h.b16 %v55
  %v1300 = vunpack.c.l.b16 %v56
  %v1301 = vunpack.c.h.b16 %v56
  %v1302 = vunpack.c.l.b16 %v57
  %v1303 = vunpack.c.h.b16 %v57
  %v1304 = vunpack.c.l.b16 %v58
  %v1305 = vunpack.c.h.b16 %v58
  %v1306 = vunpack.c.l.b16 %v59
  %v1307 = vunpack.c.h.b16 %v59
  %v1308 = vunpack.c.l.b16 %v60
  %v1309 = vunpack.c.h.b16 %v60
  %v1310 = vunpack.c.l.b16 %v61
  %v1311 = vunpack.c.h.b16 %v61
  %v1312 = vunpack.c.l.b16 %v62
  %v1313 = vunpack.c.h.b16 %v62
  %v1314 = vunpack.c.l.b16 %v63
  %v1315 = vunpack.c.h.b16 %v63
  %v1316 = vunpack.c.l.b16 %v64
  %v1317 = vunpack.c.h.b16 %v64
  %v1318 = vunpack.c.l.b16 %v65
  %v1319 = vunpack.c.h.b16 %v65
  %v1320 = vunpack.c.l.b16 %v66
  %v1321 = vunpack.c.h.b16 %v66
  %v1322 = vunpack.c.l.b16 %v67
  %v1323 = vunpack.c.h.b16 %v67
  %v1324 = vunpack.c.l.b16 %v68
  %v1325 = vunpack.c.h.b16 %v68
  %v1326 = vunpack.c.l.b16 %v69
  %v1327 = vunpack.c.h.b16 %v69
  %v1328 = vunpack.c.l.b16 %v70
  %v1329 = vunpack.c.h.b16 %v70
  %v1330 = vunpack.c.l.b16 %v71
  %v1331 = vunpack.c.h.b16 %v71
  %v1332 = vunpack.c.l.b16 %v72
  %v1333 = vunpack.c.h.b16 %v72
  %v1334 = vunpack.c.l.b16 %v73
  %v1335 = vunpack.c.h.b16 %v73
  %v1336 = vunpack.c.l.b16 %v74
  %v1337 = vunpack.c.h.b16 %v74
  %v1338 = vunpack.c.l.b16 %v75
  %v1339 = vunpack.c.h.b16 %v75
  %v1340 = vunpack.c.l.b16 %v76
  %v1341 = vunpack.c.h.b16 %v76
  %v1342 = vunpack.c.l.b16 %v77
  %v1343 = vunpack.c.h.b16 %v77
  %v1344 = vunpack.c.l.b16 %v78
  %v1345 = vunpack.c.h.b16 %v78
  %v1346 = vunpack.c.l.b16 %v79
  %v1347 = vunpack.c.h.b16 %v79
  %v1348 = vunpack.c.l.b16 %v80
  %v1349 = vunpack.c.h.b16 %v80
  %v1350 = vunpack.c.l.b16 %v81
  %v1351 = vunpack.c.h.b16 %v81
  %v1352 = vunpack.c.l.b16 %v82
  %v1353 = vunpack.c.h.b16 %v82
  %v1354 = vunpack.c.l.b16 %v83
  %v1355 = vunpack.c.h.b16 %v83
  %v1356 = vunpack.c.l.b16 %v84
  %v1357 = vunpack.c.h.b16 %v84
  %v1358 = vunpack.c.l.b16 %v85
  %v1359 = vunpack.c.h.b16 %v85
  %v1360 = vunpack.c.l.b16 %v86
  %v1361 = vunpack.c.h.b16 %v86
  %v1362 = vunpack.c.l.b16 %v87
  %v1363 = vunpack.c.h.b16 %v87
  %v1364 = vunpack.c.l.b16 %v88
  %v1365 = vunpack.c.h.b16 %v88
  %v1366 = vunpack.c.l.b16 %v89
  %v1367 = vunpack.c.h.b16 %v89
  %v1368 = vunpack.c.l.b16 %v90
  %v1369 = vunpack.c.h.b16 %v90
  %v1370 = vunpack.c.l.b16 %v91
  %v1371 = vunpack.c.h.b16 %v91
  %v1372 = vunpack.c.l.b16 %v92
  %v1373 = vunpack.c.h.b16 %v92
  %v1374 = vunpack.c.l.b16 %v93
  %v1375 = vunpack.c.h.b16 %v93
  %v1376 = vunpack.c.l.b16 %v94
  %v1377 = vunpack.c.h.b16 %v94
  %v1378 = vunpack.c.l.b16 %v95
  %v1379 = vunpack.c.h.b16 %v95
  %v1380 = vunpack.c.l.b16 %v96
  %v1381 = vunpack.c.h.b16 %v96
  %v1382 = vunpack.c.l.b16 %v97
  %v1383 = vunpack.c.h.b16 %v97
  %v1384 = vunpack.c.l.b16 %v98
  %v1385 = vunpack.c.h.b16 %v98
  %v1386 = vunpack.c.l.b16 %v99
  %v1387 = vunpack.c.h.b16 %v99
  %v1388 = vunpack.c.l.b16 %v100
  %v1389 = vunpack.c.h.b16 %v100
  %v1390 = vunpack.c.l.b16 %v101
  %v1391 = vunpack.c.h.b16 %v101
  %v1392 = vunpack.c.l.b16 %v102
  %v1393 = vunpack.c.h.b16 %v102
  %v1394 = vunpack.c.l.b16 %v103
  %v1395 = vunpack.c.h.b16 %v103
  %v1396 = vunpack.c.l.b16 %v104
  %v1397 = vunpack.c.h.b16 %v104
  %v1398 = vunpack.c.l.b16 %v105
  %v1399 = vunpack.c.h.b16 %v105
  %v1400 = vunpack.c.l.b16 %v106
  %v1401 = vunpack.c.h.b16 %v106
  %v1402 = vunpack.c.l.b16 %v107
  %v1403 = vunpack.c.h.b16 %v107
  %v1404 = vunpack.c.l.b16 %v108
  %v1405 = vunpack.c.h.b16 %v108
  %v1406 = vunpack.c.l.b16 %v109
  %v1407 = vunpack.c.h.b16 %v109
  %v1408 = vunpack.c.l.b16 %v110
  %v1409 = vunpack.c.h.b16 %v110
  %v1410 = vunpack.c.l.b16 %v111
  %v1411 = vunpack.c.h.b16 %v111
  %v1412 = vunpack.c.l.b16 %v112
  %v1413 = vunpack.c.h.b16 %v112
  %v1414 = vunpack.c.l.b16 %v113
  %v1415 = vunpack.c.h.b16 %v113
  %v1416 = vunpack.c.l.b16 %v114
  %v1417 = vunpack.c.h.b16 %v114
  %v1418 = vunpack.c.l.b16 %v115
  %v1419 = vunpack.c.h.b16 %v115
  %v1420 = vunpack.c.l.b16 %v116
  %v1421 = vunpack.c.h.b16 %v116
  %v1422 = vunpack.c.l.b16 %v117
  %v1423 = vunpack.c.h.b16 %v117
  %v1424 = vunpack.c.l.b16 %v118
  %v1425 = vunpack.c.h.b16 %v118
  %v1426 = vunpack.c.l.b16 %v119
  %v1427 = vunpack.c.h.b16 %v119
  %v1428 = vunpack.c.l.b16 %v120
  %v1429 = vunpack.c.h.b16 %v120
  %v1430 = vunpack.c.l.b16 %v121
  %v1431 = vunpack.c.h.b16 %v121
  %v1432 = vunpack.c.l.b16 %v122
  %v1433 = vunpack.c.h.b16 %v122
  %v1434 = vunpack.c.l.b16 %v123
  %v1435 = vunpack.c.h.b16 %v123
  %v1436 = vunpack.c.l.b16 %v124
  %v1437 = vunpack.c.h.b16 %v124
  %v1438 = vunpack.c.l.b16 %v125
  %v1439 = vunpack.c.h.b16 %v125
  %v1440 = vunpack.c.l.b16 %v126
  %v1441 = vunpack.c.h.b16 %v126
  %v1442 = vunpack.c.l.b16 %v127
  %v1443 = vunpack.c.h.b16 %v127
  %v1444 = vunpack.c.l.b16 %v128
  %v1445 = vunpack.c.h.b16 %v128
  %v1446 = vunpack.c.l.b16 %v129
  %v1447 = vunpack.c.h.b16 %v129
  %v1448 = vunpack.c.l.b16 %v130
  %v1449 = vunpack.c.h.b16 %v130
  %v1450 = vunpack.c.l.b16 %v131
  %v1451 = vunpack.c.h.b16 %v131
  %v1452 = vunpack.c.l.b16 %v132
  %v1453 = vunpack.c.h.b16 %v132
  %v1454 = vunpack.c.l.b16 %v133
  %v1455 = vunpack.c.h.b16 %v133
  %v1456 = vunpack.c.l.b16 %v134
  %v1457 = vunpack.c.h.b16 %v134
  %v1458 = vunpack.c.l.b16 %v135
  %v1459 = vunpack.c.h.b16 %v135
  %v1460 = vunpack.c.l.b16 %v136
  %v1461 = vunpack.c.h.b16 %v136
  %v1462 = vunpack.c.l.b16 %v137
  %v1463 = vunpack.c.h.b16 %v137
  %v1464 = vunpack.c.l.b16 %v138
  %v1465 = vunpack.c.h.b16 %v138
  %v1466 = vunpack.c.l.b16 %v139
  %v1467 = vunpack.c.h.b16 %v139
  %v1468 = vunpack.c.l.b16 %v140
  %v1469 = vunpack.c.h.b16 %v140
  %v1470 = vunpack.c.l.b16 %v141
  %v1471 = vunpack.c.h.b16 %v141
  %v1472 = vunpack.c.l.b16 %v142
  %v1473 = vunpack.c.h.b16 %v142
  %v1474 = vunpack.c.l.b16 %v143
  %v1475 = vunpack.c.h.b16 %v143
  %v1476 = vunpack.c.l.b16 %v144
  %v1477 = vunpack.c.h.b16 %v144
  %v1478 = vunpack.c.l.b16 %v145
  %v1479 = vunpack.c.h.b16 %v145
  %v1480 = vunpack.c.l.b16 %v146
  %v1481 = vunpack.c.h.b16 %v146
  %v1482 = vunpack.c.l.b16 %v147
  %v1483 = vunpack.c.h.b16 %v147
  %v1484 = vunpack.c.l.b16 %v148
  %v1485 = vunpack.c.h.b16 %v148
  %v1486 = vunpack.c.l.b16 %v149
  %v1487 = vunpack.c.h.b16 %v149
  %v1488 = vunpack.c.l.b16 %v150
  %v1489 = vunpack.c.h.b16 %v150
  %v1490 = vunpack.c.l.b16 %v151
  %v1491 = vunpack.c.h.b16 %v151
  %v1492 = vunpack.c.l.b16 %v152
  %v1493 = vunpack.c.h.b16 %v152
  %v1494 = vunpack.c.l.b16 %v153
  %v1495 = vunpack.c.h.b16 %v153
  %v1496 = vunpack.c.l.b16 %v154
  %v1497 = vunpack.c.h.b16 %v154
  %v1498 = vunpack.c.l.b16 %v155
  %v1499 = vunpack.c.h.b16 %v155
  %v1500 = vunpack.c.l.b16 %v156
  %v1501 = vunpack.c.h.b16 %v156
  %v1502 = vunpack.c.l.b16 %v157
  %v1503 = vunpack.c.h.b16 %v157
  %v1504 = vunpack.c.l.b16 %v158
  %v1505 = vunpack.c.h.b16 %v158
  %v1506 = vunpack.c.l.b16 %v159
  %v1507 = vunpack.c.h.b16 %v159
  %v1508 = vunpack.c.l.b16 %v160
  %v1509 = vunpack.c.h.b16 %v160
  %v1510 = vunpack.c.l.b16 %v161
  %v1511 = vunpack.c.h.b16 %v161
  %v1512 = vunpack.c.l.b16 %v162
  %v1513 = vunpack.c.h.b16 %v162
  %v1514 = vunpack.c.l.b16 %v163
  %v1515 = vunpack.c.h.b16 %v163
  %v1516 = vunpack.c.l.b16 %v164
  %v1517 = vunpack.c.h.b16 %v164
  %v1518 = vunpack.c.l.b16 %v165
  %v1519 = vunpack.c.h.b16 %v165
  %v1520 = vunpack.c.l.b16 %v166
  %v1521 = vunpack.c.h.b16 %v166
  %v1522 = vunpack.c.l.b16 %v167
  %v1523 = vunpack.c.h.b16 %v167
  %v1524 = vunpack.c.l.b16 %v168
  %v1525 = vunpack.c.h.b16 %v168
  %v1526 = vunpack.c.l.b16 %v169
  %v1527 = vunpack.c.h.b16 %v169
  %v1528 = vunpack.c.l.b16 %v170
  %v1529 = vunpack.c.h.b16 %v170
  %v1530 = vunpack.c.l.b16 %v171
  %v1531 = vunpack.c.h.b16 %v171
  %v1532 = vunpack.c.l.b16 %v172
  %v1533 = vunpack.c.h.b16 %v172
  %v1534 = vunpack.c.l.b16 %v173
  %v1535 = vunpack.c.h.b16 %v173
  %v1536 = vunpack.c.l.b16 %v174
  %v1537 = vunpack.c.h.b16 %v174
  %v1538 = vunpack.c.l.b16 %v175
  %v1539 = vunpack.c.h.b16 %v175
  %v1540 = vunpack.c.l.b16 %v176
  %v1541 = vunpack.c.h.b16 %v176
  %v1542 = vunpack.c.l.b16 %v177
  %v1543 = vunpack.c.h.b16 %v177
  %v1544 = vunpack.c.l.b16 %v178
  %v1545 = vunpack.c.h.b16 %v178
  %v1546 = vunpack.c.l.b16 %v179
  %v1547 = vunpack.c.h.b16 %v179
  %v1548 = vunpack.c.l.b16 %v180
  %v1549 = vunpack.c.h.b16 %v180
  %v1550 = vunpack.c.l.b16 %v181
  %v1551 = vunpack.c.h.b16 %v181
  %v1552 = vunpack.c.l.b16 %v182
  %v1553 = vunpack.c.h.b16 %v182
  %v1554 = vunpack.c.l.b16 %v183
  %v1555 = vunpack.c.h.b16 %v183
  %v1556 = vunpack.c.l.b16 %v184
  %v1557 = vunpack.c.h.b16 %v184
  %v1558 = vunpack.c.l.b16 %v185
  %v1559 = vunpack.c.h.b16 %v185
  %v1560 = vunpack.c.l.b16 %v186
  %v1561 = vunpack.c.h.b16 %v186
  %v1562 = vunpack.c.l.b16 %v187
  %v1563 = vunpack.c.h.b16 %v187
  %v1564 = vunpack.c.l.b16 %v188
  %v1565 = vunpack.c.h.b16 %v188
  %v1566 = vunpack.c.l.b16 %v189
  %v1567 = vunpack.c.h.b16 %v189
  %v1568 = vunpack.c.l.b16 %v190
  %v1569 = vunpack.c.h.b16 %v190
  %v1570 = vunpack.c.l.b16 %v191
  %v1571 = vunpack.c.h.b16 %v191
  %v1572 = vunpack.c.l.b16 %v192
  %v1573 = vunpack.c.h.b16 %v192
  %v1574 = vunpack.c.l.b16 %v193
  %v1575 = vunpack.c.h.b16 %v193
  %v1576 = vunpack.c.l.b16 %v194
  %v1577 = vunpack.c.h.b16 %v194
  %v1578 = vunpack.c.l.b16 %v195
  %v1579 = vunpack.c.h.b16 %v195
  %v1580 = vunpack.c.l.b16 %v196
  %v1581 = vunpack.c.h.b16 %v196
  %v1582 = vunpack.c.l.b16 %v197
  %v1583 = vunpack.c.h.b16 %v197
  %v1584 = vunpack.c.l.b16 %v198
  %v1585 = vunpack.c.h.b16 %v198
  %v1586 = vunpack.c.l.b16 %v199
  %v1587 = vunpack.c.h.b16 %v199
  %v1588 = vunpack.c.l.b16 %v200
  %v1589 = vunpack.c.h.b16 %v200
  %v1590 = vunpack.c.l.b16 %v201
  %v1591 = vunpack.c.h.b16 %v201
  %v1592 = vunpack.c.l.b16 %v202
  %v1593 = vunpack.c.h.b16 %v202
  %v1594 = vunpack.c.l.b16 %v203
  %v1595 = vunpack.c.h.b16 %v203
  %v1596 = vunpack.c.l.b16 %v204
  %v1597 = vunpack.c.h.b16 %v204
  %v1598 = vunpack.c.l.b16 %v205
  %v1599 = vunpack.c.h.b16 %v205
  %v1600 = vunpack.c.l.b16 %v206
  %v1601 = vunpack.c.h.b16 %v206
  %v1602 = vunpack.c.l.b16 %v207
  %v1603 = vunpack.c.h.b16 %v207
  %v1604 = vunpack.c.l.b16 %v208
  %v1605 = vunpack.c.h.b16 %v208
  %v1606 = vunpack.c.l.b16 %v209
  %v1607 = vunpack.c.h.b16 %v209
  %v1608 = vunpack.c.l.b16 %v210
  %v1609 = vunpack.c.h.b16 %v210
  %v1610 = vunpack.c.l.b16 %v211
  %v1611 = vunpack.c.h.b16 %v211
  %v1612 = vunpack.c.l.b16 %v212
  %v1613 = vunpack.c.h.b16 %v212
  %v1614 = vunpack.c.l.b16 %v213
  %v1615 = vunpack.c.h.b16 %v213
  %v1616 = vunpack.c.l.b16 %v214
  %v1617 = vunpack.c.h.b16 %v214
  %v1618 = vunpack.c.l.b16 %v215
  %v1619 = vunpack.c.h.b16 %v215
  %v1620 = vunpack.c.l.b16 %v216
  %v1621 = vunpack.c.h.b16 %v216
  %v1622 = vunpack.c.l.b16 %v217
  %v1623 = vunpack.c.h.b16 %v217
  %v1624 = vunpack.c.l.b16 %v218
  %v1625 = vunpack.c.h.b16 %v218
  %v1626 = vunpack.c.l.b16 %v219
  %v1627 = vunpack.c.h.b16 %v219
  %v1628 = vunpack.c.l.b16 %v220
  %v1629 = vunpack.c.h.b16 %v220
  %v1630 = vunpack.c.l.b16 %v221
  %v1631 = vunpack.c.h.b16 %v221
  %v1632 = vunpack.c.l.b16 %v222
  %v1633 = vunpack.c.h.b16 %v222
  %v1634 = vunpack.c.l.b16 %v223
  %v1635 = vunpack.c.h.b16 %v223
  %v1636 = vunpack.c.l.b16 %v224
  %v1637 = vunpack.c.h.b16 %v224
  %v1638 = vunpack.c.l.b16 %v225
  %v1639 = vunpack.c.h.b16 %v225
  %v1640 = vunpack.c.l.b16 %v226
  %v1641 = vunpack.c.h.b16 %v226
  %v1642 = vunpack.c.l.b16 %v227
  %v1643 = vunpack.c.h.b16 %v227
  %v1644 = vunpack.c.l.b16 %v228
  %v1645 = vunpack.c.h.b16 %v228
  %v1646 = vunpack.c.l.b16 %v229
  %v1647 = vunpack.c.h.b16 %v229
  %v1648 = vunpack.c.l.b16 %v230
  %v1649 = vunpack.c.h.b16 %v230
  %v1650 = vunpack.c.l.b16 %v231
  %v1651 = vunpack.c.h.b16 %v231
  %v1652 = vunpack.c.l.b16 %v232
  %v1653 = vunpack.c.h.b16 %v232
  %v1654 = vunpack.c.l.b16 %v233
  %v1655 = vunpack.c.h.b16 %v233
  %v1656 = vunpack.c.l.b16 %v234
  %v1657 = vunpack.c.h.b16 %v234
  %v1658 = vunpack.c.l.b16 %v235
  %v1659 = vunpack.c.h.b16 %v235
  %v1660 = vunpack.c.l.b16 %v236
  %v1661 = vunpack.c.h.b16 %v236
  %v1662 = vunpack.c.l.b16 %v237
  %v1663 = vunpack.c.h.b16 %v237
  %v1664 = vunpack.c.l.b16 %v238
  %v1665 = vunpack.c.h.b16 %v238
  %v1666 = vunpack.c.l.b16 %v239
  %v1667 = vunpack.c.h.b16 %v239
  %v1668 = vunpack.c.l.b16 %v240
  %v1669 = vunpack.c.h.b16 %v240
  %v1670 = vunpack.c.l.b16 %v241
  %v1671 = vunpack.c.h.b16 %v241
  %v1672 = vunpack.c.l.b16 %v242
  %v1673 = vunpack.c.h.b16 %v242
  %v1674 = vunpack.c.l.b16 %v243
  %v1675 = vunpack.c.h.b16 %v243
  %v1676 = vunpack.c.l.b16 %v244
  %v1677 = vunpack.c.h.b16 %v244
  %v1678 = vunpack.c.l.b16 %v245
  %v1679 = vunpack.c.h.b16 %v245
  %v1680 = vunpack.c.l.b16 %v246
  %v1681 = vunpack.c.h.b16 %v246
  %v1682 = vunpack.c.l.b16 %v247
  %v1683 = vunpack.c.h.b16 %v247
  %v1684 = vunpack.c.l.b16 %v248
  %v1685 = vunpack.c.h.b16 %v248
  %v1686 = vunpack.c.l.b16 %v249
  %v1687 = vunpack.c.h.b16 %v249
  %v1688 = vunpack.c.l.b16 %v250
  %v1689 = vunpack.c.h.b16 %v250
  %v1690 = vunpack.c.l.b16 %v251
  %v1691 = vunpack.c.h.b16 %v251
  %v1692 = vunpack.c.l.b16 %v252
  %v1693 = vunpack.c.h.b16 %v252
  %v1694 = vunpack.c.l.b16 %v253
  %v1695 = vunpack.c.h.b16 %v253
  %v1696 = vunpack.c.l.b16 %v254
  %v1697 = vunpack.c.h.b16 %v254
  %v1698 = vunpack.c.l.b16 %v255
  %v1699 = vunpack.c.h.b16 %v255
  %v1700 = vunpack.c.l.b16 %v256
  %v1701 = vunpack.c.h.b16 %v256
  %v1702 = vunpack.c.l.b16 %v257
  %v1703 = vunpack.c.h.b16 %v257
  %v1704 = vunpack.c.l.b16 %v258
  %v1705 = vunpack.c.h.b16 %v258
  %v1706 = vunpack.c.l.b16 %v259
  %v1707 = vunpack.c.h.b16 %v259
  %v1708 = vunpack.c.l.b16 %v260
  %v1709 = vunpack.c.h.b16 %v260
  %v1710 = vunpack.c.l.b16 %v261
  %v1711 = vunpack.c.h.b16 %v261
  %v1712 = vunpack.c.l.b16 %v262
  %v1713 = vunpack.c.h.b16 %v262
  %v1714 = vunpack.c.l.b16 %v263
  %v1715 = vunpack.c.h.b16 %v263
  %v1716 = vunpack.c.l.b16 %v264
  %v1717 = vunpack.c.h.b16 %v264
  %v1718 = vunpack.c.l.b16 %v265
  %v1719 = vunpack.c.h.b16 %v265
  %v1720 = vunpack.c.l.b16 %v266
  %v1721 = vunpack.c.h.b16 %v266
  %v1722 = vunpack.c.l.b16 %v267
  %v1723 = vunpack.c.h.b16 %v267
  %v1724 = vunpack.c.l.b16 %v268
  %v1725 = vunpack.c.h.b16 %v268
  %v1726 = vunpack.c.l.b16 %v269
  %v1727 = vunpack.c.h.b16 %v269
  %v1728 = vunpack.c.l.b16 %v270
  %v1729 = vunpack.c.h.b16 %v270
  %v1730 = vunpack.c.l.b16 %v271
  %v1731 = vunpack.c.h.b16 %v271
  %v1732 = vunpack.c.l.b16 %v272
  %v1733 = vunpack.c.h.b16 %v272
  %v1734 = vunpack.c.l.b16 %v273
  %v1735 = vunpack.c.h.b16 %v273
  %v1736 = vunpack.c.l.b16 %v274
  %v1737 = vunpack.c.h.b16 %v274
  %v1738 = vunpack.c.l.b16 %v275
  %v1739 = vunpack.c.h.b16 %v275
  %v1740 = vunpack.c.l.b16 %v276
  %v1741 = vunpack.c.h.b16 %v276
  %v1742 = vunpack.c.l.b16 %v277
  %v1743 = vunpack.c.h.b16 %v277
  %v1744 = vunpack.c.l.b16 %v278
  %v1745 = vunpack.c.h.b16 %v278
  %v1746 = vunpack.c.l.b16 %v279
  %v1747 = vunpack.c.h.b16 %v279
  %v1748 = vunpack.c.l.b16 %v280
  %v1749 = vunpack.c.h.b16 %v280
  %v1750 = vunpack.c.l.b16 %v281
  %v1751 = vunpack.c.h.b16 %v281
  %v1752 = vunpack.c.l.b16 %v282
  %v1753 = vunpack.c.h.b16 %v282
  %v1754 = vunpack.c.l.b16 %v283
  %v1755 = vunpack.c.h.b16 %v283
  %v1756 = vunpack.c.l.b16 %v284
  %v1757 = vunpack.c.h.b16 %v284
  %v1758 = vunpack.c.l.b16 %v285
  %v1759 = vunpack.c.h.b16 %v285
  %v1760 = vunpack.c.l.b16 %v286
  %v1761 = vunpack.c.h.b16 %v286
  %v1762 = vunpack.c.l.b16 %v287
  %v1763 = vunpack.c.h.b16 %v287
  %v1764 = vunpack.c.l.b16 %v288
  %v1765 = vunpack.c.h.b16 %v288
  %v1766 = vunpack.c.l.b16 %v289
  %v1767 = vunpack.c.h.b16 %v289
  %v1768 = vunpack.c.l.b16 %v290
  %v1769 = vunpack.c.h.b16 %v290
  %v1770 = vunpack.c.l.b16 %v291
  %v1771 = vunpack.c.h.b16 %v291
  %v1772 = vunpack.c.l.b16 %v292
  %v1773 = vunpack.c.h.b16 %v292
  %v1774 = vunpack.c.l.b16 %v293
  %v1775 = vunpack.c.h.b16 %v293
  %v1776 = vunpack.c.l.b16 %v294
  %v1777 = vunpack.c.h.b16 %v294
  %v1778 = vunpack.c.l.b16 %v295
  %v1779 = vunpack.c.h.b16 %v295
  %v1780 = vunpack.c.l.b16 %v296
  %v1781 = vunpack.c.h.b16 %v296
  %v1782 = vunpack.c.l.b16 %v297
  %v1783 = vunpack.c.h.b16 %v297
  %v1784 = vunpack.c.l.b16 %v298
  %v1785 = vunpack.c.h.b16 %v298
  %v1786 = vunpack.c.l.b16 %v299
  %v1787 = vunpack.c.h.b16 %v299
  %v1788 = vunpack.c.l.b16 %v300
  %v1789 = vunpack.c.h.b16 %v300
  %v1790 = vunpack.c.l.b16 %v301
  %v1791 = vunpack.c.h.b16 %v301
  %v1792 = vunpack.c.l.b16 %v302
  %v1793 = vunpack.c.h.b16 %v302
  %v1794 = vunpack.c.l.b16 %v303
  %v1795 = vunpack.c.h.b16 %v303
  %v1796 = vunpack.c.l.b16 %v304
  %v1797 = vunpack.c.h.b16 %v304
  %v1798 = vunpack.c.l.b16 %v305
  %v1799 = vunpack.c.h.b16 %v305
  %v1800 = vunpack.c.l.b16 %v306
  %v1801 = vunpack.c.h.b16 %v306
  %v1802 = vunpack.c.l.b16 %v307
  %v1803 = vunpack.c.h.b16 %v307
  %v1804 = vunpack.c.l.b16 %v308
  %v1805 = vunpack.c.h.b16 %v308
  %v1806 = vunpack.c.l.b16 %v309
  %v1807 = vunpack.c.h.b16 %v309
  %v1808 = vunpack.c.l.b16 %v310
  %v1809 = vunpack.c.h.b16 %v310
  %v1810 = vunpack.c.l.b16 %v311
  %v1811 = vunpack.c.h.b16 %v311
  %v1812 = vunpack.c.l.b16 %v312
  %v1813 = vunpack.c.h.b16 %v312
  %v1814 = vunpack.c.l.b16 %v313
  %v1815 = vunpack.c.h.b16 %v313
  %v1816 = vunpack.c.l.b16 %v314
  %v1817 = vunpack.c.h.b16 %v314
  %v1818 = vunpack.c.l.b16 %v315
  %v1819 = vunpack.c.h.b16 %v315
  %v1820 = vunpack.c.l.b16 %v316
  %v1821 = vunpack.c.h.b16 %v316
  %v1822 = vunpack.c.l.b16 %v317
  %v1823 = vunpack.c.h.b16 %v317
  %v1824 = vunpack.c.l.b16 %v318
  %v1825 = vunpack.c.h.b16 %v318
  %v1826 = vunpack.c.l.b16 %v319
  %v1827 = vunpack.c.h.b16 %v319
  %v1828 = vunpack.c.l.b16 %v320
  %v1829 = vunpack.c.h.b16 %v320
  %v1830 = vunpack.c.l.b16 %v321
  %v1831 = vunpack.c.h.b16 %v321
  %v1832 = vunpack.c.l.b16 %v322
  %v1833 = vunpack.c.h.b16 %v322
  %v1834 = vunpack.c.l.b16 %v323
  %v1835 = vunpack.c.h.b16 %v323
  %v1836 = vunpack.c.l.b16 %v324
  %v1837 = vunpack.c.h.b16 %v324
  %v1838 = vunpack.c.l.b16 %v325
  %v1839 = vunpack.c.h.b16 %v325
  %v1840 = vunpack.c.l.b16 %v326
  %v1841 = vunpack.c.h.b16 %v326
  %v1842 = vunpack.c.l.b16 %v327
  %v1843 = vunpack.c.h.b16 %v327
  %v1844 = vunpack.c.l.b16 %v328
  %v1845 = vunpack.c.h.b16 %v328
  %v1846 = vunpack.c.l.b16 %v329
  %v1847 = vunpack.c.h.b16 %v329
  %v1848 = vunpack.c.l.b16 %v330
  %v1849 = vunpack.c.h.b16 %v330
  %v1850 = vunpack.c.l.b16 %v331
  %v1851 = vunpack.c.h.b16 %v331
  %v1852 = vunpack.c.l.b16 %v332
  %v1853 = vunpack.c.h.b16 %v332
  %v1854 = vunpack.c.l.b16 %v333
  %v1855 = vunpack.c.h.b16 %v333
  %v1856 = vunpack.c.l.b16 %v334
  %v1857 = vunpack.c.h.b16 %v334
  %v1858 = vunpack.c.l.b16 %v335
  %v1859 = vunpack.c.h.b16 %v335
  %v1860 = vunpack.c.l.b16 %v336
  %v1861 = vunpack.c.h.b16 %v336
  %v1862 = vunpack.c.l.b16 %v337
  %v1863 = vunpack.c.h.b16 %v337
  %v1864 = vunpack.c.l.b16 %v338
  %v1865 = vunpack.c.h.b16 %v338
  %v1866 = vunpack.c.l.b16 %v339
  %v1867 = vunpack.c.h.b16 %v339
  %v1868 = vunpack.c.l.b16 %v340
  %v1869 = vunpack.c.h.b16 %v340
  %v1870 = vunpack.c.l.b16 %v341
  %v1871 = vunpack.c.h.b16 %v341
  %v1872 = vunpack.c.l.b16 %v342
  %v1873 = vunpack.c.h.b16 %v342
  %v1874 = vunpack.c.l.b16 %v343
  %v1875 = vunpack.c.h.b16 %v343
  %v1876 = vunpack.c.l.b16 %v344
  %v1877 = vunpack.c.h.b16 %v344
  %v1878 = vunpack.c.l.b16 %v345
  %v1879 = vunpack.c.h.b16 %v345
  %v1880 = vunpack.c.l.b16 %v346
  %v1881 = vunpack.c.h.b16 %v346
  %v1882 = vunpack.c.l.b16 %v347
  %v1883 = vunpack.c.h.b16 %v347
  %v1884 = vunpack.c.l.b16 %v348
  %v1885 = vunpack.c.h.b16 %v348
  %v1886 = vunpack.c.l.b16 %v349
  %v1887 = vunpack.c.h.b16 %v349
  %v1888 = vunpack.c.l.b16 %v350
  %v1889 = vunpack.c.h.b16 %v350
  %v1890 = vunpack.c.l.b16 %v351
  %v1891 = vunpack.c.h.b16 %v351
  %v1892 = vunpack.c.l.b16 %v352
  %v1893 = vunpack.c.h.b16 %v352
  %v1894 = vunpack.c.l.b16 %v353
  %v1895 = vunpack.c.h.b16 %v353
  %v1896 = vunpack.c.l.b16 %v354
  %v1897 = vunpack.c.h.b16 %v354
  %v1898 = vunpack.c.l.b16 %v355
  %v1899 = vunpack.c.h.b16 %v355
  %v1900 = vunpack.c.l.b16 %v356
  %v1901 = vunpack.c.h.b16 %v356
  %v1902 = vunpack.c.l.b16 %v357
  %v1903 = vunpack.c.h.b16 %v357
  %v1904 = vunpack.c.l.b16 %v358
  %v1905 = vunpack.c.h.b16 %v358
  %v1906 = vunpack.c.l.b16 %v359
  %v1907 = vunpack.c.h.b16 %v359
  %v1908 = vunpack.c.l.b16 %v360
  %v1909 = vunpack.c.h.b16 %v360
  %v1910 = vunpack.c.l.b16 %v361
  %v1911 = vunpack.c.h.b16 %v361
  %v1912 = vunpack.c.l.b16 %v362
  %v1913 = vunpack.c.h.b16 %v362
  %v1914 = vunpack.c.l.b16 %v363
  %v1915 = vunpack.c.h.b16 %v363
  %v1916 = vunpack.c.l.b16 %v364
  %v1917 = vunpack.c.h.b16 %v364
  %v1918 = vunpack.c.l.b16 %v365
  %v1919 = vunpack.c.h.b16 %v365
  %v1920 = vunpack.c.l.b16 %v366
  %v1921 = vunpack.c.h.b16 %v366
  %v1922 = vunpack.c.l.b16 %v367
  %v1923 = vunpack.c.h.b16 %v367
  %v1924 = vunpack.c.l.b16 %v368
  %v1925 = vunpack.c.h.b16 %v368
  %v1926 = vunpack.c.l.b16 %v369
  %v1927 = vunpack.c.h.b16 %v369
  %v1928 = vunpack.c.l.b16 %v370
  %v1929 = vunpack.c.h.b16 %v370
  %v1930 = vunpack.c.l.b16 %v371
  %v1931 = vunpack.c.h.b16 %v371
  %v1932 = vunpack.c.l.b16 %v372
  %v1933 = vunpack.c.h.b16 %v372
  %v1934 = vunpack.c.l.b16 %v373
  %v1935 = vunpack.c.h.b16 %v373
  %v1936 = vunpack.c.l.b16 %v374
  %v1937 = vunpack.c.h.b16 %v374
  %v1938 = vunpack.c.l.b16 %v375
  %v1939 = vunpack.c.h.b16 %v375
  %v1940 = vunpack.c.l.b16 %v376
  %v1941 = vunpack.c.h.b16 %v376
  %v1942 = vunpack.c.l.b16 %v377
  %v1943 = vunpack.c.h.b16 %v377
  %v1944 = vunpack.c.l.b16 %v378
  %v1945 = vunpack.c.h.b16 %v378
  %v1946 = vunpack.c.l.b16 %v379
  %v1947 = vunpack.c.h.b16 %v379
  %v1948 = vunpack.c.l.b16 %v380
  %v1949 = vunpack.c.h.b16 %v380
  %v1950 = vunpack.c.l.b16 %v381
  %v1951 = vunpack.c.h.b16 %v381
  %v1952 = vunpack.c.l.b16 %v382
  %v1953 = vunpack.c.h.b16 %v382
  %v1954 = vunpack.c.l.b16 %v383
  %v1955 = vunpack.c.h.b16 %v383
  %v1956 = vunpack.c.l.b16 %v384
  %v1957 = vunpack.c.h.b16 %v384
  %v1958 = vunpack.c.l.b16 %v385
  %v1959 = vunpack.c.h.b16 %v385
  %v1960 = vunpack.c.l.b16 %v386
  %v1961 = vunpack.c.h.b16 %v386
  %v1962 = vunpack.c.l.b16 %v387
  %v1963 = vunpack.c.h.b16 %v387
  %v1964 = vunpack.c.l.b16 %v388
  %v1965 = vunpack.c.h.b16 %v388
  %v1966 = vunpack.c.l.b16 %v389
  %v1967 = vunpack.c.h.b16 %v389
  %v1968 = vunpack.c.l.b16 %v390
  %v1969 = vunpack.c.h.b16 %v390
  %v1970 = vunpack.c.l.b16 %v391
  %v1971 = vunpack.c.h.b16 %v391
  %v1972 = vunpack.c.l.b16 %v392
  %v1973 = vunpack.c.h.b16 %v392
  %v1974 = vunpack.c.l.b16 %v393
  %v1975 = vunpack.c.h.b16 %v393
  %v1976 = vunpack.c.l.b16 %v394
  %v1977 = vunpack.c.h.b16 %v394
  %v1978 = vunpack.c.l.b16 %v395
  %v1979 = vunpack.c.h.b16 %v395
  %v1980 = vunpack.c.l.b16 %v396
  %v1981 = vunpack.c.h.b16 %v396
  %v1982 = vunpack.c.l.b16 %v397
  %v1983 = vunpack.c.h.b16 %v397
  %v1984 = vunpack.c.l.b16 %v398
  %v1985 = vunpack.c.h.b16 %v398
  %v1986 = vunpack.c.l.b16 %v399
  %v1987 = vunpack.c.h.b16 %v399
  %v1988 = vunpack.c.l.b16 %v400
  %v1989 = vunpack.c.h.b16 %v400
  %v1990 = vunpack.c.l.b16 %v401
  %v1991 = vunpack.c.h.b16 %v401
  %v1992 = vunpack.c.l.b16 %v402
  %v1993 = vunpack.c.h.b16 %v402
  %v1994 = vunpack.c.l.b16 %v403
  %v1995 = vunpack.c.h.b16 %v403
  %v1996 = vunpack.c.l.b16 %v404
  %v1997 = vunpack.c.h.b16 %v404
  %v1998 = vunpack.c.l.b16 %v405
  %v1999 = vunpack.c.h.b16 %v405
  %v2000 = vunpack.c.l.b16 %v406
  %v2001 = vunpack.c.h.b16 %v406
  %v2002 = vunpack.c.l.b16 %v407
  %v2003 = vunpack.c.h.b16 %v407
  %v2004 = vunpack.c.l.b16 %v408
  %v2005 = vunpack.c.h.b16 %v408
  %v2006 = vunpack.c.l.b16 %v409
  %v2007 = vunpack.c.h.b16 %v409
  %v2008 = vunpack.c.l.b16 %v410
  %v2009 = vunpack.c.h.b16 %v410
  %v2010 = vunpack.c.l.b16 %v411
  %v2011 = vunpack.c.h.b16 %v411
  %v2012 = vunpack.c.l.b16 %v412
  %v2013 = vunpack.c.h.b16 %v412
  %v2014 = vunpack.c.l.b16 %v413
  %v2015 = vunpack.c.h.b16 %v413
  %v2016 = vunpack.c.l.b16 %v414
  %v2017 = vunpack.c.h.b16 %v414
  %v2018 = vunpack.c.l.b16 %v415
  %v2019 = vunpack.c.h.b16 %v415
  %v2020 = vunpack.c.l.b16 %v416
  %v2021 = vunpack.c.h.b16 %v416
  %v2022 = vunpack.c.l.b16 %v417
  %v2023 = vunpack.c.h.b16 %v417
  %v2024 = vunpack.c.l.b16 %v418
  %v2025 = vunpack.c.h.b16 %v418
  %v2026 = vunpack.c.l.b16 %v419
  %v2027 = vunpack.c.h.b16 %v419
  %v2028 = vunpack.c.l.b16 %v420
  %v2029 = vunpack.c.h.b16 %v420
  %v2030 = vunpack.c.l.b16 %v421
  %v2031 = vunpack.c.h.b16 %v421
  %v2032 = vunpack.c.l.b16 %v422
  %v2033 = vunpack.c.h.b16 %v422
  %v2034 = vunpack.c.l.b16 %v423
  %v2035 = vunpack.c.h.b16 %v423
  %v2036 = vunpack.c.l.b16 %v424
  %v2037 = vunpack.c.h.b16 %v424
  %v2038 = vunpack.c.l.b16 %v425
  %v2039 = vunpack.c.h.b16 %v425
  %v2040 = vunpack.c.l.b16 %v426
  %v2041 = vunpack.c.h.b16 %v426
  %v2042 = vunpack.c.l.b16 %v427
  %v2043 = vunpack.c.h.b16 %v427
  %v2044 = vunpack.c.l.b16 %v428
  %v2045 = vunpack.c.h.b16 %v428
  %v2046 = vunpack.c.l.b16 %v429
  %v2047 = vunpack.c.h.b16 %v429
  %v2048 = vunpack.c.l.b16 %v430
  %v2049 = vunpack.c.h.b16 %v430
  %v2050 = vunpack.c.l.b16 %v431
  %v2051 = vunpack.c.h.b16 %v431
  %v2052 = vunpack.c.l.b16 %v432
  %v2053 = vunpack.c.h.b16 %v432
  %v2054 = vunpack.c.l.b16 %v433
  %v2055 = vunpack.c.h.b16 %v433
  %v2056 = vunpack.c.l.b16 %v434
  %v2057 = vunpack.c.h.b16 %v434
  %v2058 = vunpack.c.l.b16 %v435
  %v2059 = vunpack.c.h.b16 %v435
  %v2060 = vunpack.c.l.b16 %v436
  %v2061 = vunpack.c.h.b16 %v436
  %v2062 = vunpack.c.l.b16 %v437
  %v2063 = vunpack.c.h.b16 %v437
  %v2064 = vunpack.c.l.b16 %v438
  %v2065 = vunpack.c.h.b16 %v438
  %v2066 = vunpack.c.l.b16 %v439
  %v2067 = vunpack.c.h.b16 %v439
  %v2068 = vunpack.c.l.b16 %v440
  %v2069 = vunpack.c.h.b16 %v440
  %v2070 = vunpack.c.l.b16 %v441
  %v2071 = vunpack.c.h.b16 %v441
  %v2072 = vunpack.c.l.b16 %v442
  %v2073 = vunpack.c.h.b16 %v442
  %v2074 = vunpack.c.l.b16 %v443
  %v2075 = vunpack.c.h.b16 %v443
  %v2076 = vunpack.c.l.b16 %v444
  %v2077 = vunpack.c.h.b16 %v444
  %v2078 = vunpack.c.l.b16 %v445
  %v2079 = vunpack.c.h.b16 %v445
  %v2080 = vunpack.c.l.b16 %v446
  %v2081 = vunpack.c.h.b16 %v446
  %v2082 = vunpack.c.l.b16 %v447
  %v2083 = vunpack.c.h.b16 %v447
  %v2084 = vunpack.c.l.b16 %v448
  %v2085 = vunpack.c.h.b16 %v448
  %v2086 = vunpack.c.l.b16 %v449
  %v2087 = vunpack.c.h.b16 %v449
  %v2088 = vunpack.c.l.b16 %v450
  %v2089 = vunpack.c.h.b16 %v450
  %v2090 = vunpack.c.l.b16 %v451
  %v2091 = vunpack.c.h.b16 %v451
  %v2092 = vunpack.c.l.b16 %v452
  %v2093 = vunpack.c.h.b16 %v452
  %v2094 = vunpack.c.l.b16 %v453
  %v2095 = vunpack.c.h.b16 %v453
  %v2096 = vunpack.c.l.b16 %v454
  %v2097 = vunpack.c.h.b16 %v454
  %v2098 = vunpack.c.l.b16 %v455
  %v2099 = vunpack.c.h.b16 %v455
  %v2100 = vunpack.c.l.b16 %v456
  %v2101 = vunpack.c.h.b16 %v456
  %v2102 = vunpack.c.l.b16 %v457
  %v2103 = vunpack.c.h.b16 %v457
  %v2104 = vunpack.c.l.b16 %v458
  %v2105 = vunpack.c.h.b16 %v458
  %v2106 = vunpack.c.l.b16 %v459
  %v2107 = vunpack.c.h.b16 %v459
  %v2108 = vunpack.c.l.b16 %v460
  %v2109 = vunpack.c.h.b16 %v460
  %v2110 = vunpack.c.l.b16 %v461
  %v2111 = vunpack.c.h.b16 %v461
  %v2112 = vunpack.c.l.b16 %v462
  %v2113 = vunpack.c.h.b16 %v462
  %v2114 = vunpack.c.l.b16 %v463
  %v2115 = vunpack.c.h.b16 %v463
  %v2116 = vunpack.c.l.b16 %v464
  %v2117 = vunpack.c.h.b16 %v464
  %v2118 = vunpack.c.l.b16 %v465
  %v2119 = vunpack.c.h.b16 %v465
  %v2120 = vunpack.c.l.b16 %v466
  %v2121 = vunpack.c.h.b16 %v466
  %v2122 = vunpack.c.l.b16 %v467
  %v2123 = vunpack.c.h.b16 %v467
  %v2124 = vunpack.c.l.b16 %v468
  %v2125 = vunpack.c.h.b16 %v468
  %v2126 = vunpack.c.l.b16 %v469
  %v2127 = vunpack.c.h.b16 %v469
  %v2128 = vunpack.c.l.b16 %v470
  %v2129 = vunpack.c.h.b16 %v470
  %v2130 = vunpack.c.l.b16 %v471
  %v2131 = vunpack.c.h.b16 %v471
  %v2132 = vunpack.c.l.b16 %v472
  %v2133 = vunpack.c.h.b16 %v472
  %v2134 = vunpack.c.l.b16 %v473
  %v2135 = vunpack.c.h.b16 %v473
  %v2136 = vunpack.c.l.b16 %v474
  %v2137 = vunpack.c.h.b16 %v474
  %v2138 = vunpack.c.l.b16 %v475
  %v2139 = vunpack.c.h.b16 %v475
  %v2140 = vunpack.c.l.b16 %v476
  %v2141 = vunpack.c.h.b16 %v476
  %v2142 = vunpack.c.l.b16 %v477
  %v2143 = vunpack.c.h.b16 %v477
  %v2144 = vunpack.c.l.b16 %v478
  %v2145 = vunpack.c.h.b16 %v478
  %v2146 = vunpack.c.l.b16 %v479
  %v2147 = vunpack.c.h.b16 %v479
  %v2148 = vunpack.c.l.b16 %v480
  %v2149 = vunpack.c.h.b16 %v480
  %v2150 = vunpack.c.l.b16 %v481
  %v2151 = vunpack.c.h.b16 %v481
  %v2152 = vunpack.c.l.b16 %v482
  %v2153 = vunpack.c.h.b16 %v482
  %v2154 = vunpack.c.l.b16 %v483
  %v2155 = vunpack.c.h.b16 %v483
  %v2156 = vunpack.c.l.b16 %v484
  %v2157 = vunpack.c.h.b16 %v484
  %v2158 = vunpack.c.l.b16 %v485
  %v2159 = vunpack.c.h.b16 %v485
  %v2160 = vunpack.c.l.b16 %v486
  %v2161 = vunpack.c.h.b16 %v486
  %v2162 = vunpack.c.l.b16 %v487
  %v2163 = vunpack.c.h.b16 %v487
  %v2164 = vunpack.c.l.b16 %v488
  %v2165 = vunpack.c.h.b16 %v488
  %v2166 = vunpack.c.l.b16 %v489
  %v2167 = vunpack.c.h.b16 %v489
  %v2168 = vunpack.c.l.b16 %v490
  %v2169 = vunpack.c.h.b16 %v490
  %v2170 = vunpack.c.l.b16 %v491
  %v2171 = vunpack.c.h.b16 %v491
  %v2172 = vunpack.c.l.b16 %v492
  %v2173 = vunpack.c.h.b16 %v492
  %v2174 = vunpack.c.l.b16 %v493
  %v2175 = vunpack.c.h.b16 %v493
  %v2176 = vunpack.c.l.b16 %v494
  %v2177 = vunpack.c.h.b16 %v494
  %v2178 = vunpack.c.l.b16 %v495
  %v2179 = vunpack.c.h.b16 %v495
  %v2180 = vunpack.c.l.b16 %v496
  %v2181 = vunpack.c.h.b16 %v496
  %v2182 = vunpack.c.l.b16 %v497
  %v2183 = vunpack.c.h.b16 %v497
  %v2184 = vunpack.c.l.b16 %v498
  %v2185 = vunpack.c.h.b16 %v498
  %v2186 = vunpack.c.l.b16 %v499
  %v2187 = vunpack.c.h.b16 %v499
  %v2188 = vunpack.c.l.b16 %v500
  %v2189 = vunpack.c.h.b16 %v500
  %v2190 = vunpack.c.l.b16 %v501
  %v2191 = vunpack.c.h.b16 %v501
  %v2192 = vunpack.c.l.b16 %v502
  %v2193 = vunpack.c.h.b16 %v502
  %v2194 = vunpack.c.l.b16 %v503
  %v2195 = vunpack.c.h.b16 %v503
  %v2196 = vunpack.c.l.b16 %v504
  %v2197 = vunpack.c.h.b16 %v504
  %v2198 = vunpack.c.l.b16 %v505
  %v2199 = vunpack.c.h.b16 %v505
  %v2200 = vunpack.c.l.b16 %v506
  %v2201 = vunpack.c.h.b16 %v506
  %v2202 = vunpack.c.l.b16 %v507
  %v2203 = vunpack.c.h.b16 %v507
  %v2204 = vunpack.c.l.b16 %v508
  %v2205 = vunpack.c.h.b16 %v508
  %v2206 = vunpack.c.l.b16 %v509
  %v2207 = vunpack.c.h.b16 %v509
  %v2208 = vunpack.c.l.b16 %v510
  %v2209 = vunpack.c.h.b16 %v510
  %v2210 = vunpack.c.l.b16 %v511
  %v2211 = vunpack.c.h.b16 %v511
  %v2212 = vunpack.c.l.b16 %v512
  %v2213 = vunpack.c.h.b16 %v512
  %v2214 = vunpack.c.l.b16 %v513
  %v2215 = vunpack.c.h.b16 %v513
  %v2216 = vunpack.c.l.b16 %v514
  %v2217 = vunpack.c.h.b16 %v514
  %v2218 = vunpack.c.l.b16 %v515
  %v2219 = vunpack.c.h.b16 %v515
  %v2220 = vunpack.c.l.b16 %v516
  %v2221 = vunpack.c.h.b16 %v516
  %v2222 = vunpack.c.l.b16 %v517
  %v2223 = vunpack.c.h.b16 %v517
  %v2224 = vunpack.c.l.b16 %v518
  %v2225 = vunpack.c.h.b16 %v518
  %v2226 = vunpack.c.l.b16 %v519
  %v2227 = vunpack.c.h.b16 %v519
  %v2228 = vunpack.c.l.b16 %v520
  %v2229 = vunpack.c.h.b16 %v520
  %v2230 = vunpack.c.l.b16 %v521
  %v2231 = vunpack.c.h.b16 %v521
  %v2232 = vunpack.c.l.b16 %v522
  %v2233 = vunpack.c.h.b16 %v522
  %v2234 = vunpack.c.l.b16 %v523
  %v2235 = vunpack.c.h.b16 %v523
  %v2236 = vunpack.c.l.b16 %v524
  %v2237 = vunpack.c.h.b16 %v524
  %v2238 = vunpack.c.l.b16 %v525
  %v2239 = vunpack.c.h.b16 %v525
  %v2240 = vunpack.c.l.b16 %v526
  %v2241 = vunpack.c.h.b16 %v526
  %v2242 = vunpack.c.l.b16 %v527
  %v2243 = vunpack.c.h.b16 %v527
  %v2244 = vunpack.c.l.b16 %v528
  %v2245 = vunpack.c.h.b16 %v528
  %v2246 = vunpack.c.l.b16 %v529
  %v2247 = vunpack.c.h.b16 %v529
  %v2248 = vunpack.c.l.b16 %v530
  %v2249 = vunpack.c.h.b16 %v530
  %v2250 = vunpack.c.l.b16 %v531
  %v2251 = vunpack.c.h.b16 %v531
  %v2252 = vunpack.c.l.b16 %v532
  %v2253 = vunpack.c.h.b16 %v532
  %v2254 = vunpack.c.l.b16 %v533
  %v2255 = vunpack.c.h.b16 %v533
  %v2256 = vunpack.c.l.b16 %v534
  %v2257 = vunpack.c.h.b16 %v534
  %v2258 = vunpack.c.l.b16 %v535
  %v2259 = vunpack.c.h.b16 %v535
  %v2260 = vunpack.c.l.b16 %v536
  %v2261 = vunpack.c.h.b16 %v536
  %v2262 = vunpack.c.l.b16 %v537
  %v2263 = vunpack.c.h.b16 %v537
  %v2264 = vunpack.c.l.b16 %v538
  %v2265 = vunpack.c.h.b16 %v538
  %v2266 = vunpack.c.l.b16 %v539
  %v2267 = vunpack.c.h.b16 %v539
  %v2268 = vunpack.c.l.b16 %v540
  %v2269 = vunpack.c.h.b16 %v540
  %v2270 = vunpack.c.l.b16 %v541
  %v2271 = vunpack.c.h.b16 %v541
  %v2272 = vunpack.c.l.b16 %v542
  %v2273 = vunpack.c.h.b16 %v542
  %v2274 = vunpack.c.l.b16 %v543
  %v2275 = vunpack.c.h.b16 %v543
  %v2276 = vunpack.c.l.b16 %v544
  %v2277 = vunpack.c.h.b16 %v544
  %v2278 = vunpack.c.l.b16 %v545
  %v2279 = vunpack.c.h.b16 %v545
  %v2280 = vunpack.c.l.b16 %v546
  %v2281 = vunpack.c.h.b16 %v546
  %v2282 = vunpack.c.l.b16 %v547
  %v2283 = vunpack.c.h.b16 %v547
  %v2284 = vunpack.c.l.b16 %v548
  %v2285 = vunpack.c.h.b16 %v548
  %v2286 = vunpack.c.l.b16 %v549
  %v2287 = vunpack.c.h.b16 %v549
  %v2288 = vunpack.c.l.b16 %v550
  %v2289 = vunpack.c.h.b16 %v550
  %v2290 = vunpack.c.l.b16 %v551
  %v2291 = vunpack.c.h.b16 %v551
  %v2292 = vunpack.c.l.b16 %v552
  %v2293 = vunpack.c.h.b16 %v552
  %v2294 = vunpack.c.l.b16 %v553
  %v2295 = vunpack.c.h.b16 %v553
  %v2296 = vunpack.c.l.b16 %v554
  %v2297 = vunpack.c.h.b16 %v554
  %v2298 = vunpack.c.l.b16 %v555
  %v2299 = vunpack.c.h.b16 %v555
  %v2300 = vunpack.c.l.b16 %v556
  %v2301 = vunpack.c.h.b16 %v556
  %v2302 = vunpack.c.l.b16 %v557
  %v2303 = vunpack.c.h.b16 %v557
  %v2304 = vunpack.c.l.b16 %v558
  %v2305 = vunpack.c.h.b16 %v558
  %v2306 = vunpack.c.l.b16 %v559
  %v2307 = vunpack.c.h.b16 %v559
  %v2308 = vunpack.c.l.b16 %v560
  %v2309 = vunpack.c.h.b16 %v560
  %v2310 = vunpack.c.l.b16 %v561
  %v2311 = vunpack.c.h.b16 %v561
  %v2312 = vunpack.c.l.b16 %v562
  %v2313 = vunpack.c.h.b16 %v562
  %v2314 = vunpack.c.l.b16 %v563
  %v2315 = vunpack.c.h.b16 %v563
  %v2316 = vunpack.c.l.b16 %v564
  %v2317 = vunpack.c.h.b16 %v564
  %v2318 = vunpack.c.l.b16 %v565
  %v2319 = vunpack.c.h.b16 %v565
  %v2320 = vunpack.c.l.b16 %v566
  %v2321 = vunpack.c.h.b16 %v566
  %v2322 = vunpack.c.l.b16 %v567
  %v2323 = vunpack.c.h.b16 %v567
  %v2324 = vunpack.c.l.b16 %v568
  %v2325 = vunpack.c.h.b16 %v568
  %v2326 = vunpack.c.l.b16 %v569
  %v2327 = vunpack.c.h.b16 %v569
  %v2328 = vunpack.c.l.b16 %v570
  %v2329 = vunpack.c.h.b16 %v570
  %v2330 = vunpack.c.l.b16 %v571
  %v2331 = vunpack.c.h.b16 %v571
  %v2332 = vunpack.c.l.b16 %v572
  %v2333 = vunpack.c.h.b16 %v572
  %v2334 = vunpack.c.l.b16 %v573
  %v2335 = vunpack.c.h.b16 %v573
  %v2336 = vunpack.c.l.b16 %v574
  %v2337 = vunpack.c.h.b16 %v574
  %v2338 = vunpack.c.l.b16 %v575
  %v2339 = vunpack.c.h.b16 %v575
  %v2340 = vunpack.c.l.b16 %v576
  %v2341 = vunpack.c.h.b16 %v576
  %v2342 = vunpack.c.l.b16 %v577
  %v2343 = vunpack.c.h.b16 %v577
  %v2344 = vunpack.c.l.b16 %v578
  %v2345 = vunpack.c.h.b16 %v578
  %v2346 = vunpack.c.l.b16 %v579
  %v2347 = vunpack.c.h.b16 %v579
  %v2348 = vunpack.c.l.b16 %v580
  %v2349 = vunpack.c.h.b16 %v580
  %v2350 = vunpack.c.l.b16 %v581
  %v2351 = vunpack.c.h.b16 %v581
  %v2352 = vunpack.c.l.b16 %v582
  %v2353 = vunpack.c.h.b16 %v582
  %v2354 = vunpack.c.l.b16 %v583
  %v2355 = vunpack.c.h.b16 %v583
  %v2356 = vunpack.c.l.b16 %v584
  %v2357 = vunpack.c.h.b16 %v584
  %v2358 = vunpack.c.l.b16 %v585
  %v2359 = vunpack.c.h.b16 %v585
  %v2360 = vunpack.c.l.b16 %v586
  %v2361 = vunpack.c.h.b16 %v586
  %v2362 = vunpack.c.l.b16 %v587
  %v2363 = vunpack.c.h.b16 %v587
  %v2364 = vunpack.c.l.b16 %v588
  %v2365 = vunpack.c.h.b16 %v588
  %v2366 = vunpack.c.l.b16 %v589
  %v2367 = vunpack.c.h.b16 %v589
  %v2368 = vunpack.c.l.b16 %v590
  %v2369 = vunpack.c.h.b16 %v590
  %v2370 = vunpack.c.l.b16 %v591
  %v2371 = vunpack.c.h.b16 %v591
  %v2372 = vunpack.c.l.b16 %v592
  %v2373 = vunpack.c.h.b16 %v592
  %v2374 = vunpack.c.l.b16 %v593
  %v2375 = vunpack.c.h.b16 %v593
  %v2376 = vunpack.c.l.b16 %v594
  %v2377 = vunpack.c.h.b16 %v594
  %v2378 = vunpack.c.l.b16 %v595
  %v2379 = vunpack.c.h.b16 %v595
  %v2380 = vpack.c.b16 %v1234, %v1228
  %v2381 = vpack.c.b16 %v1235, %v1229
  %v2382 = vpack.c.b16 %v1236, %v1230
  %v2383 = vpack.c.b16 %v1237, %v1231
  %v2384 = vpack.c.b16 %v1238, %v1232
  %v2385 = vpack.c.b16 %v1239, %v1233
  %v2386 = vpack.c.b16 %v1246, %v1240
  %v2387 = vpack.c.b16 %v1247, %v1241
  %v2388 = vpack.c.b16 %v1248, %v1242
  %v2389 = vpack.c.b16 %v1249, %v1243
  %v2390 = vpack.c.b16 %v1250, %v1244
  %v2391 = vpack.c.b16 %v1251, %v1245
  %v2392 = vpack.c.b16 %v1258, %v1252
  %v2393 = vpack.c.b16 %v1259, %v1253
  %v2394 = vpack.c.b16 %v1260, %v1254
  %v2395 = vpack.c.b16 %v1261, %v1255
  %v2396 = vpack.c.b16 %v1262, %v1256
  %v2397 = vpack.c.b16 %v1263, %v1257
  %v2398 = vpack.c.b16 %v1270, %v1264
  %v2399 = vpack.c.b16 %v1271, %v1265
  %v2400 = vpack.c.b16 %v1272, %v1266
  %v2401 = vpack.c.b16 %v1273, %v1267
  %v2402 = vpack.c.b16 %v1274, %v1268
  %v2403 = vpack.c.b16 %v1275, %v1269
  %v2404 = vpack.c.b16 %v1282, %v1276
  %v2405 = vpack.c.b16 %v1283, %v1277
  %v2406 = vpack.c.b16 %v1284, %v1278
  %v2407 = vpack.c.b16 %v1285, %v1279
  %v2408 = vpack.c.b16 %v1286, %v1280
  %v2409 = vpack.c.b16 %v1287, %v1281
  %v2410 = vpack.c.b16 %v1294, %v1288
  %v2411 = vpack.c.b16 %v1295, %v1289
  %v2412 = vpack.c.b16 %v1296, %v1290
  %v2413 = vpack.c.b16 %v1297, %v1291
  %v2414 = vpack.c.b16 %v1298, %v1292
  %v2415 = vpack.c.b16 %v1299, %v1293
  %v2416 = vpack.c.b16 %v1306, %v1300
  %v2417 = vpack.c.b16 %v1307, %v1301
  %v2418 = vpack.c.b16 %v1308, %v1302
  %v2419 = vpack.c.b16 %v1309, %v1303
  %v2420 = vpack.c.b16 %v1310, %v1304
  %v2421 = vpack.c.b16 %v1311, %v1305
  %v2422 = vpack.c.b16 %v1318, %v1312
  %v2423 = vpack.c.b16 %v1319, %v1313
  %v2424 = vpack.c.b16 %v1320, %v1314
  %v2425 = vpack.c.b16 %v1321, %v1315
  %v2426 = vpack.c.b16 %v1322, %v1316
  %v2427 = vpack.c.b16 %v1323, %v1317
  %v2428 = vpack.c.b16 %v1330, %v1324
  %v2429 = vpack.c.b16 %v1331, %v1325
  %v2430 = vpack.c.b16 %v1332, %v1326
  %v2431 = vpack.c.b16 %v1333, %v1327
  %v2432 = vpack.c.b16 %v1334, %v1328
  %v2433 = vpack.c.b16 %v1335, %v1329
  %v2434 = vpack.c.b16 %v1342, %v1336
  %v2435 = vpack.c.b16 %v1343, %v1337
  %v2436 = vpack.c.b16 %v1344, %v1338
  %v2437 = vpack.c.b16 %v1345, %v1339
  %v2438 = vpack.c.b16 %v1346, %v1340
  %v2439 = vpack.c.b16 %v1347, %v1341
  %v2440 = vpack.c.b16 %v1354, %v1348
  %v2441 = vpack.c.b16 %v1355, %v1349
  %v2442 = vpack.c.b16 %v1356, %v1350
  %v2443 = vpack.c.b16 %v1357, %v1351
  %v2444 = vpack.c.b16 %v1358, %v1352
  %v2445 = vpack.c.b16 %v1359, %v1353
  %v2446 = vpack.c.b16 %v1366, %v1360
  %v2447 = vpack.c.b16 %v1367, %v1361
  %v2448 = vpack.c.b16 %v1368, %v1362
  %v2449 = vpack.c.b16 %v1369, %v1363
  %v2450 = vpack.c.b16 %v1370, %v1364
  %v2451 = vpack.c.b16 %v1371, %v1365
  %v2452 = vpack.c.b16 %v1378, %v1372
  %v2453 = vpack.c.b16 %v1379, %v1373
  %v2454 = vpack.c.b16 %v1380, %v1374
  %v2455 = vpack.c.b16 %v1381, %v1375
  %v2456 = vpack.c.b16 %v1382, %v1376
  %v2457 = vpack.c.b16 %v1383, %v1377
  %v2458 = vpack.c.b16 %v1390, %v1384
  %v2459 = vpack.c.b16 %v1391, %v1385
  %v2460 = vpack.c.b16 %v1392, %v1386
  %v2461 = vpack.c.b16 %v1393, %v1387
  %v2462 = vpack.c.b16 %v1394, %v1388
  %v2463 = vpack.c.b16 %v1395, %v1389
  %v2464 = vpack.c.b16 %v1402, %v1396
  %v2465 = vpack.c.b16 %v1403, %v1397
  %v2466 = vpack.c.b16 %v1404, %v1398
  %v2467 = vpack.c.b16 %v1405, %v1399
  %v2468 = vpack.c.b16 %v1406, %v1400
  %v2469 = vpack.c.b16 %v1407, %v1401
  %v2470 = vpack.c.b16 %v1414, %v1408
  %v2471 = vpack.c.b16 %v1415, %v1409
  %v2472 = vpack.c.b16 %v1416, %v1410
  %v2473 = vpack.c.b16 %v1417, %v1411
  %v2474 = vpack.c.b16 %v1418, %v1412
  %v2475 = vpack.c.b16 %v1419, %v1413
  %v2476 = vpack.c.b16 %v1426, %v1420
  %v2477 = vpack.c.b16 %v1427, %v1421
  %v2478 = vpack.c.b16 %v1428, %v1422
  %v2479 = vpack.c.b16 %v1429, %v1423
  %v2480 = vpack.c.b16 %v1430, %v1424
  %v2481 = vpack.c.b16 %v1431, %v1425
  %v2482 = vpack.c.b16 %v1438, %v1432
  %v2483 = vpack.c.b16 %v1439, %v1433
  %v2484 = vpack.c.b16 %v1440, %v1434
  %v2485 = vpack.c.b16 %v1441, %v1435
  %v2486 = vpack.c.b16 %v1442, %v1436
  %v2487 = vpack.c.b16 %v1443, %v1437
  %v2488 = vpack.c.b16 %v1450, %v1444
  %v2489 = vpack.c.b16 %v1451, %v1445
  %v2490 = vpack.c.b16 %v1452, %v1446
  %v2491 = vpack.c.b16 %v1453, %v1447
  %v2492 = vpack.c.b16 %v1454, %v1448
  %v2493 = vpack.c.b16 %v1455, %v1449
  %v2494 = vpack.c.b16 %v1462, %v1456
  %v2495 = vpack.c.b16 %v1463, %v1457
  %v2496 = vpack.c.b16 %v1464, %v1458
  %v2497 = vpack.c.b16 %v1465, %v1459
  %v2498 = vpack.c.b16 %v1466, %v1460
  %v2499 = vpack.c.b16 %v1467, %v1461
  %v2500 = vpack.c.b16 %v1474, %v1468
  %v2501 = vpack.c.b16 %v1475, %v1469
  %v2502 = vpack.c.b16 %v1476, %v1470
  %v2503 = vpack.c.b16 %v1477, %v1471
  %v2504 = vpack.c.b16 %v1478, %v1472
  %v2505 = vpack.c.b16 %v1479, %v1473
  %v2506 = vpack.c.b16 %v1486, %v1480
  %v2507 = vpack.c.b16 %v1487, %v1481
  %v2508 = vpack.c.b16 %v1488, %v1482
  %v2509 = vpack.c.b16 %v1489, %v1483
  %v2510 = vpack.c.b16 %v1490, %v1484
  %v2511 = vpack.c.b16 %v1491, %v1485
  %v2512 = vpack.c.b16 %v1498, %v1492
  %v2513 = vpack.c.b16 %v1499, %v1493
  %v2514 = vpack.c.b16 %v1500, %v1494
  %v2515 = vpack.c.b16 %v1501, %v1495
  %v2516 = vpack.c.b16 %v1502, %v1496
  %v2517 = vpack.c.b16 %v1503, %v1497
  %v2518 = vpack.c.b16 %v1510, %v1504
  %v2519 = vpack.c.b16 %v1511, %v1505
  %v2520 = vpack.c.b16 %v1512, %v1506
  %v2521 = vpack.c.b16 %v1513, %v1507
  %v2522 = vpack.c.b16 %v1514, %v1508
  %v2523 = vpack.c.b16 %v1515, %v1509
  %v2524 = vpack.c.b16 %v1522, %v1516
  %v2525 = vpack.c.b16 %v1523, %v1517
  %v2526 = vpack.c.b16 %v1524, %v1518
  %v2527 = vpack.c.b16 %v1525, %v1519
  %v2528 = vpack.c.b16 %v1526, %v1520
  %v2529 = vpack.c.b16 %v1527, %v1521
  %v2530 = vpack.c.b16 %v1534, %v1528
  %v2531 = vpack.c.b16 %v1535, %v1529
  %v2532 = vpack.c.b16 %v1536, %v1530
  %v2533 = vpack.c.b16 %v1537, %v1531
  %v2534 = vpack.c.b16 %v1538, %v1532
  %v2535 = vpack.c.b16 %v1539, %v1533
  %v2536 = vpack.c.b16 %v1546, %v1540
  %v2537 = vpack.c.b16 %v1547, %v1541
  %v2538 = vpack.c.b16 %v1548, %v1542
  %v2539 = vpack.c.b16 %v1549, %v1543
  %v2540 = vpack.c.b16 %v1550, %v1544
  %v2541 = vpack.c.b16 %v1551, %v1545
  %v2542 = vpack.c.b16 %v1558, %v1552
  %v2543 = vpack.c.b16 %v1559, %v1553
  %v2544 = vpack.c.b16 %v1560, %v1554
  %v2545 = vpack.c.b16 %v1561, %v1555
  %v2546 = vpack.c.b16 %v1562, %v1556
  %v2547 = vpack.c.b16 %v1563, %v1557
  %v2548 = vpack.c.b16 %v1570, %v1564
  %v2549 = vpack.c.b16 %v1571, %v1565
  %v2550 = vpack.c.b16 %v1572, %v1566
  %v2551 = vpack.c.b16 %v1573, %v1567
  %v2552 = vpack.c.b16 %v1574, %v1568
  %v2553 = vpack.c.b16 %v1575, %v1569
  %v2554 = vpack.c.b16 %v1582, %v1576
  %v2555 = vpack.c.b16 %v1583, %v1577
  %v2556 = vpack.c.b16 %v1584, %v1578
  %v2557 = vpack.c.b16 %v1585, %v1579
  %v2558 = vpack.c.b16 %v1586, %v1580
  %v2559 = vpack.c.b16 %v1587, %v1581
  %v2560 = vpack.c.b16 %v1594, %v1588
  %v2561 = vpack.c.b16 %v1595, %v1589
  %v2562 = vpack.c.b16 %v1596, %v1590
  %v2563 = vpack.c.b16 %v1597, %v1591
  %v2564 = vpack.c.b16 %v1598, %v1592
  %v2565 = vpack.c.b16 %v1599, %v1593
  %v2566 = vpack.c.b16 %v1606, %v1600
  %v2567 = vpack.c.b16 %v1607, %v1601
  %v2568 = vpack.c.b16 %v1608, %v1602
  %v2569 = vpack.c.b16 %v1609, %v1603
  %v2570 = vpack.c.b16 %v1610, %v1604
  %v2571 = vpack.c.b16 %v1611, %v1605
  %v2572 = vpack.c.b16 %v1618, %v1612
  %v2573 = vpack.c.b16 %v1619, %v1613
  %v2574 = vpack.c.b16 %v1620, %v1614
  %v2575 = vpack.c.b16 %v1621, %v1615
  %v2576 = vpack.c.b16 %v1622, %v1616
  %v2577 = vpack.c.b16 %v1623, %v1617
  %v2578 = vpack.c.b16 %v1630, %v1624
  %v2579 = vpack.c.b16 %v1631, %v1625
  %v2580 = vpack.c.b16 %v1632, %v1626
  %v2581 = vpack.c.b16 %v1633, %v1627
  %v2582 = vpack.c.b16 %v1634, %v1628
  %v2583 = vpack.c.b16 %v1635, %v1629
  %v2584 = vpack.c.b16 %v1642, %v1636
  %v2585 = vpack.c.b16 %v1643, %v1637
  %v2586 = vpack.c.b16 %v1644, %v1638
  %v2587 = vpack.c.b16 %v1645, %v1639
  %v2588 = vpack.c.b16 %v1646, %v1640
  %v2589 = vpack.c.b16 %v1647, %v1641
  %v2590 = vpack.c.b16 %v1654, %v1648
  %v2591 = vpack.c.b16 %v1655, %v1649
  %v2592 = vpack.c.b16 %v1656, %v1650
  %v2593 = vpack.c.b16 %v1657, %v1651
  %v2594 = vpack.c.b16 %v1658, %v1652
  %v2595 = vpack.c.b16 %v1659, %v1653
  %v2596 = vpack.c.b16 %v1666, %v1660
  %v2597 = vpack.c.b16 %v1667, %v1661
  %v2598 = vpack.c.b16 %v1668, %v1662
  %v2599 = vpack.c.b16 %v1669, %v1663
  %v2600 = vpack.c.b16 %v1670, %v1664
  %v2601 = vpack.c.b16 %v1671, %v1665
  %v2602 = vpack.c.b16 %v1678, %v1672
  %v2603 = vpack.c.b16 %v1679, %v1673
  %v2604 = vpack.c.b16 %v1680, %v1674
  %v2605 = vpack.c.b16 %v1681, %v1675
  %v2606 = vpack.c.b16 %v1682, %v1676
  %v2607 = vpack.c.b16 %v1683, %v1677
  %v2608 = vpack.c.b16 %v1690, %v1684
  %v2609 = vpack.c.b16 %v1691, %v1685
  %v2610 = vpack.c.b16 %v1692, %v1686
  %v2611 = vpack.c.b16 %v1693, %v1687
  %v2612 = vpack.c.b16 %v1694, %v1688
  %v2613 = vpack.c.b16 %v1695, %v1689
  %v2614 = vpack.c.b16 %v1702, %v1696
  %v2615 = vpack.c.b16 %v1703, %v1697
  %v2616 = vpack.c.b16 %v1704, %v1698
  %v2617 = vpack.c.b16 %v1705, %v1699
  %v2618 = vpack.c.b16 %v1706, %v1700
  %v2619 = vpack.c.b16 %v1707, %v1701
  %v2620 = vpack.c.b16 %v1714, %v1708
  %v2621 = vpack.c.b16 %v1715, %v1709
  %v2622 = vpack.c.b16 %v1716, %v1710
  %v2623 = vpack.c.b16 %v1717, %v1711
  %v2624 = vpack.c.b16 %v1718, %v1712
  %v2625 = vpack.c.b16 %v1719, %v1713
  %v2626 = vpack.c.b16 %v1726, %v1720
  %v2627 = vpack.c.b16 %v1727, %v1721
  %v2628 = vpack.c.b16 %v1728, %v1722
  %v2629 = vpack.c.b16 %v1729, %v1723
  %v2630 = vpack.c.b16 %v1730, %v1724
  %v2631 = vpack.c.b16 %v1731, %v1725
  %v2632 = vpack.c.b16 %v1738, %v1732
  %v2633 = vpack.c.b16 %v1739, %v1733
  %v2634 = vpack.c.b16 %v1740, %v1734
  %v2635 = vpack.c.b16 %v1741, %v1735
  %v2636 = vpack.c.b16 %v1742, %v1736
  %v2637 = vpack.c.b16 %v1743, %v1737
  %v2638 = vpack.c.b16 %v1750, %v1744
  %v2639 = vpack.c.b16 %v1751, %v1745
  %v2640 = vpack.c.b16 %v1752, %v1746
  %v2641 = vpack.c.b16 %v1753, %v1747
  %v2642 = vpack.c.b16 %v1754, %v1748
  %v2643 = vpack.c.b16 %v1755, %v1749
  %v2644 = vpack.c.b16 %v1762, %v1756
  %v2645 = vpack.c.b16 %v1763, %v1757
  %v2646 = vpack.c.b16 %v1764, %v1758
  %v2647 = vpack.c.b16 %v1765, %v1759
  %v2648 = vpack.c.b16 %v1766, %v1760
  %v2649 = vpack.c.b16 %v1767, %v1761
  %v2650 = vpack.c.b16 %v1774, %v1768
  %v2651 = vpack.c.b16 %v1775, %v1769
  %v2652 = vpack.c.b16 %v1776, %v1770
  %v2653 = vpack.c.b16 %v1777, %v1771
  %v2654 = vpack.c.b16 %v1778, %v1772
  %v2655 = vpack.c.b16 %v1779, %v1773
  %v2656 = vpack.c.b16 %v1786, %v1780
  %v2657 = vpack.c.b16 %v1787, %v1781
  %v2658 = vpack.c.b16 %v1788, %v1782
  %v2659 = vpack.c.b16 %v1789, %v1783
  %v2660 = vpack.c.b16 %v1790, %v1784
  %v2661 = vpack.c.b16 %v1791, %v1785
  %v2662 = vpack.c.b16 %v1798, %v1792
  %v2663 = vpack.c.b16 %v1799, %v1793
  %v2664 = vpack.c.b16 %v1800, %v1794
  %v2665 = vpack.c.b16 %v1801, %v1795
  %v2666 = vpack.c.b16 %v1802, %v1796
  %v2667 = vpack.c.b16 %v1803, %v1797
  %v2668 = vpack.c.b16 %v1810, %v1804
  %v2669 = vpack.c.b16 %v1811, %v1805
  %v2670 = vpack.c.b16 %v1812, %v1806
  %v2671 = vpack.c.b16 %v1813, %v1807
  %v2672 = vpack.c.b16 %v1814, %v1808
  %v2673 = vpack.c.b16 %v1815, %v1809
  %v2674 = vpack.c.b16 %v1822, %v1816
  %v2675 = vpack.c.b16 %v1823, %v1817
  %v2676 = vpack.c.b16 %v1824, %v1818
  %v2677 = vpack.c.b16 %v1825, %v1819
  %v2678 = vpack.c.b16 %v1826, %v1820
  %v2679 = vpack.c.b16 %v1827, %v1821
  %v2680 = vpack.c.b16 %v1834, %v1828
  %v2681 = vpack.c.b16 %v1835, %v1829
  %v2682 = vpack.c.b16 %v1836, %v1830
  %v2683 = vpack.c.b16 %v1837, %v1831
  %v2684 = vpack.c.b16 %v1838, %v1832
  %v2685 = vpack.c.b16 %v1839, %v1833
  %v2686 = vpack.c.b16 %v1846, %v1840
  %v2687 = vpack.c.b16 %v1847, %v1841
  %v2688 = vpack.c.b16 %v1848, %v1842
  %v2689 = vpack.c.b16 %v1849, %v1843
  %v2690 = vpack.c.b16 %v1850, %v1844
  %v2691 = vpack.c.b16 %v1851, %v1845
  %v2692 = vpack.c.b16 %v1858, %v1852
  %v2693 = vpack.c.b16 %v1859, %v1853
  %v2694 = vpack.c.b16 %v1860, %v1854
  %v2695 = vpack.c.b16 %v1861, %v1855
  %v2696 = vpack.c.b16 %v1862, %v1856
  %v2697 = vpack.c.b16 %v1863, %v1857
  %v2698 = vpack.c.b16 %v1870, %v1864
  %v2699 = vpack.c.b16 %v1871, %v1865
  %v2700 = vpack.c.b16 %v1872, %v1866
  %v2701 = vpack.c.b16 %v1873, %v1867
  %v2702 = vpack.c.b16 %v1874, %v1868
  %v2703 = vpack.c.b16 %v1875, %v1869
  %v2704 = vpack.c.b16 %v1882, %v1876
  %v2705 = vpack.c.b16 %v1883, %v1877
  %v2706 = vpack.c.b16 %v1884, %v1878
  %v2707 = vpack.c.b16 %v1885, %v1879
  %v2708 = vpack.c.b16 %v1886, %v1880
  %v2709 = vpack.c.b16 %v1887, %v1881
  %v2710 = vpack.c.b16 %v1894, %v1888
  %v2711 = vpack.c.b16 %v1895, %v1889
  %v2712 = vpack.c.b16 %v1896, %v1890
  %v2713 = vpack.c.b16 %v1897, %v1891
  %v2714 = vpack.c.b16 %v1898, %v1892
  %v2715 = vpack.c.b16 %v1899, %v1893
  %v2716 = vpack.c.b16 %v1906, %v1900
  %v2717 = vpack.c.b16 %v1907, %v1901
  %v2718 = vpack.c.b16 %v1908, %v1902
  %v2719 = vpack.c.b16 %v1909, %v1903
  %v2720 = vpack.c.b16 %v1910, %v1904
  %v2721 = vpack.c.b16 %v1911, %v1905
  %v2722 = vpack.c.b16 %v1918, %v1912
  %v2723 = vpack.c.b16 %v1919, %v1913
  %v2724 = vpack.c.b16 %v1920, %v1914
  %v2725 = vpack.c.b16 %v1921, %v1915
  %v2726 = vpack.c.b16 %v1922, %v1916
  %v2727 = vpack.c.b16 %v1923, %v1917
  %v2728 = vpack.c.b16 %v1930, %v1924
  %v2729 = vpack.c.b16 %v1931, %v1925
  %v2730 = vpack.c.b16 %v1932, %v1926
  %v2731 = vpack.c.b16 %v1933, %v1927
  %v2732 = vpack.c.b16 %v1934, %v1928
  %v2733 = vpack.c.b16 %v1935, %v1929
  %v2734 = vpack.c.b16 %v1942, %v1936
  %v2735 = vpack.c.b16 %v1943, %v1937
  %v2736 = vpack.c.b16 %v1944, %v1938
  %v2737 = vpack.c.b16 %v1945, %v1939
  %v2738 = vpack.c.b16 %v1946, %v1940
  %v2739 = vpack.c.b16 %v1947, %v1941
  %v2740 = vpack.c.b16 %v1954, %v1948
  %v2741 = vpack.c.b16 %v1955, %v1949
  %v2742 = vpack.c.b16 %v1956, %v1950
  %v2743 = vpack.c.b16 %v1957, %v1951
  %v2744 = vpack.c.b16 %v1958, %v1952
  %v2745 = vpack.c.b16 %v1959, %v1953
  %v2746 = vpack.c.b16 %v1966, %v1960
  %v2747 = vpack.c.b16 %v1967, %v1961
  %v2748 = vpack.c.b16 %v1968, %v1962
  %v2749 = vpack.c.b16 %v1969, %v1963
  %v2750 = vpack.c.b16 %v1970, %v1964
  %v2751 = vpack.c.b16 %v1971, %v1965
  %v2752 = vpack.c.b16 %v1978, %v1972
  %v2753 = vpack.c.b16 %v1979, %v1973
  %v2754 = vpack.c.b16 %v1980, %v1974
  %v2755 = vpack.c.b16 %v1981, %v1975
  %v2756 = vpack.c.b16 %v1982, %v1976
  %v2757 = vpack.c.b16 %v1983, %v1977
  %v2758 = vpack.c.b16 %v1990, %v1984
  %v2759 = vpack.c.b16 %v1991, %v1985
  %v2760 = vpack.c.b16 %v1992, %v1986
  %v2761 = vpack.c.b16 %v1993, %v1987
  %v2762 = vpack.c.b16 %v1994, %v1988
  %v2763 = vpack.c.b16 %v1995, %v1989
  %v2764 = vpack.c.b16 %v2002, %v1996
  %v2765 = vpack.c.b16 %v2003, %v1997
  %v2766 = vpack.c.b16 %v2004, %v1998
  %v2767 = vpack.c.b16 %v2005, %v1999
  %v2768 = vpack.c.b16 %v2006, %v2000
  %v2769 = vpack.c.b16 %v2007, %v2001
  %v2770 = vpack.c.b16 %v2014, %v2008
  %v2771 = vpack.c.b16 %v2015, %v2009
  %v2772 = vpack.c.b16 %v2016, %v2010
  %v2773 = vpack.c.b16 %v2017, %v2011
  %v2774 = vpack.c.b16 %v2018, %v2012
  %v2775 = vpack.c.b16 %v2019, %v2013
  %v2776 = vpack.c.b16 %v2026, %v2020
  %v2777 = vpack.c.b16 %v2027, %v2021
  %v2778 = vpack.c.b16 %v2028, %v2022
  %v2779 = vpack.c.b16 %v2029, %v2023
  %v2780 = vpack.c.b16 %v2030, %v2024
  %v2781 = vpack.c.b16 %v2031, %v2025
  %v2782 = vpack.c.b16 %v2038, %v2032
  %v2783 = vpack.c.b16 %v2039, %v2033
  %v2784 = vpack.c.b16 %v2040, %v2034
  %v2785 = vpack.c.b16 %v2041, %v2035
  %v2786 = vpack.c.b16 %v2042, %v2036
  %v2787 = vpack.c.b16 %v2043, %v2037
  %v2788 = vpack.c.b16 %v2050, %v2044
  %v2789 = vpack.c.b16 %v2051, %v2045
  %v2790 = vpack.c.b16 %v2052, %v2046
  %v2791 = vpack.c.b16 %v2053, %v2047
  %v2792 = vpack.c.b16 %v2054, %v2048
  %v2793 = vpack.c.b16 %v2055, %v2049
  %v2794 = vpack.c.b16 %v2062, %v2056
  %v2795 = vpack.c.b16 %v2063, %v2057
  %v2796 = vpack.c.b16 %v2064, %v2058
  %v2797 = vpack.c.b16 %v2065, %v2059
  %v2798 = vpack.c.b16 %v2066, %v2060
  %v2799 = vpack.c.b16 %v2067, %v2061
  %v2800 = vpack.c.b16 %v2074, %v2068
  %v2801 = vpack.c.b16 %v2075, %v2069
  %v2802 = vpack.c.b16 %v2076, %v2070
  %v2803 = vpack.c.b16 %v2077, %v2071
  %v2804 = vpack.c.b16 %v2078, %v2072
  %v2805 = vpack.c.b16 %v2079, %v2073
  %v2806 = vpack.c.b16 %v2086, %v2080
  %v2807 = vpack.c.b16 %v2087, %v2081
  %v2808 = vpack.c.b16 %v2088, %v2082
  %v2809 = vpack.c.b16 %v2089, %v2083
  %v2810 = vpack.c.b16 %v2090, %v2084
  %v2811 = vpack.c.b16 %v2091, %v2085
  %v2812 = vpack.c.b16 %v2098, %v2092
  %v2813 = vpack.c.b16 %v2099, %v2093
  %v2814 = vpack.c.b16 %v2100, %v2094
  %v2815 = vpack.c.b16 %v2101, %v2095
  %v2816 = vpack.c.b16 %v2102, %v2096
  %v2817 = vpack.c.b16 %v2103, %v2097
  %v2818 = vpack.c.b16 %v2110, %v2104
  %v2819 = vpack.c.b16 %v2111, %v2105
  %v2820 = vpack.c.b16 %v2112, %v2106
  %v2821 = vpack.c.b16 %v2113, %v2107
  %v2822 = vpack.c.b16 %v2114, %v2108
  %v2823 = vpack.c.b16 %v2115, %v2109
  %v2824 = vpack.c.b16 %v2122, %v2116
  %v2825 = vpack.c.b16 %v2123, %v2117
  %v2826 = vpack.c.b16 %v2124, %v2118
  %v2827 = vpack.c.b16 %v2125, %v2119
  %v2828 = vpack.c.b16 %v2126, %v2120
  %v2829 = vpack.c.b16 %v2127, %v2121
  %v2830 = vpack.c.b16 %v2134, %v2128
  %v2831 = vpack.c.b16 %v2135, %v2129
  %v2832 = vpack.c.b16 %v2136, %v2130
  %v2833 = vpack.c.b16 %v2137, %v2131
  %v2834 = vpack.c.b16 %v2138, %v2132
  %v2835 = vpack.c.b16 %v2139, %v2133
  %v2836 = vpack.c.b16 %v2146, %v2140
  %v2837 = vpack.c.b16 %v2147, %v2141
  %v2838 = vpack.c.b16 %v2148, %v2142
  %v2839 = vpack.c.b16 %v2149, %v2143
  %v2840 = vpack.c.b16 %v2150, %v2144
  %v2841 = vpack.c.b16 %v2151, %v2145
  %v2842 = vpack.c.b16 %v2158, %v2152
  %v2843 = vpack.c.b16 %v2159, %v2153
  %v2844 = vpack.c.b16 %v2160, %v2154
  %v2845 = vpack.c.b16 %v2161, %v2155
  %v2846 = vpack.c.b16 %v2162, %v2156
  %v2847 = vpack.c.b16 %v2163, %v2157
  %v2848 = vpack.c.b16 %v2170, %v2164
  %v2849 = vpack.c.b16 %v2171, %v2165
  %v2850 = vpack.c.b16 %v2172, %v2166
  %v2851 = vpack.c.b16 %v2173, %v2167
  %v2852 = vpack.c.b16 %v2174, %v2168
  %v2853 = vpack.c.b16 %v2175, %v2169
  %v2854 = vpack.c.b16 %v2182, %v2176
  %v2855 = vpack.c.b16 %v2183, %v2177
  %v2856 = vpack.c.b16 %v2184, %v2178
  %v2857 = vpack.c.b16 %v2185, %v2179
  %v2858 = vpack.c.b16 %v2186, %v2180
  %v2859 = vpack.c.b16 %v2187, %v2181
  %v2860 = vpack.c.b16 %v2194, %v2188
  %v2861 = vpack.c.b16 %v2195, %v2189
  %v2862 = vpack.c.b16 %v2196, %v2190
  %v2863 = vpack.c.b16 %v2197, %v2191
  %v2864 = vpack.c.b16 %v2198, %v2192
  %v2865 = vpack.c.b16 %v2199, %v2193
  %v2866 = vpack.c.b16 %v2206, %v2200
  %v2867 = vpack.c.b16 %v2207, %v2201
  %v2868 = vpack.c.b16 %v2208, %v2202
  %v2869 = vpack.c.b16 %v2209, %v2203
  %v2870 = vpack.c.b16 %v2210, %v2204
  %v2871 = vpack.c.b16 %v2211, %v2205
  %v2872 = vpack.c.b16 %v2218, %v2212
  %v2873 = vpack.c.b16 %v2219, %v2213
  %v2874 = vpack.c.b16 %v2220, %v2214
  %v2875 = vpack.c.b16 %v2221, %v2215
  %v2876 = vpack.c.b16 %v2222, %v2216
  %v2877 = vpack.c.b16 %v2223, %v2217
  %v2878 = vpack.c.b16 %v2230, %v2224
  %v2879 = vpack.c.b16 %v2231, %v2225
  %v2880 = vpack.c.b16 %v2232, %v2226
  %v2881 = vpack.c.b16 %v2233, %v2227
  %v2882 = vpack.c.b16 %v2234, %v2228
  %v2883 = vpack.c.b16 %v2235, %v2229
  %v2884 = vpack.c.b16 %v2242, %v2236
  %v2885 = vpack.c.b16 %v2243, %v2237
  %v2886 = vpack.c.b16 %v2244, %v2238
  %v2887 = vpack.c.b16 %v2245, %v2239
  %v2888 = vpack.c.b16 %v2246, %v2240
  %v2889 = vpack.c.b16 %v2247, %v2241
  %v2890 = vpack.c.b16 %v2254, %v2248
  %v2891 = vpack.c.b16 %v2255, %v2249
  %v2892 = vpack.c.b16 %v2256, %v2250
  %v2893 = vpack.c.b16 %v2257, %v2251
  %v2894 = vpack.c.b16 %v2258, %v2252
  %v2895 = vpack.c.b16 %v2259, %v2253
  %v2896 = vpack.c.b16 %v2266, %v2260
  %v2897 = vpack.c.b16 %v2267, %v2261
  %v2898 = vpack.c.b16 %v2268, %v2262
  %v2899 = vpack.c.b16 %v2269, %v2263
  %v2900 = vpack.c.b16 %v2270, %v2264
  %v2901 = vpack.c.b16 %v2271, %v2265
  %v2902 = vpack.c.b16 %v2278, %v2272
  %v2903 = vpack.c.b16 %v2279, %v2273
  %v2904 = vpack.c.b16 %v2280, %v2274
  %v2905 = vpack.c.b16 %v2281, %v2275
  %v2906 = vpack.c.b16 %v2282, %v2276
  %v2907 = vpack.c.b16 %v2283, %v2277
  %v2908 = vpack.c.b16 %v2290, %v2284
  %v2909 = vpack.c.b16 %v2291, %v2285
  %v2910 = vpack.c.b16 %v2292, %v2286
  %v2911 = vpack.c.b16 %v2293, %v2287
  %v2912 = vpack.c.b16 %v2294, %v2288
  %v2913 = vpack.c.b16 %v2295, %v2289
  %v2914 = vpack.c.b16 %v2302, %v2296
  %v2915 = vpack.c.b16 %v2303, %v2297
  %v2916 = vpack.c.b16 %v2304, %v2298
  %v2917 = vpack.c.b16 %v2305, %v2299
  %v2918 = vpack.c.b16 %v2306, %v2300
  %v2919 = vpack.c.b16 %v2307, %v2301
  %v2920 = vpack.c.b16 %v2314, %v2308
  %v2921 = vpack.c.b16 %v2315, %v2309
  %v2922 = vpack.c.b16 %v2316, %v2310
  %v2923 = vpack.c.b16 %v2317, %v2311
  %v2924 = vpack.c.b16 %v2318, %v2312
  %v2925 = vpack.c.b16 %v2319, %v2313
  %v2926 = vpack.c.b16 %v2326, %v2320
  %v2927 = vpack.c.b16 %v2327, %v2321
  %v2928 = vpack.c.b16 %v2328, %v2322
  %v2929 = vpack.c.b16 %v2329, %v2323
  %v2930 = vpack.c.b16 %v2330, %v2324
  %v2931 = vpack.c.b16 %v2331, %v2325
  %v2932 = vpack.c.b16 %v2338, %v2332
  %v2933 = vpack.c.b16 %v2339, %v2333
  %v2934 = vpack.c.b16 %v2340, %v2334
  %v2935 = vpack.c.b16 %v2341, %v2335
  %v2936 = vpack.c.b16 %v2342, %v2336
  %v2937 = vpack.c.b16 %v2343, %v2337
  %v2938 = vpack.c.b16 %v2350, %v2344
  %v2939 = vpack.c.b16 %v2351, %v2345
  %v2940 = vpack.c.b16 %v2352, %v2346
  %v2941 = vpack.c.b16 %v2353, %v2347
  %v2942 = vpack.c.b16 %v2354, %v2348
  %v2943 = vpack.c.b16 %v2355, %v2349
  %v2944 = vpack.c.b16 %v2362, %v2356
  %v2945 = vpack.c.b16 %v2363, %v2357
  %v2946 = vpack.c.b16 %v2364, %v2358
  %v2947 = vpack.c.b16 %v2365, %v2359
  %v2948 = vpack.c.b16 %v2366, %v2360
  %v2949 = vpack.c.b16 %v2367, %v2361
  %v2950 = vpack.c.b16 %v2374, %v2368
  %v2951 = vpack.c.b16 %v2375, %v2369
  %v2952 = vpack.c.b16 %v2376, %v2370
  %v2953 = vpack.c.b16 %v2377, %v2371
  %v2954 = vpack.c.b16 %v2378, %v2372
  %v2955 = vpack.c.b16 %v2379, %v2373
  %3532 = vmatpush.bf16.msra.mxu0 %v2422
  %3533 = vmatpush.bf16.msra.mxu0 %v2416
  %3534 = vmatpush.bf16.msra.mxu0 %v2410
  %3535 = vmatpush.bf16.msra.mxu0 %v2404
  %3536 = vmatpush.bf16.msra.mxu0 %v2398
  %3537 = vmatpush.bf16.msra.mxu0 %v2392
  %3538 = vmatpush.bf16.msra.mxu0 %v2386
  %3539 = vmatpush.bf16.msra.mxu0 %v2380
  %3540 = vmatmul.bf16.gmra.mxu0 %v628
  %v3541 = vpop.f32.mrf.mxu0
  %v3542 = vadd.f32 %v598, %v3541
  %v3543 = vpop.f32.mrf.mxu0
  %3544 = vdwg.mxu0
  %3545 = vmatpush.bf16.msra.mxu0 %v2470
  %3546 = vmatpush.bf16.msra.mxu0 %v2464
  %3547 = vmatpush.bf16.msra.mxu0 %v2458
  %3548 = vmatpush.bf16.msra.mxu0 %v2452
  %3549 = vmatpush.bf16.msra.mxu0 %v2446
  %3550 = vmatpush.bf16.msra.mxu0 %v2440
  %3551 = vmatpush.bf16.msra.mxu0 %v2434
  %3552 = vmatpush.bf16.msra.mxu0 %v2428
  %3553 = vmatmul.bf16.gmra.mxu0 %v629
  %v3554 = vpop.f32.mrf.mxu0
  %v3555 = vadd.f32 %v3542, %v3554
  %v3556 = vpop.f32.mrf.mxu0
  %3557 = vdwg.mxu0
  %3558 = vmatpush.bf16.msra.mxu0 %v2518
  %3559 = vmatpush.bf16.msra.mxu0 %v2512
  %3560 = vmatpush.bf16.msra.mxu0 %v2506
  %3561 = vmatpush.bf16.msra.mxu0 %v2500
  %3562 = vmatpush.bf16.msra.mxu0 %v2494
  %3563 = vmatpush.bf16.msra.mxu0 %v2488
  %3564 = vmatpush.bf16.msra.mxu0 %v2482
  %3565 = vmatpush.bf16.msra.mxu0 %v2476
  %3566 = vmatmul.bf16.gmra.mxu0 %v630
  %v3567 = vpop.f32.mrf.mxu0
  %v3568 = vadd.f32 %v3555, %v3567
  %v3569 = vpop.f32.mrf.mxu0
  %3570 = vdwg.mxu0
  %3571 = vmatpush.bf16.msra.mxu0 %v2566
  %3572 = vmatpush.bf16.msra.mxu0 %v2560
  %3573 = vmatpush.bf16.msra.mxu0 %v2554
  %3574 = vmatpush.bf16.msra.mxu0 %v2548
  %3575 = vmatpush.bf16.msra.mxu0 %v2542
  %3576 = vmatpush.bf16.msra.mxu0 %v2536
  %3577 = vmatpush.bf16.msra.mxu0 %v2530
  %3578 = vmatpush.bf16.msra.mxu0 %v2524
  %3579 = vmatmul.bf16.gmra.mxu0 %v631
  %v3580 = vpop.f32.mrf.mxu0
  %v3581 = vadd.f32 %v3568, %v3580
  %v3582 = vpop.f32.mrf.mxu0
  %3583 = vdwg.mxu0
  %3584 = vmatpush.bf16.msra.mxu0 %v2614
  %3585 = vmatpush.bf16.msra.mxu0 %v2608
  %3586 = vmatpush.bf16.msra.mxu0 %v2602
  %3587 = vmatpush.bf16.msra.mxu0 %v2596
  %3588 = vmatpush.bf16.msra.mxu0 %v2590
  %3589 = vmatpush.bf16.msra.mxu0 %v2584
  %3590 = vmatpush.bf16.msra.mxu0 %v2578
  %3591 = vmatpush.bf16.msra.mxu0 %v2572
  %3592 = vmatmul.bf16.gmra.mxu0 %v632
  %v3593 = vpop.f32.mrf.mxu0
  %v3594 = vadd.f32 %v3581, %v3593
  %v3595 = vpop.f32.mrf.mxu0
  %3596 = vdwg.mxu0
  %3597 = vmatpush.bf16.msra.mxu0 %v2662
  %3598 = vmatpush.bf16.msra.mxu0 %v2656
  %3599 = vmatpush.bf16.msra.mxu0 %v2650
  %3600 = vmatpush.bf16.msra.mxu0 %v2644
  %3601 = vmatpush.bf16.msra.mxu0 %v2638
  %3602 = vmatpush.bf16.msra.mxu0 %v2632
  %3603 = vmatpush.bf16.msra.mxu0 %v2626
  %3604 = vmatpush.bf16.msra.mxu0 %v2620
  %3605 = vmatmul.bf16.gmra.mxu0 %v633
  %v3606 = vpop.f32.mrf.mxu0
  %v3607 = vadd.f32 %v3594, %v3606
  %v3608 = vpop.f32.mrf.mxu0
  %3609 = vdwg.mxu0
  %3610 = vmatpush.bf16.msra.mxu0 %v2710
  %3611 = vmatpush.bf16.msra.mxu0 %v2704
  %3612 = vmatpush.bf16.msra.mxu0 %v2698
  %3613 = vmatpush.bf16.msra.mxu0 %v2692
  %3614 = vmatpush.bf16.msra.mxu0 %v2686
  %3615 = vmatpush.bf16.msra.mxu0 %v2680
  %3616 = vmatpush.bf16.msra.mxu0 %v2674
  %3617 = vmatpush.bf16.msra.mxu0 %v2668
  %3618 = vmatmul.bf16.gmra.mxu0 %v634
  %v3619 = vpop.f32.mrf.mxu0
  %v3620 = vadd.f32 %v3607, %v3619
  %v3621 = vpop.f32.mrf.mxu0
  %3622 = vdwg.mxu0
  %3623 = vmatpush.bf16.msra.mxu0 %v2758
  %3624 = vmatpush.bf16.msra.mxu0 %v2752
  %3625 = vmatpush.bf16.msra.mxu0 %v2746
  %3626 = vmatpush.bf16.msra.mxu0 %v2740
  %3627 = vmatpush.bf16.msra.mxu0 %v2734
  %3628 = vmatpush.bf16.msra.mxu0 %v2728
  %3629 = vmatpush.bf16.msra.mxu0 %v2722
  %3630 = vmatpush.bf16.msra.mxu0 %v2716
  %3631 = vmatmul.bf16.gmra.mxu0 %v635
  %v3632 = vpop.f32.mrf.mxu0
  %v3633 = vadd.f32 %v3620, %v3632
  %v3634 = vpop.f32.mrf.mxu0
  %3635 = vdwg.mxu0
  %3636 = vmatpush.bf16.msra.mxu0 %v2806
  %3637 = vmatpush.bf16.msra.mxu0 %v2800
  %3638 = vmatpush.bf16.msra.mxu0 %v2794
  %3639 = vmatpush.bf16.msra.mxu0 %v2788
  %3640 = vmatpush.bf16.msra.mxu0 %v2782
  %3641 = vmatpush.bf16.msra.mxu0 %v2776
  %3642 = vmatpush.bf16.msra.mxu0 %v2770
  %3643 = vmatpush.bf16.msra.mxu0 %v2764
  %3644 = vmatmul.bf16.gmra.mxu0 %v636
  %v3645 = vpop.f32.mrf.mxu0
  %v3646 = vadd.f32 %v3633, %v3645
  %v3647 = vpop.f32.mrf.mxu0
  %3648 = vdwg.mxu0
  %3649 = vmatpush.bf16.msra.mxu0 %v2854
  %3650 = vmatpush.bf16.msra.mxu0 %v2848
  %3651 = vmatpush.bf16.msra.mxu0 %v2842
  %3652 = vmatpush.bf16.msra.mxu0 %v2836
  %3653 = vmatpush.bf16.msra.mxu0 %v2830
  %3654 = vmatpush.bf16.msra.mxu0 %v2824
  %3655 = vmatpush.bf16.msra.mxu0 %v2818
  %3656 = vmatpush.bf16.msra.mxu0 %v2812
  %3657 = vmatmul.bf16.gmra.mxu0 %v637
  %v3658 = vpop.f32.mrf.mxu0
  %v3659 = vadd.f32 %v3646, %v3658
  %v3660 = vpop.f32.mrf.mxu0
  %3661 = vdwg.mxu0
  %3662 = vmatpush.bf16.msra.mxu0 %v2902
  %3663 = vmatpush.bf16.msra.mxu0 %v2896
  %3664 = vmatpush.bf16.msra.mxu0 %v2890
  %3665 = vmatpush.bf16.msra.mxu0 %v2884
  %3666 = vmatpush.bf16.msra.mxu0 %v2878
  %3667 = vmatpush.bf16.msra.mxu0 %v2872
  %3668 = vmatpush.bf16.msra.mxu0 %v2866
  %3669 = vmatpush.bf16.msra.mxu0 %v2860
  %3670 = vmatmul.bf16.gmra.mxu0 %v638
  %v3671 = vpop.f32.mrf.mxu0
  %v3672 = vadd.f32 %v3659, %v3671
  %v3673 = vpop.f32.mrf.mxu0
  %3674 = vdwg.mxu0
  %3675 = vmatpush.bf16.msra.mxu0 %v2950
  %3676 = vmatpush.bf16.msra.mxu0 %v2944
  %3677 = vmatpush.bf16.msra.mxu0 %v2938
  %3678 = vmatpush.bf16.msra.mxu0 %v2932
  %3679 = vmatpush.bf16.msra.mxu0 %v2926
  %3680 = vmatpush.bf16.msra.mxu0 %v2920
  %3681 = vmatpush.bf16.msra.mxu0 %v2914
  %3682 = vmatpush.bf16.msra.mxu0 %v2908
  %3683 = vmatmul.bf16.gmra.mxu0 %v639
  %v3684 = vpop.f32.mrf.mxu0
  %v3685 = vadd.f32 %v3672, %v3684
  %v3686 = vpop.f32.mrf.mxu0
  %3687 = vdwg.mxu0
  %3688 = vmatpush.bf16.msra.mxu0 %v2423
  %3689 = vmatpush.bf16.msra.mxu0 %v2417
  %3690 = vmatpush.bf16.msra.mxu0 %v2411
  %3691 = vmatpush.bf16.msra.mxu0 %v2405
  %3692 = vmatpush.bf16.msra.mxu0 %v2399
  %3693 = vmatpush.bf16.msra.mxu0 %v2393
  %3694 = vmatpush.bf16.msra.mxu0 %v2387
  %3695 = vmatpush.bf16.msra.mxu0 %v2381
  %3696 = vmatmul.bf16.gmra.mxu0 %v628
  %v3697 = vpop.f32.mrf.mxu0
  %v3698 = vadd.f32 %v599, %v3697
  %v3699 = vpop.f32.mrf.mxu0
  %3700 = vdwg.mxu0
  %3701 = vmatpush.bf16.msra.mxu0 %v2471
  %3702 = vmatpush.bf16.msra.mxu0 %v2465
  %3703 = vmatpush.bf16.msra.mxu0 %v2459
  %3704 = vmatpush.bf16.msra.mxu0 %v2453
  %3705 = vmatpush.bf16.msra.mxu0 %v2447
  %3706 = vmatpush.bf16.msra.mxu0 %v2441
  %3707 = vmatpush.bf16.msra.mxu0 %v2435
  %3708 = vmatpush.bf16.msra.mxu0 %v2429
  %3709 = vmatmul.bf16.gmra.mxu0 %v629
  %v3710 = vpop.f32.mrf.mxu0
  %v3711 = vadd.f32 %v3698, %v3710
  %v3712 = vpop.f32.mrf.mxu0
  %3713 = vdwg.mxu0
  %3714 = vmatpush.bf16.msra.mxu0 %v2519
  %3715 = vmatpush.bf16.msra.mxu0 %v2513
  %3716 = vmatpush.bf16.msra.mxu0 %v2507
  %3717 = vmatpush.bf16.msra.mxu0 %v2501
  %3718 = vmatpush.bf16.msra.mxu0 %v2495
  %3719 = vmatpush.bf16.msra.mxu0 %v2489
  %3720 = vmatpush.bf16.msra.mxu0 %v2483
  %3721 = vmatpush.bf16.msra.mxu0 %v2477
  %3722 = vmatmul.bf16.gmra.mxu0 %v630
  %v3723 = vpop.f32.mrf.mxu0
  %v3724 = vadd.f32 %v3711, %v3723
  %v3725 = vpop.f32.mrf.mxu0
  %3726 = vdwg.mxu0
  %3727 = vmatpush.bf16.msra.mxu0 %v2567
  %3728 = vmatpush.bf16.msra.mxu0 %v2561
  %3729 = vmatpush.bf16.msra.mxu0 %v2555
  %3730 = vmatpush.bf16.msra.mxu0 %v2549
  %3731 = vmatpush.bf16.msra.mxu0 %v2543
  %3732 = vmatpush.bf16.msra.mxu0 %v2537
  %3733 = vmatpush.bf16.msra.mxu0 %v2531
  %3734 = vmatpush.bf16.msra.mxu0 %v2525
  %3735 = vmatmul.bf16.gmra.mxu0 %v631
  %v3736 = vpop.f32.mrf.mxu0
  %v3737 = vadd.f32 %v3724, %v3736
  %v3738 = vpop.f32.mrf.mxu0
  %3739 = vdwg.mxu0
  %3740 = vmatpush.bf16.msra.mxu0 %v2615
  %3741 = vmatpush.bf16.msra.mxu0 %v2609
  %3742 = vmatpush.bf16.msra.mxu0 %v2603
  %3743 = vmatpush.bf16.msra.mxu0 %v2597
  %3744 = vmatpush.bf16.msra.mxu0 %v2591
  %3745 = vmatpush.bf16.msra.mxu0 %v2585
  %3746 = vmatpush.bf16.msra.mxu0 %v2579
  %3747 = vmatpush.bf16.msra.mxu0 %v2573
  %3748 = vmatmul.bf16.gmra.mxu0 %v632
  %v3749 = vpop.f32.mrf.mxu0
  %v3750 = vadd.f32 %v3737, %v3749
  %v3751 = vpop.f32.mrf.mxu0
  %3752 = vdwg.mxu0
  %3753 = vmatpush.bf16.msra.mxu0 %v2663
  %3754 = vmatpush.bf16.msra.mxu0 %v2657
  %3755 = vmatpush.bf16.msra.mxu0 %v2651
  %3756 = vmatpush.bf16.msra.mxu0 %v2645
  %3757 = vmatpush.bf16.msra.mxu0 %v2639
  %3758 = vmatpush.bf16.msra.mxu0 %v2633
  %3759 = vmatpush.bf16.msra.mxu0 %v2627
  %3760 = vmatpush.bf16.msra.mxu0 %v2621
  %3761 = vmatmul.bf16.gmra.mxu0 %v633
  %v3762 = vpop.f32.mrf.mxu0
  %v3763 = vadd.f32 %v3750, %v3762
  %v3764 = vpop.f32.mrf.mxu0
  %3765 = vdwg.mxu0
  %3766 = vmatpush.bf16.msra.mxu0 %v2711
  %3767 = vmatpush.bf16.msra.mxu0 %v2705
  %3768 = vmatpush.bf16.msra.mxu0 %v2699
  %3769 = vmatpush.bf16.msra.mxu0 %v2693
  %3770 = vmatpush.bf16.msra.mxu0 %v2687
  %3771 = vmatpush.bf16.msra.mxu0 %v2681
  %3772 = vmatpush.bf16.msra.mxu0 %v2675
  %3773 = vmatpush.bf16.msra.mxu0 %v2669
  %3774 = vmatmul.bf16.gmra.mxu0 %v634
  %v3775 = vpop.f32.mrf.mxu0
  %v3776 = vadd.f32 %v3763, %v3775
  %v3777 = vpop.f32.mrf.mxu0
  %3778 = vdwg.mxu0
  %3779 = vmatpush.bf16.msra.mxu0 %v2759
  %3780 = vmatpush.bf16.msra.mxu0 %v2753
  %3781 = vmatpush.bf16.msra.mxu0 %v2747
  %3782 = vmatpush.bf16.msra.mxu0 %v2741
  %3783 = vmatpush.bf16.msra.mxu0 %v2735
  %3784 = vmatpush.bf16.msra.mxu0 %v2729
  %3785 = vmatpush.bf16.msra.mxu0 %v2723
  %3786 = vmatpush.bf16.msra.mxu0 %v2717
  %3787 = vmatmul.bf16.gmra.mxu0 %v635
  %v3788 = vpop.f32.mrf.mxu0
  %v3789 = vadd.f32 %v3776, %v3788
  %v3790 = vpop.f32.mrf.mxu0
  %3791 = vdwg.mxu0
  %3792 = vmatpush.bf16.msra.mxu0 %v2807
  %3793 = vmatpush.bf16.msra.mxu0 %v2801
  %3794 = vmatpush.bf16.msra.mxu0 %v2795
  %3795 = vmatpush.bf16.msra.mxu0 %v2789
  %3796 = vmatpush.bf16.msra.mxu0 %v2783
  %3797 = vmatpush.bf16.msra.mxu0 %v2777
  %3798 = vmatpush.bf16.msra.mxu0 %v2771
  %3799 = vmatpush.bf16.msra.mxu0 %v2765
  %3800 = vmatmul.bf16.gmra.mxu0 %v636
  %v3801 = vpop.f32.mrf.mxu0
  %v3802 = vadd.f32 %v3789, %v3801
  %v3803 = vpop.f32.mrf.mxu0
  %3804 = vdwg.mxu0
  %3805 = vmatpush.bf16.msra.mxu0 %v2855
  %3806 = vmatpush.bf16.msra.mxu0 %v2849
  %3807 = vmatpush.bf16.msra.mxu0 %v2843
  %3808 = vmatpush.bf16.msra.mxu0 %v2837
  %3809 = vmatpush.bf16.msra.mxu0 %v2831
  %3810 = vmatpush.bf16.msra.mxu0 %v2825
  %3811 = vmatpush.bf16.msra.mxu0 %v2819
  %3812 = vmatpush.bf16.msra.mxu0 %v2813
  %3813 = vmatmul.bf16.gmra.mxu0 %v637
  %v3814 = vpop.f32.mrf.mxu0
  %v3815 = vadd.f32 %v3802, %v3814
  %v3816 = vpop.f32.mrf.mxu0
  %3817 = vdwg.mxu0
  %3818 = vmatpush.bf16.msra.mxu0 %v2903
  %3819 = vmatpush.bf16.msra.mxu0 %v2897
  %3820 = vmatpush.bf16.msra.mxu0 %v2891
  %3821 = vmatpush.bf16.msra.mxu0 %v2885
  %3822 = vmatpush.bf16.msra.mxu0 %v2879
  %3823 = vmatpush.bf16.msra.mxu0 %v2873
  %3824 = vmatpush.bf16.msra.mxu0 %v2867
  %3825 = vmatpush.bf16.msra.mxu0 %v2861
  %3826 = vmatmul.bf16.gmra.mxu0 %v638
  %v3827 = vpop.f32.mrf.mxu0
  %v3828 = vadd.f32 %v3815, %v3827
  %v3829 = vpop.f32.mrf.mxu0
  %3830 = vdwg.mxu0
  %3831 = vmatpush.bf16.msra.mxu0 %v2951
  %3832 = vmatpush.bf16.msra.mxu0 %v2945
  %3833 = vmatpush.bf16.msra.mxu0 %v2939
  %3834 = vmatpush.bf16.msra.mxu0 %v2933
  %3835 = vmatpush.bf16.msra.mxu0 %v2927
  %3836 = vmatpush.bf16.msra.mxu0 %v2921
  %3837 = vmatpush.bf16.msra.mxu0 %v2915
  %3838 = vmatpush.bf16.msra.mxu0 %v2909
  %3839 = vmatmul.bf16.gmra.mxu0 %v639
  %v3840 = vpop.f32.mrf.mxu0
  %v3841 = vadd.f32 %v3828, %v3840
  %v3842 = vpop.f32.mrf.mxu0
  %3843 = vdwg.mxu0
  %3844 = vmatpush.bf16.msra.mxu0 %v2424
  %3845 = vmatpush.bf16.msra.mxu0 %v2418
  %3846 = vmatpush.bf16.msra.mxu0 %v2412
  %3847 = vmatpush.bf16.msra.mxu0 %v2406
  %3848 = vmatpush.bf16.msra.mxu0 %v2400
  %3849 = vmatpush.bf16.msra.mxu0 %v2394
  %3850 = vmatpush.bf16.msra.mxu0 %v2388
  %3851 = vmatpush.bf16.msra.mxu0 %v2382
  %3852 = vmatmul.bf16.gmra.mxu0 %v628
  %v3853 = vpop.f32.mrf.mxu0
  %v3854 = vadd.f32 %v600, %v3853
  %v3855 = vpop.f32.mrf.mxu0
  %3856 = vdwg.mxu0
  %3857 = vmatpush.bf16.msra.mxu0 %v2472
  %3858 = vmatpush.bf16.msra.mxu0 %v2466
  %3859 = vmatpush.bf16.msra.mxu0 %v2460
  %3860 = vmatpush.bf16.msra.mxu0 %v2454
  %3861 = vmatpush.bf16.msra.mxu0 %v2448
  %3862 = vmatpush.bf16.msra.mxu0 %v2442
  %3863 = vmatpush.bf16.msra.mxu0 %v2436
  %3864 = vmatpush.bf16.msra.mxu0 %v2430
  %3865 = vmatmul.bf16.gmra.mxu0 %v629
  %v3866 = vpop.f32.mrf.mxu0
  %v3867 = vadd.f32 %v3854, %v3866
  %v3868 = vpop.f32.mrf.mxu0
  %3869 = vdwg.mxu0
  %3870 = vmatpush.bf16.msra.mxu0 %v2520
  %3871 = vmatpush.bf16.msra.mxu0 %v2514
  %3872 = vmatpush.bf16.msra.mxu0 %v2508
  %3873 = vmatpush.bf16.msra.mxu0 %v2502
  %3874 = vmatpush.bf16.msra.mxu0 %v2496
  %3875 = vmatpush.bf16.msra.mxu0 %v2490
  %3876 = vmatpush.bf16.msra.mxu0 %v2484
  %3877 = vmatpush.bf16.msra.mxu0 %v2478
  %3878 = vmatmul.bf16.gmra.mxu0 %v630
  %v3879 = vpop.f32.mrf.mxu0
  %v3880 = vadd.f32 %v3867, %v3879
  %v3881 = vpop.f32.mrf.mxu0
  %3882 = vdwg.mxu0
  %3883 = vmatpush.bf16.msra.mxu0 %v2568
  %3884 = vmatpush.bf16.msra.mxu0 %v2562
  %3885 = vmatpush.bf16.msra.mxu0 %v2556
  %3886 = vmatpush.bf16.msra.mxu0 %v2550
  %3887 = vmatpush.bf16.msra.mxu0 %v2544
  %3888 = vmatpush.bf16.msra.mxu0 %v2538
  %3889 = vmatpush.bf16.msra.mxu0 %v2532
  %3890 = vmatpush.bf16.msra.mxu0 %v2526
  %3891 = vmatmul.bf16.gmra.mxu0 %v631
  %v3892 = vpop.f32.mrf.mxu0
  %v3893 = vadd.f32 %v3880, %v3892
  %v3894 = vpop.f32.mrf.mxu0
  %3895 = vdwg.mxu0
  %3896 = vmatpush.bf16.msra.mxu0 %v2616
  %3897 = vmatpush.bf16.msra.mxu0 %v2610
  %3898 = vmatpush.bf16.msra.mxu0 %v2604
  %3899 = vmatpush.bf16.msra.mxu0 %v2598
  %3900 = vmatpush.bf16.msra.mxu0 %v2592
  %3901 = vmatpush.bf16.msra.mxu0 %v2586
  %3902 = vmatpush.bf16.msra.mxu0 %v2580
  %3903 = vmatpush.bf16.msra.mxu0 %v2574
  %3904 = vmatmul.bf16.gmra.mxu0 %v632
  %v3905 = vpop.f32.mrf.mxu0
  %v3906 = vadd.f32 %v3893, %v3905
  %v3907 = vpop.f32.mrf.mxu0
  %3908 = vdwg.mxu0
  %3909 = vmatpush.bf16.msra.mxu0 %v2664
  %3910 = vmatpush.bf16.msra.mxu0 %v2658
  %3911 = vmatpush.bf16.msra.mxu0 %v2652
  %3912 = vmatpush.bf16.msra.mxu0 %v2646
  %3913 = vmatpush.bf16.msra.mxu0 %v2640
  %3914 = vmatpush.bf16.msra.mxu0 %v2634
  %3915 = vmatpush.bf16.msra.mxu0 %v2628
  %3916 = vmatpush.bf16.msra.mxu0 %v2622
  %3917 = vmatmul.bf16.gmra.mxu0 %v633
  %v3918 = vpop.f32.mrf.mxu0
  %v3919 = vadd.f32 %v3906, %v3918
  %v3920 = vpop.f32.mrf.mxu0
  %3921 = vdwg.mxu0
  %3922 = vmatpush.bf16.msra.mxu0 %v2712
  %3923 = vmatpush.bf16.msra.mxu0 %v2706
  %3924 = vmatpush.bf16.msra.mxu0 %v2700
  %3925 = vmatpush.bf16.msra.mxu0 %v2694
  %3926 = vmatpush.bf16.msra.mxu0 %v2688
  %3927 = vmatpush.bf16.msra.mxu0 %v2682
  %3928 = vmatpush.bf16.msra.mxu0 %v2676
  %3929 = vmatpush.bf16.msra.mxu0 %v2670
  %3930 = vmatmul.bf16.gmra.mxu0 %v634
  %v3931 = vpop.f32.mrf.mxu0
  %v3932 = vadd.f32 %v3919, %v3931
  %v3933 = vpop.f32.mrf.mxu0
  %3934 = vdwg.mxu0
  %3935 = vmatpush.bf16.msra.mxu0 %v2760
  %3936 = vmatpush.bf16.msra.mxu0 %v2754
  %3937 = vmatpush.bf16.msra.mxu0 %v2748
  %3938 = vmatpush.bf16.msra.mxu0 %v2742
  %3939 = vmatpush.bf16.msra.mxu0 %v2736
  %3940 = vmatpush.bf16.msra.mxu0 %v2730
  %3941 = vmatpush.bf16.msra.mxu0 %v2724
  %3942 = vmatpush.bf16.msra.mxu0 %v2718
  %3943 = vmatmul.bf16.gmra.mxu0 %v635
  %v3944 = vpop.f32.mrf.mxu0
  %v3945 = vadd.f32 %v3932, %v3944
  %v3946 = vpop.f32.mrf.mxu0
  %3947 = vdwg.mxu0
  %3948 = vmatpush.bf16.msra.mxu0 %v2808
  %3949 = vmatpush.bf16.msra.mxu0 %v2802
  %3950 = vmatpush.bf16.msra.mxu0 %v2796
  %3951 = vmatpush.bf16.msra.mxu0 %v2790
  %3952 = vmatpush.bf16.msra.mxu0 %v2784
  %3953 = vmatpush.bf16.msra.mxu0 %v2778
  %3954 = vmatpush.bf16.msra.mxu0 %v2772
  %3955 = vmatpush.bf16.msra.mxu0 %v2766
  %3956 = vmatmul.bf16.gmra.mxu0 %v636
  %v3957 = vpop.f32.mrf.mxu0
  %v3958 = vadd.f32 %v3945, %v3957
  %v3959 = vpop.f32.mrf.mxu0
  %3960 = vdwg.mxu0
  %3961 = vmatpush.bf16.msra.mxu0 %v2856
  %3962 = vmatpush.bf16.msra.mxu0 %v2850
  %3963 = vmatpush.bf16.msra.mxu0 %v2844
  %3964 = vmatpush.bf16.msra.mxu0 %v2838
  %3965 = vmatpush.bf16.msra.mxu0 %v2832
  %3966 = vmatpush.bf16.msra.mxu0 %v2826
  %3967 = vmatpush.bf16.msra.mxu0 %v2820
  %3968 = vmatpush.bf16.msra.mxu0 %v2814
  %3969 = vmatmul.bf16.gmra.mxu0 %v637
  %v3970 = vpop.f32.mrf.mxu0
  %v3971 = vadd.f32 %v3958, %v3970
  %v3972 = vpop.f32.mrf.mxu0
  %3973 = vdwg.mxu0
  %3974 = vmatpush.bf16.msra.mxu0 %v2904
  %3975 = vmatpush.bf16.msra.mxu0 %v2898
  %3976 = vmatpush.bf16.msra.mxu0 %v2892
  %3977 = vmatpush.bf16.msra.mxu0 %v2886
  %3978 = vmatpush.bf16.msra.mxu0 %v2880
  %3979 = vmatpush.bf16.msra.mxu0 %v2874
  %3980 = vmatpush.bf16.msra.mxu0 %v2868
  %3981 = vmatpush.bf16.msra.mxu0 %v2862
  %3982 = vmatmul.bf16.gmra.mxu0 %v638
  %v3983 = vpop.f32.mrf.mxu0
  %v3984 = vadd.f32 %v3971, %v3983
  %v3985 = vpop.f32.mrf.mxu0
  %3986 = vdwg.mxu0
  %3987 = vmatpush.bf16.msra.mxu0 %v2952
  %3988 = vmatpush.bf16.msra.mxu0 %v2946
  %3989 = vmatpush.bf16.msra.mxu0 %v2940
  %3990 = vmatpush.bf16.msra.mxu0 %v2934
  %3991 = vmatpush.bf16.msra.mxu0 %v2928
  %3992 = vmatpush.bf16.msra.mxu0 %v2922
  %3993 = vmatpush.bf16.msra.mxu0 %v2916
  %3994 = vmatpush.bf16.msra.mxu0 %v2910
  %3995 = vmatmul.bf16.gmra.mxu0 %v639
  %v3996 = vpop.f32.mrf.mxu0
  %v3997 = vadd.f32 %v3984, %v3996
  %v3998 = vpop.f32.mrf.mxu0
  %3999 = vdwg.mxu0
  %4000 = vmatpush.bf16.msra.mxu0 %v2425
  %4001 = vmatpush.bf16.msra.mxu0 %v2419
  %4002 = vmatpush.bf16.msra.mxu0 %v2413
  %4003 = vmatpush.bf16.msra.mxu0 %v2407
  %4004 = vmatpush.bf16.msra.mxu0 %v2401
  %4005 = vmatpush.bf16.msra.mxu0 %v2395
  %4006 = vmatpush.bf16.msra.mxu0 %v2389
  %4007 = vmatpush.bf16.msra.mxu0 %v2383
  %4008 = vmatmul.bf16.gmra.mxu0 %v628
  %v4009 = vpop.f32.mrf.mxu0
  %v4010 = vadd.f32 %v601, %v4009
  %v4011 = vpop.f32.mrf.mxu0
  %4012 = vdwg.mxu0
  %4013 = vmatpush.bf16.msra.mxu0 %v2473
  %4014 = vmatpush.bf16.msra.mxu0 %v2467
  %4015 = vmatpush.bf16.msra.mxu0 %v2461
  %4016 = vmatpush.bf16.msra.mxu0 %v2455
  %4017 = vmatpush.bf16.msra.mxu0 %v2449
  %4018 = vmatpush.bf16.msra.mxu0 %v2443
  %4019 = vmatpush.bf16.msra.mxu0 %v2437
  %4020 = vmatpush.bf16.msra.mxu0 %v2431
  %4021 = vmatmul.bf16.gmra.mxu0 %v629
  %v4022 = vpop.f32.mrf.mxu0
  %v4023 = vadd.f32 %v4010, %v4022
  %v4024 = vpop.f32.mrf.mxu0
  %4025 = vdwg.mxu0
  %4026 = vmatpush.bf16.msra.mxu0 %v2521
  %4027 = vmatpush.bf16.msra.mxu0 %v2515
  %4028 = vmatpush.bf16.msra.mxu0 %v2509
  %4029 = vmatpush.bf16.msra.mxu0 %v2503
  %4030 = vmatpush.bf16.msra.mxu0 %v2497
  %4031 = vmatpush.bf16.msra.mxu0 %v2491
  %4032 = vmatpush.bf16.msra.mxu0 %v2485
  %4033 = vmatpush.bf16.msra.mxu0 %v2479
  %4034 = vmatmul.bf16.gmra.mxu0 %v630
  %v4035 = vpop.f32.mrf.mxu0
  %v4036 = vadd.f32 %v4023, %v4035
  %v4037 = vpop.f32.mrf.mxu0
  %4038 = vdwg.mxu0
  %4039 = vmatpush.bf16.msra.mxu0 %v2569
  %4040 = vmatpush.bf16.msra.mxu0 %v2563
  %4041 = vmatpush.bf16.msra.mxu0 %v2557
  %4042 = vmatpush.bf16.msra.mxu0 %v2551
  %4043 = vmatpush.bf16.msra.mxu0 %v2545
  %4044 = vmatpush.bf16.msra.mxu0 %v2539
  %4045 = vmatpush.bf16.msra.mxu0 %v2533
  %4046 = vmatpush.bf16.msra.mxu0 %v2527
  %4047 = vmatmul.bf16.gmra.mxu0 %v631
  %v4048 = vpop.f32.mrf.mxu0
  %v4049 = vadd.f32 %v4036, %v4048
  %v4050 = vpop.f32.mrf.mxu0
  %4051 = vdwg.mxu0
  %4052 = vmatpush.bf16.msra.mxu0 %v2617
  %4053 = vmatpush.bf16.msra.mxu0 %v2611
  %4054 = vmatpush.bf16.msra.mxu0 %v2605
  %4055 = vmatpush.bf16.msra.mxu0 %v2599
  %4056 = vmatpush.bf16.msra.mxu0 %v2593
  %4057 = vmatpush.bf16.msra.mxu0 %v2587
  %4058 = vmatpush.bf16.msra.mxu0 %v2581
  %4059 = vmatpush.bf16.msra.mxu0 %v2575
  %4060 = vmatmul.bf16.gmra.mxu0 %v632
  %v4061 = vpop.f32.mrf.mxu0
  %v4062 = vadd.f32 %v4049, %v4061
  %v4063 = vpop.f32.mrf.mxu0
  %4064 = vdwg.mxu0
  %4065 = vmatpush.bf16.msra.mxu0 %v2665
  %4066 = vmatpush.bf16.msra.mxu0 %v2659
  %4067 = vmatpush.bf16.msra.mxu0 %v2653
  %4068 = vmatpush.bf16.msra.mxu0 %v2647
  %4069 = vmatpush.bf16.msra.mxu0 %v2641
  %4070 = vmatpush.bf16.msra.mxu0 %v2635
  %4071 = vmatpush.bf16.msra.mxu0 %v2629
  %4072 = vmatpush.bf16.msra.mxu0 %v2623
  %4073 = vmatmul.bf16.gmra.mxu0 %v633
  %v4074 = vpop.f32.mrf.mxu0
  %v4075 = vadd.f32 %v4062, %v4074
  %v4076 = vpop.f32.mrf.mxu0
  %4077 = vdwg.mxu0
  %4078 = vmatpush.bf16.msra.mxu0 %v2713
  %4079 = vmatpush.bf16.msra.mxu0 %v2707
  %4080 = vmatpush.bf16.msra.mxu0 %v2701
  %4081 = vmatpush.bf16.msra.mxu0 %v2695
  %4082 = vmatpush.bf16.msra.mxu0 %v2689
  %4083 = vmatpush.bf16.msra.mxu0 %v2683
  %4084 = vmatpush.bf16.msra.mxu0 %v2677
  %4085 = vmatpush.bf16.msra.mxu0 %v2671
  %4086 = vmatmul.bf16.gmra.mxu0 %v634
  %v4087 = vpop.f32.mrf.mxu0
  %v4088 = vadd.f32 %v4075, %v4087
  %v4089 = vpop.f32.mrf.mxu0
  %4090 = vdwg.mxu0
  %4091 = vmatpush.bf16.msra.mxu0 %v2761
  %4092 = vmatpush.bf16.msra.mxu0 %v2755
  %4093 = vmatpush.bf16.msra.mxu0 %v2749
  %4094 = vmatpush.bf16.msra.mxu0 %v2743
  %4095 = vmatpush.bf16.msra.mxu0 %v2737
  %4096 = vmatpush.bf16.msra.mxu0 %v2731
  %4097 = vmatpush.bf16.msra.mxu0 %v2725
  %4098 = vmatpush.bf16.msra.mxu0 %v2719
  %4099 = vmatmul.bf16.gmra.mxu0 %v635
  %v4100 = vpop.f32.mrf.mxu0
  %v4101 = vadd.f32 %v4088, %v4100
  %v4102 = vpop.f32.mrf.mxu0
  %4103 = vdwg.mxu0
  %4104 = vmatpush.bf16.msra.mxu0 %v2809
  %4105 = vmatpush.bf16.msra.mxu0 %v2803
  %4106 = vmatpush.bf16.msra.mxu0 %v2797
  %4107 = vmatpush.bf16.msra.mxu0 %v2791
  %4108 = vmatpush.bf16.msra.mxu0 %v2785
  %4109 = vmatpush.bf16.msra.mxu0 %v2779
  %4110 = vmatpush.bf16.msra.mxu0 %v2773
  %4111 = vmatpush.bf16.msra.mxu0 %v2767
  %4112 = vmatmul.bf16.gmra.mxu0 %v636
  %v4113 = vpop.f32.mrf.mxu0
  %v4114 = vadd.f32 %v4101, %v4113
  %v4115 = vpop.f32.mrf.mxu0
  %4116 = vdwg.mxu0
  %4117 = vmatpush.bf16.msra.mxu0 %v2857
  %4118 = vmatpush.bf16.msra.mxu0 %v2851
  %4119 = vmatpush.bf16.msra.mxu0 %v2845
  %4120 = vmatpush.bf16.msra.mxu0 %v2839
  %4121 = vmatpush.bf16.msra.mxu0 %v2833
  %4122 = vmatpush.bf16.msra.mxu0 %v2827
  %4123 = vmatpush.bf16.msra.mxu0 %v2821
  %4124 = vmatpush.bf16.msra.mxu0 %v2815
  %4125 = vmatmul.bf16.gmra.mxu0 %v637
  %v4126 = vpop.f32.mrf.mxu0
  %v4127 = vadd.f32 %v4114, %v4126
  %v4128 = vpop.f32.mrf.mxu0
  %4129 = vdwg.mxu0
  %4130 = vmatpush.bf16.msra.mxu0 %v2905
  %4131 = vmatpush.bf16.msra.mxu0 %v2899
  %4132 = vmatpush.bf16.msra.mxu0 %v2893
  %4133 = vmatpush.bf16.msra.mxu0 %v2887
  %4134 = vmatpush.bf16.msra.mxu0 %v2881
  %4135 = vmatpush.bf16.msra.mxu0 %v2875
  %4136 = vmatpush.bf16.msra.mxu0 %v2869
  %4137 = vmatpush.bf16.msra.mxu0 %v2863
  %4138 = vmatmul.bf16.gmra.mxu0 %v638
  %v4139 = vpop.f32.mrf.mxu0
  %v4140 = vadd.f32 %v4127, %v4139
  %v4141 = vpop.f32.mrf.mxu0
  %4142 = vdwg.mxu0
  %4143 = vmatpush.bf16.msra.mxu0 %v2953
  %4144 = vmatpush.bf16.msra.mxu0 %v2947
  %4145 = vmatpush.bf16.msra.mxu0 %v2941
  %4146 = vmatpush.bf16.msra.mxu0 %v2935
  %4147 = vmatpush.bf16.msra.mxu0 %v2929
  %4148 = vmatpush.bf16.msra.mxu0 %v2923
  %4149 = vmatpush.bf16.msra.mxu0 %v2917
  %4150 = vmatpush.bf16.msra.mxu0 %v2911
  %4151 = vmatmul.bf16.gmra.mxu0 %v639
  %v4152 = vpop.f32.mrf.mxu0
  %v4153 = vadd.f32 %v4140, %v4152
  %v4154 = vpop.f32.mrf.mxu0
  %4155 = vdwg.mxu0
  %4156 = vmatpush.bf16.msra.mxu0 %v2426
  %4157 = vmatpush.bf16.msra.mxu0 %v2420
  %4158 = vmatpush.bf16.msra.mxu0 %v2414
  %4159 = vmatpush.bf16.msra.mxu0 %v2408
  %4160 = vmatpush.bf16.msra.mxu0 %v2402
  %4161 = vmatpush.bf16.msra.mxu0 %v2396
  %4162 = vmatpush.bf16.msra.mxu0 %v2390
  %4163 = vmatpush.bf16.msra.mxu0 %v2384
  %4164 = vmatmul.bf16.gmra.mxu0 %v628
  %v4165 = vpop.f32.mrf.mxu0
  %v4166 = vadd.f32 %v602, %v4165
  %v4167 = vpop.f32.mrf.mxu0
  %4168 = vdwg.mxu0
  %4169 = vmatpush.bf16.msra.mxu0 %v2474
  %4170 = vmatpush.bf16.msra.mxu0 %v2468
  %4171 = vmatpush.bf16.msra.mxu0 %v2462
  %4172 = vmatpush.bf16.msra.mxu0 %v2456
  %4173 = vmatpush.bf16.msra.mxu0 %v2450
  %4174 = vmatpush.bf16.msra.mxu0 %v2444
  %4175 = vmatpush.bf16.msra.mxu0 %v2438
  %4176 = vmatpush.bf16.msra.mxu0 %v2432
  %4177 = vmatmul.bf16.gmra.mxu0 %v629
  %v4178 = vpop.f32.mrf.mxu0
  %v4179 = vadd.f32 %v4166, %v4178
  %v4180 = vpop.f32.mrf.mxu0
  %4181 = vdwg.mxu0
  %4182 = vmatpush.bf16.msra.mxu0 %v2522
  %4183 = vmatpush.bf16.msra.mxu0 %v2516
  %4184 = vmatpush.bf16.msra.mxu0 %v2510
  %4185 = vmatpush.bf16.msra.mxu0 %v2504
  %4186 = vmatpush.bf16.msra.mxu0 %v2498
  %4187 = vmatpush.bf16.msra.mxu0 %v2492
  %4188 = vmatpush.bf16.msra.mxu0 %v2486
  %4189 = vmatpush.bf16.msra.mxu0 %v2480
  %4190 = vmatmul.bf16.gmra.mxu0 %v630
  %v4191 = vpop.f32.mrf.mxu0
  %v4192 = vadd.f32 %v4179, %v4191
  %v4193 = vpop.f32.mrf.mxu0
  %4194 = vdwg.mxu0
  %4195 = vmatpush.bf16.msra.mxu0 %v2570
  %4196 = vmatpush.bf16.msra.mxu0 %v2564
  %4197 = vmatpush.bf16.msra.mxu0 %v2558
  %4198 = vmatpush.bf16.msra.mxu0 %v2552
  %4199 = vmatpush.bf16.msra.mxu0 %v2546
  %4200 = vmatpush.bf16.msra.mxu0 %v2540
  %4201 = vmatpush.bf16.msra.mxu0 %v2534
  %4202 = vmatpush.bf16.msra.mxu0 %v2528
  %4203 = vmatmul.bf16.gmra.mxu0 %v631
  %v4204 = vpop.f32.mrf.mxu0
  %v4205 = vadd.f32 %v4192, %v4204
  %v4206 = vpop.f32.mrf.mxu0
  %4207 = vdwg.mxu0
  %4208 = vmatpush.bf16.msra.mxu0 %v2618
  %4209 = vmatpush.bf16.msra.mxu0 %v2612
  %4210 = vmatpush.bf16.msra.mxu0 %v2606
  %4211 = vmatpush.bf16.msra.mxu0 %v2600
  %4212 = vmatpush.bf16.msra.mxu0 %v2594
  %4213 = vmatpush.bf16.msra.mxu0 %v2588
  %4214 = vmatpush.bf16.msra.mxu0 %v2582
  %4215 = vmatpush.bf16.msra.mxu0 %v2576
  %4216 = vmatmul.bf16.gmra.mxu0 %v632
  %v4217 = vpop.f32.mrf.mxu0
  %v4218 = vadd.f32 %v4205, %v4217
  %v4219 = vpop.f32.mrf.mxu0
  %4220 = vdwg.mxu0
  %4221 = vmatpush.bf16.msra.mxu0 %v2666
  %4222 = vmatpush.bf16.msra.mxu0 %v2660
  %4223 = vmatpush.bf16.msra.mxu0 %v2654
  %4224 = vmatpush.bf16.msra.mxu0 %v2648
  %4225 = vmatpush.bf16.msra.mxu0 %v2642
  %4226 = vmatpush.bf16.msra.mxu0 %v2636
  %4227 = vmatpush.bf16.msra.mxu0 %v2630
  %4228 = vmatpush.bf16.msra.mxu0 %v2624
  %4229 = vmatmul.bf16.gmra.mxu0 %v633
  %v4230 = vpop.f32.mrf.mxu0
  %v4231 = vadd.f32 %v4218, %v4230
  %v4232 = vpop.f32.mrf.mxu0
  %4233 = vdwg.mxu0
  %4234 = vmatpush.bf16.msra.mxu0 %v2714
  %4235 = vmatpush.bf16.msra.mxu0 %v2708
  %4236 = vmatpush.bf16.msra.mxu0 %v2702
  %4237 = vmatpush.bf16.msra.mxu0 %v2696
  %4238 = vmatpush.bf16.msra.mxu0 %v2690
  %4239 = vmatpush.bf16.msra.mxu0 %v2684
  %4240 = vmatpush.bf16.msra.mxu0 %v2678
  %4241 = vmatpush.bf16.msra.mxu0 %v2672
  %4242 = vmatmul.bf16.gmra.mxu0 %v634
  %v4243 = vpop.f32.mrf.mxu0
  %v4244 = vadd.f32 %v4231, %v4243
  %v4245 = vpop.f32.mrf.mxu0
  %4246 = vdwg.mxu0
  %4247 = vmatpush.bf16.msra.mxu0 %v2762
  %4248 = vmatpush.bf16.msra.mxu0 %v2756
  %4249 = vmatpush.bf16.msra.mxu0 %v2750
  %4250 = vmatpush.bf16.msra.mxu0 %v2744
  %4251 = vmatpush.bf16.msra.mxu0 %v2738
  %4252 = vmatpush.bf16.msra.mxu0 %v2732
  %4253 = vmatpush.bf16.msra.mxu0 %v2726
  %4254 = vmatpush.bf16.msra.mxu0 %v2720
  %4255 = vmatmul.bf16.gmra.mxu0 %v635
  %v4256 = vpop.f32.mrf.mxu0
  %v4257 = vadd.f32 %v4244, %v4256
  %v4258 = vpop.f32.mrf.mxu0
  %4259 = vdwg.mxu0
  %4260 = vmatpush.bf16.msra.mxu0 %v2810
  %4261 = vmatpush.bf16.msra.mxu0 %v2804
  %4262 = vmatpush.bf16.msra.mxu0 %v2798
  %4263 = vmatpush.bf16.msra.mxu0 %v2792
  %4264 = vmatpush.bf16.msra.mxu0 %v2786
  %4265 = vmatpush.bf16.msra.mxu0 %v2780
  %4266 = vmatpush.bf16.msra.mxu0 %v2774
  %4267 = vmatpush.bf16.msra.mxu0 %v2768
  %4268 = vmatmul.bf16.gmra.mxu0 %v636
  %v4269 = vpop.f32.mrf.mxu0
  %v4270 = vadd.f32 %v4257, %v4269
  %v4271 = vpop.f32.mrf.mxu0
  %4272 = vdwg.mxu0
  %4273 = vmatpush.bf16.msra.mxu0 %v2858
  %4274 = vmatpush.bf16.msra.mxu0 %v2852
  %4275 = vmatpush.bf16.msra.mxu0 %v2846
  %4276 = vmatpush.bf16.msra.mxu0 %v2840
  %4277 = vmatpush.bf16.msra.mxu0 %v2834
  %4278 = vmatpush.bf16.msra.mxu0 %v2828
  %4279 = vmatpush.bf16.msra.mxu0 %v2822
  %4280 = vmatpush.bf16.msra.mxu0 %v2816
  %4281 = vmatmul.bf16.gmra.mxu0 %v637
  %v4282 = vpop.f32.mrf.mxu0
  %v4283 = vadd.f32 %v4270, %v4282
  %v4284 = vpop.f32.mrf.mxu0
  %4285 = vdwg.mxu0
  %4286 = vmatpush.bf16.msra.mxu0 %v2906
  %4287 = vmatpush.bf16.msra.mxu0 %v2900
  %4288 = vmatpush.bf16.msra.mxu0 %v2894
  %4289 = vmatpush.bf16.msra.mxu0 %v2888
  %4290 = vmatpush.bf16.msra.mxu0 %v2882
  %4291 = vmatpush.bf16.msra.mxu0 %v2876
  %4292 = vmatpush.bf16.msra.mxu0 %v2870
  %4293 = vmatpush.bf16.msra.mxu0 %v2864
  %4294 = vmatmul.bf16.gmra.mxu0 %v638
  %v4295 = vpop.f32.mrf.mxu0
  %v4296 = vadd.f32 %v4283, %v4295
  %v4297 = vpop.f32.mrf.mxu0
  %4298 = vdwg.mxu0
  %4299 = vmatpush.bf16.msra.mxu0 %v2954
  %4300 = vmatpush.bf16.msra.mxu0 %v2948
  %4301 = vmatpush.bf16.msra.mxu0 %v2942
  %4302 = vmatpush.bf16.msra.mxu0 %v2936
  %4303 = vmatpush.bf16.msra.mxu0 %v2930
  %4304 = vmatpush.bf16.msra.mxu0 %v2924
  %4305 = vmatpush.bf16.msra.mxu0 %v2918
  %4306 = vmatpush.bf16.msra.mxu0 %v2912
  %4307 = vmatmul.bf16.gmra.mxu0 %v639
  %v4308 = vpop.f32.mrf.mxu0
  %v4309 = vadd.f32 %v4296, %v4308
  %v4310 = vpop.f32.mrf.mxu0
  %4311 = vdwg.mxu0
  %4312 = vmatpush.bf16.msra.mxu0 %v2427
  %4313 = vmatpush.bf16.msra.mxu0 %v2421
  %4314 = vmatpush.bf16.msra.mxu0 %v2415
  %4315 = vmatpush.bf16.msra.mxu0 %v2409
  %4316 = vmatpush.bf16.msra.mxu0 %v2403
  %4317 = vmatpush.bf16.msra.mxu0 %v2397
  %4318 = vmatpush.bf16.msra.mxu0 %v2391
  %4319 = vmatpush.bf16.msra.mxu0 %v2385
  %4320 = vmatmul.bf16.gmra.mxu0 %v628
  %v4321 = vpop.f32.mrf.mxu0
  %v4322 = vadd.f32 %v603, %v4321
  %v4323 = vpop.f32.mrf.mxu0
  %4324 = vdwg.mxu0
  %4325 = vmatpush.bf16.msra.mxu0 %v2475
  %4326 = vmatpush.bf16.msra.mxu0 %v2469
  %4327 = vmatpush.bf16.msra.mxu0 %v2463
  %4328 = vmatpush.bf16.msra.mxu0 %v2457
  %4329 = vmatpush.bf16.msra.mxu0 %v2451
  %4330 = vmatpush.bf16.msra.mxu0 %v2445
  %4331 = vmatpush.bf16.msra.mxu0 %v2439
  %4332 = vmatpush.bf16.msra.mxu0 %v2433
  %4333 = vmatmul.bf16.gmra.mxu0 %v629
  %v4334 = vpop.f32.mrf.mxu0
  %v4335 = vadd.f32 %v4322, %v4334
  %v4336 = vpop.f32.mrf.mxu0
  %4337 = vdwg.mxu0
  %4338 = vmatpush.bf16.msra.mxu0 %v2523
  %4339 = vmatpush.bf16.msra.mxu0 %v2517
  %4340 = vmatpush.bf16.msra.mxu0 %v2511
  %4341 = vmatpush.bf16.msra.mxu0 %v2505
  %4342 = vmatpush.bf16.msra.mxu0 %v2499
  %4343 = vmatpush.bf16.msra.mxu0 %v2493
  %4344 = vmatpush.bf16.msra.mxu0 %v2487
  %4345 = vmatpush.bf16.msra.mxu0 %v2481
  %4346 = vmatmul.bf16.gmra.mxu0 %v630
  %v4347 = vpop.f32.mrf.mxu0
  %v4348 = vadd.f32 %v4335, %v4347
  %v4349 = vpop.f32.mrf.mxu0
  %4350 = vdwg.mxu0
  %4351 = vmatpush.bf16.msra.mxu0 %v2571
  %4352 = vmatpush.bf16.msra.mxu0 %v2565
  %4353 = vmatpush.bf16.msra.mxu0 %v2559
  %4354 = vmatpush.bf16.msra.mxu0 %v2553
  %4355 = vmatpush.bf16.msra.mxu0 %v2547
  %4356 = vmatpush.bf16.msra.mxu0 %v2541
  %4357 = vmatpush.bf16.msra.mxu0 %v2535
  %4358 = vmatpush.bf16.msra.mxu0 %v2529
  %4359 = vmatmul.bf16.gmra.mxu0 %v631
  %v4360 = vpop.f32.mrf.mxu0
  %v4361 = vadd.f32 %v4348, %v4360
  %v4362 = vpop.f32.mrf.mxu0
  %4363 = vdwg.mxu0
  %4364 = vmatpush.bf16.msra.mxu0 %v2619
  %4365 = vmatpush.bf16.msra.mxu0 %v2613
  %4366 = vmatpush.bf16.msra.mxu0 %v2607
  %4367 = vmatpush.bf16.msra.mxu0 %v2601
  %4368 = vmatpush.bf16.msra.mxu0 %v2595
  %4369 = vmatpush.bf16.msra.mxu0 %v2589
  %4370 = vmatpush.bf16.msra.mxu0 %v2583
  %4371 = vmatpush.bf16.msra.mxu0 %v2577
  %4372 = vmatmul.bf16.gmra.mxu0 %v632
  %v4373 = vpop.f32.mrf.mxu0
  %v4374 = vadd.f32 %v4361, %v4373
  %v4375 = vpop.f32.mrf.mxu0
  %4376 = vdwg.mxu0
  %4377 = vmatpush.bf16.msra.mxu0 %v2667
  %4378 = vmatpush.bf16.msra.mxu0 %v2661
  %4379 = vmatpush.bf16.msra.mxu0 %v2655
  %4380 = vmatpush.bf16.msra.mxu0 %v2649
  %4381 = vmatpush.bf16.msra.mxu0 %v2643
  %4382 = vmatpush.bf16.msra.mxu0 %v2637
  %4383 = vmatpush.bf16.msra.mxu0 %v2631
  %4384 = vmatpush.bf16.msra.mxu0 %v2625
  %4385 = vmatmul.bf16.gmra.mxu0 %v633
  %v4386 = vpop.f32.mrf.mxu0
  %v4387 = vadd.f32 %v4374, %v4386
  %v4388 = vpop.f32.mrf.mxu0
  %4389 = vdwg.mxu0
  %4390 = vmatpush.bf16.msra.mxu0 %v2715
  %4391 = vmatpush.bf16.msra.mxu0 %v2709
  %4392 = vmatpush.bf16.msra.mxu0 %v2703
  %4393 = vmatpush.bf16.msra.mxu0 %v2697
  %4394 = vmatpush.bf16.msra.mxu0 %v2691
  %4395 = vmatpush.bf16.msra.mxu0 %v2685
  %4396 = vmatpush.bf16.msra.mxu0 %v2679
  %4397 = vmatpush.bf16.msra.mxu0 %v2673
  %4398 = vmatmul.bf16.gmra.mxu0 %v634
  %v4399 = vpop.f32.mrf.mxu0
  %v4400 = vadd.f32 %v4387, %v4399
  %v4401 = vpop.f32.mrf.mxu0
  %4402 = vdwg.mxu0
  %4403 = vmatpush.bf16.msra.mxu0 %v2763
  %4404 = vmatpush.bf16.msra.mxu0 %v2757
  %4405 = vmatpush.bf16.msra.mxu0 %v2751
  %4406 = vmatpush.bf16.msra.mxu0 %v2745
  %4407 = vmatpush.bf16.msra.mxu0 %v2739
  %4408 = vmatpush.bf16.msra.mxu0 %v2733
  %4409 = vmatpush.bf16.msra.mxu0 %v2727
  %4410 = vmatpush.bf16.msra.mxu0 %v2721
  %4411 = vmatmul.bf16.gmra.mxu0 %v635
  %v4412 = vpop.f32.mrf.mxu0
  %v4413 = vadd.f32 %v4400, %v4412
  %v4414 = vpop.f32.mrf.mxu0
  %4415 = vdwg.mxu0
  %4416 = vmatpush.bf16.msra.mxu0 %v2811
  %4417 = vmatpush.bf16.msra.mxu0 %v2805
  %4418 = vmatpush.bf16.msra.mxu0 %v2799
  %4419 = vmatpush.bf16.msra.mxu0 %v2793
  %4420 = vmatpush.bf16.msra.mxu0 %v2787
  %4421 = vmatpush.bf16.msra.mxu0 %v2781
  %4422 = vmatpush.bf16.msra.mxu0 %v2775
  %4423 = vmatpush.bf16.msra.mxu0 %v2769
  %4424 = vmatmul.bf16.gmra.mxu0 %v636
  %v4425 = vpop.f32.mrf.mxu0
  %v4426 = vadd.f32 %v4413, %v4425
  %v4427 = vpop.f32.mrf.mxu0
  %4428 = vdwg.mxu0
  %4429 = vmatpush.bf16.msra.mxu0 %v2859
  %4430 = vmatpush.bf16.msra.mxu0 %v2853
  %4431 = vmatpush.bf16.msra.mxu0 %v2847
  %4432 = vmatpush.bf16.msra.mxu0 %v2841
  %4433 = vmatpush.bf16.msra.mxu0 %v2835
  %4434 = vmatpush.bf16.msra.mxu0 %v2829
  %4435 = vmatpush.bf16.msra.mxu0 %v2823
  %4436 = vmatpush.bf16.msra.mxu0 %v2817
  %4437 = vmatmul.bf16.gmra.mxu0 %v637
  %v4438 = vpop.f32.mrf.mxu0
  %v4439 = vadd.f32 %v4426, %v4438
  %v4440 = vpop.f32.mrf.mxu0
  %4441 = vdwg.mxu0
  %4442 = vmatpush.bf16.msra.mxu0 %v2907
  %4443 = vmatpush.bf16.msra.mxu0 %v2901
  %4444 = vmatpush.bf16.msra.mxu0 %v2895
  %4445 = vmatpush.bf16.msra.mxu0 %v2889
  %4446 = vmatpush.bf16.msra.mxu0 %v2883
  %4447 = vmatpush.bf16.msra.mxu0 %v2877
  %4448 = vmatpush.bf16.msra.mxu0 %v2871
  %4449 = vmatpush.bf16.msra.mxu0 %v2865
  %4450 = vmatmul.bf16.gmra.mxu0 %v638
  %v4451 = vpop.f32.mrf.mxu0
  %v4452 = vadd.f32 %v4439, %v4451
  %v4453 = vpop.f32.mrf.mxu0
  %4454 = vdwg.mxu0
  %4455 = vmatpush.bf16.msra.mxu0 %v2955
  %4456 = vmatpush.bf16.msra.mxu0 %v2949
  %4457 = vmatpush.bf16.msra.mxu0 %v2943
  %4458 = vmatpush.bf16.msra.mxu0 %v2937
  %4459 = vmatpush.bf16.msra.mxu0 %v2931
  %4460 = vmatpush.bf16.msra.mxu0 %v2925
  %4461 = vmatpush.bf16.msra.mxu0 %v2919
  %4462 = vmatpush.bf16.msra.mxu0 %v2913
  %4463 = vmatmul.bf16.gmra.mxu0 %v639
  %v4464 = vpop.f32.mrf.mxu0
  %v4465 = vadd.f32 %v4452, %v4464
  %v4466 = vpop.f32.mrf.mxu0
  %4467 = vdwg.mxu0
  %v4468 = vpack.c.bf16 %v3841, %v3685
  %v4469 = vpack.c.bf16 %v4153, %v3997
  %v4470 = vpack.c.bf16 %v4465, %v4309
  %4471 = vst [vmem:[%s3] sm:$0xff] %v4468
  %4472 = vst [vmem:[%s3 + $0x8] sm:$0xff] %v4469
  %4473 = vst [vmem:[%s3 + $0x10] sm:$0xff] %v4470
  // Predicated region
  $region14: #{resnet_forward.8} parent=0 // pred_check
    _
  $region15: #{resnet_forward.8} parent=0 // pred_check_branch
    %4475 = sbr.rel (0) target = $region17
  $region16: #{resnet_forward.8} parent=0 // pred_region
    _
  $region17: #{resnet_forward.8} parent=0 // pred_fallthru
    _
  // Predicated region
  $region18: #{resnet_forward.8} parent=0 // pred_check
    _
  $region19: #{resnet_forward.8} parent=0 // pred_check_branch
    %4477 = sbr.rel (0) target = $region21
  $region20: #{resnet_forward.8} parent=0 // pred_region
    _
  $region21: #{resnet_forward.8} parent=0 // pred_fallthru
    _

</llo_original>
